<compile_context>
chip_gen: v5e
topology: v5e:2x2
jax: 0.10.0
libtpu: 0.0.40
codegen_flags: <defaults>
</compile_context>

<pallas_src>
import functools

import jax
import jax.numpy as jnp
from jax.experimental import pallas as pl
from jax.experimental.pallas import tpu as pltpu

RES_SCALE = 1.0
KSIZE = 3  # kernel_size of the body convs


def _build_im2col(src_ref, im_ref, ml_ref, mr_ref, *, H, W, C):
    """Fill im_ref (H*W, 9C) with 3x3 'same'-padded patches of src_ref (H*W, C).

    Tap t = (dy+1)*3 + (dx+1) occupies columns [t*C, (t+1)*C).  The spatial
    shift (dy, dx) is a flat row offset k = dy*W + dx; rows whose y+dy falls
    outside the image are zeroed (small contiguous ranges), columns whose x+dx
    falls outside the image are killed with the precomputed masks.
    """
    HW = H * W
    t = 0
    for dy in (-1, 0, 1):
        for dx in (-1, 0, 1):
            k = dy * W + dx
            s0 = max(k, 0)            # first source row
            d0 = max(-k, 0)           # first destination row
            L = HW - abs(k)
            end = d0 + L
            c0 = t * C
            if d0 > 0:
                im_ref[0:d0, c0:c0 + C] = jnp.zeros((d0, C), jnp.float32)
            if end < HW:
                im_ref[end:HW, c0:c0 + C] = jnp.zeros((HW - end, C), jnp.float32)
            vals = src_ref[s0:s0 + L, :]
            if dx == -1:
                vals = vals * ml_ref[d0:end, :]
            elif dx == 1:
                vals = vals * mr_ref[d0:end, :]
            im_ref[d0:end, c0:c0 + C] = vals
            t += 1


def resblock2_kernel(x_ref, w1_ref, b1_ref, w2_ref, b2_ref, w3_ref, b3_ref,
                     ml_ref, mr_ref, out_ref, ori_ref, h_ref, im_ref, *, H, W):
    """One batch element per grid step (C = n_feat).

    x_ref  : (1, H*W, 2C) bf16   flattened NHWC input
    w1_ref : (2C, C)      bf16   1x1 conv weight (in, out)
    b1_ref : (1, C)       f32
    w2_ref : (9C, C)      bf16   3x3 conv #1, rows ordered (tap, in)
    b2_ref : (1, C)       f32
    w3_ref : (9C, C)      bf16   3x3 conv #2
    b3_ref : (1, C)       f32
    ml_ref : (H*W, 1)     f32    1.0 where pixel column x >= 1
    mr_ref : (H*W, 1)     f32    1.0 where pixel column x <= W-2
    out_ref: (1, H*W, C)  f32
    ori_ref, h_ref : (H*W, C)  f32 VMEM scratch
    im_ref : (H*W, 9C)    f32 VMEM scratch (im2col slab)
    """
    C = out_ref.shape[2]

    # ---- 1x1 conv: single channel matmul on the MXU ----
    ori_ref[...] = jnp.dot(x_ref[0], w1_ref[...],
                           preferred_element_type=jnp.float32) + b1_ref[...]

    # ---- 3x3 conv #1 (fused im2col matmul, K = 9C) + ReLU ----
    _build_im2col(ori_ref, im_ref, ml_ref, mr_ref, H=H, W=W, C=C)
    h = jnp.dot(im_ref[...].astype(jnp.bfloat16), w2_ref[...],
                preferred_element_type=jnp.float32) + b2_ref[...]
    h_ref[...] = jnp.maximum(h, 0.0)          # nn.ReLU(True)

    # ---- 3x3 conv #2 ----
    _build_im2col(h_ref, im_ref, ml_ref, mr_ref, H=H, W=W, C=C)
    res = jnp.dot(im_ref[...].astype(jnp.bfloat16), w3_ref[...],
                  preferred_element_type=jnp.float32) + b3_ref[...]

    if RES_SCALE != 1.0:                      # specialized at trace time
        res = res * RES_SCALE
    out_ref[0] = (res + ori_ref[...]).astype(out_ref.dtype)


@jax.jit
def resblock2(x, w1, b1, w2, b2, w3, b3):
    """x: (B, H, W, 2C) float32 NHWC -> (B, H, W, C) float32."""
    B, H, W, C2 = x.shape
    C = C2 // 2
    HW = H * W
    K2 = KSIZE * KSIZE

    # Layout / dtype plumbing (free reshapes at the XLA level; bf16 halves the
    # HBM->VMEM bytes for x and the weights).
    xf = x.reshape(B, HW, C2).astype(jnp.bfloat16)
    w1b = w1.astype(jnp.bfloat16)                      # (2C, C)
    w2b = w2.reshape(K2 * C, C).astype(jnp.bfloat16)   # (9C, C), rows = (tap, in)
    w3b = w3.reshape(K2 * C, C).astype(jnp.bfloat16)

    # Column-boundary masks for the 3x3 "same" padding.
    col = jnp.arange(HW, dtype=jnp.int32) % W
    m_left = (col >= 1).astype(jnp.float32).reshape(HW, 1)
    m_right = (col <= W - 2).astype(jnp.float32).reshape(HW, 1)

    kernel = functools.partial(resblock2_kernel, H=H, W=W)

    out = pl.pallas_call(
        kernel,
        out_shape=jax.ShapeDtypeStruct((B, HW, C), jnp.float32),
        grid_spec=pltpu.PrefetchScalarGridSpec(
            num_scalar_prefetch=0,
            grid=(B,),
            in_specs=[
                pl.BlockSpec((1, HW, C2), lambda b: (b, 0, 0)),   # x
                pl.BlockSpec((C2, C), lambda b: (0, 0)),          # w1
                pl.BlockSpec((1, C), lambda b: (0, 0)),           # b1
                pl.BlockSpec((K2 * C, C), lambda b: (0, 0)),      # w2
                pl.BlockSpec((1, C), lambda b: (0, 0)),           # b2
                pl.BlockSpec((K2 * C, C), lambda b: (0, 0)),      # w3
                pl.BlockSpec((1, C), lambda b: (0, 0)),           # b3
                pl.BlockSpec((HW, 1), lambda b: (0, 0)),          # m_left
                pl.BlockSpec((HW, 1), lambda b: (0, 0)),          # m_right
            ],
            out_specs=pl.BlockSpec((1, HW, C), lambda b: (b, 0, 0)),
            scratch_shapes=[
                pltpu.VMEM((HW, C), jnp.float32),        # ori
                pltpu.VMEM((HW, C), jnp.float32),        # ReLU output
                pltpu.VMEM((HW, K2 * C), jnp.float32),   # im2col slab
            ],
        ),
        compiler_params=pltpu.CompilerParams(
            dimension_semantics=("parallel",),
            vmem_limit_bytes=64 * 1024 * 1024,
        ),
    )(xf, w1b, b1, w2b, b2, w3b, b3, m_left, m_right)

    return out.reshape(B, H, W, C)


def reference_forward(x, w1, b1, w2, b2, w3, b3):
    """Pure-JAX f32 reference (NHWC conv), mirrors the PyTorch forward."""
    B, H, W, C2 = x.shape
    C = C2 // 2
    dn = ("NHWC", "HWIO", "NHWC")

    ori = jax.lax.conv_general_dilated(
        x, w1.reshape(1, 1, C2, C), (1, 1), "SAME",
        dimension_numbers=dn) + b1.reshape(1, 1, 1, C)

    h = jax.lax.conv_general_dilated(
        ori, w2.reshape(KSIZE, KSIZE, C, C), (1, 1), "SAME",
        dimension_numbers=dn) + b2.reshape(1, 1, 1, C)
    h = jnp.maximum(h, 0.0)

    res = jax.lax.conv_general_dilated(
        h, w3.reshape(KSIZE, KSIZE, C, C), (1, 1), "SAME",
        dimension_numbers=dn) + b3.reshape(1, 1, 1, C)

    return res * RES_SCALE + ori


if __name__ == "__main__":
    B, n_feat, H, W = 2, 4, 16, 16
    C2 = 2 * n_feat

    key = jax.random.PRNGKey(0)
    kx, k1, kb1, k2, kb2, k3, kb3 = jax.random.split(key, 7)

    # input (NHWC layout; a PyTorch NCHW tensor would be transposed here)
    x = jax.random.normal(kx, (B, H, W, C2), jnp.float32)

    # deterministic synthetic parameters (shapes implied by __init__)
    w1 = 0.1 * jax.random.normal(k1, (C2, n_feat), jnp.float32)            # 1x1 conv
    b1 = 0.1 * jax.random.normal(kb1, (1, n_feat), jnp.float32)
    w2 = 0.1 * jax.random.normal(k2, (KSIZE * KSIZE, n_feat, n_feat), jnp.float32)
    b2 = 0.1 * jax.random.normal(kb2, (1, n_feat), jnp.float32)
    w3 = 0.1 * jax.random.normal(k3, (KSIZE * KSIZE, n_feat, n_feat), jnp.float32)
    b3 = 0.1 * jax.random.normal(kb3, (1, n_feat), jnp.float32)

    out = jax.block_until_ready(resblock2(x, w1, b1, w2, b2, w3, b3))
    ref = jax.block_until_ready(reference_forward(x, w1, b1, w2, b2, w3, b3))

    assert out.shape == (B, H, W, n_feat)
    # bf16 MXU inputs vs. pure-f32 reference -> bf16-level tolerance.
    assert jnp.allclose(out, ref, atol=5e-2, rtol=5e-2), (
        float(jnp.max(jnp.abs(out - ref))))

    print("KERNEL_OK")
</pallas_src>

<mosaic_0001>
module attributes {stable_mosaic.version = 11 : i64} {
  func.func @resblock2_kernel(%arg0: i32, %arg1: memref<1x256x8xbf16, #tpu.memory_space<vmem>>, %arg2: memref<8x4xbf16, #tpu.memory_space<vmem>>, %arg3: memref<1x4xf32, #tpu.memory_space<vmem>>, %arg4: memref<36x4xbf16, #tpu.memory_space<vmem>>, %arg5: memref<1x4xf32, #tpu.memory_space<vmem>>, %arg6: memref<36x4xbf16, #tpu.memory_space<vmem>>, %arg7: memref<1x4xf32, #tpu.memory_space<vmem>>, %arg8: memref<256x1xf32, #tpu.memory_space<vmem>>, %arg9: memref<256x1xf32, #tpu.memory_space<vmem>>, %arg10: memref<1x256x4xf32, #tpu.memory_space<vmem>>, %arg11: memref<256x4xf32, #tpu.memory_space<vmem>>, %arg12: memref<256x4xf32, #tpu.memory_space<vmem>>, %arg13: memref<256x36xf32, #tpu.memory_space<vmem>>) attributes {dimension_semantics = [#tpu.dimension_semantics<parallel>], iteration_bounds = array<i64: 2>, scalar_prefetch = 0 : i64, scratch_operands = 3 : i64, tpu.core_type = #tpu.core_type<tc>, window_params = [{transform_indices = @transform_0, window_bounds = array<i64: 1, 256, 8>}, {pipeline_mode = #tpu.pipeline_mode<synchronous>, transform_indices = @transform_1, window_bounds = array<i64: 8, 4>}, {pipeline_mode = #tpu.pipeline_mode<synchronous>, transform_indices = @transform_2, window_bounds = array<i64: 1, 4>}, {pipeline_mode = #tpu.pipeline_mode<synchronous>, transform_indices = @transform_3, window_bounds = array<i64: 36, 4>}, {pipeline_mode = #tpu.pipeline_mode<synchronous>, transform_indices = @transform_4, window_bounds = array<i64: 1, 4>}, {pipeline_mode = #tpu.pipeline_mode<synchronous>, transform_indices = @transform_5, window_bounds = array<i64: 36, 4>}, {pipeline_mode = #tpu.pipeline_mode<synchronous>, transform_indices = @transform_6, window_bounds = array<i64: 1, 4>}, {pipeline_mode = #tpu.pipeline_mode<synchronous>, transform_indices = @transform_7, window_bounds = array<i64: 256, 1>}, {pipeline_mode = #tpu.pipeline_mode<synchronous>, transform_indices = @transform_8, window_bounds = array<i64: 256, 1>}, {transform_indices = @transform_9, window_bounds = array<i64: 1, 256, 4>}]} {
    %c0 = arith.constant 0 : index
    %c0_0 = arith.constant 0 : index
    %c0_1 = arith.constant 0 : index
    %0 = vector.load %arg1[%c0, %c0_0, %c0_1] : memref<1x256x8xbf16, #tpu.memory_space<vmem>>, vector<1x256x8xbf16>
    %1 = vector.shape_cast %0 : vector<1x256x8xbf16> to vector<256x8xbf16>
    %c0_2 = arith.constant 0 : index
    %c0_3 = arith.constant 0 : index
    %2 = vector.load %arg2[%c0_2, %c0_3] : memref<8x4xbf16, #tpu.memory_space<vmem>>, vector<8x4xbf16>
    %cst = arith.constant dense<0.000000e+00> : vector<256x4xf32>
    %3 = tpu.matmul %1, %2, %cst {dimension_numbers = #tpu.dot_dimension_numbers<[1], [0], [0], [1], [0, 0, 1, 1], [], []>} : vector<256x8xbf16>, vector<8x4xbf16>, vector<256x4xf32> -> vector<256x4xf32>
    %c0_4 = arith.constant 0 : index
    %c0_5 = arith.constant 0 : index
    %4 = vector.load %arg3[%c0_4, %c0_5] : memref<1x4xf32, #tpu.memory_space<vmem>>, vector<1x4xf32>
    %5 = vector.broadcast %4 : vector<1x4xf32> to vector<256x4xf32>
    %6 = arith.addf %3, %5 : vector<256x4xf32>
    %c0_6 = arith.constant 0 : index
    %c0_7 = arith.constant 0 : index
    %7 = vector.load %arg11[%c0_6, %c0_7] : memref<256x4xf32, #tpu.memory_space<vmem>>, vector<256x4xf32>
    tpu.vector_store %arg11[%c0_6, %c0_7], %6 {strides = array<i32>} : memref<256x4xf32, #tpu.memory_space<vmem>>, vector<256x4xf32>,
    %cst_8 = arith.constant 0.000000e+00 : f32
    %8 = vector.broadcast %cst_8 : f32 to vector<17x4xf32>
    %c0_9 = arith.constant 0 : index
    %c0_10 = arith.constant 0 : index
    %9 = vector.load %arg13[%c0_9, %c0_10] : memref<256x36xf32, #tpu.memory_space<vmem>>, vector<17x4xf32>
    tpu.vector_store %arg13[%c0_9, %c0_10], %8 {strides = array<i32>} : memref<256x36xf32, #tpu.memory_space<vmem>>, vector<17x4xf32>,
    %c0_11 = arith.constant 0 : index
    %c0_12 = arith.constant 0 : index
    %10 = vector.load %arg11[%c0_11, %c0_12] : memref<256x4xf32, #tpu.memory_space<vmem>>, vector<239x4xf32>
    %c17 = arith.constant 17 : index
    %c0_13 = arith.constant 0 : index
    %11 = vector.load %arg8[%c17, %c0_13] : memref<256x1xf32, #tpu.memory_space<vmem>>, vector<239x1xf32>
    %12 = vector.broadcast %11 : vector<239x1xf32> to vector<239x4xf32>
    %13 = arith.mulf %10, %12 : vector<239x4xf32>
    %c17_14 = arith.constant 17 : index
    %c0_15 = arith.constant 0 : index
    %14 = vector.load %arg13[%c17_14, %c0_15] : memref<256x36xf32, #tpu.memory_space<vmem>>, vector<239x4xf32>
    tpu.vector_store %arg13[%c17_14, %c0_15], %13 {strides = array<i32>} : memref<256x36xf32, #tpu.memory_space<vmem>>, vector<239x4xf32>,
    %cst_16 = arith.constant 0.000000e+00 : f32
    %15 = vector.broadcast %cst_16 : f32 to vector<16x4xf32>
    %c0_17 = arith.constant 0 : index
    %c4 = arith.constant 4 : index
    %16 = vector.load %arg13[%c0_17, %c4] : memref<256x36xf32, #tpu.memory_space<vmem>>, vector<16x4xf32>
    tpu.vector_store %arg13[%c0_17, %c4], %15 {strides = array<i32>} : memref<256x36xf32, #tpu.memory_space<vmem>>, vector<16x4xf32>,
    %c0_18 = arith.constant 0 : index
    %c0_19 = arith.constant 0 : index
    %17 = vector.load %arg11[%c0_18, %c0_19] : memref<256x4xf32, #tpu.memory_space<vmem>>, vector<240x4xf32>
    %c16 = arith.constant 16 : index
    %c4_20 = arith.constant 4 : index
    %18 = vector.load %arg13[%c16, %c4_20] : memref<256x36xf32, #tpu.memory_space<vmem>>, vector<240x4xf32>
    tpu.vector_store %arg13[%c16, %c4_20], %17 {strides = array<i32>} : memref<256x36xf32, #tpu.memory_space<vmem>>, vector<240x4xf32>,
    %cst_21 = arith.constant 0.000000e+00 : f32
    %19 = vector.broadcast %cst_21 : f32 to vector<15x4xf32>
    %c0_22 = arith.constant 0 : index
    %c8 = arith.constant 8 : index
    %20 = vector.load %arg13[%c0_22, %c8] : memref<256x36xf32, #tpu.memory_space<vmem>>, vector<15x4xf32>
    tpu.vector_store %arg13[%c0_22, %c8], %19 {strides = array<i32>} : memref<256x36xf32, #tpu.memory_space<vmem>>, vector<15x4xf32>,
    %c0_23 = arith.constant 0 : index
    %c0_24 = arith.constant 0 : index
    %21 = vector.load %arg11[%c0_23, %c0_24] : memref<256x4xf32, #tpu.memory_space<vmem>>, vector<241x4xf32>
    %c15 = arith.constant 15 : index
    %c0_25 = arith.constant 0 : index
    %22 = vector.load %arg9[%c15, %c0_25] : memref<256x1xf32, #tpu.memory_space<vmem>>, vector<241x1xf32>
    %23 = vector.broadcast %22 : vector<241x1xf32> to vector<241x4xf32>
    %24 = arith.mulf %21, %23 : vector<241x4xf32>
    %c15_26 = arith.constant 15 : index
    %c8_27 = arith.constant 8 : index
    %25 = vector.load %arg13[%c15_26, %c8_27] : memref<256x36xf32, #tpu.memory_space<vmem>>, vector<241x4xf32>
    tpu.vector_store %arg13[%c15_26, %c8_27], %24 {strides = array<i32>} : memref<256x36xf32, #tpu.memory_space<vmem>>, vector<241x4xf32>,
    %cst_28 = arith.constant 0.000000e+00 : f32
    %26 = vector.broadcast %cst_28 : f32 to vector<1x4xf32>
    %c0_29 = arith.constant 0 : index
    %c12 = arith.constant 12 : index
    %27 = vector.load %arg13[%c0_29, %c12] : memref<256x36xf32, #tpu.memory_space<vmem>>, vector<1x4xf32>
    tpu.vector_store %arg13[%c0_29, %c12], %26 {strides = array<i32>} : memref<256x36xf32, #tpu.memory_space<vmem>>, vector<1x4xf32>,
    %c0_30 = arith.constant 0 : index
    %c0_31 = arith.constant 0 : index
    %28 = vector.load %arg11[%c0_30, %c0_31] : memref<256x4xf32, #tpu.memory_space<vmem>>, vector<255x4xf32>
    %c1 = arith.constant 1 : index
    %c0_32 = arith.constant 0 : index
    %29 = vector.load %arg8[%c1, %c0_32] : memref<256x1xf32, #tpu.memory_space<vmem>>, vector<255x1xf32>
    %30 = vector.broadcast %29 : vector<255x1xf32> to vector<255x4xf32>
    %31 = arith.mulf %28, %30 : vector<255x4xf32>
    %c1_33 = arith.constant 1 : index
    %c12_34 = arith.constant 12 : index
    %32 = vector.load %arg13[%c1_33, %c12_34] : memref<256x36xf32, #tpu.memory_space<vmem>>, vector<255x4xf32>
    tpu.vector_store %arg13[%c1_33, %c12_34], %31 {strides = array<i32>} : memref<256x36xf32, #tpu.memory_space<vmem>>, vector<255x4xf32>,
    %c0_35 = arith.constant 0 : index
    %c0_36 = arith.constant 0 : index
    %33 = vector.load %arg11[%c0_35, %c0_36] : memref<256x4xf32, #tpu.memory_space<vmem>>, vector<256x4xf32>
    %c0_37 = arith.constant 0 : index
    %c16_38 = arith.constant 16 : index
    %34 = vector.load %arg13[%c0_37, %c16_38] : memref<256x36xf32, #tpu.memory_space<vmem>>, vector<256x4xf32>
    tpu.vector_store %arg13[%c0_37, %c16_38], %33 {strides = array<i32>} : memref<256x36xf32, #tpu.memory_space<vmem>>, vector<256x4xf32>,
    %cst_39 = arith.constant 0.000000e+00 : f32
    %35 = vector.broadcast %cst_39 : f32 to vector<1x4xf32>
    %c255 = arith.constant 255 : index
    %c20 = arith.constant 20 : index
    %36 = vector.load %arg13[%c255, %c20] : memref<256x36xf32, #tpu.memory_space<vmem>>, vector<1x4xf32>
    tpu.vector_store %arg13[%c255, %c20], %35 {strides = array<i32>} : memref<256x36xf32, #tpu.memory_space<vmem>>, vector<1x4xf32>,
    %c1_40 = arith.constant 1 : index
    %c0_41 = arith.constant 0 : index
    %37 = vector.load %arg11[%c1_40, %c0_41] : memref<256x4xf32, #tpu.memory_space<vmem>>, vector<255x4xf32>
    %c0_42 = arith.constant 0 : index
    %c0_43 = arith.constant 0 : index
    %38 = vector.load %arg9[%c0_42, %c0_43] : memref<256x1xf32, #tpu.memory_space<vmem>>, vector<255x1xf32>
    %39 = vector.broadcast %38 : vector<255x1xf32> to vector<255x4xf32>
    %40 = arith.mulf %37, %39 : vector<255x4xf32>
    %c0_44 = arith.constant 0 : index
    %c20_45 = arith.constant 20 : index
    %41 = vector.load %arg13[%c0_44, %c20_45] : memref<256x36xf32, #tpu.memory_space<vmem>>, vector<255x4xf32>
    tpu.vector_store %arg13[%c0_44, %c20_45], %40 {strides = array<i32>} : memref<256x36xf32, #tpu.memory_space<vmem>>, vector<255x4xf32>,
    %cst_46 = arith.constant 0.000000e+00 : f32
    %42 = vector.broadcast %cst_46 : f32 to vector<15x4xf32>
    %c241 = arith.constant 241 : index
    %c24 = arith.constant 24 : index
    %43 = vector.load %arg13[%c241, %c24] : memref<256x36xf32, #tpu.memory_space<vmem>>, vector<15x4xf32>
    tpu.vector_store %arg13[%c241, %c24], %42 {strides = array<i32>} : memref<256x36xf32, #tpu.memory_space<vmem>>, vector<15x4xf32>,
    %c15_47 = arith.constant 15 : index
    %c0_48 = arith.constant 0 : index
    %44 = vector.load %arg11[%c15_47, %c0_48] : memref<256x4xf32, #tpu.memory_space<vmem>>, vector<241x4xf32>
    %c0_49 = arith.constant 0 : index
    %c0_50 = arith.constant 0 : index
    %45 = vector.load %arg8[%c0_49, %c0_50] : memref<256x1xf32, #tpu.memory_space<vmem>>, vector<241x1xf32>
    %46 = vector.broadcast %45 : vector<241x1xf32> to vector<241x4xf32>
    %47 = arith.mulf %44, %46 : vector<241x4xf32>
    %c0_51 = arith.constant 0 : index
    %c24_52 = arith.constant 24 : index
    %48 = vector.load %arg13[%c0_51, %c24_52] : memref<256x36xf32, #tpu.memory_space<vmem>>, vector<241x4xf32>
    tpu.vector_store %arg13[%c0_51, %c24_52], %47 {strides = array<i32>} : memref<256x36xf32, #tpu.memory_space<vmem>>, vector<241x4xf32>,
    %cst_53 = arith.constant 0.000000e+00 : f32
    %49 = vector.broadcast %cst_53 : f32 to vector<16x4xf32>
    %c240 = arith.constant 240 : index
    %c28 = arith.constant 28 : index
    %50 = vector.load %arg13[%c240, %c28] : memref<256x36xf32, #tpu.memory_space<vmem>>, vector<16x4xf32>
    tpu.vector_store %arg13[%c240, %c28], %49 {strides = array<i32>} : memref<256x36xf32, #tpu.memory_space<vmem>>, vector<16x4xf32>,
    %c16_54 = arith.constant 16 : index
    %c0_55 = arith.constant 0 : index
    %51 = vector.load %arg11[%c16_54, %c0_55] : memref<256x4xf32, #tpu.memory_space<vmem>>, vector<240x4xf32>
    %c0_56 = arith.constant 0 : index
    %c28_57 = arith.constant 28 : index
    %52 = vector.load %arg13[%c0_56, %c28_57] : memref<256x36xf32, #tpu.memory_space<vmem>>, vector<240x4xf32>
    tpu.vector_store %arg13[%c0_56, %c28_57], %51 {strides = array<i32>} : memref<256x36xf32, #tpu.memory_space<vmem>>, vector<240x4xf32>,
    %cst_58 = arith.constant 0.000000e+00 : f32
    %53 = vector.broadcast %cst_58 : f32 to vector<17x4xf32>
    %c239 = arith.constant 239 : index
    %c32 = arith.constant 32 : index
    %54 = vector.load %arg13[%c239, %c32] : memref<256x36xf32, #tpu.memory_space<vmem>>, vector<17x4xf32>
    tpu.vector_store %arg13[%c239, %c32], %53 {strides = array<i32>} : memref<256x36xf32, #tpu.memory_space<vmem>>, vector<17x4xf32>,
    %c17_59 = arith.constant 17 : index
    %c0_60 = arith.constant 0 : index
    %55 = vector.load %arg11[%c17_59, %c0_60] : memref<256x4xf32, #tpu.memory_space<vmem>>, vector<239x4xf32>
    %c0_61 = arith.constant 0 : index
    %c0_62 = arith.constant 0 : index
    %56 = vector.load %arg9[%c0_61, %c0_62] : memref<256x1xf32, #tpu.memory_space<vmem>>, vector<239x1xf32>
    %57 = vector.broadcast %56 : vector<239x1xf32> to vector<239x4xf32>
    %58 = arith.mulf %55, %57 : vector<239x4xf32>
    %c0_63 = arith.constant 0 : index
    %c32_64 = arith.constant 32 : index
    %59 = vector.load %arg13[%c0_63, %c32_64] : memref<256x36xf32, #tpu.memory_space<vmem>>, vector<239x4xf32>
    tpu.vector_store %arg13[%c0_63, %c32_64], %58 {strides = array<i32>} : memref<256x36xf32, #tpu.memory_space<vmem>>, vector<239x4xf32>,
    %c0_65 = arith.constant 0 : index
    %c0_66 = arith.constant 0 : index
    %60 = vector.load %arg13[%c0_65, %c0_66] : memref<256x36xf32, #tpu.memory_space<vmem>>, vector<256x36xf32>
    %61 = arith.truncf %60 : vector<256x36xf32> to vector<256x36xbf16>
    %c0_67 = arith.constant 0 : index
    %c0_68 = arith.constant 0 : index
    %62 = vector.load %arg4[%c0_67, %c0_68] : memref<36x4xbf16, #tpu.memory_space<vmem>>, vector<36x4xbf16>
    %cst_69 = arith.constant dense<0.000000e+00> : vector<256x4xf32>
    %63 = tpu.matmul %61, %62, %cst_69 {dimension_numbers = #tpu.dot_dimension_numbers<[1], [0], [0], [1], [0, 0, 1, 1], [], []>} : vector<256x36xbf16>, vector<36x4xbf16>, vector<256x4xf32> -> vector<256x4xf32>
    %c0_70 = arith.constant 0 : index
    %c0_71 = arith.constant 0 : index
    %64 = vector.load %arg5[%c0_70, %c0_71] : memref<1x4xf32, #tpu.memory_space<vmem>>, vector<1x4xf32>
    %65 = vector.broadcast %64 : vector<1x4xf32> to vector<256x4xf32>
    %66 = arith.addf %63, %65 : vector<256x4xf32>
    %cst_72 = arith.constant 0.000000e+00 : f32
    %67 = vector.broadcast %cst_72 : f32 to vector<256x4xf32>
    %68 = arith.maximumf %66, %67 : vector<256x4xf32>
    %c0_73 = arith.constant 0 : index
    %c0_74 = arith.constant 0 : index
    %69 = vector.load %arg12[%c0_73, %c0_74] : memref<256x4xf32, #tpu.memory_space<vmem>>, vector<256x4xf32>
    tpu.vector_store %arg12[%c0_73, %c0_74], %68 {strides = array<i32>} : memref<256x4xf32, #tpu.memory_space<vmem>>, vector<256x4xf32>,
    %cst_75 = arith.constant 0.000000e+00 : f32
    %70 = vector.broadcast %cst_75 : f32 to vector<17x4xf32>
    %c0_76 = arith.constant 0 : index
    %c0_77 = arith.constant 0 : index
    %71 = vector.load %arg13[%c0_76, %c0_77] : memref<256x36xf32, #tpu.memory_space<vmem>>, vector<17x4xf32>
    tpu.vector_store %arg13[%c0_76, %c0_77], %70 {strides = array<i32>} : memref<256x36xf32, #tpu.memory_space<vmem>>, vector<17x4xf32>,
    %c0_78 = arith.constant 0 : index
    %c0_79 = arith.constant 0 : index
    %72 = vector.load %arg12[%c0_78, %c0_79] : memref<256x4xf32, #tpu.memory_space<vmem>>, vector<239x4xf32>
    %c17_80 = arith.constant 17 : index
    %c0_81 = arith.constant 0 : index
    %73 = vector.load %arg8[%c17_80, %c0_81] : memref<256x1xf32, #tpu.memory_space<vmem>>, vector<239x1xf32>
    %74 = vector.broadcast %73 : vector<239x1xf32> to vector<239x4xf32>
    %75 = arith.mulf %72, %74 : vector<239x4xf32>
    %c17_82 = arith.constant 17 : index
    %c0_83 = arith.constant 0 : index
    %76 = vector.load %arg13[%c17_82, %c0_83] : memref<256x36xf32, #tpu.memory_space<vmem>>, vector<239x4xf32>
    tpu.vector_store %arg13[%c17_82, %c0_83], %75 {strides = array<i32>} : memref<256x36xf32, #tpu.memory_space<vmem>>, vector<239x4xf32>,
    %cst_84 = arith.constant 0.000000e+00 : f32
    %77 = vector.broadcast %cst_84 : f32 to vector<16x4xf32>
    %c0_85 = arith.constant 0 : index
    %c4_86 = arith.constant 4 : index
    %78 = vector.load %arg13[%c0_85, %c4_86] : memref<256x36xf32, #tpu.memory_space<vmem>>, vector<16x4xf32>
    tpu.vector_store %arg13[%c0_85, %c4_86], %77 {strides = array<i32>} : memref<256x36xf32, #tpu.memory_space<vmem>>, vector<16x4xf32>,
    %c0_87 = arith.constant 0 : index
    %c0_88 = arith.constant 0 : index
    %79 = vector.load %arg12[%c0_87, %c0_88] : memref<256x4xf32, #tpu.memory_space<vmem>>, vector<240x4xf32>
    %c16_89 = arith.constant 16 : index
    %c4_90 = arith.constant 4 : index
    %80 = vector.load %arg13[%c16_89, %c4_90] : memref<256x36xf32, #tpu.memory_space<vmem>>, vector<240x4xf32>
    tpu.vector_store %arg13[%c16_89, %c4_90], %79 {strides = array<i32>} : memref<256x36xf32, #tpu.memory_space<vmem>>, vector<240x4xf32>,
    %cst_91 = arith.constant 0.000000e+00 : f32
    %81 = vector.broadcast %cst_91 : f32 to vector<15x4xf32>
    %c0_92 = arith.constant 0 : index
    %c8_93 = arith.constant 8 : index
    %82 = vector.load %arg13[%c0_92, %c8_93] : memref<256x36xf32, #tpu.memory_space<vmem>>, vector<15x4xf32>
    tpu.vector_store %arg13[%c0_92, %c8_93], %81 {strides = array<i32>} : memref<256x36xf32, #tpu.memory_space<vmem>>, vector<15x4xf32>,
    %c0_94 = arith.constant 0 : index
    %c0_95 = arith.constant 0 : index
    %83 = vector.load %arg12[%c0_94, %c0_95] : memref<256x4xf32, #tpu.memory_space<vmem>>, vector<241x4xf32>
    %c15_96 = arith.constant 15 : index
    %c0_97 = arith.constant 0 : index
    %84 = vector.load %arg9[%c15_96, %c0_97] : memref<256x1xf32, #tpu.memory_space<vmem>>, vector<241x1xf32>
    %85 = vector.broadcast %84 : vector<241x1xf32> to vector<241x4xf32>
    %86 = arith.mulf %83, %85 : vector<241x4xf32>
    %c15_98 = arith.constant 15 : index
    %c8_99 = arith.constant 8 : index
    %87 = vector.load %arg13[%c15_98, %c8_99] : memref<256x36xf32, #tpu.memory_space<vmem>>, vector<241x4xf32>
    tpu.vector_store %arg13[%c15_98, %c8_99], %86 {strides = array<i32>} : memref<256x36xf32, #tpu.memory_space<vmem>>, vector<241x4xf32>,
    %cst_100 = arith.constant 0.000000e+00 : f32
    %88 = vector.broadcast %cst_100 : f32 to vector<1x4xf32>
    %c0_101 = arith.constant 0 : index
    %c12_102 = arith.constant 12 : index
    %89 = vector.load %arg13[%c0_101, %c12_102] : memref<256x36xf32, #tpu.memory_space<vmem>>, vector<1x4xf32>
    tpu.vector_store %arg13[%c0_101, %c12_102], %88 {strides = array<i32>} : memref<256x36xf32, #tpu.memory_space<vmem>>, vector<1x4xf32>,
    %c0_103 = arith.constant 0 : index
    %c0_104 = arith.constant 0 : index
    %90 = vector.load %arg12[%c0_103, %c0_104] : memref<256x4xf32, #tpu.memory_space<vmem>>, vector<255x4xf32>
    %c1_105 = arith.constant 1 : index
    %c0_106 = arith.constant 0 : index
    %91 = vector.load %arg8[%c1_105, %c0_106] : memref<256x1xf32, #tpu.memory_space<vmem>>, vector<255x1xf32>
    %92 = vector.broadcast %91 : vector<255x1xf32> to vector<255x4xf32>
    %93 = arith.mulf %90, %92 : vector<255x4xf32>
    %c1_107 = arith.constant 1 : index
    %c12_108 = arith.constant 12 : index
    %94 = vector.load %arg13[%c1_107, %c12_108] : memref<256x36xf32, #tpu.memory_space<vmem>>, vector<255x4xf32>
    tpu.vector_store %arg13[%c1_107, %c12_108], %93 {strides = array<i32>} : memref<256x36xf32, #tpu.memory_space<vmem>>, vector<255x4xf32>,
    %c0_109 = arith.constant 0 : index
    %c0_110 = arith.constant 0 : index
    %95 = vector.load %arg12[%c0_109, %c0_110] : memref<256x4xf32, #tpu.memory_space<vmem>>, vector<256x4xf32>
    %c0_111 = arith.constant 0 : index
    %c16_112 = arith.constant 16 : index
    %96 = vector.load %arg13[%c0_111, %c16_112] : memref<256x36xf32, #tpu.memory_space<vmem>>, vector<256x4xf32>
    tpu.vector_store %arg13[%c0_111, %c16_112], %95 {strides = array<i32>} : memref<256x36xf32, #tpu.memory_space<vmem>>, vector<256x4xf32>,
    %cst_113 = arith.constant 0.000000e+00 : f32
    %97 = vector.broadcast %cst_113 : f32 to vector<1x4xf32>
    %c255_114 = arith.constant 255 : index
    %c20_115 = arith.constant 20 : index
    %98 = vector.load %arg13[%c255_114, %c20_115] : memref<256x36xf32, #tpu.memory_space<vmem>>, vector<1x4xf32>
    tpu.vector_store %arg13[%c255_114, %c20_115], %97 {strides = array<i32>} : memref<256x36xf32, #tpu.memory_space<vmem>>, vector<1x4xf32>,
    %c1_116 = arith.constant 1 : index
    %c0_117 = arith.constant 0 : index
    %99 = vector.load %arg12[%c1_116, %c0_117] : memref<256x4xf32, #tpu.memory_space<vmem>>, vector<255x4xf32>
    %c0_118 = arith.constant 0 : index
    %c0_119 = arith.constant 0 : index
    %100 = vector.load %arg9[%c0_118, %c0_119] : memref<256x1xf32, #tpu.memory_space<vmem>>, vector<255x1xf32>
    %101 = vector.broadcast %100 : vector<255x1xf32> to vector<255x4xf32>
    %102 = arith.mulf %99, %101 : vector<255x4xf32>
    %c0_120 = arith.constant 0 : index
    %c20_121 = arith.constant 20 : index
    %103 = vector.load %arg13[%c0_120, %c20_121] : memref<256x36xf32, #tpu.memory_space<vmem>>, vector<255x4xf32>
    tpu.vector_store %arg13[%c0_120, %c20_121], %102 {strides = array<i32>} : memref<256x36xf32, #tpu.memory_space<vmem>>, vector<255x4xf32>,
    %cst_122 = arith.constant 0.000000e+00 : f32
    %104 = vector.broadcast %cst_122 : f32 to vector<15x4xf32>
    %c241_123 = arith.constant 241 : index
    %c24_124 = arith.constant 24 : index
    %105 = vector.load %arg13[%c241_123, %c24_124] : memref<256x36xf32, #tpu.memory_space<vmem>>, vector<15x4xf32>
    tpu.vector_store %arg13[%c241_123, %c24_124], %104 {strides = array<i32>} : memref<256x36xf32, #tpu.memory_space<vmem>>, vector<15x4xf32>,
    %c15_125 = arith.constant 15 : index
    %c0_126 = arith.constant 0 : index
    %106 = vector.load %arg12[%c15_125, %c0_126] : memref<256x4xf32, #tpu.memory_space<vmem>>, vector<241x4xf32>
    %c0_127 = arith.constant 0 : index
    %c0_128 = arith.constant 0 : index
    %107 = vector.load %arg8[%c0_127, %c0_128] : memref<256x1xf32, #tpu.memory_space<vmem>>, vector<241x1xf32>
    %108 = vector.broadcast %107 : vector<241x1xf32> to vector<241x4xf32>
    %109 = arith.mulf %106, %108 : vector<241x4xf32>
    %c0_129 = arith.constant 0 : index
    %c24_130 = arith.constant 24 : index
    %110 = vector.load %arg13[%c0_129, %c24_130] : memref<256x36xf32, #tpu.memory_space<vmem>>, vector<241x4xf32>
    tpu.vector_store %arg13[%c0_129, %c24_130], %109 {strides = array<i32>} : memref<256x36xf32, #tpu.memory_space<vmem>>, vector<241x4xf32>,
    %cst_131 = arith.constant 0.000000e+00 : f32
    %111 = vector.broadcast %cst_131 : f32 to vector<16x4xf32>
    %c240_132 = arith.constant 240 : index
    %c28_133 = arith.constant 28 : index
    %112 = vector.load %arg13[%c240_132, %c28_133] : memref<256x36xf32, #tpu.memory_space<vmem>>, vector<16x4xf32>
    tpu.vector_store %arg13[%c240_132, %c28_133], %111 {strides = array<i32>} : memref<256x36xf32, #tpu.memory_space<vmem>>, vector<16x4xf32>,
    %c16_134 = arith.constant 16 : index
    %c0_135 = arith.constant 0 : index
    %113 = vector.load %arg12[%c16_134, %c0_135] : memref<256x4xf32, #tpu.memory_space<vmem>>, vector<240x4xf32>
    %c0_136 = arith.constant 0 : index
    %c28_137 = arith.constant 28 : index
    %114 = vector.load %arg13[%c0_136, %c28_137] : memref<256x36xf32, #tpu.memory_space<vmem>>, vector<240x4xf32>
    tpu.vector_store %arg13[%c0_136, %c28_137], %113 {strides = array<i32>} : memref<256x36xf32, #tpu.memory_space<vmem>>, vector<240x4xf32>,
    %cst_138 = arith.constant 0.000000e+00 : f32
    %115 = vector.broadcast %cst_138 : f32 to vector<17x4xf32>
    %c239_139 = arith.constant 239 : index
    %c32_140 = arith.constant 32 : index
    %116 = vector.load %arg13[%c239_139, %c32_140] : memref<256x36xf32, #tpu.memory_space<vmem>>, vector<17x4xf32>
    tpu.vector_store %arg13[%c239_139, %c32_140], %115 {strides = array<i32>} : memref<256x36xf32, #tpu.memory_space<vmem>>, vector<17x4xf32>,
    %c17_141 = arith.constant 17 : index
    %c0_142 = arith.constant 0 : index
    %117 = vector.load %arg12[%c17_141, %c0_142] : memref<256x4xf32, #tpu.memory_space<vmem>>, vector<239x4xf32>
    %c0_143 = arith.constant 0 : index
    %c0_144 = arith.constant 0 : index
    %118 = vector.load %arg9[%c0_143, %c0_144] : memref<256x1xf32, #tpu.memory_space<vmem>>, vector<239x1xf32>
    %119 = vector.broadcast %118 : vector<239x1xf32> to vector<239x4xf32>
    %120 = arith.mulf %117, %119 : vector<239x4xf32>
    %c0_145 = arith.constant 0 : index
    %c32_146 = arith.constant 32 : index
    %121 = vector.load %arg13[%c0_145, %c32_146] : memref<256x36xf32, #tpu.memory_space<vmem>>, vector<239x4xf32>
    tpu.vector_store %arg13[%c0_145, %c32_146], %120 {strides = array<i32>} : memref<256x36xf32, #tpu.memory_space<vmem>>, vector<239x4xf32>,
    %c0_147 = arith.constant 0 : index
    %c0_148 = arith.constant 0 : index
    %122 = vector.load %arg13[%c0_147, %c0_148] : memref<256x36xf32, #tpu.memory_space<vmem>>, vector<256x36xf32>
    %123 = arith.truncf %122 : vector<256x36xf32> to vector<256x36xbf16>
    %c0_149 = arith.constant 0 : index
    %c0_150 = arith.constant 0 : index
    %124 = vector.load %arg6[%c0_149, %c0_150] : memref<36x4xbf16, #tpu.memory_space<vmem>>, vector<36x4xbf16>
    %cst_151 = arith.constant dense<0.000000e+00> : vector<256x4xf32>
    %125 = tpu.matmul %123, %124, %cst_151 {dimension_numbers = #tpu.dot_dimension_numbers<[1], [0], [0], [1], [0, 0, 1, 1], [], []>} : vector<256x36xbf16>, vector<36x4xbf16>, vector<256x4xf32> -> vector<256x4xf32>
    %c0_152 = arith.constant 0 : index
    %c0_153 = arith.constant 0 : index
    %126 = vector.load %arg7[%c0_152, %c0_153] : memref<1x4xf32, #tpu.memory_space<vmem>>, vector<1x4xf32>
    %127 = vector.broadcast %126 : vector<1x4xf32> to vector<256x4xf32>
    %128 = arith.addf %125, %127 : vector<256x4xf32>
    %c0_154 = arith.constant 0 : index
    %c0_155 = arith.constant 0 : index
    %129 = vector.load %arg11[%c0_154, %c0_155] : memref<256x4xf32, #tpu.memory_space<vmem>>, vector<256x4xf32>
    %130 = arith.addf %128, %129 : vector<256x4xf32>
    %c0_156 = arith.constant 0 : index
    %c0_157 = arith.constant 0 : index
    %c0_158 = arith.constant 0 : index
    %131 = vector.load %arg10[%c0_156, %c0_157, %c0_158] : memref<1x256x4xf32, #tpu.memory_space<vmem>>, vector<1x256x4xf32>
    %132 = vector.shape_cast %131 : vector<1x256x4xf32> to vector<256x4xf32>
    %133 = vector.shape_cast %130 : vector<256x4xf32> to vector<1x256x4xf32>
    tpu.vector_store %arg10[%c0_156, %c0_157, %c0_158], %133 {strides = array<i32>} : memref<1x256x4xf32, #tpu.memory_space<vmem>>, vector<1x256x4xf32>,
    return
  }
  func.func @transform_0(%arg0: i32) -> (i32, i32, i32) {
    %c0_i32 = arith.constant 0 : i32
    %c0_i32_0 = arith.constant 0 : i32
    %c0_i32_1 = arith.constant 0 : i32
    return %arg0, %c0_i32, %c0_i32_0 : i32, i32, i32
  }
  func.func @transform_1(%arg0: i32) -> (i32, i32) {
    %c0_i32 = arith.constant 0 : i32
    %c0_i32_0 = arith.constant 0 : i32
    %c0_i32_1 = arith.constant 0 : i32
    return %c0_i32, %c0_i32_0 : i32, i32
  }
  func.func @transform_2(%arg0: i32) -> (i32, i32) {
    %c0_i32 = arith.constant 0 : i32
    %c0_i32_0 = arith.constant 0 : i32
    %c0_i32_1 = arith.constant 0 : i32
    return %c0_i32, %c0_i32_0 : i32, i32
  }
  func.func @transform_3(%arg0: i32) -> (i32, i32) {
    %c0_i32 = arith.constant 0 : i32
    %c0_i32_0 = arith.constant 0 : i32
    %c0_i32_1 = arith.constant 0 : i32
    return %c0_i32, %c0_i32_0 : i32, i32
  }
  func.func @transform_4(%arg0: i32) -> (i32, i32) {
    %c0_i32 = arith.constant 0 : i32
    %c0_i32_0 = arith.constant 0 : i32
    %c0_i32_1 = arith.constant 0 : i32
    return %c0_i32, %c0_i32_0 : i32, i32
  }
  func.func @transform_5(%arg0: i32) -> (i32, i32) {
    %c0_i32 = arith.constant 0 : i32
    %c0_i32_0 = arith.constant 0 : i32
    %c0_i32_1 = arith.constant 0 : i32
    return %c0_i32, %c0_i32_0 : i32, i32
  }
  func.func @transform_6(%arg0: i32) -> (i32, i32) {
    %c0_i32 = arith.constant 0 : i32
    %c0_i32_0 = arith.constant 0 : i32
    %c0_i32_1 = arith.constant 0 : i32
    return %c0_i32, %c0_i32_0 : i32, i32
  }
  func.func @transform_7(%arg0: i32) -> (i32, i32) {
    %c0_i32 = arith.constant 0 : i32
    %c0_i32_0 = arith.constant 0 : i32
    %c0_i32_1 = arith.constant 0 : i32
    return %c0_i32, %c0_i32_0 : i32, i32
  }
  func.func @transform_8(%arg0: i32) -> (i32, i32) {
    %c0_i32 = arith.constant 0 : i32
    %c0_i32_0 = arith.constant 0 : i32
    %c0_i32_1 = arith.constant 0 : i32
    return %c0_i32, %c0_i32_0 : i32, i32
  }
  func.func @transform_9(%arg0: i32) -> (i32, i32, i32) {
    %c0_i32 = arith.constant 0 : i32
    %c0_i32_0 = arith.constant 0 : i32
    %c0_i32_1 = arith.constant 0 : i32
    return %arg0, %c0_i32, %c0_i32_0 : i32, i32, i32
  }
}

</mosaic_0001>

<llo_original>
// kernel: resblock2.1
$region0: #{resblock2.1}
  #allocation0 [shape = 'u32[]', space=smem, size = 0x4, offset = 0x4, fixed_abs, tag = 'smem constant byte address 0x4 - core index']
  #allocation1 [shape = 'u32[72,128]{1,0:T(1,128)}', space=vmem, size = 0x9000, scoped, tag = 'internal scratch']
  #allocation2 [shape = 'f32[256,4]{1,0:T(8,128)}', space=vmem, size = 0x20000, scoped, tag = 'scratch operand']
  #allocation3 [shape = 'f32[256,4]{1,0:T(8,128)}', space=vmem, size = 0x20000, scoped, tag = 'scratch operand']
  #allocation4 [shape = 'f32[256,36]{1,0:T(8,128)}', space=vmem, size = 0x20000, scoped, tag = 'scratch operand']
  %s0 = inlined_call_operand.vmem [shape: bf16[2,256,8], index: 0, kind: input, shape index: {}]
  %s1 = inlined_call_operand.vmem [shape: bf16[8,4], index: 1, kind: input, shape index: {}]
  %s2 = inlined_call_operand.vmem [shape: f32[1,4], index: 2, kind: input, shape index: {}]
  %s3 = inlined_call_operand.vmem [shape: bf16[36,4], index: 3, kind: input, shape index: {}]
  %s4 = inlined_call_operand.vmem [shape: f32[1,4], index: 4, kind: input, shape index: {}]
  %s5 = inlined_call_operand.vmem [shape: bf16[36,4], index: 5, kind: input, shape index: {}]
  %s6 = inlined_call_operand.vmem [shape: f32[1,4], index: 6, kind: input, shape index: {}]
  %s7 = inlined_call_operand.vmem [shape: f32[256,1], index: 7, kind: input, shape index: {}]
  %s8 = inlined_call_operand.vmem [shape: f32[256,1], index: 8, kind: input, shape index: {}]
  %s9 = inlined_call_operand.vmem [shape: f32[2,256,4], index: 9, kind: output, shape index: {}]
  %s10 = sld [smem:[#allocation0]]
  $region69: #{resblock2.1} parent=0
    _
  %s12 = ssub.s32 1, %s10
  %s13 = scalar_select 0, %s12, %s10
  loop: start=0, step=1, limit=4
  $region2: #{resblock2.1} parent=0 // loop_pre_header
    _
  $region3: #{resblock2.1} parent=0 // loop_header
    %s15 = sphi 0, %s19
    %p16 = scmp.ge.s32.totalorder %s15, 4
    %s25 = sphi 0, %s27
    %s28 = sphi 0, %s25
    %s29 = sphi 0, %s28
    %s45 = sphi 0, %s29
    %s49 = sphi 0, %s49
    %s51 = sphi 0, %s49
    %s52 = sphi 0, %s51
    %s66 = sphi 0, %s52
    %s70 = sphi 0, %s70
    %s72 = sphi 0, %s70
    %s73 = sphi 0, %s72
    %s87 = sphi 0, %s73
    %s91 = sphi 0, %s91
    %s93 = sphi 0, %s91
    %s94 = sphi 0, %s93
    %s108 = sphi 0, %s94
    %s112 = sphi 0, %s112
    %s114 = sphi 0, %s112
    %s115 = sphi 0, %s114
    %s129 = sphi 0, %s115
    %s133 = sphi 0, %s133
    %s135 = sphi 0, %s133
    %s136 = sphi 0, %s135
    %s150 = sphi 0, %s136
    %s154 = sphi 0, %s154
    %s156 = sphi 0, %s154
    %s157 = sphi 0, %s156
    %s171 = sphi 0, %s157
    %s175 = sphi 0, %s175
    %s177 = sphi 0, %s175
    %s178 = sphi 0, %s177
    %s192 = sphi 0, %s178
    %s196 = sphi 0, %s196
    %s198 = sphi 0, %s196
    %s199 = sphi 0, %s198
    %s213 = sphi 0, %s199
    %s219 = sphi 0, %s221
    %s222 = sphi 0, %s219
    %s223 = sphi 0, %s222
    %s239 = sphi 0, %s223
  $region4: #{resblock2.1} parent=0 // loop_header_branch
    %18 = sbr.rel (%p16) target = $region8
  $region5: #{resblock2.1} parent=0 // loop_body
    %s20 = ssub.s32 %s15, 1
    %s21 = ssub.s32 %s15, 2
    %s22 = sadd.s32 %s15, 1
    %s23 = ssub.s32 %s15, %s22
    %p24 = scmp.eq.s32.totalorder %s23, 0
    %s26 = sadd.s32 %s25, 1
    %s27 = scalar_select %p24, %s25, %s26
    %p30 = pneg %p24
    %p31 = scmp.eq.s32.totalorder %s15, 1
    %p32 = por %p30, %p31
    %p33 = scmp.ne.s32.totalorder %s25, %s28
    %p34 = scmp.eq.s32.totalorder %s15, 0
    %p35 = por %p33, %p34
    %p36 = scmp.ne.s32.totalorder %s25, %s28
    %p37 = scmp.eq.s32.totalorder %s20, 1
    %p38 = por %p36, %p37
    %p39 = scmp.ne.s32.totalorder %s28, %s29
    %p40 = scmp.eq.s32.totalorder %s20, 0
    %p41 = por %p39, %p40
    %p42 = scmp.ne.s32.totalorder %s28, %s29
    %p43 = scmp.eq.s32.totalorder %s21, 1
    %p44 = por %p42, %p43
    %p46 = scmp.ne.s32.totalorder %s29, %s45
    %p47 = scmp.eq.s32.totalorder %s21, 0
    %p48 = por %p46, %p47
    %s50 = sadd.s32 %s49, 1
    %p53 = scmp.eq.s32.totalorder %s15, 1
    %p54 = scmp.ne.s32.totalorder %s49, %s51
    %p55 = scmp.eq.s32.totalorder %s15, 0
    %p56 = por %p54, %p55
    %p57 = scmp.ne.s32.totalorder %s49, %s51
    %p58 = scmp.eq.s32.totalorder %s20, 1
    %p59 = por %p57, %p58
    %p60 = scmp.ne.s32.totalorder %s51, %s52
    %p61 = scmp.eq.s32.totalorder %s20, 0
    %p62 = por %p60, %p61
    %p63 = scmp.ne.s32.totalorder %s51, %s52
    %p64 = scmp.eq.s32.totalorder %s21, 1
    %p65 = por %p63, %p64
    %p67 = scmp.ne.s32.totalorder %s52, %s66
    %p68 = scmp.eq.s32.totalorder %s21, 0
    %p69 = por %p67, %p68
    %s71 = sadd.s32 %s70, 1
    %p74 = scmp.eq.s32.totalorder %s15, 1
    %p75 = scmp.ne.s32.totalorder %s70, %s72
    %p76 = scmp.eq.s32.totalorder %s15, 0
    %p77 = por %p75, %p76
    %p78 = scmp.ne.s32.totalorder %s70, %s72
    %p79 = scmp.eq.s32.totalorder %s20, 1
    %p80 = por %p78, %p79
    %p81 = scmp.ne.s32.totalorder %s72, %s73
    %p82 = scmp.eq.s32.totalorder %s20, 0
    %p83 = por %p81, %p82
    %p84 = scmp.ne.s32.totalorder %s72, %s73
    %p85 = scmp.eq.s32.totalorder %s21, 1
    %p86 = por %p84, %p85
    %p88 = scmp.ne.s32.totalorder %s73, %s87
    %p89 = scmp.eq.s32.totalorder %s21, 0
    %p90 = por %p88, %p89
    %s92 = sadd.s32 %s91, 1
    %p95 = scmp.eq.s32.totalorder %s15, 1
    %p96 = scmp.ne.s32.totalorder %s91, %s93
    %p97 = scmp.eq.s32.totalorder %s15, 0
    %p98 = por %p96, %p97
    %p99 = scmp.ne.s32.totalorder %s91, %s93
    %p100 = scmp.eq.s32.totalorder %s20, 1
    %p101 = por %p99, %p100
    %p102 = scmp.ne.s32.totalorder %s93, %s94
    %p103 = scmp.eq.s32.totalorder %s20, 0
    %p104 = por %p102, %p103
    %p105 = scmp.ne.s32.totalorder %s93, %s94
    %p106 = scmp.eq.s32.totalorder %s21, 1
    %p107 = por %p105, %p106
    %p109 = scmp.ne.s32.totalorder %s94, %s108
    %p110 = scmp.eq.s32.totalorder %s21, 0
    %p111 = por %p109, %p110
    %s113 = sadd.s32 %s112, 1
    %p116 = scmp.eq.s32.totalorder %s15, 1
    %p117 = scmp.ne.s32.totalorder %s112, %s114
    %p118 = scmp.eq.s32.totalorder %s15, 0
    %p119 = por %p117, %p118
    %p120 = scmp.ne.s32.totalorder %s112, %s114
    %p121 = scmp.eq.s32.totalorder %s20, 1
    %p122 = por %p120, %p121
    %p123 = scmp.ne.s32.totalorder %s114, %s115
    %p124 = scmp.eq.s32.totalorder %s20, 0
    %p125 = por %p123, %p124
    %p126 = scmp.ne.s32.totalorder %s114, %s115
    %p127 = scmp.eq.s32.totalorder %s21, 1
    %p128 = por %p126, %p127
    %p130 = scmp.ne.s32.totalorder %s115, %s129
    %p131 = scmp.eq.s32.totalorder %s21, 0
    %p132 = por %p130, %p131
    %s134 = sadd.s32 %s133, 1
    %p137 = scmp.eq.s32.totalorder %s15, 1
    %p138 = scmp.ne.s32.totalorder %s133, %s135
    %p139 = scmp.eq.s32.totalorder %s15, 0
    %p140 = por %p138, %p139
    %p141 = scmp.ne.s32.totalorder %s133, %s135
    %p142 = scmp.eq.s32.totalorder %s20, 1
    %p143 = por %p141, %p142
    %p144 = scmp.ne.s32.totalorder %s135, %s136
    %p145 = scmp.eq.s32.totalorder %s20, 0
    %p146 = por %p144, %p145
    %p147 = scmp.ne.s32.totalorder %s135, %s136
    %p148 = scmp.eq.s32.totalorder %s21, 1
    %p149 = por %p147, %p148
    %p151 = scmp.ne.s32.totalorder %s136, %s150
    %p152 = scmp.eq.s32.totalorder %s21, 0
    %p153 = por %p151, %p152
    %s155 = sadd.s32 %s154, 1
    %p158 = scmp.eq.s32.totalorder %s15, 1
    %p159 = scmp.ne.s32.totalorder %s154, %s156
    %p160 = scmp.eq.s32.totalorder %s15, 0
    %p161 = por %p159, %p160
    %p162 = scmp.ne.s32.totalorder %s154, %s156
    %p163 = scmp.eq.s32.totalorder %s20, 1
    %p164 = por %p162, %p163
    %p165 = scmp.ne.s32.totalorder %s156, %s157
    %p166 = scmp.eq.s32.totalorder %s20, 0
    %p167 = por %p165, %p166
    %p168 = scmp.ne.s32.totalorder %s156, %s157
    %p169 = scmp.eq.s32.totalorder %s21, 1
    %p170 = por %p168, %p169
    %p172 = scmp.ne.s32.totalorder %s157, %s171
    %p173 = scmp.eq.s32.totalorder %s21, 0
    %p174 = por %p172, %p173
    %s176 = sadd.s32 %s175, 1
    %p179 = scmp.eq.s32.totalorder %s15, 1
    %p180 = scmp.ne.s32.totalorder %s175, %s177
    %p181 = scmp.eq.s32.totalorder %s15, 0
    %p182 = por %p180, %p181
    %p183 = scmp.ne.s32.totalorder %s175, %s177
    %p184 = scmp.eq.s32.totalorder %s20, 1
    %p185 = por %p183, %p184
    %p186 = scmp.ne.s32.totalorder %s177, %s178
    %p187 = scmp.eq.s32.totalorder %s20, 0
    %p188 = por %p186, %p187
    %p189 = scmp.ne.s32.totalorder %s177, %s178
    %p190 = scmp.eq.s32.totalorder %s21, 1
    %p191 = por %p189, %p190
    %p193 = scmp.ne.s32.totalorder %s178, %s192
    %p194 = scmp.eq.s32.totalorder %s21, 0
    %p195 = por %p193, %p194
    %s197 = sadd.s32 %s196, 1
    %p200 = scmp.eq.s32.totalorder %s15, 1
    %p201 = scmp.ne.s32.totalorder %s196, %s198
    %p202 = scmp.eq.s32.totalorder %s15, 0
    %p203 = por %p201, %p202
    %p204 = scmp.ne.s32.totalorder %s196, %s198
    %p205 = scmp.eq.s32.totalorder %s20, 1
    %p206 = por %p204, %p205
    %p207 = scmp.ne.s32.totalorder %s198, %s199
    %p208 = scmp.eq.s32.totalorder %s20, 0
    %p209 = por %p207, %p208
    %p210 = scmp.ne.s32.totalorder %s198, %s199
    %p211 = scmp.eq.s32.totalorder %s21, 1
    %p212 = por %p210, %p211
    %p214 = scmp.ne.s32.totalorder %s199, %s213
    %p215 = scmp.eq.s32.totalorder %s21, 0
    %p216 = por %p214, %p215
    %s217 = ssub.s32 %s15, %s22
    %p218 = scmp.eq.s32.totalorder %s217, 0
    %s220 = sadd.s32 %s219, 1
    %s221 = scalar_select %p218, %s219, %s220
    %p224 = pneg %p218
    %p225 = scmp.eq.s32.totalorder %s15, 1
    %p226 = por %p224, %p225
    %p227 = scmp.ne.s32.totalorder %s219, %s222
    %p228 = scmp.eq.s32.totalorder %s15, 0
    %p229 = por %p227, %p228
    %p230 = scmp.ne.s32.totalorder %s219, %s222
    %p231 = scmp.eq.s32.totalorder %s20, 1
    %p232 = por %p230, %p231
    %p233 = scmp.ne.s32.totalorder %s222, %s223
    %p234 = scmp.eq.s32.totalorder %s20, 0
    %p235 = por %p233, %p234
    %p236 = scmp.ne.s32.totalorder %s222, %s223
    %p237 = scmp.eq.s32.totalorder %s21, 1
    %p238 = por %p236, %p237
    %p240 = scmp.ne.s32.totalorder %s223, %s239
    %p241 = scmp.eq.s32.totalorder %s21, 0
    %p242 = por %p240, %p241
    %p243 = scmp.le.s32.totalorder 1, %s15
    %p244 = scmp.lt.s32.totalorder %s15, 3
    %p245 = pnand %p243, %p244
    %p246 = pneg %p245
    // Predicated region
    $region9: #{resblock2.1} parent=5 // pred_check
      _
    $region10: #{resblock2.1} parent=5 // pred_check_branch
      %248 = sbr.rel (%p245) target = $region12
    $region11: #{resblock2.1} parent=5 // pred_region
      %s249 = ssub.s32 %s15, 1
      // Predicated region
      $region13: #{resblock2.1} parent=11 // pred_check
        %p250 = pneg %p62
      $region14: #{resblock2.1} parent=11 // pred_check_branch
        %252 = sbr.rel (%p250) target = $region16
      $region15: #{resblock2.1} parent=11 // pred_region
        _
      $region16: #{resblock2.1} parent=11 // pred_fallthru
        _
      // Predicated region
      $region17: #{resblock2.1} parent=11 // pred_check
        %p253 = pneg %p83
      $region18: #{resblock2.1} parent=11 // pred_check_branch
        %255 = sbr.rel (%p253) target = $region20
      $region19: #{resblock2.1} parent=11 // pred_region
        _
      $region20: #{resblock2.1} parent=11 // pred_fallthru
        _
      // Predicated region
      $region21: #{resblock2.1} parent=11 // pred_check
        %p256 = pneg %p104
      $region22: #{resblock2.1} parent=11 // pred_check_branch
        %258 = sbr.rel (%p256) target = $region24
      $region23: #{resblock2.1} parent=11 // pred_region
        _
      $region24: #{resblock2.1} parent=11 // pred_fallthru
        _
      // Predicated region
      $region25: #{resblock2.1} parent=11 // pred_check
        %p259 = pneg %p125
      $region26: #{resblock2.1} parent=11 // pred_check_branch
        %261 = sbr.rel (%p259) target = $region28
      $region27: #{resblock2.1} parent=11 // pred_region
        _
      $region28: #{resblock2.1} parent=11 // pred_fallthru
        _
      // Predicated region
      $region29: #{resblock2.1} parent=11 // pred_check
        %p262 = pneg %p146
      $region30: #{resblock2.1} parent=11 // pred_check_branch
        %264 = sbr.rel (%p262) target = $region32
      $region31: #{resblock2.1} parent=11 // pred_region
        _
      $region32: #{resblock2.1} parent=11 // pred_fallthru
        _
      // Predicated region
      $region33: #{resblock2.1} parent=11 // pred_check
        %p265 = pneg %p167
      $region34: #{resblock2.1} parent=11 // pred_check_branch
        %267 = sbr.rel (%p265) target = $region36
      $region35: #{resblock2.1} parent=11 // pred_region
        _
      $region36: #{resblock2.1} parent=11 // pred_fallthru
        _
      // Predicated region
      $region37: #{resblock2.1} parent=11 // pred_check
        %p268 = pneg %p188
      $region38: #{resblock2.1} parent=11 // pred_check_branch
        %270 = sbr.rel (%p268) target = $region40
      $region39: #{resblock2.1} parent=11 // pred_region
        _
      $region40: #{resblock2.1} parent=11 // pred_fallthru
        _
      // Predicated region
      $region41: #{resblock2.1} parent=11 // pred_check
        %p271 = pneg %p209
      $region42: #{resblock2.1} parent=11 // pred_check_branch
        %273 = sbr.rel (%p271) target = $region44
      $region43: #{resblock2.1} parent=11 // pred_region
        _
      $region44: #{resblock2.1} parent=11 // pred_fallthru
        _
    $region12: #{resblock2.1} parent=5 // pred_fallthru
      _
    %p274 = scmp.lt.s32.totalorder %s15, 2
    // Predicated region
    $region45: #{resblock2.1} parent=5 // pred_check
      %p275 = pneg %p274
    $region46: #{resblock2.1} parent=5 // pred_check_branch
      %277 = sbr.rel (%p275) target = $region48
    $region47: #{resblock2.1} parent=5 // pred_region
      // Predicated region
      $region49: #{resblock2.1} parent=47 // pred_check
        %p278 = pneg %p35
      $region50: #{resblock2.1} parent=47 // pred_check_branch
        %280 = sbr.rel (%p278) target = $region52
      $region51: #{resblock2.1} parent=47 // pred_region
        %p281 = scmp.lt.s32.totalorder %s15, 1
        %s282 = scalar_select %p281, %s15, 1
        %s283 = smul.addr %s282, 32
        %s284 = smul.addr %s283, 4
        %s285 = scalar_lea.vmem %s0, %s284
      $region52: #{resblock2.1} parent=47 // pred_fallthru
        _
    $region48: #{resblock2.1} parent=5 // pred_fallthru
      _
    %p286 = scmp.le.s32.totalorder 1, %s15
    %p287 = scmp.lt.s32.totalorder %s15, 3
    %p288 = pnand %p286, %p287
    %p289 = pneg %p288
    // Predicated region
    $region53: #{resblock2.1} parent=5 // pred_check
      _
    $region54: #{resblock2.1} parent=5 // pred_check_branch
      %291 = sbr.rel (%p288) target = $region56
    $region55: #{resblock2.1} parent=5 // pred_region
      %s292 = ssub.s32 %s15, 1
      %p293 = scmp.lt.s32.totalorder %s20, 1
      %s294 = scalar_select %p293, %s20, 1
      %s295 = smul.addr %s294, 32
      %s296 = smul.addr %s295, 4
      %s297 = scalar_lea.vmem %s0, %s296
      %p298 = pneg %p41
      %p299 = pneg %p38
      %p300 = pneg %p62
      %p301 = pneg %p59
      %p302 = pneg %p83
      %p303 = pneg %p80
      %p304 = pneg %p104
      %p305 = pneg %p101
      %p306 = pneg %p125
      %p307 = pneg %p122
      %p308 = pneg %p146
      %p309 = pneg %p143
      %p310 = pneg %p167
      %p311 = pneg %p164
      %p312 = pneg %p188
      %p313 = pneg %p185
      %p314 = pneg %p209
      %p315 = pneg %p206
      %p316 = pneg %p235
      %p317 = pneg %p232
      %p318 = scmp.lt.s32.totalorder %s20, 1
      %s319 = scalar_select %p318, %s20, 1
      %s320 = smul.addr %s319, 32
      %s321 = smul.addr %s320, 8
      %s322 = scalar_lea.vmem %s9, %s321
      %p323 = scmp.lt.s32.totalorder %s20, 1
      %s324 = scalar_select %p323, %s20, 1
      %s325 = smul.addr %s324, 32
      %s326 = smul.addr %s325, 4
      %s327 = scalar_lea.vmem %s0, %s326
      %p328 = scmp.lt.s32.totalorder %s20, 1
      %s329 = scalar_select %p328, %s20, 1
      %s330 = smul.addr %s329, 32
      %s331 = smul.addr %s330, 8
      %s332 = scalar_lea.vmem %s9, %s331
      %v334 = vld [vmem:[%s327] sm:$0xf]
      %v335 = vld [vmem:[%s327 + $0x4] sm:$0xf]
      %v336 = vld [vmem:[%s327 + $0x8] sm:$0xf]
      %v337 = vld [vmem:[%s327 + $0xc] sm:$0xf]
      %v338 = vld [vmem:[%s327 + $0x10] sm:$0xf]
      %v339 = vld [vmem:[%s327 + $0x14] sm:$0xf]
      %v340 = vld [vmem:[%s327 + $0x18] sm:$0xf]
      %v341 = vld [vmem:[%s327 + $0x1c] sm:$0xf]
      %v342 = vld [vmem:[%s327 + $0x20] sm:$0xf]
      %v343 = vld [vmem:[%s327 + $0x24] sm:$0xf]
      %v344 = vld [vmem:[%s327 + $0x28] sm:$0xf]
      %v345 = vld [vmem:[%s327 + $0x2c] sm:$0xf]
      %v346 = vld [vmem:[%s327 + $0x30] sm:$0xf]
      %v347 = vld [vmem:[%s327 + $0x34] sm:$0xf]
      %v348 = vld [vmem:[%s327 + $0x38] sm:$0xf]
      %v349 = vld [vmem:[%s327 + $0x3c] sm:$0xf]
      %v350 = vld [vmem:[%s327 + $0x40] sm:$0xf]
      %v351 = vld [vmem:[%s327 + $0x44] sm:$0xf]
      %v352 = vld [vmem:[%s327 + $0x48] sm:$0xf]
      %v353 = vld [vmem:[%s327 + $0x4c] sm:$0xf]
      %v354 = vld [vmem:[%s327 + $0x50] sm:$0xf]
      %v355 = vld [vmem:[%s327 + $0x54] sm:$0xf]
      %v356 = vld [vmem:[%s327 + $0x58] sm:$0xf]
      %v357 = vld [vmem:[%s327 + $0x5c] sm:$0xf]
      %v358 = vld [vmem:[%s327 + $0x60] sm:$0xf]
      %v359 = vld [vmem:[%s327 + $0x64] sm:$0xf]
      %v360 = vld [vmem:[%s327 + $0x68] sm:$0xf]
      %v361 = vld [vmem:[%s327 + $0x6c] sm:$0xf]
      %v362 = vld [vmem:[%s327 + $0x70] sm:$0xf]
      %v363 = vld [vmem:[%s327 + $0x74] sm:$0xf]
      %v364 = vld [vmem:[%s327 + $0x78] sm:$0xf]
      %v365 = vld [vmem:[%s327 + $0x7c] sm:$0xf]
      %v366 = vld [vmem:[%s1] sm:$0xf]
      %v367 = vld [vmem:[%s2] sm:$0x1]
      %v369 = vperm.slane %v367, 0
      %v403 = vunpack.c.l.b16 %v334
      %v404 = vunpack.c.l.b16 %v335
      %v405 = vunpack.c.l.b16 %v336
      %v406 = vunpack.c.l.b16 %v337
      %v407 = vunpack.c.l.b16 %v338
      %v408 = vunpack.c.l.b16 %v339
      %v409 = vunpack.c.l.b16 %v340
      %v410 = vunpack.c.l.b16 %v341
      %v411 = vunpack.c.l.b16 %v342
      %v412 = vunpack.c.l.b16 %v343
      %v413 = vunpack.c.l.b16 %v344
      %v414 = vunpack.c.l.b16 %v345
      %v415 = vunpack.c.l.b16 %v346
      %v416 = vunpack.c.l.b16 %v347
      %v417 = vunpack.c.l.b16 %v348
      %v418 = vunpack.c.l.b16 %v349
      %v419 = vunpack.c.l.b16 %v350
      %v420 = vunpack.c.l.b16 %v351
      %v421 = vunpack.c.l.b16 %v352
      %v422 = vunpack.c.l.b16 %v353
      %v423 = vunpack.c.l.b16 %v354
      %v424 = vunpack.c.l.b16 %v355
      %v425 = vunpack.c.l.b16 %v356
      %v426 = vunpack.c.l.b16 %v357
      %v427 = vunpack.c.l.b16 %v358
      %v428 = vunpack.c.l.b16 %v359
      %v429 = vunpack.c.l.b16 %v360
      %v430 = vunpack.c.l.b16 %v361
      %v431 = vunpack.c.l.b16 %v362
      %v432 = vunpack.c.l.b16 %v363
      %v433 = vunpack.c.l.b16 %v364
      %v434 = vunpack.c.l.b16 %v365
      %v435 = vpack.c.b16 %v404, %v403
      %v436 = vpack.c.b16 %v406, %v405
      %v437 = vpack.c.b16 %v408, %v407
      %v438 = vpack.c.b16 %v410, %v409
      %v439 = vpack.c.b16 %v412, %v411
      %v440 = vpack.c.b16 %v414, %v413
      %v441 = vpack.c.b16 %v416, %v415
      %v442 = vpack.c.b16 %v418, %v417
      %v443 = vpack.c.b16 %v420, %v419
      %v444 = vpack.c.b16 %v422, %v421
      %v445 = vpack.c.b16 %v424, %v423
      %v446 = vpack.c.b16 %v426, %v425
      %v447 = vpack.c.b16 %v428, %v427
      %v448 = vpack.c.b16 %v430, %v429
      %v449 = vpack.c.b16 %v432, %v431
      %v450 = vpack.c.b16 %v434, %v433
      %vm451 = vcmask 64512
      %v453 = vsel %vm451, %v435, 0
      %v456 = vsel %vm451, %v436, 0
      %v459 = vsel %vm451, %v437, 0
      %v462 = vsel %vm451, %v438, 0
      %v465 = vsel %vm451, %v439, 0
      %v468 = vsel %vm451, %v440, 0
      %v471 = vsel %vm451, %v441, 0
      %v474 = vsel %vm451, %v442, 0
      %v477 = vsel %vm451, %v443, 0
      %v480 = vsel %vm451, %v444, 0
      %v483 = vsel %vm451, %v445, 0
      %v486 = vsel %vm451, %v446, 0
      %v489 = vsel %vm451, %v447, 0
      %v492 = vsel %vm451, %v448, 0
      %v495 = vsel %vm451, %v449, 0
      %v498 = vsel %vm451, %v450, 0
      %vm500 = vcmask 1043456
      %v502 = vsel %vm500, %v366, 0
      %504 = vmatpush.bf16.msra.mxu0 0
      %505 = vmatpush.bf16.msra.mxu0 0
      %506 = vmatpush.bf16.msra.mxu0 0
      %507 = vmatpush.bf16.msra.mxu0 0
      %508 = vmatpush.bf16.msra.mxu0 0
      %509 = vmatpush.bf16.msra.mxu0 0
      %510 = vmatpush.bf16.msra.mxu0 0
      %511 = vmatpush.bf16.msra.mxu0 %v502
      %512 = vmatmul.bf16.gmra.mxu0 %v453
      %v513 = vpop.f32.mrf.mxu0
      %v514 = vadd.f32 %v369, %v513
      %v515 = vpop.f32.mrf.mxu0
      %v516 = vadd.f32 %v369, %v515
      %517 = vmatmul.bf16.gmra.mxu0 %v456
      %v518 = vpop.f32.mrf.mxu0
      %v519 = vadd.f32 %v369, %v518
      %v520 = vpop.f32.mrf.mxu0
      %v521 = vadd.f32 %v369, %v520
      %522 = vmatmul.bf16.gmra.mxu0 %v459
      %v523 = vpop.f32.mrf.mxu0
      %v524 = vadd.f32 %v369, %v523
      %v525 = vpop.f32.mrf.mxu0
      %v526 = vadd.f32 %v369, %v525
      %527 = vmatmul.bf16.gmra.mxu0 %v462
      %v528 = vpop.f32.mrf.mxu0
      %v529 = vadd.f32 %v369, %v528
      %v530 = vpop.f32.mrf.mxu0
      %v531 = vadd.f32 %v369, %v530
      %532 = vmatmul.bf16.gmra.mxu0 %v465
      %v533 = vpop.f32.mrf.mxu0
      %v534 = vadd.f32 %v369, %v533
      %v535 = vpop.f32.mrf.mxu0
      %v536 = vadd.f32 %v369, %v535
      %537 = vmatmul.bf16.gmra.mxu0 %v468
      %v538 = vpop.f32.mrf.mxu0
      %v539 = vadd.f32 %v369, %v538
      %v540 = vpop.f32.mrf.mxu0
      %v541 = vadd.f32 %v369, %v540
      %542 = vmatmul.bf16.gmra.mxu0 %v471
      %v543 = vpop.f32.mrf.mxu0
      %v544 = vadd.f32 %v369, %v543
      %v545 = vpop.f32.mrf.mxu0
      %v546 = vadd.f32 %v369, %v545
      %547 = vmatmul.bf16.gmra.mxu0 %v474
      %v548 = vpop.f32.mrf.mxu0
      %v549 = vadd.f32 %v369, %v548
      %v550 = vpop.f32.mrf.mxu0
      %v551 = vadd.f32 %v369, %v550
      %552 = vmatmul.bf16.gmra.mxu0 %v477
      %v553 = vpop.f32.mrf.mxu0
      %v554 = vadd.f32 %v369, %v553
      %v555 = vpop.f32.mrf.mxu0
      %v556 = vadd.f32 %v369, %v555
      %557 = vmatmul.bf16.gmra.mxu0 %v480
      %v558 = vpop.f32.mrf.mxu0
      %v559 = vadd.f32 %v369, %v558
      %v560 = vpop.f32.mrf.mxu0
      %v561 = vadd.f32 %v369, %v560
      %562 = vmatmul.bf16.gmra.mxu0 %v483
      %v563 = vpop.f32.mrf.mxu0
      %v564 = vadd.f32 %v369, %v563
      %v565 = vpop.f32.mrf.mxu0
      %v566 = vadd.f32 %v369, %v565
      %567 = vmatmul.bf16.gmra.mxu0 %v486
      %v568 = vpop.f32.mrf.mxu0
      %v569 = vadd.f32 %v369, %v568
      %v570 = vpop.f32.mrf.mxu0
      %v571 = vadd.f32 %v369, %v570
      %572 = vmatmul.bf16.gmra.mxu0 %v489
      %v573 = vpop.f32.mrf.mxu0
      %v574 = vadd.f32 %v369, %v573
      %v575 = vpop.f32.mrf.mxu0
      %v576 = vadd.f32 %v369, %v575
      %577 = vmatmul.bf16.gmra.mxu0 %v492
      %v578 = vpop.f32.mrf.mxu0
      %v579 = vadd.f32 %v369, %v578
      %v580 = vpop.f32.mrf.mxu0
      %v581 = vadd.f32 %v369, %v580
      %582 = vmatmul.bf16.gmra.mxu0 %v495
      %v583 = vpop.f32.mrf.mxu0
      %v584 = vadd.f32 %v369, %v583
      %v585 = vpop.f32.mrf.mxu0
      %v586 = vadd.f32 %v369, %v585
      %587 = vmatmul.bf16.gmra.mxu0 %v498
      %v588 = vpop.f32.mrf.mxu0
      %v589 = vadd.f32 %v369, %v588
      %v590 = vpop.f32.mrf.mxu0
      %v591 = vadd.f32 %v369, %v590
      %592 = vdwg.mxu0
      %vm593 = vcmask 31744
      %594 = vst.msk [vmem:[#allocation2] sm:$0xff] %vm593, %v514
      %595 = vst.msk [vmem:[#allocation2 + $0x8] sm:$0xff] %vm593, %v516
      %596 = vst.msk [vmem:[#allocation2 + $0x10] sm:$0xff] %vm593, %v519
      %597 = vst.msk [vmem:[#allocation2 + $0x18] sm:$0xff] %vm593, %v521
      %598 = vst.msk [vmem:[#allocation2 + $0x20] sm:$0xff] %vm593, %v524
      %599 = vst.msk [vmem:[#allocation2 + $0x28] sm:$0xff] %vm593, %v526
      %600 = vst.msk [vmem:[#allocation2 + $0x30] sm:$0xff] %vm593, %v529
      %601 = vst.msk [vmem:[#allocation2 + $0x38] sm:$0xff] %vm593, %v531
      %602 = vst.msk [vmem:[#allocation2 + $0x40] sm:$0xff] %vm593, %v534
      %603 = vst.msk [vmem:[#allocation2 + $0x48] sm:$0xff] %vm593, %v536
      %604 = vst.msk [vmem:[#allocation2 + $0x50] sm:$0xff] %vm593, %v539
      %605 = vst.msk [vmem:[#allocation2 + $0x58] sm:$0xff] %vm593, %v541
      %606 = vst.msk [vmem:[#allocation2 + $0x60] sm:$0xff] %vm593, %v544
      %607 = vst.msk [vmem:[#allocation2 + $0x68] sm:$0xff] %vm593, %v546
      %608 = vst.msk [vmem:[#allocation2 + $0x70] sm:$0xff] %vm593, %v549
      %609 = vst.msk [vmem:[#allocation2 + $0x78] sm:$0xff] %vm593, %v551
      %610 = vst.msk [vmem:[#allocation2 + $0x80] sm:$0xff] %vm593, %v554
      %611 = vst.msk [vmem:[#allocation2 + $0x88] sm:$0xff] %vm593, %v556
      %612 = vst.msk [vmem:[#allocation2 + $0x90] sm:$0xff] %vm593, %v559
      %613 = vst.msk [vmem:[#allocation2 + $0x98] sm:$0xff] %vm593, %v561
      %614 = vst.msk [vmem:[#allocation2 + $0xa0] sm:$0xff] %vm593, %v564
      %615 = vst.msk [vmem:[#allocation2 + $0xa8] sm:$0xff] %vm593, %v566
      %616 = vst.msk [vmem:[#allocation2 + $0xb0] sm:$0xff] %vm593, %v569
      %617 = vst.msk [vmem:[#allocation2 + $0xb8] sm:$0xff] %vm593, %v571
      %618 = vst.msk [vmem:[#allocation2 + $0xc0] sm:$0xff] %vm593, %v574
      %619 = vst.msk [vmem:[#allocation2 + $0xc8] sm:$0xff] %vm593, %v576
      %620 = vst.msk [vmem:[#allocation2 + $0xd0] sm:$0xff] %vm593, %v579
      %621 = vst.msk [vmem:[#allocation2 + $0xd8] sm:$0xff] %vm593, %v581
      %622 = vst.msk [vmem:[#allocation2 + $0xe0] sm:$0xff] %vm593, %v584
      %623 = vst.msk [vmem:[#allocation2 + $0xe8] sm:$0xff] %vm593, %v586
      %624 = vst.msk [vmem:[#allocation2 + $0xf0] sm:$0xff] %vm593, %v589
      %625 = vst.msk [vmem:[#allocation2 + $0xf8] sm:$0xff] %vm593, %v591
      %626 = vst.msk [vmem:[#allocation4] sm:$0xff] %vm593, 0.0
      %627 = vst.msk [vmem:[#allocation4 + $0x8] sm:$0xff] %vm593, 0.0
      %vm628 = vcmask 24576
      %629 = vst.msk [vmem:[#allocation4 + $0x10] sm:$0x1] %vm628, 0.0
      %v630 = vld [vmem:[#allocation2] sm:$0xff]
      %v631 = vld [vmem:[#allocation2 + $0x8] sm:$0xff]
      %v632 = vld [vmem:[#allocation2 + $0x10] sm:$0xff]
      %v633 = vld [vmem:[#allocation2 + $0x18] sm:$0xff]
      %v634 = vld [vmem:[#allocation2 + $0x20] sm:$0xff]
      %v635 = vld [vmem:[#allocation2 + $0x28] sm:$0xff]
      %v636 = vld [vmem:[#allocation2 + $0x30] sm:$0xff]
      %v637 = vld [vmem:[#allocation2 + $0x38] sm:$0xff]
      %v638 = vld [vmem:[#allocation2 + $0x40] sm:$0xff]
      %v639 = vld [vmem:[#allocation2 + $0x48] sm:$0xff]
      %v640 = vld [vmem:[#allocation2 + $0x50] sm:$0xff]
      %v641 = vld [vmem:[#allocation2 + $0x58] sm:$0xff]
      %v642 = vld [vmem:[#allocation2 + $0x60] sm:$0xff]
      %v643 = vld [vmem:[#allocation2 + $0x68] sm:$0xff]
      %v644 = vld [vmem:[#allocation2 + $0x70] sm:$0xff]
      %v645 = vld [vmem:[#allocation2 + $0x78] sm:$0xff]
      %v646 = vld [vmem:[#allocation2 + $0x80] sm:$0xff]
      %v647 = vld [vmem:[#allocation2 + $0x88] sm:$0xff]
      %v648 = vld [vmem:[#allocation2 + $0x90] sm:$0xff]
      %v649 = vld [vmem:[#allocation2 + $0x98] sm:$0xff]
      %v650 = vld [vmem:[#allocation2 + $0xa0] sm:$0xff]
      %v651 = vld [vmem:[#allocation2 + $0xa8] sm:$0xff]
      %v652 = vld [vmem:[#allocation2 + $0xb0] sm:$0xff]
      %v653 = vld [vmem:[#allocation2 + $0xb8] sm:$0xff]
      %v654 = vld [vmem:[#allocation2 + $0xc0] sm:$0xff]
      %v655 = vld [vmem:[#allocation2 + $0xc8] sm:$0xff]
      %v656 = vld [vmem:[#allocation2 + $0xd0] sm:$0xff]
      %v657 = vld [vmem:[#allocation2 + $0xd8] sm:$0xff]
      %v658 = vld [vmem:[#allocation2 + $0xe0] sm:$0xff]
      %v659 = vld [vmem:[#allocation2 + $0xe8] sm:$0x7f]
      %v660 = vld [vmem:[%s7 + $0x11] sm:$0xff]
      %v661 = vld [vmem:[%s7 + $0x19] sm:$0xff]
      %v662 = vld [vmem:[%s7 + $0x21] sm:$0xff]
      %v663 = vld [vmem:[%s7 + $0x29] sm:$0xff]
      %v664 = vld [vmem:[%s7 + $0x31] sm:$0xff]
      %v665 = vld [vmem:[%s7 + $0x39] sm:$0xff]
      %v666 = vld [vmem:[%s7 + $0x41] sm:$0xff]
      %v667 = vld [vmem:[%s7 + $0x49] sm:$0xff]
      %v668 = vld [vmem:[%s7 + $0x51] sm:$0xff]
      %v669 = vld [vmem:[%s7 + $0x59] sm:$0xff]
      %v670 = vld [vmem:[%s7 + $0x61] sm:$0xff]
      %v671 = vld [vmem:[%s7 + $0x69] sm:$0xff]
      %v672 = vld [vmem:[%s7 + $0x71] sm:$0xff]
      %v673 = vld [vmem:[%s7 + $0x79] sm:$0xff]
      %v674 = vld [vmem:[%s7 + $0x81] sm:$0xff]
      %v675 = vld [vmem:[%s7 + $0x89] sm:$0xff]
      %v676 = vld [vmem:[%s7 + $0x91] sm:$0xff]
      %v677 = vld [vmem:[%s7 + $0x99] sm:$0xff]
      %v678 = vld [vmem:[%s7 + $0xa1] sm:$0xff]
      %v679 = vld [vmem:[%s7 + $0xa9] sm:$0xff]
      %v680 = vld [vmem:[%s7 + $0xb1] sm:$0xff]
      %v681 = vld [vmem:[%s7 + $0xb9] sm:$0xff]
      %v682 = vld [vmem:[%s7 + $0xc1] sm:$0xff]
      %v683 = vld [vmem:[%s7 + $0xc9] sm:$0xff]
      %v684 = vld [vmem:[%s7 + $0xd1] sm:$0xff]
      %v685 = vld [vmem:[%s7 + $0xd9] sm:$0xff]
      %v686 = vld [vmem:[%s7 + $0xe1] sm:$0xff]
      %v687 = vld [vmem:[%s7 + $0xe9] sm:$0xff]
      %v688 = vld [vmem:[%s7 + $0xf1] sm:$0xff]
      %v689 = vld [vmem:[%s7 + $0xf9] sm:$0x7f]
      %691 = vset.pattern.permute.xlu0 0
      %692 = vperm.xlu0 %691, %v660
      %v693 = vpop.permute.xlu0 %692
      %696 = vset.pattern.permute.xlu0 0
      %697 = vperm.xlu0 %696, %v661
      %v698 = vpop.permute.xlu0 %697
      %701 = vset.pattern.permute.xlu0 0
      %702 = vperm.xlu0 %701, %v662
      %v703 = vpop.permute.xlu0 %702
      %706 = vset.pattern.permute.xlu0 0
      %707 = vperm.xlu0 %706, %v663
      %v708 = vpop.permute.xlu0 %707
      %711 = vset.pattern.permute.xlu0 0
      %712 = vperm.xlu0 %711, %v664
      %v713 = vpop.permute.xlu0 %712
      %716 = vset.pattern.permute.xlu0 0
      %717 = vperm.xlu0 %716, %v665
      %v718 = vpop.permute.xlu0 %717
      %721 = vset.pattern.permute.xlu0 0
      %722 = vperm.xlu0 %721, %v666
      %v723 = vpop.permute.xlu0 %722
      %726 = vset.pattern.permute.xlu0 0
      %727 = vperm.xlu0 %726, %v667
      %v728 = vpop.permute.xlu0 %727
      %731 = vset.pattern.permute.xlu0 0
      %732 = vperm.xlu0 %731, %v668
      %v733 = vpop.permute.xlu0 %732
      %736 = vset.pattern.permute.xlu0 0
      %737 = vperm.xlu0 %736, %v669
      %v738 = vpop.permute.xlu0 %737
      %741 = vset.pattern.permute.xlu0 0
      %742 = vperm.xlu0 %741, %v670
      %v743 = vpop.permute.xlu0 %742
      %746 = vset.pattern.permute.xlu0 0
      %747 = vperm.xlu0 %746, %v671
      %v748 = vpop.permute.xlu0 %747
      %751 = vset.pattern.permute.xlu0 0
      %752 = vperm.xlu0 %751, %v672
      %v753 = vpop.permute.xlu0 %752
      %756 = vset.pattern.permute.xlu0 0
      %757 = vperm.xlu0 %756, %v673
      %v758 = vpop.permute.xlu0 %757
      %761 = vset.pattern.permute.xlu0 0
      %762 = vperm.xlu0 %761, %v674
      %v763 = vpop.permute.xlu0 %762
      %766 = vset.pattern.permute.xlu0 0
      %767 = vperm.xlu0 %766, %v675
      %v768 = vpop.permute.xlu0 %767
      %771 = vset.pattern.permute.xlu0 0
      %772 = vperm.xlu0 %771, %v676
      %v773 = vpop.permute.xlu0 %772
      %776 = vset.pattern.permute.xlu0 0
      %777 = vperm.xlu0 %776, %v677
      %v778 = vpop.permute.xlu0 %777
      %781 = vset.pattern.permute.xlu0 0
      %782 = vperm.xlu0 %781, %v678
      %v783 = vpop.permute.xlu0 %782
      %786 = vset.pattern.permute.xlu0 0
      %787 = vperm.xlu0 %786, %v679
      %v788 = vpop.permute.xlu0 %787
      %791 = vset.pattern.permute.xlu0 0
      %792 = vperm.xlu0 %791, %v680
      %v793 = vpop.permute.xlu0 %792
      %796 = vset.pattern.permute.xlu0 0
      %797 = vperm.xlu0 %796, %v681
      %v798 = vpop.permute.xlu0 %797
      %801 = vset.pattern.permute.xlu0 0
      %802 = vperm.xlu0 %801, %v682
      %v803 = vpop.permute.xlu0 %802
      %806 = vset.pattern.permute.xlu0 0
      %807 = vperm.xlu0 %806, %v683
      %v808 = vpop.permute.xlu0 %807
      %811 = vset.pattern.permute.xlu0 0
      %812 = vperm.xlu0 %811, %v684
      %v813 = vpop.permute.xlu0 %812
      %816 = vset.pattern.permute.xlu0 0
      %817 = vperm.xlu0 %816, %v685
      %v818 = vpop.permute.xlu0 %817
      %821 = vset.pattern.permute.xlu0 0
      %822 = vperm.xlu0 %821, %v686
      %v823 = vpop.permute.xlu0 %822
      %826 = vset.pattern.permute.xlu0 0
      %827 = vperm.xlu0 %826, %v687
      %v828 = vpop.permute.xlu0 %827
      %831 = vset.pattern.permute.xlu0 0
      %832 = vperm.xlu0 %831, %v688
      %v833 = vpop.permute.xlu0 %832
      %836 = vset.pattern.permute.xlu0 0
      %837 = vperm.xlu0 %836, %v689
      %v838 = vpop.permute.xlu0 %837
      %v840 = vmul.f32 %v630, %v693
      %v841 = vmul.f32 %v631, %v698
      %v842 = vmul.f32 %v632, %v703
      %v843 = vmul.f32 %v633, %v708
      %v844 = vmul.f32 %v634, %v713
      %v845 = vmul.f32 %v635, %v718
      %v846 = vmul.f32 %v636, %v723
      %v847 = vmul.f32 %v637, %v728
      %v848 = vmul.f32 %v638, %v733
      %v849 = vmul.f32 %v639, %v738
      %v850 = vmul.f32 %v640, %v743
      %v851 = vmul.f32 %v641, %v748
      %v852 = vmul.f32 %v642, %v753
      %v853 = vmul.f32 %v643, %v758
      %v854 = vmul.f32 %v644, %v763
      %v855 = vmul.f32 %v645, %v768
      %v856 = vmul.f32 %v646, %v773
      %v857 = vmul.f32 %v647, %v778
      %v858 = vmul.f32 %v648, %v783
      %v859 = vmul.f32 %v649, %v788
      %v860 = vmul.f32 %v650, %v793
      %v861 = vmul.f32 %v651, %v798
      %v862 = vmul.f32 %v652, %v803
      %v863 = vmul.f32 %v653, %v808
      %v864 = vmul.f32 %v654, %v813
      %v865 = vmul.f32 %v655, %v818
      %v866 = vmul.f32 %v656, %v823
      %v867 = vmul.f32 %v657, %v828
      %v868 = vmul.f32 %v658, %v833
      %v869 = vmul.f32 %v659, %v838
      %870 = vst.msk [vmem:[#allocation4 + $0x11] sm:$0xff] %vm593, %v840
      %871 = vst.msk [vmem:[#allocation4 + $0x19] sm:$0xff] %vm593, %v841
      %872 = vst.msk [vmem:[#allocation4 + $0x21] sm:$0xff] %vm593, %v842
      %873 = vst.msk [vmem:[#allocation4 + $0x29] sm:$0xff] %vm593, %v843
      %874 = vst.msk [vmem:[#allocation4 + $0x31] sm:$0xff] %vm593, %v844
      %875 = vst.msk [vmem:[#allocation4 + $0x39] sm:$0xff] %vm593, %v845
      %876 = vst.msk [vmem:[#allocation4 + $0x41] sm:$0xff] %vm593, %v846
      %877 = vst.msk [vmem:[#allocation4 + $0x49] sm:$0xff] %vm593, %v847
      %878 = vst.msk [vmem:[#allocation4 + $0x51] sm:$0xff] %vm593, %v848
      %879 = vst.msk [vmem:[#allocation4 + $0x59] sm:$0xff] %vm593, %v849
      %880 = vst.msk [vmem:[#allocation4 + $0x61] sm:$0xff] %vm593, %v850
      %881 = vst.msk [vmem:[#allocation4 + $0x69] sm:$0xff] %vm593, %v851
      %882 = vst.msk [vmem:[#allocation4 + $0x71] sm:$0xff] %vm593, %v852
      %883 = vst.msk [vmem:[#allocation4 + $0x79] sm:$0xff] %vm593, %v853
      %884 = vst.msk [vmem:[#allocation4 + $0x81] sm:$0xff] %vm593, %v854
      %885 = vst.msk [vmem:[#allocation4 + $0x89] sm:$0xff] %vm593, %v855
      %886 = vst.msk [vmem:[#allocation4 + $0x91] sm:$0xff] %vm593, %v856
      %887 = vst.msk [vmem:[#allocation4 + $0x99] sm:$0xff] %vm593, %v857
      %888 = vst.msk [vmem:[#allocation4 + $0xa1] sm:$0xff] %vm593, %v858
      %889 = vst.msk [vmem:[#allocation4 + $0xa9] sm:$0xff] %vm593, %v859
      %890 = vst.msk [vmem:[#allocation4 + $0xb1] sm:$0xff] %vm593, %v860
      %891 = vst.msk [vmem:[#allocation4 + $0xb9] sm:$0xff] %vm593, %v861
      %892 = vst.msk [vmem:[#allocation4 + $0xc1] sm:$0xff] %vm593, %v862
      %893 = vst.msk [vmem:[#allocation4 + $0xc9] sm:$0xff] %vm593, %v863
      %894 = vst.msk [vmem:[#allocation4 + $0xd1] sm:$0xff] %vm593, %v864
      %895 = vst.msk [vmem:[#allocation4 + $0xd9] sm:$0xff] %vm593, %v865
      %896 = vst.msk [vmem:[#allocation4 + $0xe1] sm:$0xff] %vm593, %v866
      %897 = vst.msk [vmem:[#allocation4 + $0xe9] sm:$0xff] %vm593, %v867
      %898 = vst.msk [vmem:[#allocation4 + $0xf1] sm:$0xff] %vm593, %v868
      %vm899 = vcmask 30720
      %900 = vst.msk [vmem:[#allocation4 + $0xf9] sm:$0x7f] %vm899, %v869
      %vm901 = vcmask 64544
      %902 = vst.msk [vmem:[#allocation4] sm:$0xff] %vm901, 0.0
      %903 = vst.msk [vmem:[#allocation4 + $0x8] sm:$0xff] %vm901, 0.0
      %v904 = vld [vmem:[#allocation2] sm:$0xff]
      %v905 = vld [vmem:[#allocation2 + $0x8] sm:$0xff]
      %v906 = vld [vmem:[#allocation2 + $0x10] sm:$0xff]
      %v907 = vld [vmem:[#allocation2 + $0x18] sm:$0xff]
      %v908 = vld [vmem:[#allocation2 + $0x20] sm:$0xff]
      %v909 = vld [vmem:[#allocation2 + $0x28] sm:$0xff]
      %v910 = vld [vmem:[#allocation2 + $0x30] sm:$0xff]
      %v911 = vld [vmem:[#allocation2 + $0x38] sm:$0xff]
      %v912 = vld [vmem:[#allocation2 + $0x40] sm:$0xff]
      %v913 = vld [vmem:[#allocation2 + $0x48] sm:$0xff]
      %v914 = vld [vmem:[#allocation2 + $0x50] sm:$0xff]
      %v915 = vld [vmem:[#allocation2 + $0x58] sm:$0xff]
      %v916 = vld [vmem:[#allocation2 + $0x60] sm:$0xff]
      %v917 = vld [vmem:[#allocation2 + $0x68] sm:$0xff]
      %v918 = vld [vmem:[#allocation2 + $0x70] sm:$0xff]
      %v919 = vld [vmem:[#allocation2 + $0x78] sm:$0xff]
      %v920 = vld [vmem:[#allocation2 + $0x80] sm:$0xff]
      %v921 = vld [vmem:[#allocation2 + $0x88] sm:$0xff]
      %v922 = vld [vmem:[#allocation2 + $0x90] sm:$0xff]
      %v923 = vld [vmem:[#allocation2 + $0x98] sm:$0xff]
      %v924 = vld [vmem:[#allocation2 + $0xa0] sm:$0xff]
      %v925 = vld [vmem:[#allocation2 + $0xa8] sm:$0xff]
      %v926 = vld [vmem:[#allocation2 + $0xb0] sm:$0xff]
      %v927 = vld [vmem:[#allocation2 + $0xb8] sm:$0xff]
      %v928 = vld [vmem:[#allocation2 + $0xc0] sm:$0xff]
      %v929 = vld [vmem:[#allocation2 + $0xc8] sm:$0xff]
      %v930 = vld [vmem:[#allocation2 + $0xd0] sm:$0xff]
      %v931 = vld [vmem:[#allocation2 + $0xd8] sm:$0xff]
      %v932 = vld [vmem:[#allocation2 + $0xe0] sm:$0xff]
      %v933 = vld [vmem:[#allocation2 + $0xe8] sm:$0xff]
      %964 = vrot.lane.b32.xlu0 %v904, 4
      %v965 = vpop.permute.xlu0 %964
      %966 = vrot.lane.b32.xlu0 %v905, 4
      %v967 = vpop.permute.xlu0 %966
      %968 = vrot.lane.b32.xlu0 %v906, 4
      %v969 = vpop.permute.xlu0 %968
      %970 = vrot.lane.b32.xlu0 %v907, 4
      %v971 = vpop.permute.xlu0 %970
      %972 = vrot.lane.b32.xlu0 %v908, 4
      %v973 = vpop.permute.xlu0 %972
      %974 = vrot.lane.b32.xlu0 %v909, 4
      %v975 = vpop.permute.xlu0 %974
      %976 = vrot.lane.b32.xlu0 %v910, 4
      %v977 = vpop.permute.xlu0 %976
      %978 = vrot.lane.b32.xlu0 %v911, 4
      %v979 = vpop.permute.xlu0 %978
      %980 = vrot.lane.b32.xlu0 %v912, 4
      %v981 = vpop.permute.xlu0 %980
      %982 = vrot.lane.b32.xlu0 %v913, 4
      %v983 = vpop.permute.xlu0 %982
      %984 = vrot.lane.b32.xlu0 %v914, 4
      %v985 = vpop.permute.xlu0 %984
      %986 = vrot.lane.b32.xlu0 %v915, 4
      %v987 = vpop.permute.xlu0 %986
      %988 = vrot.lane.b32.xlu0 %v916, 4
      %v989 = vpop.permute.xlu0 %988
      %990 = vrot.lane.b32.xlu0 %v917, 4
      %v991 = vpop.permute.xlu0 %990
      %992 = vrot.lane.b32.xlu0 %v918, 4
      %v993 = vpop.permute.xlu0 %992
      %994 = vrot.lane.b32.xlu0 %v919, 4
      %v995 = vpop.permute.xlu0 %994
      %996 = vrot.lane.b32.xlu0 %v920, 4
      %v997 = vpop.permute.xlu0 %996
      %998 = vrot.lane.b32.xlu0 %v921, 4
      %v999 = vpop.permute.xlu0 %998
      %1000 = vrot.lane.b32.xlu0 %v922, 4
      %v1001 = vpop.permute.xlu0 %1000
      %1002 = vrot.lane.b32.xlu0 %v923, 4
      %v1003 = vpop.permute.xlu0 %1002
      %1004 = vrot.lane.b32.xlu0 %v924, 4
      %v1005 = vpop.permute.xlu0 %1004
      %1006 = vrot.lane.b32.xlu0 %v925, 4
      %v1007 = vpop.permute.xlu0 %1006
      %1008 = vrot.lane.b32.xlu0 %v926, 4
      %v1009 = vpop.permute.xlu0 %1008
      %1010 = vrot.lane.b32.xlu0 %v927, 4
      %v1011 = vpop.permute.xlu0 %1010
      %1012 = vrot.lane.b32.xlu0 %v928, 4
      %v1013 = vpop.permute.xlu0 %1012
      %1014 = vrot.lane.b32.xlu0 %v929, 4
      %v1015 = vpop.permute.xlu0 %1014
      %1016 = vrot.lane.b32.xlu0 %v930, 4
      %v1017 = vpop.permute.xlu0 %1016
      %1018 = vrot.lane.b32.xlu0 %v931, 4
      %v1019 = vpop.permute.xlu0 %1018
      %1020 = vrot.lane.b32.xlu0 %v932, 4
      %v1021 = vpop.permute.xlu0 %1020
      %1022 = vrot.lane.b32.xlu0 %v933, 4
      %v1023 = vpop.permute.xlu0 %1022
      %1054 = vst.msk [vmem:[#allocation4 + $0x10] sm:$0xff] %vm901, %v965
      %1055 = vst.msk [vmem:[#allocation4 + $0x18] sm:$0xff] %vm901, %v967
      %1056 = vst.msk [vmem:[#allocation4 + $0x20] sm:$0xff] %vm901, %v969
      %1057 = vst.msk [vmem:[#allocation4 + $0x28] sm:$0xff] %vm901, %v971
      %1058 = vst.msk [vmem:[#allocation4 + $0x30] sm:$0xff] %vm901, %v973
      %1059 = vst.msk [vmem:[#allocation4 + $0x38] sm:$0xff] %vm901, %v975
      %1060 = vst.msk [vmem:[#allocation4 + $0x40] sm:$0xff] %vm901, %v977
      %1061 = vst.msk [vmem:[#allocation4 + $0x48] sm:$0xff] %vm901, %v979
      %1062 = vst.msk [vmem:[#allocation4 + $0x50] sm:$0xff] %vm901, %v981
      %1063 = vst.msk [vmem:[#allocation4 + $0x58] sm:$0xff] %vm901, %v983
      %1064 = vst.msk [vmem:[#allocation4 + $0x60] sm:$0xff] %vm901, %v985
      %1065 = vst.msk [vmem:[#allocation4 + $0x68] sm:$0xff] %vm901, %v987
      %1066 = vst.msk [vmem:[#allocation4 + $0x70] sm:$0xff] %vm901, %v989
      %1067 = vst.msk [vmem:[#allocation4 + $0x78] sm:$0xff] %vm901, %v991
      %1068 = vst.msk [vmem:[#allocation4 + $0x80] sm:$0xff] %vm901, %v993
      %1069 = vst.msk [vmem:[#allocation4 + $0x88] sm:$0xff] %vm901, %v995
      %1070 = vst.msk [vmem:[#allocation4 + $0x90] sm:$0xff] %vm901, %v997
      %1071 = vst.msk [vmem:[#allocation4 + $0x98] sm:$0xff] %vm901, %v999
      %1072 = vst.msk [vmem:[#allocation4 + $0xa0] sm:$0xff] %vm901, %v1001
      %1073 = vst.msk [vmem:[#allocation4 + $0xa8] sm:$0xff] %vm901, %v1003
      %1074 = vst.msk [vmem:[#allocation4 + $0xb0] sm:$0xff] %vm901, %v1005
      %1075 = vst.msk [vmem:[#allocation4 + $0xb8] sm:$0xff] %vm901, %v1007
      %1076 = vst.msk [vmem:[#allocation4 + $0xc0] sm:$0xff] %vm901, %v1009
      %1077 = vst.msk [vmem:[#allocation4 + $0xc8] sm:$0xff] %vm901, %v1011
      %1078 = vst.msk [vmem:[#allocation4 + $0xd0] sm:$0xff] %vm901, %v1013
      %1079 = vst.msk [vmem:[#allocation4 + $0xd8] sm:$0xff] %vm901, %v1015
      %1080 = vst.msk [vmem:[#allocation4 + $0xe0] sm:$0xff] %vm901, %v1017
      %1081 = vst.msk [vmem:[#allocation4 + $0xe8] sm:$0xff] %vm901, %v1019
      %1082 = vst.msk [vmem:[#allocation4 + $0xf0] sm:$0xff] %vm901, %v1021
      %1083 = vst.msk [vmem:[#allocation4 + $0xf8] sm:$0xff] %vm901, %v1023
      %vm1084 = vcmask 97344
      %1085 = vst.msk [vmem:[#allocation4] sm:$0xff] %vm1084, 0.0
      %vm1086 = vcmask 96320
      %1087 = vst.msk [vmem:[#allocation4 + $0x8] sm:$0x7f] %vm1086, 0.0
      %v1088 = vld [vmem:[#allocation2] sm:$0xff]
      %v1089 = vld [vmem:[#allocation2 + $0x8] sm:$0xff]
      %v1090 = vld [vmem:[#allocation2 + $0x10] sm:$0xff]
      %v1091 = vld [vmem:[#allocation2 + $0x18] sm:$0xff]
      %v1092 = vld [vmem:[#allocation2 + $0x20] sm:$0xff]
      %v1093 = vld [vmem:[#allocation2 + $0x28] sm:$0xff]
      %v1094 = vld [vmem:[#allocation2 + $0x30] sm:$0xff]
      %v1095 = vld [vmem:[#allocation2 + $0x38] sm:$0xff]
      %v1096 = vld [vmem:[#allocation2 + $0x40] sm:$0xff]
      %v1097 = vld [vmem:[#allocation2 + $0x48] sm:$0xff]
      %v1098 = vld [vmem:[#allocation2 + $0x50] sm:$0xff]
      %v1099 = vld [vmem:[#allocation2 + $0x58] sm:$0xff]
      %v1100 = vld [vmem:[#allocation2 + $0x60] sm:$0xff]
      %v1101 = vld [vmem:[#allocation2 + $0x68] sm:$0xff]
      %v1102 = vld [vmem:[#allocation2 + $0x70] sm:$0xff]
      %v1103 = vld [vmem:[#allocation2 + $0x78] sm:$0xff]
      %v1104 = vld [vmem:[#allocation2 + $0x80] sm:$0xff]
      %v1105 = vld [vmem:[#allocation2 + $0x88] sm:$0xff]
      %v1106 = vld [vmem:[#allocation2 + $0x90] sm:$0xff]
      %v1107 = vld [vmem:[#allocation2 + $0x98] sm:$0xff]
      %v1108 = vld [vmem:[#allocation2 + $0xa0] sm:$0xff]
      %v1109 = vld [vmem:[#allocation2 + $0xa8] sm:$0xff]
      %v1110 = vld [vmem:[#allocation2 + $0xb0] sm:$0xff]
      %v1111 = vld [vmem:[#allocation2 + $0xb8] sm:$0xff]
      %v1112 = vld [vmem:[#allocation2 + $0xc0] sm:$0xff]
      %v1113 = vld [vmem:[#allocation2 + $0xc8] sm:$0xff]
      %v1114 = vld [vmem:[#allocation2 + $0xd0] sm:$0xff]
      %v1115 = vld [vmem:[#allocation2 + $0xd8] sm:$0xff]
      %v1116 = vld [vmem:[#allocation2 + $0xe0] sm:$0xff]
      %v1117 = vld [vmem:[#allocation2 + $0xe8] sm:$0xff]
      %v1118 = vld [vmem:[#allocation2 + $0xf0] sm:$0x1]
      %v1119 = vld [vmem:[%s8 + $0xf] sm:$0xff]
      %v1120 = vld [vmem:[%s8 + $0x17] sm:$0xff]
      %v1121 = vld [vmem:[%s8 + $0x1f] sm:$0xff]
      %v1122 = vld [vmem:[%s8 + $0x27] sm:$0xff]
      %v1123 = vld [vmem:[%s8 + $0x2f] sm:$0xff]
      %v1124 = vld [vmem:[%s8 + $0x37] sm:$0xff]
      %v1125 = vld [vmem:[%s8 + $0x3f] sm:$0xff]
      %v1126 = vld [vmem:[%s8 + $0x47] sm:$0xff]
      %v1127 = vld [vmem:[%s8 + $0x4f] sm:$0xff]
      %v1128 = vld [vmem:[%s8 + $0x57] sm:$0xff]
      %v1129 = vld [vmem:[%s8 + $0x5f] sm:$0xff]
      %v1130 = vld [vmem:[%s8 + $0x67] sm:$0xff]
      %v1131 = vld [vmem:[%s8 + $0x6f] sm:$0xff]
      %v1132 = vld [vmem:[%s8 + $0x77] sm:$0xff]
      %v1133 = vld [vmem:[%s8 + $0x7f] sm:$0xff]
      %v1134 = vld [vmem:[%s8 + $0x87] sm:$0xff]
      %v1135 = vld [vmem:[%s8 + $0x8f] sm:$0xff]
      %v1136 = vld [vmem:[%s8 + $0x97] sm:$0xff]
      %v1137 = vld [vmem:[%s8 + $0x9f] sm:$0xff]
      %v1138 = vld [vmem:[%s8 + $0xa7] sm:$0xff]
      %v1139 = vld [vmem:[%s8 + $0xaf] sm:$0xff]
      %v1140 = vld [vmem:[%s8 + $0xb7] sm:$0xff]
      %v1141 = vld [vmem:[%s8 + $0xbf] sm:$0xff]
      %v1142 = vld [vmem:[%s8 + $0xc7] sm:$0xff]
      %v1143 = vld [vmem:[%s8 + $0xcf] sm:$0xff]
      %v1144 = vld [vmem:[%s8 + $0xd7] sm:$0xff]
      %v1145 = vld [vmem:[%s8 + $0xdf] sm:$0xff]
      %v1146 = vld [vmem:[%s8 + $0xe7] sm:$0xff]
      %v1147 = vld [vmem:[%s8 + $0xef] sm:$0xff]
      %v1148 = vld [vmem:[%s8 + $0xf7] sm:$0xff]
      %v1149 = vld [vmem:[%s8 + $0xff] sm:$0x1]
      %1151 = vset.pattern.permute.xlu0 0
      %1152 = vperm.xlu0 %1151, %v1119
      %v1153 = vpop.permute.xlu0 %1152
      %1156 = vset.pattern.permute.xlu0 0
      %1157 = vperm.xlu0 %1156, %v1120
      %v1158 = vpop.permute.xlu0 %1157
      %1161 = vset.pattern.permute.xlu0 0
      %1162 = vperm.xlu0 %1161, %v1121
      %v1163 = vpop.permute.xlu0 %1162
      %1166 = vset.pattern.permute.xlu0 0
      %1167 = vperm.xlu0 %1166, %v1122
      %v1168 = vpop.permute.xlu0 %1167
      %1171 = vset.pattern.permute.xlu0 0
      %1172 = vperm.xlu0 %1171, %v1123
      %v1173 = vpop.permute.xlu0 %1172
      %1176 = vset.pattern.permute.xlu0 0
      %1177 = vperm.xlu0 %1176, %v1124
      %v1178 = vpop.permute.xlu0 %1177
      %1181 = vset.pattern.permute.xlu0 0
      %1182 = vperm.xlu0 %1181, %v1125
      %v1183 = vpop.permute.xlu0 %1182
      %1186 = vset.pattern.permute.xlu0 0
      %1187 = vperm.xlu0 %1186, %v1126
      %v1188 = vpop.permute.xlu0 %1187
      %1191 = vset.pattern.permute.xlu0 0
      %1192 = vperm.xlu0 %1191, %v1127
      %v1193 = vpop.permute.xlu0 %1192
      %1196 = vset.pattern.permute.xlu0 0
      %1197 = vperm.xlu0 %1196, %v1128
      %v1198 = vpop.permute.xlu0 %1197
      %1201 = vset.pattern.permute.xlu0 0
      %1202 = vperm.xlu0 %1201, %v1129
      %v1203 = vpop.permute.xlu0 %1202
      %1206 = vset.pattern.permute.xlu0 0
      %1207 = vperm.xlu0 %1206, %v1130
      %v1208 = vpop.permute.xlu0 %1207
      %1211 = vset.pattern.permute.xlu0 0
      %1212 = vperm.xlu0 %1211, %v1131
      %v1213 = vpop.permute.xlu0 %1212
      %1216 = vset.pattern.permute.xlu0 0
      %1217 = vperm.xlu0 %1216, %v1132
      %v1218 = vpop.permute.xlu0 %1217
      %1221 = vset.pattern.permute.xlu0 0
      %1222 = vperm.xlu0 %1221, %v1133
      %v1223 = vpop.permute.xlu0 %1222
      %1226 = vset.pattern.permute.xlu0 0
      %1227 = vperm.xlu0 %1226, %v1134
      %v1228 = vpop.permute.xlu0 %1227
      %1231 = vset.pattern.permute.xlu0 0
      %1232 = vperm.xlu0 %1231, %v1135
      %v1233 = vpop.permute.xlu0 %1232
      %1236 = vset.pattern.permute.xlu0 0
      %1237 = vperm.xlu0 %1236, %v1136
      %v1238 = vpop.permute.xlu0 %1237
      %1241 = vset.pattern.permute.xlu0 0
      %1242 = vperm.xlu0 %1241, %v1137
      %v1243 = vpop.permute.xlu0 %1242
      %1246 = vset.pattern.permute.xlu0 0
      %1247 = vperm.xlu0 %1246, %v1138
      %v1248 = vpop.permute.xlu0 %1247
      %1251 = vset.pattern.permute.xlu0 0
      %1252 = vperm.xlu0 %1251, %v1139
      %v1253 = vpop.permute.xlu0 %1252
      %1256 = vset.pattern.permute.xlu0 0
      %1257 = vperm.xlu0 %1256, %v1140
      %v1258 = vpop.permute.xlu0 %1257
      %1261 = vset.pattern.permute.xlu0 0
      %1262 = vperm.xlu0 %1261, %v1141
      %v1263 = vpop.permute.xlu0 %1262
      %1266 = vset.pattern.permute.xlu0 0
      %1267 = vperm.xlu0 %1266, %v1142
      %v1268 = vpop.permute.xlu0 %1267
      %1271 = vset.pattern.permute.xlu0 0
      %1272 = vperm.xlu0 %1271, %v1143
      %v1273 = vpop.permute.xlu0 %1272
      %1276 = vset.pattern.permute.xlu0 0
      %1277 = vperm.xlu0 %1276, %v1144
      %v1278 = vpop.permute.xlu0 %1277
      %1281 = vset.pattern.permute.xlu0 0
      %1282 = vperm.xlu0 %1281, %v1145
      %v1283 = vpop.permute.xlu0 %1282
      %1286 = vset.pattern.permute.xlu0 0
      %1287 = vperm.xlu0 %1286, %v1146
      %v1288 = vpop.permute.xlu0 %1287
      %1291 = vset.pattern.permute.xlu0 0
      %1292 = vperm.xlu0 %1291, %v1147
      %v1293 = vpop.permute.xlu0 %1292
      %1296 = vset.pattern.permute.xlu0 0
      %1297 = vperm.xlu0 %1296, %v1148
      %v1298 = vpop.permute.xlu0 %1297
      %1301 = vset.pattern.permute.xlu0 0
      %1302 = vperm.xlu0 %1301, %v1149
      %v1303 = vpop.permute.xlu0 %1302
      %v1305 = vmul.f32 %v1088, %v1153
      %v1306 = vmul.f32 %v1089, %v1158
      %v1307 = vmul.f32 %v1090, %v1163
      %v1308 = vmul.f32 %v1091, %v1168
      %v1309 = vmul.f32 %v1092, %v1173
      %v1310 = vmul.f32 %v1093, %v1178
      %v1311 = vmul.f32 %v1094, %v1183
      %v1312 = vmul.f32 %v1095, %v1188
      %v1313 = vmul.f32 %v1096, %v1193
      %v1314 = vmul.f32 %v1097, %v1198
      %v1315 = vmul.f32 %v1098, %v1203
      %v1316 = vmul.f32 %v1099, %v1208
      %v1317 = vmul.f32 %v1100, %v1213
      %v1318 = vmul.f32 %v1101, %v1218
      %v1319 = vmul.f32 %v1102, %v1223
      %v1320 = vmul.f32 %v1103, %v1228
      %v1321 = vmul.f32 %v1104, %v1233
      %v1322 = vmul.f32 %v1105, %v1238
      %v1323 = vmul.f32 %v1106, %v1243
      %v1324 = vmul.f32 %v1107, %v1248
      %v1325 = vmul.f32 %v1108, %v1253
      %v1326 = vmul.f32 %v1109, %v1258
      %v1327 = vmul.f32 %v1110, %v1263
      %v1328 = vmul.f32 %v1111, %v1268
      %v1329 = vmul.f32 %v1112, %v1273
      %v1330 = vmul.f32 %v1113, %v1278
      %v1331 = vmul.f32 %v1114, %v1283
      %v1332 = vmul.f32 %v1115, %v1288
      %v1333 = vmul.f32 %v1116, %v1293
      %v1334 = vmul.f32 %v1117, %v1298
      %v1335 = vmul.f32 %v1118, %v1303
      %1367 = vrot.lane.b32.xlu0 %v1305, 8
      %v1368 = vpop.permute.xlu0 %1367
      %1369 = vrot.lane.b32.xlu0 %v1306, 8
      %v1370 = vpop.permute.xlu0 %1369
      %1371 = vrot.lane.b32.xlu0 %v1307, 8
      %v1372 = vpop.permute.xlu0 %1371
      %1373 = vrot.lane.b32.xlu0 %v1308, 8
      %v1374 = vpop.permute.xlu0 %1373
      %1375 = vrot.lane.b32.xlu0 %v1309, 8
      %v1376 = vpop.permute.xlu0 %1375
      %1377 = vrot.lane.b32.xlu0 %v1310, 8
      %v1378 = vpop.permute.xlu0 %1377
      %1379 = vrot.lane.b32.xlu0 %v1311, 8
      %v1380 = vpop.permute.xlu0 %1379
      %1381 = vrot.lane.b32.xlu0 %v1312, 8
      %v1382 = vpop.permute.xlu0 %1381
      %1383 = vrot.lane.b32.xlu0 %v1313, 8
      %v1384 = vpop.permute.xlu0 %1383
      %1385 = vrot.lane.b32.xlu0 %v1314, 8
      %v1386 = vpop.permute.xlu0 %1385
      %1387 = vrot.lane.b32.xlu0 %v1315, 8
      %v1388 = vpop.permute.xlu0 %1387
      %1389 = vrot.lane.b32.xlu0 %v1316, 8
      %v1390 = vpop.permute.xlu0 %1389
      %1391 = vrot.lane.b32.xlu0 %v1317, 8
      %v1392 = vpop.permute.xlu0 %1391
      %1393 = vrot.lane.b32.xlu0 %v1318, 8
      %v1394 = vpop.permute.xlu0 %1393
      %1395 = vrot.lane.b32.xlu0 %v1319, 8
      %v1396 = vpop.permute.xlu0 %1395
      %1397 = vrot.lane.b32.xlu0 %v1320, 8
      %v1398 = vpop.permute.xlu0 %1397
      %1399 = vrot.lane.b32.xlu0 %v1321, 8
      %v1400 = vpop.permute.xlu0 %1399
      %1401 = vrot.lane.b32.xlu0 %v1322, 8
      %v1402 = vpop.permute.xlu0 %1401
      %1403 = vrot.lane.b32.xlu0 %v1323, 8
      %v1404 = vpop.permute.xlu0 %1403
      %1405 = vrot.lane.b32.xlu0 %v1324, 8
      %v1406 = vpop.permute.xlu0 %1405
      %1407 = vrot.lane.b32.xlu0 %v1325, 8
      %v1408 = vpop.permute.xlu0 %1407
      %1409 = vrot.lane.b32.xlu0 %v1326, 8
      %v1410 = vpop.permute.xlu0 %1409
      %1411 = vrot.lane.b32.xlu0 %v1327, 8
      %v1412 = vpop.permute.xlu0 %1411
      %1413 = vrot.lane.b32.xlu0 %v1328, 8
      %v1414 = vpop.permute.xlu0 %1413
      %1415 = vrot.lane.b32.xlu0 %v1329, 8
      %v1416 = vpop.permute.xlu0 %1415
      %1417 = vrot.lane.b32.xlu0 %v1330, 8
      %v1418 = vpop.permute.xlu0 %1417
      %1419 = vrot.lane.b32.xlu0 %v1331, 8
      %v1420 = vpop.permute.xlu0 %1419
      %1421 = vrot.lane.b32.xlu0 %v1332, 8
      %v1422 = vpop.permute.xlu0 %1421
      %1423 = vrot.lane.b32.xlu0 %v1333, 8
      %v1424 = vpop.permute.xlu0 %1423
      %1425 = vrot.lane.b32.xlu0 %v1334, 8
      %v1426 = vpop.permute.xlu0 %1425
      %1427 = vrot.lane.b32.xlu0 %v1335, 8
      %v1428 = vpop.permute.xlu0 %1427
      %1460 = vst.msk [vmem:[#allocation4 + $0xf] sm:$0xff] %vm1084, %v1368
      %1461 = vst.msk [vmem:[#allocation4 + $0x17] sm:$0xff] %vm1084, %v1370
      %1462 = vst.msk [vmem:[#allocation4 + $0x1f] sm:$0xff] %vm1084, %v1372
      %1463 = vst.msk [vmem:[#allocation4 + $0x27] sm:$0xff] %vm1084, %v1374
      %1464 = vst.msk [vmem:[#allocation4 + $0x2f] sm:$0xff] %vm1084, %v1376
      %1465 = vst.msk [vmem:[#allocation4 + $0x37] sm:$0xff] %vm1084, %v1378
      %1466 = vst.msk [vmem:[#allocation4 + $0x3f] sm:$0xff] %vm1084, %v1380
      %1467 = vst.msk [vmem:[#allocation4 + $0x47] sm:$0xff] %vm1084, %v1382
      %1468 = vst.msk [vmem:[#allocation4 + $0x4f] sm:$0xff] %vm1084, %v1384
      %1469 = vst.msk [vmem:[#allocation4 + $0x57] sm:$0xff] %vm1084, %v1386
      %1470 = vst.msk [vmem:[#allocation4 + $0x5f] sm:$0xff] %vm1084, %v1388
      %1471 = vst.msk [vmem:[#allocation4 + $0x67] sm:$0xff] %vm1084, %v1390
      %1472 = vst.msk [vmem:[#allocation4 + $0x6f] sm:$0xff] %vm1084, %v1392
      %1473 = vst.msk [vmem:[#allocation4 + $0x77] sm:$0xff] %vm1084, %v1394
      %1474 = vst.msk [vmem:[#allocation4 + $0x7f] sm:$0xff] %vm1084, %v1396
      %1475 = vst.msk [vmem:[#allocation4 + $0x87] sm:$0xff] %vm1084, %v1398
      %1476 = vst.msk [vmem:[#allocation4 + $0x8f] sm:$0xff] %vm1084, %v1400
      %1477 = vst.msk [vmem:[#allocation4 + $0x97] sm:$0xff] %vm1084, %v1402
      %1478 = vst.msk [vmem:[#allocation4 + $0x9f] sm:$0xff] %vm1084, %v1404
      %1479 = vst.msk [vmem:[#allocation4 + $0xa7] sm:$0xff] %vm1084, %v1406
      %1480 = vst.msk [vmem:[#allocation4 + $0xaf] sm:$0xff] %vm1084, %v1408
      %1481 = vst.msk [vmem:[#allocation4 + $0xb7] sm:$0xff] %vm1084, %v1410
      %1482 = vst.msk [vmem:[#allocation4 + $0xbf] sm:$0xff] %vm1084, %v1412
      %1483 = vst.msk [vmem:[#allocation4 + $0xc7] sm:$0xff] %vm1084, %v1414
      %1484 = vst.msk [vmem:[#allocation4 + $0xcf] sm:$0xff] %vm1084, %v1416
      %1485 = vst.msk [vmem:[#allocation4 + $0xd7] sm:$0xff] %vm1084, %v1418
      %1486 = vst.msk [vmem:[#allocation4 + $0xdf] sm:$0xff] %vm1084, %v1420
      %1487 = vst.msk [vmem:[#allocation4 + $0xe7] sm:$0xff] %vm1084, %v1422
      %1488 = vst.msk [vmem:[#allocation4 + $0xef] sm:$0xff] %vm1084, %v1424
      %1489 = vst.msk [vmem:[#allocation4 + $0xf7] sm:$0xff] %vm1084, %v1426
      %vm1490 = vcmask 90176
      %1491 = vst.msk [vmem:[#allocation4 + $0xff] sm:$0x1] %vm1490, %v1428
      %vm1492 = vcmask 122976
      %1493 = vst.msk [vmem:[#allocation4] sm:$0x1] %vm1492, 0.0
      %v1494 = vld [vmem:[#allocation2] sm:$0xff]
      %v1495 = vld [vmem:[#allocation2 + $0x8] sm:$0xff]
      %v1496 = vld [vmem:[#allocation2 + $0x10] sm:$0xff]
      %v1497 = vld [vmem:[#allocation2 + $0x18] sm:$0xff]
      %v1498 = vld [vmem:[#allocation2 + $0x20] sm:$0xff]
      %v1499 = vld [vmem:[#allocation2 + $0x28] sm:$0xff]
      %v1500 = vld [vmem:[#allocation2 + $0x30] sm:$0xff]
      %v1501 = vld [vmem:[#allocation2 + $0x38] sm:$0xff]
      %v1502 = vld [vmem:[#allocation2 + $0x40] sm:$0xff]
      %v1503 = vld [vmem:[#allocation2 + $0x48] sm:$0xff]
      %v1504 = vld [vmem:[#allocation2 + $0x50] sm:$0xff]
      %v1505 = vld [vmem:[#allocation2 + $0x58] sm:$0xff]
      %v1506 = vld [vmem:[#allocation2 + $0x60] sm:$0xff]
      %v1507 = vld [vmem:[#allocation2 + $0x68] sm:$0xff]
      %v1508 = vld [vmem:[#allocation2 + $0x70] sm:$0xff]
      %v1509 = vld [vmem:[#allocation2 + $0x78] sm:$0xff]
      %v1510 = vld [vmem:[#allocation2 + $0x80] sm:$0xff]
      %v1511 = vld [vmem:[#allocation2 + $0x88] sm:$0xff]
      %v1512 = vld [vmem:[#allocation2 + $0x90] sm:$0xff]
      %v1513 = vld [vmem:[#allocation2 + $0x98] sm:$0xff]
      %v1514 = vld [vmem:[#allocation2 + $0xa0] sm:$0xff]
      %v1515 = vld [vmem:[#allocation2 + $0xa8] sm:$0xff]
      %v1516 = vld [vmem:[#allocation2 + $0xb0] sm:$0xff]
      %v1517 = vld [vmem:[#allocation2 + $0xb8] sm:$0xff]
      %v1518 = vld [vmem:[#allocation2 + $0xc0] sm:$0xff]
      %v1519 = vld [vmem:[#allocation2 + $0xc8] sm:$0xff]
      %v1520 = vld [vmem:[#allocation2 + $0xd0] sm:$0xff]
      %v1521 = vld [vmem:[#allocation2 + $0xd8] sm:$0xff]
      %v1522 = vld [vmem:[#allocation2 + $0xe0] sm:$0xff]
      %v1523 = vld [vmem:[#allocation2 + $0xe8] sm:$0xff]
      %v1524 = vld [vmem:[#allocation2 + $0xf0] sm:$0xff]
      %v1525 = vld [vmem:[#allocation2 + $0xf8] sm:$0x7f]
      %v1526 = vld [vmem:[%s7 + $0x1] sm:$0xff]
      %v1527 = vld [vmem:[%s7 + $0x9] sm:$0xff]
      %v1528 = vld [vmem:[%s7 + $0x11] sm:$0xff]
      %v1529 = vld [vmem:[%s7 + $0x19] sm:$0xff]
      %v1530 = vld [vmem:[%s7 + $0x21] sm:$0xff]
      %v1531 = vld [vmem:[%s7 + $0x29] sm:$0xff]
      %v1532 = vld [vmem:[%s7 + $0x31] sm:$0xff]
      %v1533 = vld [vmem:[%s7 + $0x39] sm:$0xff]
      %v1534 = vld [vmem:[%s7 + $0x41] sm:$0xff]
      %v1535 = vld [vmem:[%s7 + $0x49] sm:$0xff]
      %v1536 = vld [vmem:[%s7 + $0x51] sm:$0xff]
      %v1537 = vld [vmem:[%s7 + $0x59] sm:$0xff]
      %v1538 = vld [vmem:[%s7 + $0x61] sm:$0xff]
      %v1539 = vld [vmem:[%s7 + $0x69] sm:$0xff]
      %v1540 = vld [vmem:[%s7 + $0x71] sm:$0xff]
      %v1541 = vld [vmem:[%s7 + $0x79] sm:$0xff]
      %v1542 = vld [vmem:[%s7 + $0x81] sm:$0xff]
      %v1543 = vld [vmem:[%s7 + $0x89] sm:$0xff]
      %v1544 = vld [vmem:[%s7 + $0x91] sm:$0xff]
      %v1545 = vld [vmem:[%s7 + $0x99] sm:$0xff]
      %v1546 = vld [vmem:[%s7 + $0xa1] sm:$0xff]
      %v1547 = vld [vmem:[%s7 + $0xa9] sm:$0xff]
      %v1548 = vld [vmem:[%s7 + $0xb1] sm:$0xff]
      %v1549 = vld [vmem:[%s7 + $0xb9] sm:$0xff]
      %v1550 = vld [vmem:[%s7 + $0xc1] sm:$0xff]
      %v1551 = vld [vmem:[%s7 + $0xc9] sm:$0xff]
      %v1552 = vld [vmem:[%s7 + $0xd1] sm:$0xff]
      %v1553 = vld [vmem:[%s7 + $0xd9] sm:$0xff]
      %v1554 = vld [vmem:[%s7 + $0xe1] sm:$0xff]
      %v1555 = vld [vmem:[%s7 + $0xe9] sm:$0xff]
      %v1556 = vld [vmem:[%s7 + $0xf1] sm:$0xff]
      %v1557 = vld [vmem:[%s7 + $0xf9] sm:$0x7f]
      %1559 = vset.pattern.permute.xlu0 0
      %1560 = vperm.xlu0 %1559, %v1526
      %v1561 = vpop.permute.xlu0 %1560
      %1564 = vset.pattern.permute.xlu0 0
      %1565 = vperm.xlu0 %1564, %v1527
      %v1566 = vpop.permute.xlu0 %1565
      %1569 = vset.pattern.permute.xlu0 0
      %1570 = vperm.xlu0 %1569, %v1528
      %v1571 = vpop.permute.xlu0 %1570
      %1574 = vset.pattern.permute.xlu0 0
      %1575 = vperm.xlu0 %1574, %v1529
      %v1576 = vpop.permute.xlu0 %1575
      %1579 = vset.pattern.permute.xlu0 0
      %1580 = vperm.xlu0 %1579, %v1530
      %v1581 = vpop.permute.xlu0 %1580
      %1584 = vset.pattern.permute.xlu0 0
      %1585 = vperm.xlu0 %1584, %v1531
      %v1586 = vpop.permute.xlu0 %1585
      %1589 = vset.pattern.permute.xlu0 0
      %1590 = vperm.xlu0 %1589, %v1532
      %v1591 = vpop.permute.xlu0 %1590
      %1594 = vset.pattern.permute.xlu0 0
      %1595 = vperm.xlu0 %1594, %v1533
      %v1596 = vpop.permute.xlu0 %1595
      %1599 = vset.pattern.permute.xlu0 0
      %1600 = vperm.xlu0 %1599, %v1534
      %v1601 = vpop.permute.xlu0 %1600
      %1604 = vset.pattern.permute.xlu0 0
      %1605 = vperm.xlu0 %1604, %v1535
      %v1606 = vpop.permute.xlu0 %1605
      %1609 = vset.pattern.permute.xlu0 0
      %1610 = vperm.xlu0 %1609, %v1536
      %v1611 = vpop.permute.xlu0 %1610
      %1614 = vset.pattern.permute.xlu0 0
      %1615 = vperm.xlu0 %1614, %v1537
      %v1616 = vpop.permute.xlu0 %1615
      %1619 = vset.pattern.permute.xlu0 0
      %1620 = vperm.xlu0 %1619, %v1538
      %v1621 = vpop.permute.xlu0 %1620
      %1624 = vset.pattern.permute.xlu0 0
      %1625 = vperm.xlu0 %1624, %v1539
      %v1626 = vpop.permute.xlu0 %1625
      %1629 = vset.pattern.permute.xlu0 0
      %1630 = vperm.xlu0 %1629, %v1540
      %v1631 = vpop.permute.xlu0 %1630
      %1634 = vset.pattern.permute.xlu0 0
      %1635 = vperm.xlu0 %1634, %v1541
      %v1636 = vpop.permute.xlu0 %1635
      %1639 = vset.pattern.permute.xlu0 0
      %1640 = vperm.xlu0 %1639, %v1542
      %v1641 = vpop.permute.xlu0 %1640
      %1644 = vset.pattern.permute.xlu0 0
      %1645 = vperm.xlu0 %1644, %v1543
      %v1646 = vpop.permute.xlu0 %1645
      %1649 = vset.pattern.permute.xlu0 0
      %1650 = vperm.xlu0 %1649, %v1544
      %v1651 = vpop.permute.xlu0 %1650
      %1654 = vset.pattern.permute.xlu0 0
      %1655 = vperm.xlu0 %1654, %v1545
      %v1656 = vpop.permute.xlu0 %1655
      %1659 = vset.pattern.permute.xlu0 0
      %1660 = vperm.xlu0 %1659, %v1546
      %v1661 = vpop.permute.xlu0 %1660
      %1664 = vset.pattern.permute.xlu0 0
      %1665 = vperm.xlu0 %1664, %v1547
      %v1666 = vpop.permute.xlu0 %1665
      %1669 = vset.pattern.permute.xlu0 0
      %1670 = vperm.xlu0 %1669, %v1548
      %v1671 = vpop.permute.xlu0 %1670
      %1674 = vset.pattern.permute.xlu0 0
      %1675 = vperm.xlu0 %1674, %v1549
      %v1676 = vpop.permute.xlu0 %1675
      %1679 = vset.pattern.permute.xlu0 0
      %1680 = vperm.xlu0 %1679, %v1550
      %v1681 = vpop.permute.xlu0 %1680
      %1684 = vset.pattern.permute.xlu0 0
      %1685 = vperm.xlu0 %1684, %v1551
      %v1686 = vpop.permute.xlu0 %1685
      %1689 = vset.pattern.permute.xlu0 0
      %1690 = vperm.xlu0 %1689, %v1552
      %v1691 = vpop.permute.xlu0 %1690
      %1694 = vset.pattern.permute.xlu0 0
      %1695 = vperm.xlu0 %1694, %v1553
      %v1696 = vpop.permute.xlu0 %1695
      %1699 = vset.pattern.permute.xlu0 0
      %1700 = vperm.xlu0 %1699, %v1554
      %v1701 = vpop.permute.xlu0 %1700
      %1704 = vset.pattern.permute.xlu0 0
      %1705 = vperm.xlu0 %1704, %v1555
      %v1706 = vpop.permute.xlu0 %1705
      %1709 = vset.pattern.permute.xlu0 0
      %1710 = vperm.xlu0 %1709, %v1556
      %v1711 = vpop.permute.xlu0 %1710
      %1714 = vset.pattern.permute.xlu0 0
      %1715 = vperm.xlu0 %1714, %v1557
      %v1716 = vpop.permute.xlu0 %1715
      %v1718 = vmul.f32 %v1494, %v1561
      %v1719 = vmul.f32 %v1495, %v1566
      %v1720 = vmul.f32 %v1496, %v1571
      %v1721 = vmul.f32 %v1497, %v1576
      %v1722 = vmul.f32 %v1498, %v1581
      %v1723 = vmul.f32 %v1499, %v1586
      %v1724 = vmul.f32 %v1500, %v1591
      %v1725 = vmul.f32 %v1501, %v1596
      %v1726 = vmul.f32 %v1502, %v1601
      %v1727 = vmul.f32 %v1503, %v1606
      %v1728 = vmul.f32 %v1504, %v1611
      %v1729 = vmul.f32 %v1505, %v1616
      %v1730 = vmul.f32 %v1506, %v1621
      %v1731 = vmul.f32 %v1507, %v1626
      %v1732 = vmul.f32 %v1508, %v1631
      %v1733 = vmul.f32 %v1509, %v1636
      %v1734 = vmul.f32 %v1510, %v1641
      %v1735 = vmul.f32 %v1511, %v1646
      %v1736 = vmul.f32 %v1512, %v1651
      %v1737 = vmul.f32 %v1513, %v1656
      %v1738 = vmul.f32 %v1514, %v1661
      %v1739 = vmul.f32 %v1515, %v1666
      %v1740 = vmul.f32 %v1516, %v1671
      %v1741 = vmul.f32 %v1517, %v1676
      %v1742 = vmul.f32 %v1518, %v1681
      %v1743 = vmul.f32 %v1519, %v1686
      %v1744 = vmul.f32 %v1520, %v1691
      %v1745 = vmul.f32 %v1521, %v1696
      %v1746 = vmul.f32 %v1522, %v1701
      %v1747 = vmul.f32 %v1523, %v1706
      %v1748 = vmul.f32 %v1524, %v1711
      %v1749 = vmul.f32 %v1525, %v1716
      %1782 = vrot.lane.b32.xlu0 %v1718, 12
      %v1783 = vpop.permute.xlu0 %1782
      %1784 = vrot.lane.b32.xlu0 %v1719, 12
      %v1785 = vpop.permute.xlu0 %1784
      %1786 = vrot.lane.b32.xlu0 %v1720, 12
      %v1787 = vpop.permute.xlu0 %1786
      %1788 = vrot.lane.b32.xlu0 %v1721, 12
      %v1789 = vpop.permute.xlu0 %1788
      %1790 = vrot.lane.b32.xlu0 %v1722, 12
      %v1791 = vpop.permute.xlu0 %1790
      %1792 = vrot.lane.b32.xlu0 %v1723, 12
      %v1793 = vpop.permute.xlu0 %1792
      %1794 = vrot.lane.b32.xlu0 %v1724, 12
      %v1795 = vpop.permute.xlu0 %1794
      %1796 = vrot.lane.b32.xlu0 %v1725, 12
      %v1797 = vpop.permute.xlu0 %1796
      %1798 = vrot.lane.b32.xlu0 %v1726, 12
      %v1799 = vpop.permute.xlu0 %1798
      %1800 = vrot.lane.b32.xlu0 %v1727, 12
      %v1801 = vpop.permute.xlu0 %1800
      %1802 = vrot.lane.b32.xlu0 %v1728, 12
      %v1803 = vpop.permute.xlu0 %1802
      %1804 = vrot.lane.b32.xlu0 %v1729, 12
      %v1805 = vpop.permute.xlu0 %1804
      %1806 = vrot.lane.b32.xlu0 %v1730, 12
      %v1807 = vpop.permute.xlu0 %1806
      %1808 = vrot.lane.b32.xlu0 %v1731, 12
      %v1809 = vpop.permute.xlu0 %1808
      %1810 = vrot.lane.b32.xlu0 %v1732, 12
      %v1811 = vpop.permute.xlu0 %1810
      %1812 = vrot.lane.b32.xlu0 %v1733, 12
      %v1813 = vpop.permute.xlu0 %1812
      %1814 = vrot.lane.b32.xlu0 %v1734, 12
      %v1815 = vpop.permute.xlu0 %1814
      %1816 = vrot.lane.b32.xlu0 %v1735, 12
      %v1817 = vpop.permute.xlu0 %1816
      %1818 = vrot.lane.b32.xlu0 %v1736, 12
      %v1819 = vpop.permute.xlu0 %1818
      %1820 = vrot.lane.b32.xlu0 %v1737, 12
      %v1821 = vpop.permute.xlu0 %1820
      %1822 = vrot.lane.b32.xlu0 %v1738, 12
      %v1823 = vpop.permute.xlu0 %1822
      %1824 = vrot.lane.b32.xlu0 %v1739, 12
      %v1825 = vpop.permute.xlu0 %1824
      %1826 = vrot.lane.b32.xlu0 %v1740, 12
      %v1827 = vpop.permute.xlu0 %1826
      %1828 = vrot.lane.b32.xlu0 %v1741, 12
      %v1829 = vpop.permute.xlu0 %1828
      %1830 = vrot.lane.b32.xlu0 %v1742, 12
      %v1831 = vpop.permute.xlu0 %1830
      %1832 = vrot.lane.b32.xlu0 %v1743, 12
      %v1833 = vpop.permute.xlu0 %1832
      %1834 = vrot.lane.b32.xlu0 %v1744, 12
      %v1835 = vpop.permute.xlu0 %1834
      %1836 = vrot.lane.b32.xlu0 %v1745, 12
      %v1837 = vpop.permute.xlu0 %1836
      %1838 = vrot.lane.b32.xlu0 %v1746, 12
      %v1839 = vpop.permute.xlu0 %1838
      %1840 = vrot.lane.b32.xlu0 %v1747, 12
      %v1841 = vpop.permute.xlu0 %1840
      %1842 = vrot.lane.b32.xlu0 %v1748, 12
      %v1843 = vpop.permute.xlu0 %1842
      %1844 = vrot.lane.b32.xlu0 %v1749, 12
      %v1845 = vpop.permute.xlu0 %1844
      %vm1878 = vcmask 130144
      %1879 = vst.msk [vmem:[#allocation4 + $0x1] sm:$0xff] %vm1878, %v1783
      %1880 = vst.msk [vmem:[#allocation4 + $0x9] sm:$0xff] %vm1878, %v1785
      %1881 = vst.msk [vmem:[#allocation4 + $0x11] sm:$0xff] %vm1878, %v1787
      %1882 = vst.msk [vmem:[#allocation4 + $0x19] sm:$0xff] %vm1878, %v1789
      %1883 = vst.msk [vmem:[#allocation4 + $0x21] sm:$0xff] %vm1878, %v1791
      %1884 = vst.msk [vmem:[#allocation4 + $0x29] sm:$0xff] %vm1878, %v1793
      %1885 = vst.msk [vmem:[#allocation4 + $0x31] sm:$0xff] %vm1878, %v1795
      %1886 = vst.msk [vmem:[#allocation4 + $0x39] sm:$0xff] %vm1878, %v1797
      %1887 = vst.msk [vmem:[#allocation4 + $0x41] sm:$0xff] %vm1878, %v1799
      %1888 = vst.msk [vmem:[#allocation4 + $0x49] sm:$0xff] %vm1878, %v1801
      %1889 = vst.msk [vmem:[#allocation4 + $0x51] sm:$0xff] %vm1878, %v1803
      %1890 = vst.msk [vmem:[#allocation4 + $0x59] sm:$0xff] %vm1878, %v1805
      %1891 = vst.msk [vmem:[#allocation4 + $0x61] sm:$0xff] %vm1878, %v1807
      %1892 = vst.msk [vmem:[#allocation4 + $0x69] sm:$0xff] %vm1878, %v1809
      %1893 = vst.msk [vmem:[#allocation4 + $0x71] sm:$0xff] %vm1878, %v1811
      %1894 = vst.msk [vmem:[#allocation4 + $0x79] sm:$0xff] %vm1878, %v1813
      %1895 = vst.msk [vmem:[#allocation4 + $0x81] sm:$0xff] %vm1878, %v1815
      %1896 = vst.msk [vmem:[#allocation4 + $0x89] sm:$0xff] %vm1878, %v1817
      %1897 = vst.msk [vmem:[#allocation4 + $0x91] sm:$0xff] %vm1878, %v1819
      %1898 = vst.msk [vmem:[#allocation4 + $0x99] sm:$0xff] %vm1878, %v1821
      %1899 = vst.msk [vmem:[#allocation4 + $0xa1] sm:$0xff] %vm1878, %v1823
      %1900 = vst.msk [vmem:[#allocation4 + $0xa9] sm:$0xff] %vm1878, %v1825
      %1901 = vst.msk [vmem:[#allocation4 + $0xb1] sm:$0xff] %vm1878, %v1827
      %1902 = vst.msk [vmem:[#allocation4 + $0xb9] sm:$0xff] %vm1878, %v1829
      %1903 = vst.msk [vmem:[#allocation4 + $0xc1] sm:$0xff] %vm1878, %v1831
      %1904 = vst.msk [vmem:[#allocation4 + $0xc9] sm:$0xff] %vm1878, %v1833
      %1905 = vst.msk [vmem:[#allocation4 + $0xd1] sm:$0xff] %vm1878, %v1835
      %1906 = vst.msk [vmem:[#allocation4 + $0xd9] sm:$0xff] %vm1878, %v1837
      %1907 = vst.msk [vmem:[#allocation4 + $0xe1] sm:$0xff] %vm1878, %v1839
      %1908 = vst.msk [vmem:[#allocation4 + $0xe9] sm:$0xff] %vm1878, %v1841
      %1909 = vst.msk [vmem:[#allocation4 + $0xf1] sm:$0xff] %vm1878, %v1843
      %vm1910 = vcmask 129120
      %1911 = vst.msk [vmem:[#allocation4 + $0xf9] sm:$0x7f] %vm1910, %v1845
      %v1912 = vld [vmem:[#allocation2] sm:$0xff]
      %v1913 = vld [vmem:[#allocation2 + $0x8] sm:$0xff]
      %v1914 = vld [vmem:[#allocation2 + $0x10] sm:$0xff]
      %v1915 = vld [vmem:[#allocation2 + $0x18] sm:$0xff]
      %v1916 = vld [vmem:[#allocation2 + $0x20] sm:$0xff]
      %v1917 = vld [vmem:[#allocation2 + $0x28] sm:$0xff]
      %v1918 = vld [vmem:[#allocation2 + $0x30] sm:$0xff]
      %v1919 = vld [vmem:[#allocation2 + $0x38] sm:$0xff]
      %v1920 = vld [vmem:[#allocation2 + $0x40] sm:$0xff]
      %v1921 = vld [vmem:[#allocation2 + $0x48] sm:$0xff]
      %v1922 = vld [vmem:[#allocation2 + $0x50] sm:$0xff]
      %v1923 = vld [vmem:[#allocation2 + $0x58] sm:$0xff]
      %v1924 = vld [vmem:[#allocation2 + $0x60] sm:$0xff]
      %v1925 = vld [vmem:[#allocation2 + $0x68] sm:$0xff]
      %v1926 = vld [vmem:[#allocation2 + $0x70] sm:$0xff]
      %v1927 = vld [vmem:[#allocation2 + $0x78] sm:$0xff]
      %v1928 = vld [vmem:[#allocation2 + $0x80] sm:$0xff]
      %v1929 = vld [vmem:[#allocation2 + $0x88] sm:$0xff]
      %v1930 = vld [vmem:[#allocation2 + $0x90] sm:$0xff]
      %v1931 = vld [vmem:[#allocation2 + $0x98] sm:$0xff]
      %v1932 = vld [vmem:[#allocation2 + $0xa0] sm:$0xff]
      %v1933 = vld [vmem:[#allocation2 + $0xa8] sm:$0xff]
      %v1934 = vld [vmem:[#allocation2 + $0xb0] sm:$0xff]
      %v1935 = vld [vmem:[#allocation2 + $0xb8] sm:$0xff]
      %v1936 = vld [vmem:[#allocation2 + $0xc0] sm:$0xff]
      %v1937 = vld [vmem:[#allocation2 + $0xc8] sm:$0xff]
      %v1938 = vld [vmem:[#allocation2 + $0xd0] sm:$0xff]
      %v1939 = vld [vmem:[#allocation2 + $0xd8] sm:$0xff]
      %v1940 = vld [vmem:[#allocation2 + $0xe0] sm:$0xff]
      %v1941 = vld [vmem:[#allocation2 + $0xe8] sm:$0xff]
      %v1942 = vld [vmem:[#allocation2 + $0xf0] sm:$0xff]
      %v1943 = vld [vmem:[#allocation2 + $0xf8] sm:$0xff]
      %1976 = vrot.lane.b32.xlu0 %v1912, 16
      %v1977 = vpop.permute.xlu0 %1976
      %1978 = vrot.lane.b32.xlu0 %v1913, 16
      %v1979 = vpop.permute.xlu0 %1978
      %1980 = vrot.lane.b32.xlu0 %v1914, 16
      %v1981 = vpop.permute.xlu0 %1980
      %1982 = vrot.lane.b32.xlu0 %v1915, 16
      %v1983 = vpop.permute.xlu0 %1982
      %1984 = vrot.lane.b32.xlu0 %v1916, 16
      %v1985 = vpop.permute.xlu0 %1984
      %1986 = vrot.lane.b32.xlu0 %v1917, 16
      %v1987 = vpop.permute.xlu0 %1986
      %1988 = vrot.lane.b32.xlu0 %v1918, 16
      %v1989 = vpop.permute.xlu0 %1988
      %1990 = vrot.lane.b32.xlu0 %v1919, 16
      %v1991 = vpop.permute.xlu0 %1990
      %1992 = vrot.lane.b32.xlu0 %v1920, 16
      %v1993 = vpop.permute.xlu0 %1992
      %1994 = vrot.lane.b32.xlu0 %v1921, 16
      %v1995 = vpop.permute.xlu0 %1994
      %1996 = vrot.lane.b32.xlu0 %v1922, 16
      %v1997 = vpop.permute.xlu0 %1996
      %1998 = vrot.lane.b32.xlu0 %v1923, 16
      %v1999 = vpop.permute.xlu0 %1998
      %2000 = vrot.lane.b32.xlu0 %v1924, 16
      %v2001 = vpop.permute.xlu0 %2000
      %2002 = vrot.lane.b32.xlu0 %v1925, 16
      %v2003 = vpop.permute.xlu0 %2002
      %2004 = vrot.lane.b32.xlu0 %v1926, 16
      %v2005 = vpop.permute.xlu0 %2004
      %2006 = vrot.lane.b32.xlu0 %v1927, 16
      %v2007 = vpop.permute.xlu0 %2006
      %2008 = vrot.lane.b32.xlu0 %v1928, 16
      %v2009 = vpop.permute.xlu0 %2008
      %2010 = vrot.lane.b32.xlu0 %v1929, 16
      %v2011 = vpop.permute.xlu0 %2010
      %2012 = vrot.lane.b32.xlu0 %v1930, 16
      %v2013 = vpop.permute.xlu0 %2012
      %2014 = vrot.lane.b32.xlu0 %v1931, 16
      %v2015 = vpop.permute.xlu0 %2014
      %2016 = vrot.lane.b32.xlu0 %v1932, 16
      %v2017 = vpop.permute.xlu0 %2016
      %2018 = vrot.lane.b32.xlu0 %v1933, 16
      %v2019 = vpop.permute.xlu0 %2018
      %2020 = vrot.lane.b32.xlu0 %v1934, 16
      %v2021 = vpop.permute.xlu0 %2020
      %2022 = vrot.lane.b32.xlu0 %v1935, 16
      %v2023 = vpop.permute.xlu0 %2022
      %2024 = vrot.lane.b32.xlu0 %v1936, 16
      %v2025 = vpop.permute.xlu0 %2024
      %2026 = vrot.lane.b32.xlu0 %v1937, 16
      %v2027 = vpop.permute.xlu0 %2026
      %2028 = vrot.lane.b32.xlu0 %v1938, 16
      %v2029 = vpop.permute.xlu0 %2028
      %2030 = vrot.lane.b32.xlu0 %v1939, 16
      %v2031 = vpop.permute.xlu0 %2030
      %2032 = vrot.lane.b32.xlu0 %v1940, 16
      %v2033 = vpop.permute.xlu0 %2032
      %2034 = vrot.lane.b32.xlu0 %v1941, 16
      %v2035 = vpop.permute.xlu0 %2034
      %2036 = vrot.lane.b32.xlu0 %v1942, 16
      %v2037 = vpop.permute.xlu0 %2036
      %2038 = vrot.lane.b32.xlu0 %v1943, 16
      %v2039 = vpop.permute.xlu0 %2038
      %vm2072 = vcmask 162944
      %2073 = vst.msk [vmem:[#allocation4] sm:$0xff] %vm2072, %v1977
      %2074 = vst.msk [vmem:[#allocation4 + $0x8] sm:$0xff] %vm2072, %v1979
      %2075 = vst.msk [vmem:[#allocation4 + $0x10] sm:$0xff] %vm2072, %v1981
      %2076 = vst.msk [vmem:[#allocation4 + $0x18] sm:$0xff] %vm2072, %v1983
      %2077 = vst.msk [vmem:[#allocation4 + $0x20] sm:$0xff] %vm2072, %v1985
      %2078 = vst.msk [vmem:[#allocation4 + $0x28] sm:$0xff] %vm2072, %v1987
      %2079 = vst.msk [vmem:[#allocation4 + $0x30] sm:$0xff] %vm2072, %v1989
      %2080 = vst.msk [vmem:[#allocation4 + $0x38] sm:$0xff] %vm2072, %v1991
      %2081 = vst.msk [vmem:[#allocation4 + $0x40] sm:$0xff] %vm2072, %v1993
      %2082 = vst.msk [vmem:[#allocation4 + $0x48] sm:$0xff] %vm2072, %v1995
      %2083 = vst.msk [vmem:[#allocation4 + $0x50] sm:$0xff] %vm2072, %v1997
      %2084 = vst.msk [vmem:[#allocation4 + $0x58] sm:$0xff] %vm2072, %v1999
      %2085 = vst.msk [vmem:[#allocation4 + $0x60] sm:$0xff] %vm2072, %v2001
      %2086 = vst.msk [vmem:[#allocation4 + $0x68] sm:$0xff] %vm2072, %v2003
      %2087 = vst.msk [vmem:[#allocation4 + $0x70] sm:$0xff] %vm2072, %v2005
      %2088 = vst.msk [vmem:[#allocation4 + $0x78] sm:$0xff] %vm2072, %v2007
      %2089 = vst.msk [vmem:[#allocation4 + $0x80] sm:$0xff] %vm2072, %v2009
      %2090 = vst.msk [vmem:[#allocation4 + $0x88] sm:$0xff] %vm2072, %v2011
      %2091 = vst.msk [vmem:[#allocation4 + $0x90] sm:$0xff] %vm2072, %v2013
      %2092 = vst.msk [vmem:[#allocation4 + $0x98] sm:$0xff] %vm2072, %v2015
      %2093 = vst.msk [vmem:[#allocation4 + $0xa0] sm:$0xff] %vm2072, %v2017
      %2094 = vst.msk [vmem:[#allocation4 + $0xa8] sm:$0xff] %vm2072, %v2019
      %2095 = vst.msk [vmem:[#allocation4 + $0xb0] sm:$0xff] %vm2072, %v2021
      %2096 = vst.msk [vmem:[#allocation4 + $0xb8] sm:$0xff] %vm2072, %v2023
      %2097 = vst.msk [vmem:[#allocation4 + $0xc0] sm:$0xff] %vm2072, %v2025
      %2098 = vst.msk [vmem:[#allocation4 + $0xc8] sm:$0xff] %vm2072, %v2027
      %2099 = vst.msk [vmem:[#allocation4 + $0xd0] sm:$0xff] %vm2072, %v2029
      %2100 = vst.msk [vmem:[#allocation4 + $0xd8] sm:$0xff] %vm2072, %v2031
      %2101 = vst.msk [vmem:[#allocation4 + $0xe0] sm:$0xff] %vm2072, %v2033
      %2102 = vst.msk [vmem:[#allocation4 + $0xe8] sm:$0xff] %vm2072, %v2035
      %2103 = vst.msk [vmem:[#allocation4 + $0xf0] sm:$0xff] %vm2072, %v2037
      %2104 = vst.msk [vmem:[#allocation4 + $0xf8] sm:$0xff] %vm2072, %v2039
      %vm2105 = vcmask 188576
      %2106 = vst.msk [vmem:[#allocation4 + $0xff] sm:$0x1] %vm2105, 0.0
      %v2107 = vld [vmem:[#allocation2 + $0x1] sm:$0xff]
      %v2108 = vld [vmem:[#allocation2 + $0x9] sm:$0xff]
      %v2109 = vld [vmem:[#allocation2 + $0x11] sm:$0xff]
      %v2110 = vld [vmem:[#allocation2 + $0x19] sm:$0xff]
      %v2111 = vld [vmem:[#allocation2 + $0x21] sm:$0xff]
      %v2112 = vld [vmem:[#allocation2 + $0x29] sm:$0xff]
      %v2113 = vld [vmem:[#allocation2 + $0x31] sm:$0xff]
      %v2114 = vld [vmem:[#allocation2 + $0x39] sm:$0xff]
      %v2115 = vld [vmem:[#allocation2 + $0x41] sm:$0xff]
      %v2116 = vld [vmem:[#allocation2 + $0x49] sm:$0xff]
      %v2117 = vld [vmem:[#allocation2 + $0x51] sm:$0xff]
      %v2118 = vld [vmem:[#allocation2 + $0x59] sm:$0xff]
      %v2119 = vld [vmem:[#allocation2 + $0x61] sm:$0xff]
      %v2120 = vld [vmem:[#allocation2 + $0x69] sm:$0xff]
      %v2121 = vld [vmem:[#allocation2 + $0x71] sm:$0xff]
      %v2122 = vld [vmem:[#allocation2 + $0x79] sm:$0xff]
      %v2123 = vld [vmem:[#allocation2 + $0x81] sm:$0xff]
      %v2124 = vld [vmem:[#allocation2 + $0x89] sm:$0xff]
      %v2125 = vld [vmem:[#allocation2 + $0x91] sm:$0xff]
      %v2126 = vld [vmem:[#allocation2 + $0x99] sm:$0xff]
      %v2127 = vld [vmem:[#allocation2 + $0xa1] sm:$0xff]
      %v2128 = vld [vmem:[#allocation2 + $0xa9] sm:$0xff]
      %v2129 = vld [vmem:[#allocation2 + $0xb1] sm:$0xff]
      %v2130 = vld [vmem:[#allocation2 + $0xb9] sm:$0xff]
      %v2131 = vld [vmem:[#allocation2 + $0xc1] sm:$0xff]
      %v2132 = vld [vmem:[#allocation2 + $0xc9] sm:$0xff]
      %v2133 = vld [vmem:[#allocation2 + $0xd1] sm:$0xff]
      %v2134 = vld [vmem:[#allocation2 + $0xd9] sm:$0xff]
      %v2135 = vld [vmem:[#allocation2 + $0xe1] sm:$0xff]
      %v2136 = vld [vmem:[#allocation2 + $0xe9] sm:$0xff]
      %v2137 = vld [vmem:[#allocation2 + $0xf1] sm:$0xff]
      %v2138 = vld [vmem:[#allocation2 + $0xf9] sm:$0x7f]
      %v2139 = vld [vmem:[%s8] sm:$0xff]
      %v2140 = vld [vmem:[%s8 + $0x8] sm:$0xff]
      %v2141 = vld [vmem:[%s8 + $0x10] sm:$0xff]
      %v2142 = vld [vmem:[%s8 + $0x18] sm:$0xff]
      %v2143 = vld [vmem:[%s8 + $0x20] sm:$0xff]
      %v2144 = vld [vmem:[%s8 + $0x28] sm:$0xff]
      %v2145 = vld [vmem:[%s8 + $0x30] sm:$0xff]
      %v2146 = vld [vmem:[%s8 + $0x38] sm:$0xff]
      %v2147 = vld [vmem:[%s8 + $0x40] sm:$0xff]
      %v2148 = vld [vmem:[%s8 + $0x48] sm:$0xff]
      %v2149 = vld [vmem:[%s8 + $0x50] sm:$0xff]
      %v2150 = vld [vmem:[%s8 + $0x58] sm:$0xff]
      %v2151 = vld [vmem:[%s8 + $0x60] sm:$0xff]
      %v2152 = vld [vmem:[%s8 + $0x68] sm:$0xff]
      %v2153 = vld [vmem:[%s8 + $0x70] sm:$0xff]
      %v2154 = vld [vmem:[%s8 + $0x78] sm:$0xff]
      %v2155 = vld [vmem:[%s8 + $0x80] sm:$0xff]
      %v2156 = vld [vmem:[%s8 + $0x88] sm:$0xff]
      %v2157 = vld [vmem:[%s8 + $0x90] sm:$0xff]
      %v2158 = vld [vmem:[%s8 + $0x98] sm:$0xff]
      %v2159 = vld [vmem:[%s8 + $0xa0] sm:$0xff]
      %v2160 = vld [vmem:[%s8 + $0xa8] sm:$0xff]
      %v2161 = vld [vmem:[%s8 + $0xb0] sm:$0xff]
      %v2162 = vld [vmem:[%s8 + $0xb8] sm:$0xff]
      %v2163 = vld [vmem:[%s8 + $0xc0] sm:$0xff]
      %v2164 = vld [vmem:[%s8 + $0xc8] sm:$0xff]
      %v2165 = vld [vmem:[%s8 + $0xd0] sm:$0xff]
      %v2166 = vld [vmem:[%s8 + $0xd8] sm:$0xff]
      %v2167 = vld [vmem:[%s8 + $0xe0] sm:$0xff]
      %v2168 = vld [vmem:[%s8 + $0xe8] sm:$0xff]
      %v2169 = vld [vmem:[%s8 + $0xf0] sm:$0xff]
      %v2170 = vld [vmem:[%s8 + $0xf8] sm:$0x7f]
      %2172 = vset.pattern.permute.xlu0 0
      %2173 = vperm.xlu0 %2172, %v2139
      %v2174 = vpop.permute.xlu0 %2173
      %2177 = vset.pattern.permute.xlu0 0
      %2178 = vperm.xlu0 %2177, %v2140
      %v2179 = vpop.permute.xlu0 %2178
      %2182 = vset.pattern.permute.xlu0 0
      %2183 = vperm.xlu0 %2182, %v2141
      %v2184 = vpop.permute.xlu0 %2183
      %2187 = vset.pattern.permute.xlu0 0
      %2188 = vperm.xlu0 %2187, %v2142
      %v2189 = vpop.permute.xlu0 %2188
      %2192 = vset.pattern.permute.xlu0 0
      %2193 = vperm.xlu0 %2192, %v2143
      %v2194 = vpop.permute.xlu0 %2193
      %2197 = vset.pattern.permute.xlu0 0
      %2198 = vperm.xlu0 %2197, %v2144
      %v2199 = vpop.permute.xlu0 %2198
      %2202 = vset.pattern.permute.xlu0 0
      %2203 = vperm.xlu0 %2202, %v2145
      %v2204 = vpop.permute.xlu0 %2203
      %2207 = vset.pattern.permute.xlu0 0
      %2208 = vperm.xlu0 %2207, %v2146
      %v2209 = vpop.permute.xlu0 %2208
      %2212 = vset.pattern.permute.xlu0 0
      %2213 = vperm.xlu0 %2212, %v2147
      %v2214 = vpop.permute.xlu0 %2213
      %2217 = vset.pattern.permute.xlu0 0
      %2218 = vperm.xlu0 %2217, %v2148
      %v2219 = vpop.permute.xlu0 %2218
      %2222 = vset.pattern.permute.xlu0 0
      %2223 = vperm.xlu0 %2222, %v2149
      %v2224 = vpop.permute.xlu0 %2223
      %2227 = vset.pattern.permute.xlu0 0
      %2228 = vperm.xlu0 %2227, %v2150
      %v2229 = vpop.permute.xlu0 %2228
      %2232 = vset.pattern.permute.xlu0 0
      %2233 = vperm.xlu0 %2232, %v2151
      %v2234 = vpop.permute.xlu0 %2233
      %2237 = vset.pattern.permute.xlu0 0
      %2238 = vperm.xlu0 %2237, %v2152
      %v2239 = vpop.permute.xlu0 %2238
      %2242 = vset.pattern.permute.xlu0 0
      %2243 = vperm.xlu0 %2242, %v2153
      %v2244 = vpop.permute.xlu0 %2243
      %2247 = vset.pattern.permute.xlu0 0
      %2248 = vperm.xlu0 %2247, %v2154
      %v2249 = vpop.permute.xlu0 %2248
      %2252 = vset.pattern.permute.xlu0 0
      %2253 = vperm.xlu0 %2252, %v2155
      %v2254 = vpop.permute.xlu0 %2253
      %2257 = vset.pattern.permute.xlu0 0
      %2258 = vperm.xlu0 %2257, %v2156
      %v2259 = vpop.permute.xlu0 %2258
      %2262 = vset.pattern.permute.xlu0 0
      %2263 = vperm.xlu0 %2262, %v2157
      %v2264 = vpop.permute.xlu0 %2263
      %2267 = vset.pattern.permute.xlu0 0
      %2268 = vperm.xlu0 %2267, %v2158
      %v2269 = vpop.permute.xlu0 %2268
      %2272 = vset.pattern.permute.xlu0 0
      %2273 = vperm.xlu0 %2272, %v2159
      %v2274 = vpop.permute.xlu0 %2273
      %2277 = vset.pattern.permute.xlu0 0
      %2278 = vperm.xlu0 %2277, %v2160
      %v2279 = vpop.permute.xlu0 %2278
      %2282 = vset.pattern.permute.xlu0 0
      %2283 = vperm.xlu0 %2282, %v2161
      %v2284 = vpop.permute.xlu0 %2283
      %2287 = vset.pattern.permute.xlu0 0
      %2288 = vperm.xlu0 %2287, %v2162
      %v2289 = vpop.permute.xlu0 %2288
      %2292 = vset.pattern.permute.xlu0 0
      %2293 = vperm.xlu0 %2292, %v2163
      %v2294 = vpop.permute.xlu0 %2293
      %2297 = vset.pattern.permute.xlu0 0
      %2298 = vperm.xlu0 %2297, %v2164
      %v2299 = vpop.permute.xlu0 %2298
      %2302 = vset.pattern.permute.xlu0 0
      %2303 = vperm.xlu0 %2302, %v2165
      %v2304 = vpop.permute.xlu0 %2303
      %2307 = vset.pattern.permute.xlu0 0
      %2308 = vperm.xlu0 %2307, %v2166
      %v2309 = vpop.permute.xlu0 %2308
      %2312 = vset.pattern.permute.xlu0 0
      %2313 = vperm.xlu0 %2312, %v2167
      %v2314 = vpop.permute.xlu0 %2313
      %2317 = vset.pattern.permute.xlu0 0
      %2318 = vperm.xlu0 %2317, %v2168
      %v2319 = vpop.permute.xlu0 %2318
      %2322 = vset.pattern.permute.xlu0 0
      %2323 = vperm.xlu0 %2322, %v2169
      %v2324 = vpop.permute.xlu0 %2323
      %2327 = vset.pattern.permute.xlu0 0
      %2328 = vperm.xlu0 %2327, %v2170
      %v2329 = vpop.permute.xlu0 %2328
      %v2331 = vmul.f32 %v2107, %v2174
      %v2332 = vmul.f32 %v2108, %v2179
      %v2333 = vmul.f32 %v2109, %v2184
      %v2334 = vmul.f32 %v2110, %v2189
      %v2335 = vmul.f32 %v2111, %v2194
      %v2336 = vmul.f32 %v2112, %v2199
      %v2337 = vmul.f32 %v2113, %v2204
      %v2338 = vmul.f32 %v2114, %v2209
      %v2339 = vmul.f32 %v2115, %v2214
      %v2340 = vmul.f32 %v2116, %v2219
      %v2341 = vmul.f32 %v2117, %v2224
      %v2342 = vmul.f32 %v2118, %v2229
      %v2343 = vmul.f32 %v2119, %v2234
      %v2344 = vmul.f32 %v2120, %v2239
      %v2345 = vmul.f32 %v2121, %v2244
      %v2346 = vmul.f32 %v2122, %v2249
      %v2347 = vmul.f32 %v2123, %v2254
      %v2348 = vmul.f32 %v2124, %v2259
      %v2349 = vmul.f32 %v2125, %v2264
      %v2350 = vmul.f32 %v2126, %v2269
      %v2351 = vmul.f32 %v2127, %v2274
      %v2352 = vmul.f32 %v2128, %v2279
      %v2353 = vmul.f32 %v2129, %v2284
      %v2354 = vmul.f32 %v2130, %v2289
      %v2355 = vmul.f32 %v2131, %v2294
      %v2356 = vmul.f32 %v2132, %v2299
      %v2357 = vmul.f32 %v2133, %v2304
      %v2358 = vmul.f32 %v2134, %v2309
      %v2359 = vmul.f32 %v2135, %v2314
      %v2360 = vmul.f32 %v2136, %v2319
      %v2361 = vmul.f32 %v2137, %v2324
      %v2362 = vmul.f32 %v2138, %v2329
      %2395 = vrot.lane.b32.xlu0 %v2331, 20
      %v2396 = vpop.permute.xlu0 %2395
      %2397 = vrot.lane.b32.xlu0 %v2332, 20
      %v2398 = vpop.permute.xlu0 %2397
      %2399 = vrot.lane.b32.xlu0 %v2333, 20
      %v2400 = vpop.permute.xlu0 %2399
      %2401 = vrot.lane.b32.xlu0 %v2334, 20
      %v2402 = vpop.permute.xlu0 %2401
      %2403 = vrot.lane.b32.xlu0 %v2335, 20
      %v2404 = vpop.permute.xlu0 %2403
      %2405 = vrot.lane.b32.xlu0 %v2336, 20
      %v2406 = vpop.permute.xlu0 %2405
      %2407 = vrot.lane.b32.xlu0 %v2337, 20
      %v2408 = vpop.permute.xlu0 %2407
      %2409 = vrot.lane.b32.xlu0 %v2338, 20
      %v2410 = vpop.permute.xlu0 %2409
      %2411 = vrot.lane.b32.xlu0 %v2339, 20
      %v2412 = vpop.permute.xlu0 %2411
      %2413 = vrot.lane.b32.xlu0 %v2340, 20
      %v2414 = vpop.permute.xlu0 %2413
      %2415 = vrot.lane.b32.xlu0 %v2341, 20
      %v2416 = vpop.permute.xlu0 %2415
      %2417 = vrot.lane.b32.xlu0 %v2342, 20
      %v2418 = vpop.permute.xlu0 %2417
      %2419 = vrot.lane.b32.xlu0 %v2343, 20
      %v2420 = vpop.permute.xlu0 %2419
      %2421 = vrot.lane.b32.xlu0 %v2344, 20
      %v2422 = vpop.permute.xlu0 %2421
      %2423 = vrot.lane.b32.xlu0 %v2345, 20
      %v2424 = vpop.permute.xlu0 %2423
      %2425 = vrot.lane.b32.xlu0 %v2346, 20
      %v2426 = vpop.permute.xlu0 %2425
      %2427 = vrot.lane.b32.xlu0 %v2347, 20
      %v2428 = vpop.permute.xlu0 %2427
      %2429 = vrot.lane.b32.xlu0 %v2348, 20
      %v2430 = vpop.permute.xlu0 %2429
      %2431 = vrot.lane.b32.xlu0 %v2349, 20
      %v2432 = vpop.permute.xlu0 %2431
      %2433 = vrot.lane.b32.xlu0 %v2350, 20
      %v2434 = vpop.permute.xlu0 %2433
      %2435 = vrot.lane.b32.xlu0 %v2351, 20
      %v2436 = vpop.permute.xlu0 %2435
      %2437 = vrot.lane.b32.xlu0 %v2352, 20
      %v2438 = vpop.permute.xlu0 %2437
      %2439 = vrot.lane.b32.xlu0 %v2353, 20
      %v2440 = vpop.permute.xlu0 %2439
      %2441 = vrot.lane.b32.xlu0 %v2354, 20
      %v2442 = vpop.permute.xlu0 %2441
      %2443 = vrot.lane.b32.xlu0 %v2355, 20
      %v2444 = vpop.permute.xlu0 %2443
      %2445 = vrot.lane.b32.xlu0 %v2356, 20
      %v2446 = vpop.permute.xlu0 %2445
      %2447 = vrot.lane.b32.xlu0 %v2357, 20
      %v2448 = vpop.permute.xlu0 %2447
      %2449 = vrot.lane.b32.xlu0 %v2358, 20
      %v2450 = vpop.permute.xlu0 %2449
      %2451 = vrot.lane.b32.xlu0 %v2359, 20
      %v2452 = vpop.permute.xlu0 %2451
      %2453 = vrot.lane.b32.xlu0 %v2360, 20
      %v2454 = vpop.permute.xlu0 %2453
      %2455 = vrot.lane.b32.xlu0 %v2361, 20
      %v2456 = vpop.permute.xlu0 %2455
      %2457 = vrot.lane.b32.xlu0 %v2362, 20
      %v2458 = vpop.permute.xlu0 %2457
      %vm2491 = vcmask 195744
      %2492 = vst.msk [vmem:[#allocation4] sm:$0xff] %vm2491, %v2396
      %2493 = vst.msk [vmem:[#allocation4 + $0x8] sm:$0xff] %vm2491, %v2398
      %2494 = vst.msk [vmem:[#allocation4 + $0x10] sm:$0xff] %vm2491, %v2400
      %2495 = vst.msk [vmem:[#allocation4 + $0x18] sm:$0xff] %vm2491, %v2402
      %2496 = vst.msk [vmem:[#allocation4 + $0x20] sm:$0xff] %vm2491, %v2404
      %2497 = vst.msk [vmem:[#allocation4 + $0x28] sm:$0xff] %vm2491, %v2406
      %2498 = vst.msk [vmem:[#allocation4 + $0x30] sm:$0xff] %vm2491, %v2408
      %2499 = vst.msk [vmem:[#allocation4 + $0x38] sm:$0xff] %vm2491, %v2410
      %2500 = vst.msk [vmem:[#allocation4 + $0x40] sm:$0xff] %vm2491, %v2412
      %2501 = vst.msk [vmem:[#allocation4 + $0x48] sm:$0xff] %vm2491, %v2414
      %2502 = vst.msk [vmem:[#allocation4 + $0x50] sm:$0xff] %vm2491, %v2416
      %2503 = vst.msk [vmem:[#allocation4 + $0x58] sm:$0xff] %vm2491, %v2418
      %2504 = vst.msk [vmem:[#allocation4 + $0x60] sm:$0xff] %vm2491, %v2420
      %2505 = vst.msk [vmem:[#allocation4 + $0x68] sm:$0xff] %vm2491, %v2422
      %2506 = vst.msk [vmem:[#allocation4 + $0x70] sm:$0xff] %vm2491, %v2424
      %2507 = vst.msk [vmem:[#allocation4 + $0x78] sm:$0xff] %vm2491, %v2426
      %2508 = vst.msk [vmem:[#allocation4 + $0x80] sm:$0xff] %vm2491, %v2428
      %2509 = vst.msk [vmem:[#allocation4 + $0x88] sm:$0xff] %vm2491, %v2430
      %2510 = vst.msk [vmem:[#allocation4 + $0x90] sm:$0xff] %vm2491, %v2432
      %2511 = vst.msk [vmem:[#allocation4 + $0x98] sm:$0xff] %vm2491, %v2434
      %2512 = vst.msk [vmem:[#allocation4 + $0xa0] sm:$0xff] %vm2491, %v2436
      %2513 = vst.msk [vmem:[#allocation4 + $0xa8] sm:$0xff] %vm2491, %v2438
      %2514 = vst.msk [vmem:[#allocation4 + $0xb0] sm:$0xff] %vm2491, %v2440
      %2515 = vst.msk [vmem:[#allocation4 + $0xb8] sm:$0xff] %vm2491, %v2442
      %2516 = vst.msk [vmem:[#allocation4 + $0xc0] sm:$0xff] %vm2491, %v2444
      %2517 = vst.msk [vmem:[#allocation4 + $0xc8] sm:$0xff] %vm2491, %v2446
      %2518 = vst.msk [vmem:[#allocation4 + $0xd0] sm:$0xff] %vm2491, %v2448
      %2519 = vst.msk [vmem:[#allocation4 + $0xd8] sm:$0xff] %vm2491, %v2450
      %2520 = vst.msk [vmem:[#allocation4 + $0xe0] sm:$0xff] %vm2491, %v2452
      %2521 = vst.msk [vmem:[#allocation4 + $0xe8] sm:$0xff] %vm2491, %v2454
      %2522 = vst.msk [vmem:[#allocation4 + $0xf0] sm:$0xff] %vm2491, %v2456
      %vm2523 = vcmask 194720
      %2524 = vst.msk [vmem:[#allocation4 + $0xf8] sm:$0x7f] %vm2523, %v2458
      %vm2525 = vcmask 228544
      %2526 = vst.msk [vmem:[#allocation4 + $0xf1] sm:$0xff] %vm2525, 0.0
      %vm2527 = vcmask 227520
      %2528 = vst.msk [vmem:[#allocation4 + $0xf9] sm:$0x7f] %vm2527, 0.0
      %v2529 = vld [vmem:[#allocation2 + $0xf] sm:$0xff]
      %v2530 = vld [vmem:[#allocation2 + $0x17] sm:$0xff]
      %v2531 = vld [vmem:[#allocation2 + $0x1f] sm:$0xff]
      %v2532 = vld [vmem:[#allocation2 + $0x27] sm:$0xff]
      %v2533 = vld [vmem:[#allocation2 + $0x2f] sm:$0xff]
      %v2534 = vld [vmem:[#allocation2 + $0x37] sm:$0xff]
      %v2535 = vld [vmem:[#allocation2 + $0x3f] sm:$0xff]
      %v2536 = vld [vmem:[#allocation2 + $0x47] sm:$0xff]
      %v2537 = vld [vmem:[#allocation2 + $0x4f] sm:$0xff]
      %v2538 = vld [vmem:[#allocation2 + $0x57] sm:$0xff]
      %v2539 = vld [vmem:[#allocation2 + $0x5f] sm:$0xff]
      %v2540 = vld [vmem:[#allocation2 + $0x67] sm:$0xff]
      %v2541 = vld [vmem:[#allocation2 + $0x6f] sm:$0xff]
      %v2542 = vld [vmem:[#allocation2 + $0x77] sm:$0xff]
      %v2543 = vld [vmem:[#allocation2 + $0x7f] sm:$0xff]
      %v2544 = vld [vmem:[#allocation2 + $0x87] sm:$0xff]
      %v2545 = vld [vmem:[#allocation2 + $0x8f] sm:$0xff]
      %v2546 = vld [vmem:[#allocation2 + $0x97] sm:$0xff]
      %v2547 = vld [vmem:[#allocation2 + $0x9f] sm:$0xff]
      %v2548 = vld [vmem:[#allocation2 + $0xa7] sm:$0xff]
      %v2549 = vld [vmem:[#allocation2 + $0xaf] sm:$0xff]
      %v2550 = vld [vmem:[#allocation2 + $0xb7] sm:$0xff]
      %v2551 = vld [vmem:[#allocation2 + $0xbf] sm:$0xff]
      %v2552 = vld [vmem:[#allocation2 + $0xc7] sm:$0xff]
      %v2553 = vld [vmem:[#allocation2 + $0xcf] sm:$0xff]
      %v2554 = vld [vmem:[#allocation2 + $0xd7] sm:$0xff]
      %v2555 = vld [vmem:[#allocation2 + $0xdf] sm:$0xff]
      %v2556 = vld [vmem:[#allocation2 + $0xe7] sm:$0xff]
      %v2557 = vld [vmem:[#allocation2 + $0xef] sm:$0xff]
      %v2558 = vld [vmem:[#allocation2 + $0xf7] sm:$0xff]
      %v2559 = vld [vmem:[#allocation2 + $0xff] sm:$0x1]
      %v2560 = vld [vmem:[%s7] sm:$0xff]
      %v2561 = vld [vmem:[%s7 + $0x8] sm:$0xff]
      %v2562 = vld [vmem:[%s7 + $0x10] sm:$0xff]
      %v2563 = vld [vmem:[%s7 + $0x18] sm:$0xff]
      %v2564 = vld [vmem:[%s7 + $0x20] sm:$0xff]
      %v2565 = vld [vmem:[%s7 + $0x28] sm:$0xff]
      %v2566 = vld [vmem:[%s7 + $0x30] sm:$0xff]
      %v2567 = vld [vmem:[%s7 + $0x38] sm:$0xff]
      %v2568 = vld [vmem:[%s7 + $0x40] sm:$0xff]
      %v2569 = vld [vmem:[%s7 + $0x48] sm:$0xff]
      %v2570 = vld [vmem:[%s7 + $0x50] sm:$0xff]
      %v2571 = vld [vmem:[%s7 + $0x58] sm:$0xff]
      %v2572 = vld [vmem:[%s7 + $0x60] sm:$0xff]
      %v2573 = vld [vmem:[%s7 + $0x68] sm:$0xff]
      %v2574 = vld [vmem:[%s7 + $0x70] sm:$0xff]
      %v2575 = vld [vmem:[%s7 + $0x78] sm:$0xff]
      %v2576 = vld [vmem:[%s7 + $0x80] sm:$0xff]
      %v2577 = vld [vmem:[%s7 + $0x88] sm:$0xff]
      %v2578 = vld [vmem:[%s7 + $0x90] sm:$0xff]
      %v2579 = vld [vmem:[%s7 + $0x98] sm:$0xff]
      %v2580 = vld [vmem:[%s7 + $0xa0] sm:$0xff]
      %v2581 = vld [vmem:[%s7 + $0xa8] sm:$0xff]
      %v2582 = vld [vmem:[%s7 + $0xb0] sm:$0xff]
      %v2583 = vld [vmem:[%s7 + $0xb8] sm:$0xff]
      %v2584 = vld [vmem:[%s7 + $0xc0] sm:$0xff]
      %v2585 = vld [vmem:[%s7 + $0xc8] sm:$0xff]
      %v2586 = vld [vmem:[%s7 + $0xd0] sm:$0xff]
      %v2587 = vld [vmem:[%s7 + $0xd8] sm:$0xff]
      %v2588 = vld [vmem:[%s7 + $0xe0] sm:$0xff]
      %v2589 = vld [vmem:[%s7 + $0xe8] sm:$0xff]
      %v2590 = vld [vmem:[%s7 + $0xf0] sm:$0x1]
      %2592 = vset.pattern.permute.xlu0 0
      %2593 = vperm.xlu0 %2592, %v2560
      %v2594 = vpop.permute.xlu0 %2593
      %2597 = vset.pattern.permute.xlu0 0
      %2598 = vperm.xlu0 %2597, %v2561
      %v2599 = vpop.permute.xlu0 %2598
      %2602 = vset.pattern.permute.xlu0 0
      %2603 = vperm.xlu0 %2602, %v2562
      %v2604 = vpop.permute.xlu0 %2603
      %2607 = vset.pattern.permute.xlu0 0
      %2608 = vperm.xlu0 %2607, %v2563
      %v2609 = vpop.permute.xlu0 %2608
      %2612 = vset.pattern.permute.xlu0 0
      %2613 = vperm.xlu0 %2612, %v2564
      %v2614 = vpop.permute.xlu0 %2613
      %2617 = vset.pattern.permute.xlu0 0
      %2618 = vperm.xlu0 %2617, %v2565
      %v2619 = vpop.permute.xlu0 %2618
      %2622 = vset.pattern.permute.xlu0 0
      %2623 = vperm.xlu0 %2622, %v2566
      %v2624 = vpop.permute.xlu0 %2623
      %2627 = vset.pattern.permute.xlu0 0
      %2628 = vperm.xlu0 %2627, %v2567
      %v2629 = vpop.permute.xlu0 %2628
      %2632 = vset.pattern.permute.xlu0 0
      %2633 = vperm.xlu0 %2632, %v2568
      %v2634 = vpop.permute.xlu0 %2633
      %2637 = vset.pattern.permute.xlu0 0
      %2638 = vperm.xlu0 %2637, %v2569
      %v2639 = vpop.permute.xlu0 %2638
      %2642 = vset.pattern.permute.xlu0 0
      %2643 = vperm.xlu0 %2642, %v2570
      %v2644 = vpop.permute.xlu0 %2643
      %2647 = vset.pattern.permute.xlu0 0
      %2648 = vperm.xlu0 %2647, %v2571
      %v2649 = vpop.permute.xlu0 %2648
      %2652 = vset.pattern.permute.xlu0 0
      %2653 = vperm.xlu0 %2652, %v2572
      %v2654 = vpop.permute.xlu0 %2653
      %2657 = vset.pattern.permute.xlu0 0
      %2658 = vperm.xlu0 %2657, %v2573
      %v2659 = vpop.permute.xlu0 %2658
      %2662 = vset.pattern.permute.xlu0 0
      %2663 = vperm.xlu0 %2662, %v2574
      %v2664 = vpop.permute.xlu0 %2663
      %2667 = vset.pattern.permute.xlu0 0
      %2668 = vperm.xlu0 %2667, %v2575
      %v2669 = vpop.permute.xlu0 %2668
      %2672 = vset.pattern.permute.xlu0 0
      %2673 = vperm.xlu0 %2672, %v2576
      %v2674 = vpop.permute.xlu0 %2673
      %2677 = vset.pattern.permute.xlu0 0
      %2678 = vperm.xlu0 %2677, %v2577
      %v2679 = vpop.permute.xlu0 %2678
      %2682 = vset.pattern.permute.xlu0 0
      %2683 = vperm.xlu0 %2682, %v2578
      %v2684 = vpop.permute.xlu0 %2683
      %2687 = vset.pattern.permute.xlu0 0
      %2688 = vperm.xlu0 %2687, %v2579
      %v2689 = vpop.permute.xlu0 %2688
      %2692 = vset.pattern.permute.xlu0 0
      %2693 = vperm.xlu0 %2692, %v2580
      %v2694 = vpop.permute.xlu0 %2693
      %2697 = vset.pattern.permute.xlu0 0
      %2698 = vperm.xlu0 %2697, %v2581
      %v2699 = vpop.permute.xlu0 %2698
      %2702 = vset.pattern.permute.xlu0 0
      %2703 = vperm.xlu0 %2702, %v2582
      %v2704 = vpop.permute.xlu0 %2703
      %2707 = vset.pattern.permute.xlu0 0
      %2708 = vperm.xlu0 %2707, %v2583
      %v2709 = vpop.permute.xlu0 %2708
      %2712 = vset.pattern.permute.xlu0 0
      %2713 = vperm.xlu0 %2712, %v2584
      %v2714 = vpop.permute.xlu0 %2713
      %2717 = vset.pattern.permute.xlu0 0
      %2718 = vperm.xlu0 %2717, %v2585
      %v2719 = vpop.permute.xlu0 %2718
      %2722 = vset.pattern.permute.xlu0 0
      %2723 = vperm.xlu0 %2722, %v2586
      %v2724 = vpop.permute.xlu0 %2723
      %2727 = vset.pattern.permute.xlu0 0
      %2728 = vperm.xlu0 %2727, %v2587
      %v2729 = vpop.permute.xlu0 %2728
      %2732 = vset.pattern.permute.xlu0 0
      %2733 = vperm.xlu0 %2732, %v2588
      %v2734 = vpop.permute.xlu0 %2733
      %2737 = vset.pattern.permute.xlu0 0
      %2738 = vperm.xlu0 %2737, %v2589
      %v2739 = vpop.permute.xlu0 %2738
      %2742 = vset.pattern.permute.xlu0 0
      %2743 = vperm.xlu0 %2742, %v2590
      %v2744 = vpop.permute.xlu0 %2743
      %v2746 = vmul.f32 %v2529, %v2594
      %v2747 = vmul.f32 %v2530, %v2599
      %v2748 = vmul.f32 %v2531, %v2604
      %v2749 = vmul.f32 %v2532, %v2609
      %v2750 = vmul.f32 %v2533, %v2614
      %v2751 = vmul.f32 %v2534, %v2619
      %v2752 = vmul.f32 %v2535, %v2624
      %v2753 = vmul.f32 %v2536, %v2629
      %v2754 = vmul.f32 %v2537, %v2634
      %v2755 = vmul.f32 %v2538, %v2639
      %v2756 = vmul.f32 %v2539, %v2644
      %v2757 = vmul.f32 %v2540, %v2649
      %v2758 = vmul.f32 %v2541, %v2654
      %v2759 = vmul.f32 %v2542, %v2659
      %v2760 = vmul.f32 %v2543, %v2664
      %v2761 = vmul.f32 %v2544, %v2669
      %v2762 = vmul.f32 %v2545, %v2674
      %v2763 = vmul.f32 %v2546, %v2679
      %v2764 = vmul.f32 %v2547, %v2684
      %v2765 = vmul.f32 %v2548, %v2689
      %v2766 = vmul.f32 %v2549, %v2694
      %v2767 = vmul.f32 %v2550, %v2699
      %v2768 = vmul.f32 %v2551, %v2704
      %v2769 = vmul.f32 %v2552, %v2709
      %v2770 = vmul.f32 %v2553, %v2714
      %v2771 = vmul.f32 %v2554, %v2719
      %v2772 = vmul.f32 %v2555, %v2724
      %v2773 = vmul.f32 %v2556, %v2729
      %v2774 = vmul.f32 %v2557, %v2734
      %v2775 = vmul.f32 %v2558, %v2739
      %v2776 = vmul.f32 %v2559, %v2744
      %2808 = vrot.lane.b32.xlu0 %v2746, 24
      %v2809 = vpop.permute.xlu0 %2808
      %2810 = vrot.lane.b32.xlu0 %v2747, 24
      %v2811 = vpop.permute.xlu0 %2810
      %2812 = vrot.lane.b32.xlu0 %v2748, 24
      %v2813 = vpop.permute.xlu0 %2812
      %2814 = vrot.lane.b32.xlu0 %v2749, 24
      %v2815 = vpop.permute.xlu0 %2814
      %2816 = vrot.lane.b32.xlu0 %v2750, 24
      %v2817 = vpop.permute.xlu0 %2816
      %2818 = vrot.lane.b32.xlu0 %v2751, 24
      %v2819 = vpop.permute.xlu0 %2818
      %2820 = vrot.lane.b32.xlu0 %v2752, 24
      %v2821 = vpop.permute.xlu0 %2820
      %2822 = vrot.lane.b32.xlu0 %v2753, 24
      %v2823 = vpop.permute.xlu0 %2822
      %2824 = vrot.lane.b32.xlu0 %v2754, 24
      %v2825 = vpop.permute.xlu0 %2824
      %2826 = vrot.lane.b32.xlu0 %v2755, 24
      %v2827 = vpop.permute.xlu0 %2826
      %2828 = vrot.lane.b32.xlu0 %v2756, 24
      %v2829 = vpop.permute.xlu0 %2828
      %2830 = vrot.lane.b32.xlu0 %v2757, 24
      %v2831 = vpop.permute.xlu0 %2830
      %2832 = vrot.lane.b32.xlu0 %v2758, 24
      %v2833 = vpop.permute.xlu0 %2832
      %2834 = vrot.lane.b32.xlu0 %v2759, 24
      %v2835 = vpop.permute.xlu0 %2834
      %2836 = vrot.lane.b32.xlu0 %v2760, 24
      %v2837 = vpop.permute.xlu0 %2836
      %2838 = vrot.lane.b32.xlu0 %v2761, 24
      %v2839 = vpop.permute.xlu0 %2838
      %2840 = vrot.lane.b32.xlu0 %v2762, 24
      %v2841 = vpop.permute.xlu0 %2840
      %2842 = vrot.lane.b32.xlu0 %v2763, 24
      %v2843 = vpop.permute.xlu0 %2842
      %2844 = vrot.lane.b32.xlu0 %v2764, 24
      %v2845 = vpop.permute.xlu0 %2844
      %2846 = vrot.lane.b32.xlu0 %v2765, 24
      %v2847 = vpop.permute.xlu0 %2846
      %2848 = vrot.lane.b32.xlu0 %v2766, 24
      %v2849 = vpop.permute.xlu0 %2848
      %2850 = vrot.lane.b32.xlu0 %v2767, 24
      %v2851 = vpop.permute.xlu0 %2850
      %2852 = vrot.lane.b32.xlu0 %v2768, 24
      %v2853 = vpop.permute.xlu0 %2852
      %2854 = vrot.lane.b32.xlu0 %v2769, 24
      %v2855 = vpop.permute.xlu0 %2854
      %2856 = vrot.lane.b32.xlu0 %v2770, 24
      %v2857 = vpop.permute.xlu0 %2856
      %2858 = vrot.lane.b32.xlu0 %v2771, 24
      %v2859 = vpop.permute.xlu0 %2858
      %2860 = vrot.lane.b32.xlu0 %v2772, 24
      %v2861 = vpop.permute.xlu0 %2860
      %2862 = vrot.lane.b32.xlu0 %v2773, 24
      %v2863 = vpop.permute.xlu0 %2862
      %2864 = vrot.lane.b32.xlu0 %v2774, 24
      %v2865 = vpop.permute.xlu0 %2864
      %2866 = vrot.lane.b32.xlu0 %v2775, 24
      %v2867 = vpop.permute.xlu0 %2866
      %2868 = vrot.lane.b32.xlu0 %v2776, 24
      %v2869 = vpop.permute.xlu0 %2868
      %2901 = vst.msk [vmem:[#allocation4] sm:$0xff] %vm2525, %v2809
      %2902 = vst.msk [vmem:[#allocation4 + $0x8] sm:$0xff] %vm2525, %v2811
      %2903 = vst.msk [vmem:[#allocation4 + $0x10] sm:$0xff] %vm2525, %v2813
      %2904 = vst.msk [vmem:[#allocation4 + $0x18] sm:$0xff] %vm2525, %v2815
      %2905 = vst.msk [vmem:[#allocation4 + $0x20] sm:$0xff] %vm2525, %v2817
      %2906 = vst.msk [vmem:[#allocation4 + $0x28] sm:$0xff] %vm2525, %v2819
      %2907 = vst.msk [vmem:[#allocation4 + $0x30] sm:$0xff] %vm2525, %v2821
      %2908 = vst.msk [vmem:[#allocation4 + $0x38] sm:$0xff] %vm2525, %v2823
      %2909 = vst.msk [vmem:[#allocation4 + $0x40] sm:$0xff] %vm2525, %v2825
      %2910 = vst.msk [vmem:[#allocation4 + $0x48] sm:$0xff] %vm2525, %v2827
      %2911 = vst.msk [vmem:[#allocation4 + $0x50] sm:$0xff] %vm2525, %v2829
      %2912 = vst.msk [vmem:[#allocation4 + $0x58] sm:$0xff] %vm2525, %v2831
      %2913 = vst.msk [vmem:[#allocation4 + $0x60] sm:$0xff] %vm2525, %v2833
      %2914 = vst.msk [vmem:[#allocation4 + $0x68] sm:$0xff] %vm2525, %v2835
      %2915 = vst.msk [vmem:[#allocation4 + $0x70] sm:$0xff] %vm2525, %v2837
      %2916 = vst.msk [vmem:[#allocation4 + $0x78] sm:$0xff] %vm2525, %v2839
      %2917 = vst.msk [vmem:[#allocation4 + $0x80] sm:$0xff] %vm2525, %v2841
      %2918 = vst.msk [vmem:[#allocation4 + $0x88] sm:$0xff] %vm2525, %v2843
      %2919 = vst.msk [vmem:[#allocation4 + $0x90] sm:$0xff] %vm2525, %v2845
      %2920 = vst.msk [vmem:[#allocation4 + $0x98] sm:$0xff] %vm2525, %v2847
      %2921 = vst.msk [vmem:[#allocation4 + $0xa0] sm:$0xff] %vm2525, %v2849
      %2922 = vst.msk [vmem:[#allocation4 + $0xa8] sm:$0xff] %vm2525, %v2851
      %2923 = vst.msk [vmem:[#allocation4 + $0xb0] sm:$0xff] %vm2525, %v2853
      %2924 = vst.msk [vmem:[#allocation4 + $0xb8] sm:$0xff] %vm2525, %v2855
      %2925 = vst.msk [vmem:[#allocation4 + $0xc0] sm:$0xff] %vm2525, %v2857
      %2926 = vst.msk [vmem:[#allocation4 + $0xc8] sm:$0xff] %vm2525, %v2859
      %2927 = vst.msk [vmem:[#allocation4 + $0xd0] sm:$0xff] %vm2525, %v2861
      %2928 = vst.msk [vmem:[#allocation4 + $0xd8] sm:$0xff] %vm2525, %v2863
      %2929 = vst.msk [vmem:[#allocation4 + $0xe0] sm:$0xff] %vm2525, %v2865
      %2930 = vst.msk [vmem:[#allocation4 + $0xe8] sm:$0xff] %vm2525, %v2867
      %vm2931 = vcmask 221376
      %2932 = vst.msk [vmem:[#allocation4 + $0xf0] sm:$0x1] %vm2931, %v2869
      %vm2933 = vcmask 261344
      %2934 = vst.msk [vmem:[#allocation4 + $0xf0] sm:$0xff] %vm2933, 0.0
      %2935 = vst.msk [vmem:[#allocation4 + $0xf8] sm:$0xff] %vm2933, 0.0
      %v2936 = vld [vmem:[#allocation2 + $0x10] sm:$0xff]
      %v2937 = vld [vmem:[#allocation2 + $0x18] sm:$0xff]
      %v2938 = vld [vmem:[#allocation2 + $0x20] sm:$0xff]
      %v2939 = vld [vmem:[#allocation2 + $0x28] sm:$0xff]
      %v2940 = vld [vmem:[#allocation2 + $0x30] sm:$0xff]
      %v2941 = vld [vmem:[#allocation2 + $0x38] sm:$0xff]
      %v2942 = vld [vmem:[#allocation2 + $0x40] sm:$0xff]
      %v2943 = vld [vmem:[#allocation2 + $0x48] sm:$0xff]
      %v2944 = vld [vmem:[#allocation2 + $0x50] sm:$0xff]
      %v2945 = vld [vmem:[#allocation2 + $0x58] sm:$0xff]
      %v2946 = vld [vmem:[#allocation2 + $0x60] sm:$0xff]
      %v2947 = vld [vmem:[#allocation2 + $0x68] sm:$0xff]
      %v2948 = vld [vmem:[#allocation2 + $0x70] sm:$0xff]
      %v2949 = vld [vmem:[#allocation2 + $0x78] sm:$0xff]
      %v2950 = vld [vmem:[#allocation2 + $0x80] sm:$0xff]
      %v2951 = vld [vmem:[#allocation2 + $0x88] sm:$0xff]
      %v2952 = vld [vmem:[#allocation2 + $0x90] sm:$0xff]
      %v2953 = vld [vmem:[#allocation2 + $0x98] sm:$0xff]
      %v2954 = vld [vmem:[#allocation2 + $0xa0] sm:$0xff]
      %v2955 = vld [vmem:[#allocation2 + $0xa8] sm:$0xff]
      %v2956 = vld [vmem:[#allocation2 + $0xb0] sm:$0xff]
      %v2957 = vld [vmem:[#allocation2 + $0xb8] sm:$0xff]
      %v2958 = vld [vmem:[#allocation2 + $0xc0] sm:$0xff]
      %v2959 = vld [vmem:[#allocation2 + $0xc8] sm:$0xff]
      %v2960 = vld [vmem:[#allocation2 + $0xd0] sm:$0xff]
      %v2961 = vld [vmem:[#allocation2 + $0xd8] sm:$0xff]
      %v2962 = vld [vmem:[#allocation2 + $0xe0] sm:$0xff]
      %v2963 = vld [vmem:[#allocation2 + $0xe8] sm:$0xff]
      %v2964 = vld [vmem:[#allocation2 + $0xf0] sm:$0xff]
      %v2965 = vld [vmem:[#allocation2 + $0xf8] sm:$0xff]
      %2996 = vrot.lane.b32.xlu0 %v2936, 28
      %v2997 = vpop.permute.xlu0 %2996
      %2998 = vrot.lane.b32.xlu0 %v2937, 28
      %v2999 = vpop.permute.xlu0 %2998
      %3000 = vrot.lane.b32.xlu0 %v2938, 28
      %v3001 = vpop.permute.xlu0 %3000
      %3002 = vrot.lane.b32.xlu0 %v2939, 28
      %v3003 = vpop.permute.xlu0 %3002
      %3004 = vrot.lane.b32.xlu0 %v2940, 28
      %v3005 = vpop.permute.xlu0 %3004
      %3006 = vrot.lane.b32.xlu0 %v2941, 28
      %v3007 = vpop.permute.xlu0 %3006
      %3008 = vrot.lane.b32.xlu0 %v2942, 28
      %v3009 = vpop.permute.xlu0 %3008
      %3010 = vrot.lane.b32.xlu0 %v2943, 28
      %v3011 = vpop.permute.xlu0 %3010
      %3012 = vrot.lane.b32.xlu0 %v2944, 28
      %v3013 = vpop.permute.xlu0 %3012
      %3014 = vrot.lane.b32.xlu0 %v2945, 28
      %v3015 = vpop.permute.xlu0 %3014
      %3016 = vrot.lane.b32.xlu0 %v2946, 28
      %v3017 = vpop.permute.xlu0 %3016
      %3018 = vrot.lane.b32.xlu0 %v2947, 28
      %v3019 = vpop.permute.xlu0 %3018
      %3020 = vrot.lane.b32.xlu0 %v2948, 28
      %v3021 = vpop.permute.xlu0 %3020
      %3022 = vrot.lane.b32.xlu0 %v2949, 28
      %v3023 = vpop.permute.xlu0 %3022
      %3024 = vrot.lane.b32.xlu0 %v2950, 28
      %v3025 = vpop.permute.xlu0 %3024
      %3026 = vrot.lane.b32.xlu0 %v2951, 28
      %v3027 = vpop.permute.xlu0 %3026
      %3028 = vrot.lane.b32.xlu0 %v2952, 28
      %v3029 = vpop.permute.xlu0 %3028
      %3030 = vrot.lane.b32.xlu0 %v2953, 28
      %v3031 = vpop.permute.xlu0 %3030
      %3032 = vrot.lane.b32.xlu0 %v2954, 28
      %v3033 = vpop.permute.xlu0 %3032
      %3034 = vrot.lane.b32.xlu0 %v2955, 28
      %v3035 = vpop.permute.xlu0 %3034
      %3036 = vrot.lane.b32.xlu0 %v2956, 28
      %v3037 = vpop.permute.xlu0 %3036
      %3038 = vrot.lane.b32.xlu0 %v2957, 28
      %v3039 = vpop.permute.xlu0 %3038
      %3040 = vrot.lane.b32.xlu0 %v2958, 28
      %v3041 = vpop.permute.xlu0 %3040
      %3042 = vrot.lane.b32.xlu0 %v2959, 28
      %v3043 = vpop.permute.xlu0 %3042
      %3044 = vrot.lane.b32.xlu0 %v2960, 28
      %v3045 = vpop.permute.xlu0 %3044
      %3046 = vrot.lane.b32.xlu0 %v2961, 28
      %v3047 = vpop.permute.xlu0 %3046
      %3048 = vrot.lane.b32.xlu0 %v2962, 28
      %v3049 = vpop.permute.xlu0 %3048
      %3050 = vrot.lane.b32.xlu0 %v2963, 28
      %v3051 = vpop.permute.xlu0 %3050
      %3052 = vrot.lane.b32.xlu0 %v2964, 28
      %v3053 = vpop.permute.xlu0 %3052
      %3054 = vrot.lane.b32.xlu0 %v2965, 28
      %v3055 = vpop.permute.xlu0 %3054
      %3086 = vst.msk [vmem:[#allocation4] sm:$0xff] %vm2933, %v2997
      %3087 = vst.msk [vmem:[#allocation4 + $0x8] sm:$0xff] %vm2933, %v2999
      %3088 = vst.msk [vmem:[#allocation4 + $0x10] sm:$0xff] %vm2933, %v3001
      %3089 = vst.msk [vmem:[#allocation4 + $0x18] sm:$0xff] %vm2933, %v3003
      %3090 = vst.msk [vmem:[#allocation4 + $0x20] sm:$0xff] %vm2933, %v3005
      %3091 = vst.msk [vmem:[#allocation4 + $0x28] sm:$0xff] %vm2933, %v3007
      %3092 = vst.msk [vmem:[#allocation4 + $0x30] sm:$0xff] %vm2933, %v3009
      %3093 = vst.msk [vmem:[#allocation4 + $0x38] sm:$0xff] %vm2933, %v3011
      %3094 = vst.msk [vmem:[#allocation4 + $0x40] sm:$0xff] %vm2933, %v3013
      %3095 = vst.msk [vmem:[#allocation4 + $0x48] sm:$0xff] %vm2933, %v3015
      %3096 = vst.msk [vmem:[#allocation4 + $0x50] sm:$0xff] %vm2933, %v3017
      %3097 = vst.msk [vmem:[#allocation4 + $0x58] sm:$0xff] %vm2933, %v3019
      %3098 = vst.msk [vmem:[#allocation4 + $0x60] sm:$0xff] %vm2933, %v3021
      %3099 = vst.msk [vmem:[#allocation4 + $0x68] sm:$0xff] %vm2933, %v3023
      %3100 = vst.msk [vmem:[#allocation4 + $0x70] sm:$0xff] %vm2933, %v3025
      %3101 = vst.msk [vmem:[#allocation4 + $0x78] sm:$0xff] %vm2933, %v3027
      %3102 = vst.msk [vmem:[#allocation4 + $0x80] sm:$0xff] %vm2933, %v3029
      %3103 = vst.msk [vmem:[#allocation4 + $0x88] sm:$0xff] %vm2933, %v3031
      %3104 = vst.msk [vmem:[#allocation4 + $0x90] sm:$0xff] %vm2933, %v3033
      %3105 = vst.msk [vmem:[#allocation4 + $0x98] sm:$0xff] %vm2933, %v3035
      %3106 = vst.msk [vmem:[#allocation4 + $0xa0] sm:$0xff] %vm2933, %v3037
      %3107 = vst.msk [vmem:[#allocation4 + $0xa8] sm:$0xff] %vm2933, %v3039
      %3108 = vst.msk [vmem:[#allocation4 + $0xb0] sm:$0xff] %vm2933, %v3041
      %3109 = vst.msk [vmem:[#allocation4 + $0xb8] sm:$0xff] %vm2933, %v3043
      %3110 = vst.msk [vmem:[#allocation4 + $0xc0] sm:$0xff] %vm2933, %v3045
      %3111 = vst.msk [vmem:[#allocation4 + $0xc8] sm:$0xff] %vm2933, %v3047
      %3112 = vst.msk [vmem:[#allocation4 + $0xd0] sm:$0xff] %vm2933, %v3049
      %3113 = vst.msk [vmem:[#allocation4 + $0xd8] sm:$0xff] %vm2933, %v3051
      %3114 = vst.msk [vmem:[#allocation4 + $0xe0] sm:$0xff] %vm2933, %v3053
      %3115 = vst.msk [vmem:[#allocation4 + $0xe8] sm:$0xff] %vm2933, %v3055
      %vm3116 = vcmask 294144
      %3117 = vst.msk [vmem:[#allocation4 + $0xef] sm:$0xff] %vm3116, 0.0
      %3118 = vst.msk [vmem:[#allocation4 + $0xf7] sm:$0xff] %vm3116, 0.0
      %vm3119 = vcmask 286976
      %3120 = vst.msk [vmem:[#allocation4 + $0xff] sm:$0x1] %vm3119, 0.0
      %v3121 = vld [vmem:[#allocation2 + $0x11] sm:$0xff]
      %v3122 = vld [vmem:[#allocation2 + $0x19] sm:$0xff]
      %v3123 = vld [vmem:[#allocation2 + $0x21] sm:$0xff]
      %v3124 = vld [vmem:[#allocation2 + $0x29] sm:$0xff]
      %v3125 = vld [vmem:[#allocation2 + $0x31] sm:$0xff]
      %v3126 = vld [vmem:[#allocation2 + $0x39] sm:$0xff]
      %v3127 = vld [vmem:[#allocation2 + $0x41] sm:$0xff]
      %v3128 = vld [vmem:[#allocation2 + $0x49] sm:$0xff]
      %v3129 = vld [vmem:[#allocation2 + $0x51] sm:$0xff]
      %v3130 = vld [vmem:[#allocation2 + $0x59] sm:$0xff]
      %v3131 = vld [vmem:[#allocation2 + $0x61] sm:$0xff]
      %v3132 = vld [vmem:[#allocation2 + $0x69] sm:$0xff]
      %v3133 = vld [vmem:[#allocation2 + $0x71] sm:$0xff]
      %v3134 = vld [vmem:[#allocation2 + $0x79] sm:$0xff]
      %v3135 = vld [vmem:[#allocation2 + $0x81] sm:$0xff]
      %v3136 = vld [vmem:[#allocation2 + $0x89] sm:$0xff]
      %v3137 = vld [vmem:[#allocation2 + $0x91] sm:$0xff]
      %v3138 = vld [vmem:[#allocation2 + $0x99] sm:$0xff]
      %v3139 = vld [vmem:[#allocation2 + $0xa1] sm:$0xff]
      %v3140 = vld [vmem:[#allocation2 + $0xa9] sm:$0xff]
      %v3141 = vld [vmem:[#allocation2 + $0xb1] sm:$0xff]
      %v3142 = vld [vmem:[#allocation2 + $0xb9] sm:$0xff]
      %v3143 = vld [vmem:[#allocation2 + $0xc1] sm:$0xff]
      %v3144 = vld [vmem:[#allocation2 + $0xc9] sm:$0xff]
      %v3145 = vld [vmem:[#allocation2 + $0xd1] sm:$0xff]
      %v3146 = vld [vmem:[#allocation2 + $0xd9] sm:$0xff]
      %v3147 = vld [vmem:[#allocation2 + $0xe1] sm:$0xff]
      %v3148 = vld [vmem:[#allocation2 + $0xe9] sm:$0xff]
      %v3149 = vld [vmem:[#allocation2 + $0xf1] sm:$0xff]
      %v3150 = vld [vmem:[#allocation2 + $0xf9] sm:$0x7f]
      %v3151 = vld [vmem:[%s8] sm:$0xff]
      %v3152 = vld [vmem:[%s8 + $0x8] sm:$0xff]
      %v3153 = vld [vmem:[%s8 + $0x10] sm:$0xff]
      %v3154 = vld [vmem:[%s8 + $0x18] sm:$0xff]
      %v3155 = vld [vmem:[%s8 + $0x20] sm:$0xff]
      %v3156 = vld [vmem:[%s8 + $0x28] sm:$0xff]
      %v3157 = vld [vmem:[%s8 + $0x30] sm:$0xff]
      %v3158 = vld [vmem:[%s8 + $0x38] sm:$0xff]
      %v3159 = vld [vmem:[%s8 + $0x40] sm:$0xff]
      %v3160 = vld [vmem:[%s8 + $0x48] sm:$0xff]
      %v3161 = vld [vmem:[%s8 + $0x50] sm:$0xff]
      %v3162 = vld [vmem:[%s8 + $0x58] sm:$0xff]
      %v3163 = vld [vmem:[%s8 + $0x60] sm:$0xff]
      %v3164 = vld [vmem:[%s8 + $0x68] sm:$0xff]
      %v3165 = vld [vmem:[%s8 + $0x70] sm:$0xff]
      %v3166 = vld [vmem:[%s8 + $0x78] sm:$0xff]
      %v3167 = vld [vmem:[%s8 + $0x80] sm:$0xff]
      %v3168 = vld [vmem:[%s8 + $0x88] sm:$0xff]
      %v3169 = vld [vmem:[%s8 + $0x90] sm:$0xff]
      %v3170 = vld [vmem:[%s8 + $0x98] sm:$0xff]
      %v3171 = vld [vmem:[%s8 + $0xa0] sm:$0xff]
      %v3172 = vld [vmem:[%s8 + $0xa8] sm:$0xff]
      %v3173 = vld [vmem:[%s8 + $0xb0] sm:$0xff]
      %v3174 = vld [vmem:[%s8 + $0xb8] sm:$0xff]
      %v3175 = vld [vmem:[%s8 + $0xc0] sm:$0xff]
      %v3176 = vld [vmem:[%s8 + $0xc8] sm:$0xff]
      %v3177 = vld [vmem:[%s8 + $0xd0] sm:$0xff]
      %v3178 = vld [vmem:[%s8 + $0xd8] sm:$0xff]
      %v3179 = vld [vmem:[%s8 + $0xe0] sm:$0xff]
      %v3180 = vld [vmem:[%s8 + $0xe8] sm:$0x7f]
      %3182 = vset.pattern.permute.xlu0 0
      %3183 = vperm.xlu0 %3182, %v3151
      %v3184 = vpop.permute.xlu0 %3183
      %3187 = vset.pattern.permute.xlu0 0
      %3188 = vperm.xlu0 %3187, %v3152
      %v3189 = vpop.permute.xlu0 %3188
      %3192 = vset.pattern.permute.xlu0 0
      %3193 = vperm.xlu0 %3192, %v3153
      %v3194 = vpop.permute.xlu0 %3193
      %3197 = vset.pattern.permute.xlu0 0
      %3198 = vperm.xlu0 %3197, %v3154
      %v3199 = vpop.permute.xlu0 %3198
      %3202 = vset.pattern.permute.xlu0 0
      %3203 = vperm.xlu0 %3202, %v3155
      %v3204 = vpop.permute.xlu0 %3203
      %3207 = vset.pattern.permute.xlu0 0
      %3208 = vperm.xlu0 %3207, %v3156
      %v3209 = vpop.permute.xlu0 %3208
      %3212 = vset.pattern.permute.xlu0 0
      %3213 = vperm.xlu0 %3212, %v3157
      %v3214 = vpop.permute.xlu0 %3213
      %3217 = vset.pattern.permute.xlu0 0
      %3218 = vperm.xlu0 %3217, %v3158
      %v3219 = vpop.permute.xlu0 %3218
      %3222 = vset.pattern.permute.xlu0 0
      %3223 = vperm.xlu0 %3222, %v3159
      %v3224 = vpop.permute.xlu0 %3223
      %3227 = vset.pattern.permute.xlu0 0
      %3228 = vperm.xlu0 %3227, %v3160
      %v3229 = vpop.permute.xlu0 %3228
      %3232 = vset.pattern.permute.xlu0 0
      %3233 = vperm.xlu0 %3232, %v3161
      %v3234 = vpop.permute.xlu0 %3233
      %3237 = vset.pattern.permute.xlu0 0
      %3238 = vperm.xlu0 %3237, %v3162
      %v3239 = vpop.permute.xlu0 %3238
      %3242 = vset.pattern.permute.xlu0 0
      %3243 = vperm.xlu0 %3242, %v3163
      %v3244 = vpop.permute.xlu0 %3243
      %3247 = vset.pattern.permute.xlu0 0
      %3248 = vperm.xlu0 %3247, %v3164
      %v3249 = vpop.permute.xlu0 %3248
      %3252 = vset.pattern.permute.xlu0 0
      %3253 = vperm.xlu0 %3252, %v3165
      %v3254 = vpop.permute.xlu0 %3253
      %3257 = vset.pattern.permute.xlu0 0
      %3258 = vperm.xlu0 %3257, %v3166
      %v3259 = vpop.permute.xlu0 %3258
      %3262 = vset.pattern.permute.xlu0 0
      %3263 = vperm.xlu0 %3262, %v3167
      %v3264 = vpop.permute.xlu0 %3263
      %3267 = vset.pattern.permute.xlu0 0
      %3268 = vperm.xlu0 %3267, %v3168
      %v3269 = vpop.permute.xlu0 %3268
      %3272 = vset.pattern.permute.xlu0 0
      %3273 = vperm.xlu0 %3272, %v3169
      %v3274 = vpop.permute.xlu0 %3273
      %3277 = vset.pattern.permute.xlu0 0
      %3278 = vperm.xlu0 %3277, %v3170
      %v3279 = vpop.permute.xlu0 %3278
      %3282 = vset.pattern.permute.xlu0 0
      %3283 = vperm.xlu0 %3282, %v3171
      %v3284 = vpop.permute.xlu0 %3283
      %3287 = vset.pattern.permute.xlu0 0
      %3288 = vperm.xlu0 %3287, %v3172
      %v3289 = vpop.permute.xlu0 %3288
      %3292 = vset.pattern.permute.xlu0 0
      %3293 = vperm.xlu0 %3292, %v3173
      %v3294 = vpop.permute.xlu0 %3293
      %3297 = vset.pattern.permute.xlu0 0
      %3298 = vperm.xlu0 %3297, %v3174
      %v3299 = vpop.permute.xlu0 %3298
      %3302 = vset.pattern.permute.xlu0 0
      %3303 = vperm.xlu0 %3302, %v3175
      %v3304 = vpop.permute.xlu0 %3303
      %3307 = vset.pattern.permute.xlu0 0
      %3308 = vperm.xlu0 %3307, %v3176
      %v3309 = vpop.permute.xlu0 %3308
      %3312 = vset.pattern.permute.xlu0 0
      %3313 = vperm.xlu0 %3312, %v3177
      %v3314 = vpop.permute.xlu0 %3313
      %3317 = vset.pattern.permute.xlu0 0
      %3318 = vperm.xlu0 %3317, %v3178
      %v3319 = vpop.permute.xlu0 %3318
      %3322 = vset.pattern.permute.xlu0 0
      %3323 = vperm.xlu0 %3322, %v3179
      %v3324 = vpop.permute.xlu0 %3323
      %3327 = vset.pattern.permute.xlu0 0
      %3328 = vperm.xlu0 %3327, %v3180
      %v3329 = vpop.permute.xlu0 %3328
      %v3331 = vmul.f32 %v3121, %v3184
      %v3332 = vmul.f32 %v3122, %v3189
      %v3333 = vmul.f32 %v3123, %v3194
      %v3334 = vmul.f32 %v3124, %v3199
      %v3335 = vmul.f32 %v3125, %v3204
      %v3336 = vmul.f32 %v3126, %v3209
      %v3337 = vmul.f32 %v3127, %v3214
      %v3338 = vmul.f32 %v3128, %v3219
      %v3339 = vmul.f32 %v3129, %v3224
      %v3340 = vmul.f32 %v3130, %v3229
      %v3341 = vmul.f32 %v3131, %v3234
      %v3342 = vmul.f32 %v3132, %v3239
      %v3343 = vmul.f32 %v3133, %v3244
      %v3344 = vmul.f32 %v3134, %v3249
      %v3345 = vmul.f32 %v3135, %v3254
      %v3346 = vmul.f32 %v3136, %v3259
      %v3347 = vmul.f32 %v3137, %v3264
      %v3348 = vmul.f32 %v3138, %v3269
      %v3349 = vmul.f32 %v3139, %v3274
      %v3350 = vmul.f32 %v3140, %v3279
      %v3351 = vmul.f32 %v3141, %v3284
      %v3352 = vmul.f32 %v3142, %v3289
      %v3353 = vmul.f32 %v3143, %v3294
      %v3354 = vmul.f32 %v3144, %v3299
      %v3355 = vmul.f32 %v3145, %v3304
      %v3356 = vmul.f32 %v3146, %v3309
      %v3357 = vmul.f32 %v3147, %v3314
      %v3358 = vmul.f32 %v3148, %v3319
      %v3359 = vmul.f32 %v3149, %v3324
      %v3360 = vmul.f32 %v3150, %v3329
      %3391 = vrot.lane.b32.xlu0 %v3331, 32
      %v3392 = vpop.permute.xlu0 %3391
      %3393 = vrot.lane.b32.xlu0 %v3332, 32
      %v3394 = vpop.permute.xlu0 %3393
      %3395 = vrot.lane.b32.xlu0 %v3333, 32
      %v3396 = vpop.permute.xlu0 %3395
      %3397 = vrot.lane.b32.xlu0 %v3334, 32
      %v3398 = vpop.permute.xlu0 %3397
      %3399 = vrot.lane.b32.xlu0 %v3335, 32
      %v3400 = vpop.permute.xlu0 %3399
      %3401 = vrot.lane.b32.xlu0 %v3336, 32
      %v3402 = vpop.permute.xlu0 %3401
      %3403 = vrot.lane.b32.xlu0 %v3337, 32
      %v3404 = vpop.permute.xlu0 %3403
      %3405 = vrot.lane.b32.xlu0 %v3338, 32
      %v3406 = vpop.permute.xlu0 %3405
      %3407 = vrot.lane.b32.xlu0 %v3339, 32
      %v3408 = vpop.permute.xlu0 %3407
      %3409 = vrot.lane.b32.xlu0 %v3340, 32
      %v3410 = vpop.permute.xlu0 %3409
      %3411 = vrot.lane.b32.xlu0 %v3341, 32
      %v3412 = vpop.permute.xlu0 %3411
      %3413 = vrot.lane.b32.xlu0 %v3342, 32
      %v3414 = vpop.permute.xlu0 %3413
      %3415 = vrot.lane.b32.xlu0 %v3343, 32
      %v3416 = vpop.permute.xlu0 %3415
      %3417 = vrot.lane.b32.xlu0 %v3344, 32
      %v3418 = vpop.permute.xlu0 %3417
      %3419 = vrot.lane.b32.xlu0 %v3345, 32
      %v3420 = vpop.permute.xlu0 %3419
      %3421 = vrot.lane.b32.xlu0 %v3346, 32
      %v3422 = vpop.permute.xlu0 %3421
      %3423 = vrot.lane.b32.xlu0 %v3347, 32
      %v3424 = vpop.permute.xlu0 %3423
      %3425 = vrot.lane.b32.xlu0 %v3348, 32
      %v3426 = vpop.permute.xlu0 %3425
      %3427 = vrot.lane.b32.xlu0 %v3349, 32
      %v3428 = vpop.permute.xlu0 %3427
      %3429 = vrot.lane.b32.xlu0 %v3350, 32
      %v3430 = vpop.permute.xlu0 %3429
      %3431 = vrot.lane.b32.xlu0 %v3351, 32
      %v3432 = vpop.permute.xlu0 %3431
      %3433 = vrot.lane.b32.xlu0 %v3352, 32
      %v3434 = vpop.permute.xlu0 %3433
      %3435 = vrot.lane.b32.xlu0 %v3353, 32
      %v3436 = vpop.permute.xlu0 %3435
      %3437 = vrot.lane.b32.xlu0 %v3354, 32
      %v3438 = vpop.permute.xlu0 %3437
      %3439 = vrot.lane.b32.xlu0 %v3355, 32
      %v3440 = vpop.permute.xlu0 %3439
      %3441 = vrot.lane.b32.xlu0 %v3356, 32
      %v3442 = vpop.permute.xlu0 %3441
      %3443 = vrot.lane.b32.xlu0 %v3357, 32
      %v3444 = vpop.permute.xlu0 %3443
      %3445 = vrot.lane.b32.xlu0 %v3358, 32
      %v3446 = vpop.permute.xlu0 %3445
      %3447 = vrot.lane.b32.xlu0 %v3359, 32
      %v3448 = vpop.permute.xlu0 %3447
      %3449 = vrot.lane.b32.xlu0 %v3360, 32
      %v3450 = vpop.permute.xlu0 %3449
      %3481 = vst.msk [vmem:[#allocation4] sm:$0xff] %vm3116, %v3392
      %3482 = vst.msk [vmem:[#allocation4 + $0x8] sm:$0xff] %vm3116, %v3394
      %3483 = vst.msk [vmem:[#allocation4 + $0x10] sm:$0xff] %vm3116, %v3396
      %3484 = vst.msk [vmem:[#allocation4 + $0x18] sm:$0xff] %vm3116, %v3398
      %3485 = vst.msk [vmem:[#allocation4 + $0x20] sm:$0xff] %vm3116, %v3400
      %3486 = vst.msk [vmem:[#allocation4 + $0x28] sm:$0xff] %vm3116, %v3402
      %3487 = vst.msk [vmem:[#allocation4 + $0x30] sm:$0xff] %vm3116, %v3404
      %3488 = vst.msk [vmem:[#allocation4 + $0x38] sm:$0xff] %vm3116, %v3406
      %3489 = vst.msk [vmem:[#allocation4 + $0x40] sm:$0xff] %vm3116, %v3408
      %3490 = vst.msk [vmem:[#allocation4 + $0x48] sm:$0xff] %vm3116, %v3410
      %3491 = vst.msk [vmem:[#allocation4 + $0x50] sm:$0xff] %vm3116, %v3412
      %3492 = vst.msk [vmem:[#allocation4 + $0x58] sm:$0xff] %vm3116, %v3414
      %3493 = vst.msk [vmem:[#allocation4 + $0x60] sm:$0xff] %vm3116, %v3416
      %3494 = vst.msk [vmem:[#allocation4 + $0x68] sm:$0xff] %vm3116, %v3418
      %3495 = vst.msk [vmem:[#allocation4 + $0x70] sm:$0xff] %vm3116, %v3420
      %3496 = vst.msk [vmem:[#allocation4 + $0x78] sm:$0xff] %vm3116, %v3422
      %3497 = vst.msk [vmem:[#allocation4 + $0x80] sm:$0xff] %vm3116, %v3424
      %3498 = vst.msk [vmem:[#allocation4 + $0x88] sm:$0xff] %vm3116, %v3426
      %3499 = vst.msk [vmem:[#allocation4 + $0x90] sm:$0xff] %vm3116, %v3428
      %3500 = vst.msk [vmem:[#allocation4 + $0x98] sm:$0xff] %vm3116, %v3430
      %3501 = vst.msk [vmem:[#allocation4 + $0xa0] sm:$0xff] %vm3116, %v3432
      %3502 = vst.msk [vmem:[#allocation4 + $0xa8] sm:$0xff] %vm3116, %v3434
      %3503 = vst.msk [vmem:[#allocation4 + $0xb0] sm:$0xff] %vm3116, %v3436
      %3504 = vst.msk [vmem:[#allocation4 + $0xb8] sm:$0xff] %vm3116, %v3438
      %3505 = vst.msk [vmem:[#allocation4 + $0xc0] sm:$0xff] %vm3116, %v3440
      %3506 = vst.msk [vmem:[#allocation4 + $0xc8] sm:$0xff] %vm3116, %v3442
      %3507 = vst.msk [vmem:[#allocation4 + $0xd0] sm:$0xff] %vm3116, %v3444
      %3508 = vst.msk [vmem:[#allocation4 + $0xd8] sm:$0xff] %vm3116, %v3446
      %3509 = vst.msk [vmem:[#allocation4 + $0xe0] sm:$0xff] %vm3116, %v3448
      %vm3510 = vcmask 293120
      %3511 = vst.msk [vmem:[#allocation4 + $0xe8] sm:$0x7f] %vm3510, %v3450
      %v3512 = vld [vmem:[#allocation4] sm:$0xff]
      %v3513 = vld [vmem:[#allocation4 + $0x8] sm:$0xff]
      %v3514 = vld [vmem:[#allocation4 + $0x10] sm:$0xff]
      %v3515 = vld [vmem:[#allocation4 + $0x18] sm:$0xff]
      %v3516 = vld [vmem:[#allocation4 + $0x20] sm:$0xff]
      %v3517 = vld [vmem:[#allocation4 + $0x28] sm:$0xff]
      %v3518 = vld [vmem:[#allocation4 + $0x30] sm:$0xff]
      %v3519 = vld [vmem:[#allocation4 + $0x38] sm:$0xff]
      %v3520 = vld [vmem:[#allocation4 + $0x40] sm:$0xff]
      %v3521 = vld [vmem:[#allocation4 + $0x48] sm:$0xff]
      %v3522 = vld [vmem:[#allocation4 + $0x50] sm:$0xff]
      %v3523 = vld [vmem:[#allocation4 + $0x58] sm:$0xff]
      %v3524 = vld [vmem:[#allocation4 + $0x60] sm:$0xff]
      %v3525 = vld [vmem:[#allocation4 + $0x68] sm:$0xff]
      %v3526 = vld [vmem:[#allocation4 + $0x70] sm:$0xff]
      %v3527 = vld [vmem:[#allocation4 + $0x78] sm:$0xff]
      %v3528 = vld [vmem:[#allocation4 + $0x80] sm:$0xff]
      %v3529 = vld [vmem:[#allocation4 + $0x88] sm:$0xff]
      %v3530 = vld [vmem:[#allocation4 + $0x90] sm:$0xff]
      %v3531 = vld [vmem:[#allocation4 + $0x98] sm:$0xff]
      %v3532 = vld [vmem:[#allocation4 + $0xa0] sm:$0xff]
      %v3533 = vld [vmem:[#allocation4 + $0xa8] sm:$0xff]
      %v3534 = vld [vmem:[#allocation4 + $0xb0] sm:$0xff]
      %v3535 = vld [vmem:[#allocation4 + $0xb8] sm:$0xff]
      %v3536 = vld [vmem:[#allocation4 + $0xc0] sm:$0xff]
      %v3537 = vld [vmem:[#allocation4 + $0xc8] sm:$0xff]
      %v3538 = vld [vmem:[#allocation4 + $0xd0] sm:$0xff]
      %v3539 = vld [vmem:[#allocation4 + $0xd8] sm:$0xff]
      %v3540 = vld [vmem:[#allocation4 + $0xe0] sm:$0xff]
      %v3541 = vld [vmem:[#allocation4 + $0xe8] sm:$0xff]
      %v3542 = vld [vmem:[#allocation4 + $0xf0] sm:$0xff]
      %v3543 = vld [vmem:[#allocation4 + $0xf8] sm:$0xff]
      %v3544 = vpack.c.bf16 %v3513, %v3512
      %v3545 = vpack.c.bf16 %v3515, %v3514
      %v3546 = vpack.c.bf16 %v3517, %v3516
      %v3547 = vpack.c.bf16 %v3519, %v3518
      %v3548 = vpack.c.bf16 %v3521, %v3520
      %v3549 = vpack.c.bf16 %v3523, %v3522
      %v3550 = vpack.c.bf16 %v3525, %v3524
      %v3551 = vpack.c.bf16 %v3527, %v3526
      %v3552 = vpack.c.bf16 %v3529, %v3528
      %v3553 = vpack.c.bf16 %v3531, %v3530
      %v3554 = vpack.c.bf16 %v3533, %v3532
      %v3555 = vpack.c.bf16 %v3535, %v3534
      %v3556 = vpack.c.bf16 %v3537, %v3536
      %v3557 = vpack.c.bf16 %v3539, %v3538
      %v3558 = vpack.c.bf16 %v3541, %v3540
      %v3559 = vpack.c.bf16 %v3543, %v3542
      %v3560 = vld [vmem:[%s3] sm:$0xf]
      %v3561 = vld [vmem:[%s3 + $0x4] sm:$0xf]
      %v3562 = vld [vmem:[%s3 + $0x8] sm:$0xf]
      %v3563 = vld [vmem:[%s3 + $0xc] sm:$0xf]
      %v3564 = vld [vmem:[%s3 + $0x10] sm:$0x3]
      %v3565 = vld [vmem:[%s4] sm:$0x1]
      %v3567 = vperm.slane %v3565, 0
      %v3574 = vunpack.c.l.b16 %v3560
      %v3575 = vunpack.c.l.b16 %v3561
      %v3576 = vunpack.c.l.b16 %v3562
      %v3577 = vunpack.c.l.b16 %v3563
      %v3578 = vunpack.c.l.b16 %v3564
      %v3579 = vpack.c.b16 %v3575, %v3574
      %v3580 = vpack.c.b16 %v3577, %v3576
      %v3581 = vpack.c.b16 %v3578, %v3578
      %vm3584 = vcmask 293888
      %v3586 = vsel %vm3584, %v3544, 0
      %v3589 = vsel %vm3584, %v3545, 0
      %v3592 = vsel %vm3584, %v3546, 0
      %v3595 = vsel %vm3584, %v3547, 0
      %v3598 = vsel %vm3584, %v3548, 0
      %v3601 = vsel %vm3584, %v3549, 0
      %v3604 = vsel %vm3584, %v3550, 0
      %v3607 = vsel %vm3584, %v3551, 0
      %v3610 = vsel %vm3584, %v3552, 0
      %v3613 = vsel %vm3584, %v3553, 0
      %v3616 = vsel %vm3584, %v3554, 0
      %v3619 = vsel %vm3584, %v3555, 0
      %v3622 = vsel %vm3584, %v3556, 0
      %v3625 = vsel %vm3584, %v3557, 0
      %v3628 = vsel %vm3584, %v3558, 0
      %v3631 = vsel %vm3584, %v3559, 0
      %vm3633 = vcmask 1041408
      %v3635 = vsel %vm3633, %v3581, 0
      %3637 = vmatpush.bf16.msra.mxu0 0
      %3638 = vmatpush.bf16.msra.mxu0 0
      %3639 = vmatpush.bf16.msra.mxu0 0
      %3640 = vmatpush.bf16.msra.mxu0 0
      %3641 = vmatpush.bf16.msra.mxu0 0
      %3642 = vmatpush.bf16.msra.mxu0 %v3635
      %3643 = vmatpush.bf16.msra.mxu0 %v3580
      %3644 = vmatpush.bf16.msra.mxu0 %v3579
      %3645 = vmatmul.bf16.gmra.mxu0 %v3586
      %v3646 = vpop.f32.mrf.mxu0
      %v3647 = vadd.f32 %v3567, %v3646
      %v3648 = vpop.f32.mrf.mxu0
      %v3649 = vadd.f32 %v3567, %v3648
      %3650 = vmatmul.bf16.gmra.mxu0 %v3589
      %v3651 = vpop.f32.mrf.mxu0
      %v3652 = vadd.f32 %v3567, %v3651
      %v3653 = vpop.f32.mrf.mxu0
      %v3654 = vadd.f32 %v3567, %v3653
      %3655 = vmatmul.bf16.gmra.mxu0 %v3592
      %v3656 = vpop.f32.mrf.mxu0
      %v3657 = vadd.f32 %v3567, %v3656
      %v3658 = vpop.f32.mrf.mxu0
      %v3659 = vadd.f32 %v3567, %v3658
      %3660 = vmatmul.bf16.gmra.mxu0 %v3595
      %v3661 = vpop.f32.mrf.mxu0
      %v3662 = vadd.f32 %v3567, %v3661
      %v3663 = vpop.f32.mrf.mxu0
      %v3664 = vadd.f32 %v3567, %v3663
      %3665 = vmatmul.bf16.gmra.mxu0 %v3598
      %v3666 = vpop.f32.mrf.mxu0
      %v3667 = vadd.f32 %v3567, %v3666
      %v3668 = vpop.f32.mrf.mxu0
      %v3669 = vadd.f32 %v3567, %v3668
      %3670 = vmatmul.bf16.gmra.mxu0 %v3601
      %v3671 = vpop.f32.mrf.mxu0
      %v3672 = vadd.f32 %v3567, %v3671
      %v3673 = vpop.f32.mrf.mxu0
      %v3674 = vadd.f32 %v3567, %v3673
      %3675 = vmatmul.bf16.gmra.mxu0 %v3604
      %v3676 = vpop.f32.mrf.mxu0
      %v3677 = vadd.f32 %v3567, %v3676
      %v3678 = vpop.f32.mrf.mxu0
      %v3679 = vadd.f32 %v3567, %v3678
      %3680 = vmatmul.bf16.gmra.mxu0 %v3607
      %v3681 = vpop.f32.mrf.mxu0
      %v3682 = vadd.f32 %v3567, %v3681
      %v3683 = vpop.f32.mrf.mxu0
      %v3684 = vadd.f32 %v3567, %v3683
      %3685 = vmatmul.bf16.gmra.mxu0 %v3610
      %v3686 = vpop.f32.mrf.mxu0
      %v3687 = vadd.f32 %v3567, %v3686
      %v3688 = vpop.f32.mrf.mxu0
      %v3689 = vadd.f32 %v3567, %v3688
      %3690 = vmatmul.bf16.gmra.mxu0 %v3613
      %v3691 = vpop.f32.mrf.mxu0
      %v3692 = vadd.f32 %v3567, %v3691
      %v3693 = vpop.f32.mrf.mxu0
      %v3694 = vadd.f32 %v3567, %v3693
      %3695 = vmatmul.bf16.gmra.mxu0 %v3616
      %v3696 = vpop.f32.mrf.mxu0
      %v3697 = vadd.f32 %v3567, %v3696
      %v3698 = vpop.f32.mrf.mxu0
      %v3699 = vadd.f32 %v3567, %v3698
      %3700 = vmatmul.bf16.gmra.mxu0 %v3619
      %v3701 = vpop.f32.mrf.mxu0
      %v3702 = vadd.f32 %v3567, %v3701
      %v3703 = vpop.f32.mrf.mxu0
      %v3704 = vadd.f32 %v3567, %v3703
      %3705 = vmatmul.bf16.gmra.mxu0 %v3622
      %v3706 = vpop.f32.mrf.mxu0
      %v3707 = vadd.f32 %v3567, %v3706
      %v3708 = vpop.f32.mrf.mxu0
      %v3709 = vadd.f32 %v3567, %v3708
      %3710 = vmatmul.bf16.gmra.mxu0 %v3625
      %v3711 = vpop.f32.mrf.mxu0
      %v3712 = vadd.f32 %v3567, %v3711
      %v3713 = vpop.f32.mrf.mxu0
      %v3714 = vadd.f32 %v3567, %v3713
      %3715 = vmatmul.bf16.gmra.mxu0 %v3628
      %v3716 = vpop.f32.mrf.mxu0
      %v3717 = vadd.f32 %v3567, %v3716
      %v3718 = vpop.f32.mrf.mxu0
      %v3719 = vadd.f32 %v3567, %v3718
      %3720 = vmatmul.bf16.gmra.mxu0 %v3631
      %v3721 = vpop.f32.mrf.mxu0
      %v3722 = vadd.f32 %v3567, %v3721
      %v3723 = vpop.f32.mrf.mxu0
      %v3724 = vadd.f32 %v3567, %v3723
      %3725 = vdwg.mxu0
      %v3726 = vmax.f32 %v3647, 0.0
      %v3727 = vmax.f32 %v3649, 0.0
      %v3728 = vmax.f32 %v3652, 0.0
      %v3729 = vmax.f32 %v3654, 0.0
      %v3730 = vmax.f32 %v3657, 0.0
      %v3731 = vmax.f32 %v3659, 0.0
      %v3732 = vmax.f32 %v3662, 0.0
      %v3733 = vmax.f32 %v3664, 0.0
      %v3734 = vmax.f32 %v3667, 0.0
      %v3735 = vmax.f32 %v3669, 0.0
      %v3736 = vmax.f32 %v3672, 0.0
      %v3737 = vmax.f32 %v3674, 0.0
      %v3738 = vmax.f32 %v3677, 0.0
      %v3739 = vmax.f32 %v3679, 0.0
      %v3740 = vmax.f32 %v3682, 0.0
      %v3741 = vmax.f32 %v3684, 0.0
      %v3742 = vmax.f32 %v3687, 0.0
      %v3743 = vmax.f32 %v3689, 0.0
      %v3744 = vmax.f32 %v3692, 0.0
      %v3745 = vmax.f32 %v3694, 0.0
      %v3746 = vmax.f32 %v3697, 0.0
      %v3747 = vmax.f32 %v3699, 0.0
      %v3748 = vmax.f32 %v3702, 0.0
      %v3749 = vmax.f32 %v3704, 0.0
      %v3750 = vmax.f32 %v3707, 0.0
      %v3751 = vmax.f32 %v3709, 0.0
      %v3752 = vmax.f32 %v3712, 0.0
      %v3753 = vmax.f32 %v3714, 0.0
      %v3754 = vmax.f32 %v3717, 0.0
      %v3755 = vmax.f32 %v3719, 0.0
      %v3756 = vmax.f32 %v3722, 0.0
      %v3757 = vmax.f32 %v3724, 0.0
      %3758 = vst.msk [vmem:[#allocation3] sm:$0xff] %vm593, %v3726
      %3759 = vst.msk [vmem:[#allocation3 + $0x8] sm:$0xff] %vm593, %v3727
      %3760 = vst.msk [vmem:[#allocation3 + $0x10] sm:$0xff] %vm593, %v3728
      %3761 = vst.msk [vmem:[#allocation3 + $0x18] sm:$0xff] %vm593, %v3729
      %3762 = vst.msk [vmem:[#allocation3 + $0x20] sm:$0xff] %vm593, %v3730
      %3763 = vst.msk [vmem:[#allocation3 + $0x28] sm:$0xff] %vm593, %v3731
      %3764 = vst.msk [vmem:[#allocation3 + $0x30] sm:$0xff] %vm593, %v3732
      %3765 = vst.msk [vmem:[#allocation3 + $0x38] sm:$0xff] %vm593, %v3733
      %3766 = vst.msk [vmem:[#allocation3 + $0x40] sm:$0xff] %vm593, %v3734
      %3767 = vst.msk [vmem:[#allocation3 + $0x48] sm:$0xff] %vm593, %v3735
      %3768 = vst.msk [vmem:[#allocation3 + $0x50] sm:$0xff] %vm593, %v3736
      %3769 = vst.msk [vmem:[#allocation3 + $0x58] sm:$0xff] %vm593, %v3737
      %3770 = vst.msk [vmem:[#allocation3 + $0x60] sm:$0xff] %vm593, %v3738
      %3771 = vst.msk [vmem:[#allocation3 + $0x68] sm:$0xff] %vm593, %v3739
      %3772 = vst.msk [vmem:[#allocation3 + $0x70] sm:$0xff] %vm593, %v3740
      %3773 = vst.msk [vmem:[#allocation3 + $0x78] sm:$0xff] %vm593, %v3741
      %3774 = vst.msk [vmem:[#allocation3 + $0x80] sm:$0xff] %vm593, %v3742
      %3775 = vst.msk [vmem:[#allocation3 + $0x88] sm:$0xff] %vm593, %v3743
      %3776 = vst.msk [vmem:[#allocation3 + $0x90] sm:$0xff] %vm593, %v3744
      %3777 = vst.msk [vmem:[#allocation3 + $0x98] sm:$0xff] %vm593, %v3745
      %3778 = vst.msk [vmem:[#allocation3 + $0xa0] sm:$0xff] %vm593, %v3746
      %3779 = vst.msk [vmem:[#allocation3 + $0xa8] sm:$0xff] %vm593, %v3747
      %3780 = vst.msk [vmem:[#allocation3 + $0xb0] sm:$0xff] %vm593, %v3748
      %3781 = vst.msk [vmem:[#allocation3 + $0xb8] sm:$0xff] %vm593, %v3749
      %3782 = vst.msk [vmem:[#allocation3 + $0xc0] sm:$0xff] %vm593, %v3750
      %3783 = vst.msk [vmem:[#allocation3 + $0xc8] sm:$0xff] %vm593, %v3751
      %3784 = vst.msk [vmem:[#allocation3 + $0xd0] sm:$0xff] %vm593, %v3752
      %3785 = vst.msk [vmem:[#allocation3 + $0xd8] sm:$0xff] %vm593, %v3753
      %3786 = vst.msk [vmem:[#allocation3 + $0xe0] sm:$0xff] %vm593, %v3754
      %3787 = vst.msk [vmem:[#allocation3 + $0xe8] sm:$0xff] %vm593, %v3755
      %3788 = vst.msk [vmem:[#allocation3 + $0xf0] sm:$0xff] %vm593, %v3756
      %3789 = vst.msk [vmem:[#allocation3 + $0xf8] sm:$0xff] %vm593, %v3757
      %3790 = vst.msk [vmem:[#allocation4] sm:$0xff] %vm593, 0.0
      %3791 = vst.msk [vmem:[#allocation4 + $0x8] sm:$0xff] %vm593, 0.0
      %3792 = vst.msk [vmem:[#allocation4 + $0x10] sm:$0x1] %vm628, 0.0
      %v3793 = vld [vmem:[#allocation3] sm:$0xff]
      %v3794 = vld [vmem:[#allocation3 + $0x8] sm:$0xff]
      %v3795 = vld [vmem:[#allocation3 + $0x10] sm:$0xff]
      %v3796 = vld [vmem:[#allocation3 + $0x18] sm:$0xff]
      %v3797 = vld [vmem:[#allocation3 + $0x20] sm:$0xff]
      %v3798 = vld [vmem:[#allocation3 + $0x28] sm:$0xff]
      %v3799 = vld [vmem:[#allocation3 + $0x30] sm:$0xff]
      %v3800 = vld [vmem:[#allocation3 + $0x38] sm:$0xff]
      %v3801 = vld [vmem:[#allocation3 + $0x40] sm:$0xff]
      %v3802 = vld [vmem:[#allocation3 + $0x48] sm:$0xff]
      %v3803 = vld [vmem:[#allocation3 + $0x50] sm:$0xff]
      %v3804 = vld [vmem:[#allocation3 + $0x58] sm:$0xff]
      %v3805 = vld [vmem:[#allocation3 + $0x60] sm:$0xff]
      %v3806 = vld [vmem:[#allocation3 + $0x68] sm:$0xff]
      %v3807 = vld [vmem:[#allocation3 + $0x70] sm:$0xff]
      %v3808 = vld [vmem:[#allocation3 + $0x78] sm:$0xff]
      %v3809 = vld [vmem:[#allocation3 + $0x80] sm:$0xff]
      %v3810 = vld [vmem:[#allocation3 + $0x88] sm:$0xff]
      %v3811 = vld [vmem:[#allocation3 + $0x90] sm:$0xff]
      %v3812 = vld [vmem:[#allocation3 + $0x98] sm:$0xff]
      %v3813 = vld [vmem:[#allocation3 + $0xa0] sm:$0xff]
      %v3814 = vld [vmem:[#allocation3 + $0xa8] sm:$0xff]
      %v3815 = vld [vmem:[#allocation3 + $0xb0] sm:$0xff]
      %v3816 = vld [vmem:[#allocation3 + $0xb8] sm:$0xff]
      %v3817 = vld [vmem:[#allocation3 + $0xc0] sm:$0xff]
      %v3818 = vld [vmem:[#allocation3 + $0xc8] sm:$0xff]
      %v3819 = vld [vmem:[#allocation3 + $0xd0] sm:$0xff]
      %v3820 = vld [vmem:[#allocation3 + $0xd8] sm:$0xff]
      %v3821 = vld [vmem:[#allocation3 + $0xe0] sm:$0xff]
      %v3822 = vld [vmem:[#allocation3 + $0xe8] sm:$0x7f]
      %v3823 = vld [vmem:[%s7 + $0x11] sm:$0xff]
      %v3824 = vld [vmem:[%s7 + $0x19] sm:$0xff]
      %v3825 = vld [vmem:[%s7 + $0x21] sm:$0xff]
      %v3826 = vld [vmem:[%s7 + $0x29] sm:$0xff]
      %v3827 = vld [vmem:[%s7 + $0x31] sm:$0xff]
      %v3828 = vld [vmem:[%s7 + $0x39] sm:$0xff]
      %v3829 = vld [vmem:[%s7 + $0x41] sm:$0xff]
      %v3830 = vld [vmem:[%s7 + $0x49] sm:$0xff]
      %v3831 = vld [vmem:[%s7 + $0x51] sm:$0xff]
      %v3832 = vld [vmem:[%s7 + $0x59] sm:$0xff]
      %v3833 = vld [vmem:[%s7 + $0x61] sm:$0xff]
      %v3834 = vld [vmem:[%s7 + $0x69] sm:$0xff]
      %v3835 = vld [vmem:[%s7 + $0x71] sm:$0xff]
      %v3836 = vld [vmem:[%s7 + $0x79] sm:$0xff]
      %v3837 = vld [vmem:[%s7 + $0x81] sm:$0xff]
      %v3838 = vld [vmem:[%s7 + $0x89] sm:$0xff]
      %v3839 = vld [vmem:[%s7 + $0x91] sm:$0xff]
      %v3840 = vld [vmem:[%s7 + $0x99] sm:$0xff]
      %v3841 = vld [vmem:[%s7 + $0xa1] sm:$0xff]
      %v3842 = vld [vmem:[%s7 + $0xa9] sm:$0xff]
      %v3843 = vld [vmem:[%s7 + $0xb1] sm:$0xff]
      %v3844 = vld [vmem:[%s7 + $0xb9] sm:$0xff]
      %v3845 = vld [vmem:[%s7 + $0xc1] sm:$0xff]
      %v3846 = vld [vmem:[%s7 + $0xc9] sm:$0xff]
      %v3847 = vld [vmem:[%s7 + $0xd1] sm:$0xff]
      %v3848 = vld [vmem:[%s7 + $0xd9] sm:$0xff]
      %v3849 = vld [vmem:[%s7 + $0xe1] sm:$0xff]
      %v3850 = vld [vmem:[%s7 + $0xe9] sm:$0xff]
      %v3851 = vld [vmem:[%s7 + $0xf1] sm:$0xff]
      %v3852 = vld [vmem:[%s7 + $0xf9] sm:$0x7f]
      %3854 = vset.pattern.permute.xlu0 0
      %3855 = vperm.xlu0 %3854, %v3823
      %v3856 = vpop.permute.xlu0 %3855
      %3859 = vset.pattern.permute.xlu0 0
      %3860 = vperm.xlu0 %3859, %v3824
      %v3861 = vpop.permute.xlu0 %3860
      %3864 = vset.pattern.permute.xlu0 0
      %3865 = vperm.xlu0 %3864, %v3825
      %v3866 = vpop.permute.xlu0 %3865
      %3869 = vset.pattern.permute.xlu0 0
      %3870 = vperm.xlu0 %3869, %v3826
      %v3871 = vpop.permute.xlu0 %3870
      %3874 = vset.pattern.permute.xlu0 0
      %3875 = vperm.xlu0 %3874, %v3827
      %v3876 = vpop.permute.xlu0 %3875
      %3879 = vset.pattern.permute.xlu0 0
      %3880 = vperm.xlu0 %3879, %v3828
      %v3881 = vpop.permute.xlu0 %3880
      %3884 = vset.pattern.permute.xlu0 0
      %3885 = vperm.xlu0 %3884, %v3829
      %v3886 = vpop.permute.xlu0 %3885
      %3889 = vset.pattern.permute.xlu0 0
      %3890 = vperm.xlu0 %3889, %v3830
      %v3891 = vpop.permute.xlu0 %3890
      %3894 = vset.pattern.permute.xlu0 0
      %3895 = vperm.xlu0 %3894, %v3831
      %v3896 = vpop.permute.xlu0 %3895
      %3899 = vset.pattern.permute.xlu0 0
      %3900 = vperm.xlu0 %3899, %v3832
      %v3901 = vpop.permute.xlu0 %3900
      %3904 = vset.pattern.permute.xlu0 0
      %3905 = vperm.xlu0 %3904, %v3833
      %v3906 = vpop.permute.xlu0 %3905
      %3909 = vset.pattern.permute.xlu0 0
      %3910 = vperm.xlu0 %3909, %v3834
      %v3911 = vpop.permute.xlu0 %3910
      %3914 = vset.pattern.permute.xlu0 0
      %3915 = vperm.xlu0 %3914, %v3835
      %v3916 = vpop.permute.xlu0 %3915
      %3919 = vset.pattern.permute.xlu0 0
      %3920 = vperm.xlu0 %3919, %v3836
      %v3921 = vpop.permute.xlu0 %3920
      %3924 = vset.pattern.permute.xlu0 0
      %3925 = vperm.xlu0 %3924, %v3837
      %v3926 = vpop.permute.xlu0 %3925
      %3929 = vset.pattern.permute.xlu0 0
      %3930 = vperm.xlu0 %3929, %v3838
      %v3931 = vpop.permute.xlu0 %3930
      %3934 = vset.pattern.permute.xlu0 0
      %3935 = vperm.xlu0 %3934, %v3839
      %v3936 = vpop.permute.xlu0 %3935
      %3939 = vset.pattern.permute.xlu0 0
      %3940 = vperm.xlu0 %3939, %v3840
      %v3941 = vpop.permute.xlu0 %3940
      %3944 = vset.pattern.permute.xlu0 0
      %3945 = vperm.xlu0 %3944, %v3841
      %v3946 = vpop.permute.xlu0 %3945
      %3949 = vset.pattern.permute.xlu0 0
      %3950 = vperm.xlu0 %3949, %v3842
      %v3951 = vpop.permute.xlu0 %3950
      %3954 = vset.pattern.permute.xlu0 0
      %3955 = vperm.xlu0 %3954, %v3843
      %v3956 = vpop.permute.xlu0 %3955
      %3959 = vset.pattern.permute.xlu0 0
      %3960 = vperm.xlu0 %3959, %v3844
      %v3961 = vpop.permute.xlu0 %3960
      %3964 = vset.pattern.permute.xlu0 0
      %3965 = vperm.xlu0 %3964, %v3845
      %v3966 = vpop.permute.xlu0 %3965
      %3969 = vset.pattern.permute.xlu0 0
      %3970 = vperm.xlu0 %3969, %v3846
      %v3971 = vpop.permute.xlu0 %3970
      %3974 = vset.pattern.permute.xlu0 0
      %3975 = vperm.xlu0 %3974, %v3847
      %v3976 = vpop.permute.xlu0 %3975
      %3979 = vset.pattern.permute.xlu0 0
      %3980 = vperm.xlu0 %3979, %v3848
      %v3981 = vpop.permute.xlu0 %3980
      %3984 = vset.pattern.permute.xlu0 0
      %3985 = vperm.xlu0 %3984, %v3849
      %v3986 = vpop.permute.xlu0 %3985
      %3989 = vset.pattern.permute.xlu0 0
      %3990 = vperm.xlu0 %3989, %v3850
      %v3991 = vpop.permute.xlu0 %3990
      %3994 = vset.pattern.permute.xlu0 0
      %3995 = vperm.xlu0 %3994, %v3851
      %v3996 = vpop.permute.xlu0 %3995
      %3999 = vset.pattern.permute.xlu0 0
      %4000 = vperm.xlu0 %3999, %v3852
      %v4001 = vpop.permute.xlu0 %4000
      %v4003 = vmul.f32 %v3793, %v3856
      %v4004 = vmul.f32 %v3794, %v3861
      %v4005 = vmul.f32 %v3795, %v3866
      %v4006 = vmul.f32 %v3796, %v3871
      %v4007 = vmul.f32 %v3797, %v3876
      %v4008 = vmul.f32 %v3798, %v3881
      %v4009 = vmul.f32 %v3799, %v3886
      %v4010 = vmul.f32 %v3800, %v3891
      %v4011 = vmul.f32 %v3801, %v3896
      %v4012 = vmul.f32 %v3802, %v3901
      %v4013 = vmul.f32 %v3803, %v3906
      %v4014 = vmul.f32 %v3804, %v3911
      %v4015 = vmul.f32 %v3805, %v3916
      %v4016 = vmul.f32 %v3806, %v3921
      %v4017 = vmul.f32 %v3807, %v3926
      %v4018 = vmul.f32 %v3808, %v3931
      %v4019 = vmul.f32 %v3809, %v3936
      %v4020 = vmul.f32 %v3810, %v3941
      %v4021 = vmul.f32 %v3811, %v3946
      %v4022 = vmul.f32 %v3812, %v3951
      %v4023 = vmul.f32 %v3813, %v3956
      %v4024 = vmul.f32 %v3814, %v3961
      %v4025 = vmul.f32 %v3815, %v3966
      %v4026 = vmul.f32 %v3816, %v3971
      %v4027 = vmul.f32 %v3817, %v3976
      %v4028 = vmul.f32 %v3818, %v3981
      %v4029 = vmul.f32 %v3819, %v3986
      %v4030 = vmul.f32 %v3820, %v3991
      %v4031 = vmul.f32 %v3821, %v3996
      %v4032 = vmul.f32 %v3822, %v4001
      %4033 = vst.msk [vmem:[#allocation4 + $0x11] sm:$0xff] %vm593, %v4003
      %4034 = vst.msk [vmem:[#allocation4 + $0x19] sm:$0xff] %vm593, %v4004
      %4035 = vst.msk [vmem:[#allocation4 + $0x21] sm:$0xff] %vm593, %v4005
      %4036 = vst.msk [vmem:[#allocation4 + $0x29] sm:$0xff] %vm593, %v4006
      %4037 = vst.msk [vmem:[#allocation4 + $0x31] sm:$0xff] %vm593, %v4007
      %4038 = vst.msk [vmem:[#allocation4 + $0x39] sm:$0xff] %vm593, %v4008
      %4039 = vst.msk [vmem:[#allocation4 + $0x41] sm:$0xff] %vm593, %v4009
      %4040 = vst.msk [vmem:[#allocation4 + $0x49] sm:$0xff] %vm593, %v4010
      %4041 = vst.msk [vmem:[#allocation4 + $0x51] sm:$0xff] %vm593, %v4011
      %4042 = vst.msk [vmem:[#allocation4 + $0x59] sm:$0xff] %vm593, %v4012
      %4043 = vst.msk [vmem:[#allocation4 + $0x61] sm:$0xff] %vm593, %v4013
      %4044 = vst.msk [vmem:[#allocation4 + $0x69] sm:$0xff] %vm593, %v4014
      %4045 = vst.msk [vmem:[#allocation4 + $0x71] sm:$0xff] %vm593, %v4015
      %4046 = vst.msk [vmem:[#allocation4 + $0x79] sm:$0xff] %vm593, %v4016
      %4047 = vst.msk [vmem:[#allocation4 + $0x81] sm:$0xff] %vm593, %v4017
      %4048 = vst.msk [vmem:[#allocation4 + $0x89] sm:$0xff] %vm593, %v4018
      %4049 = vst.msk [vmem:[#allocation4 + $0x91] sm:$0xff] %vm593, %v4019
      %4050 = vst.msk [vmem:[#allocation4 + $0x99] sm:$0xff] %vm593, %v4020
      %4051 = vst.msk [vmem:[#allocation4 + $0xa1] sm:$0xff] %vm593, %v4021
      %4052 = vst.msk [vmem:[#allocation4 + $0xa9] sm:$0xff] %vm593, %v4022
      %4053 = vst.msk [vmem:[#allocation4 + $0xb1] sm:$0xff] %vm593, %v4023
      %4054 = vst.msk [vmem:[#allocation4 + $0xb9] sm:$0xff] %vm593, %v4024
      %4055 = vst.msk [vmem:[#allocation4 + $0xc1] sm:$0xff] %vm593, %v4025
      %4056 = vst.msk [vmem:[#allocation4 + $0xc9] sm:$0xff] %vm593, %v4026
      %4057 = vst.msk [vmem:[#allocation4 + $0xd1] sm:$0xff] %vm593, %v4027
      %4058 = vst.msk [vmem:[#allocation4 + $0xd9] sm:$0xff] %vm593, %v4028
      %4059 = vst.msk [vmem:[#allocation4 + $0xe1] sm:$0xff] %vm593, %v4029
      %4060 = vst.msk [vmem:[#allocation4 + $0xe9] sm:$0xff] %vm593, %v4030
      %4061 = vst.msk [vmem:[#allocation4 + $0xf1] sm:$0xff] %vm593, %v4031
      %4062 = vst.msk [vmem:[#allocation4 + $0xf9] sm:$0x7f] %vm899, %v4032
      %4063 = vst.msk [vmem:[#allocation4] sm:$0xff] %vm901, 0.0
      %4064 = vst.msk [vmem:[#allocation4 + $0x8] sm:$0xff] %vm901, 0.0
      %v4065 = vld [vmem:[#allocation3] sm:$0xff]
      %v4066 = vld [vmem:[#allocation3 + $0x8] sm:$0xff]
      %v4067 = vld [vmem:[#allocation3 + $0x10] sm:$0xff]
      %v4068 = vld [vmem:[#allocation3 + $0x18] sm:$0xff]
      %v4069 = vld [vmem:[#allocation3 + $0x20] sm:$0xff]
      %v4070 = vld [vmem:[#allocation3 + $0x28] sm:$0xff]
      %v4071 = vld [vmem:[#allocation3 + $0x30] sm:$0xff]
      %v4072 = vld [vmem:[#allocation3 + $0x38] sm:$0xff]
      %v4073 = vld [vmem:[#allocation3 + $0x40] sm:$0xff]
      %v4074 = vld [vmem:[#allocation3 + $0x48] sm:$0xff]
      %v4075 = vld [vmem:[#allocation3 + $0x50] sm:$0xff]
      %v4076 = vld [vmem:[#allocation3 + $0x58] sm:$0xff]
      %v4077 = vld [vmem:[#allocation3 + $0x60] sm:$0xff]
      %v4078 = vld [vmem:[#allocation3 + $0x68] sm:$0xff]
      %v4079 = vld [vmem:[#allocation3 + $0x70] sm:$0xff]
      %v4080 = vld [vmem:[#allocation3 + $0x78] sm:$0xff]
      %v4081 = vld [vmem:[#allocation3 + $0x80] sm:$0xff]
      %v4082 = vld [vmem:[#allocation3 + $0x88] sm:$0xff]
      %v4083 = vld [vmem:[#allocation3 + $0x90] sm:$0xff]
      %v4084 = vld [vmem:[#allocation3 + $0x98] sm:$0xff]
      %v4085 = vld [vmem:[#allocation3 + $0xa0] sm:$0xff]
      %v4086 = vld [vmem:[#allocation3 + $0xa8] sm:$0xff]
      %v4087 = vld [vmem:[#allocation3 + $0xb0] sm:$0xff]
      %v4088 = vld [vmem:[#allocation3 + $0xb8] sm:$0xff]
      %v4089 = vld [vmem:[#allocation3 + $0xc0] sm:$0xff]
      %v4090 = vld [vmem:[#allocation3 + $0xc8] sm:$0xff]
      %v4091 = vld [vmem:[#allocation3 + $0xd0] sm:$0xff]
      %v4092 = vld [vmem:[#allocation3 + $0xd8] sm:$0xff]
      %v4093 = vld [vmem:[#allocation3 + $0xe0] sm:$0xff]
      %v4094 = vld [vmem:[#allocation3 + $0xe8] sm:$0xff]
      %4125 = vrot.lane.b32.xlu0 %v4065, 4
      %v4126 = vpop.permute.xlu0 %4125
      %4127 = vrot.lane.b32.xlu0 %v4066, 4
      %v4128 = vpop.permute.xlu0 %4127
      %4129 = vrot.lane.b32.xlu0 %v4067, 4
      %v4130 = vpop.permute.xlu0 %4129
      %4131 = vrot.lane.b32.xlu0 %v4068, 4
      %v4132 = vpop.permute.xlu0 %4131
      %4133 = vrot.lane.b32.xlu0 %v4069, 4
      %v4134 = vpop.permute.xlu0 %4133
      %4135 = vrot.lane.b32.xlu0 %v4070, 4
      %v4136 = vpop.permute.xlu0 %4135
      %4137 = vrot.lane.b32.xlu0 %v4071, 4
      %v4138 = vpop.permute.xlu0 %4137
      %4139 = vrot.lane.b32.xlu0 %v4072, 4
      %v4140 = vpop.permute.xlu0 %4139
      %4141 = vrot.lane.b32.xlu0 %v4073, 4
      %v4142 = vpop.permute.xlu0 %4141
      %4143 = vrot.lane.b32.xlu0 %v4074, 4
      %v4144 = vpop.permute.xlu0 %4143
      %4145 = vrot.lane.b32.xlu0 %v4075, 4
      %v4146 = vpop.permute.xlu0 %4145
      %4147 = vrot.lane.b32.xlu0 %v4076, 4
      %v4148 = vpop.permute.xlu0 %4147
      %4149 = vrot.lane.b32.xlu0 %v4077, 4
      %v4150 = vpop.permute.xlu0 %4149
      %4151 = vrot.lane.b32.xlu0 %v4078, 4
      %v4152 = vpop.permute.xlu0 %4151
      %4153 = vrot.lane.b32.xlu0 %v4079, 4
      %v4154 = vpop.permute.xlu0 %4153
      %4155 = vrot.lane.b32.xlu0 %v4080, 4
      %v4156 = vpop.permute.xlu0 %4155
      %4157 = vrot.lane.b32.xlu0 %v4081, 4
      %v4158 = vpop.permute.xlu0 %4157
      %4159 = vrot.lane.b32.xlu0 %v4082, 4
      %v4160 = vpop.permute.xlu0 %4159
      %4161 = vrot.lane.b32.xlu0 %v4083, 4
      %v4162 = vpop.permute.xlu0 %4161
      %4163 = vrot.lane.b32.xlu0 %v4084, 4
      %v4164 = vpop.permute.xlu0 %4163
      %4165 = vrot.lane.b32.xlu0 %v4085, 4
      %v4166 = vpop.permute.xlu0 %4165
      %4167 = vrot.lane.b32.xlu0 %v4086, 4
      %v4168 = vpop.permute.xlu0 %4167
      %4169 = vrot.lane.b32.xlu0 %v4087, 4
      %v4170 = vpop.permute.xlu0 %4169
      %4171 = vrot.lane.b32.xlu0 %v4088, 4
      %v4172 = vpop.permute.xlu0 %4171
      %4173 = vrot.lane.b32.xlu0 %v4089, 4
      %v4174 = vpop.permute.xlu0 %4173
      %4175 = vrot.lane.b32.xlu0 %v4090, 4
      %v4176 = vpop.permute.xlu0 %4175
      %4177 = vrot.lane.b32.xlu0 %v4091, 4
      %v4178 = vpop.permute.xlu0 %4177
      %4179 = vrot.lane.b32.xlu0 %v4092, 4
      %v4180 = vpop.permute.xlu0 %4179
      %4181 = vrot.lane.b32.xlu0 %v4093, 4
      %v4182 = vpop.permute.xlu0 %4181
      %4183 = vrot.lane.b32.xlu0 %v4094, 4
      %v4184 = vpop.permute.xlu0 %4183
      %4215 = vst.msk [vmem:[#allocation4 + $0x10] sm:$0xff] %vm901, %v4126
      %4216 = vst.msk [vmem:[#allocation4 + $0x18] sm:$0xff] %vm901, %v4128
      %4217 = vst.msk [vmem:[#allocation4 + $0x20] sm:$0xff] %vm901, %v4130
      %4218 = vst.msk [vmem:[#allocation4 + $0x28] sm:$0xff] %vm901, %v4132
      %4219 = vst.msk [vmem:[#allocation4 + $0x30] sm:$0xff] %vm901, %v4134
      %4220 = vst.msk [vmem:[#allocation4 + $0x38] sm:$0xff] %vm901, %v4136
      %4221 = vst.msk [vmem:[#allocation4 + $0x40] sm:$0xff] %vm901, %v4138
      %4222 = vst.msk [vmem:[#allocation4 + $0x48] sm:$0xff] %vm901, %v4140
      %4223 = vst.msk [vmem:[#allocation4 + $0x50] sm:$0xff] %vm901, %v4142
      %4224 = vst.msk [vmem:[#allocation4 + $0x58] sm:$0xff] %vm901, %v4144
      %4225 = vst.msk [vmem:[#allocation4 + $0x60] sm:$0xff] %vm901, %v4146
      %4226 = vst.msk [vmem:[#allocation4 + $0x68] sm:$0xff] %vm901, %v4148
      %4227 = vst.msk [vmem:[#allocation4 + $0x70] sm:$0xff] %vm901, %v4150
      %4228 = vst.msk [vmem:[#allocation4 + $0x78] sm:$0xff] %vm901, %v4152
      %4229 = vst.msk [vmem:[#allocation4 + $0x80] sm:$0xff] %vm901, %v4154
      %4230 = vst.msk [vmem:[#allocation4 + $0x88] sm:$0xff] %vm901, %v4156
      %4231 = vst.msk [vmem:[#allocation4 + $0x90] sm:$0xff] %vm901, %v4158
      %4232 = vst.msk [vmem:[#allocation4 + $0x98] sm:$0xff] %vm901, %v4160
      %4233 = vst.msk [vmem:[#allocation4 + $0xa0] sm:$0xff] %vm901, %v4162
      %4234 = vst.msk [vmem:[#allocation4 + $0xa8] sm:$0xff] %vm901, %v4164
      %4235 = vst.msk [vmem:[#allocation4 + $0xb0] sm:$0xff] %vm901, %v4166
      %4236 = vst.msk [vmem:[#allocation4 + $0xb8] sm:$0xff] %vm901, %v4168
      %4237 = vst.msk [vmem:[#allocation4 + $0xc0] sm:$0xff] %vm901, %v4170
      %4238 = vst.msk [vmem:[#allocation4 + $0xc8] sm:$0xff] %vm901, %v4172
      %4239 = vst.msk [vmem:[#allocation4 + $0xd0] sm:$0xff] %vm901, %v4174
      %4240 = vst.msk [vmem:[#allocation4 + $0xd8] sm:$0xff] %vm901, %v4176
      %4241 = vst.msk [vmem:[#allocation4 + $0xe0] sm:$0xff] %vm901, %v4178
      %4242 = vst.msk [vmem:[#allocation4 + $0xe8] sm:$0xff] %vm901, %v4180
      %4243 = vst.msk [vmem:[#allocation4 + $0xf0] sm:$0xff] %vm901, %v4182
      %4244 = vst.msk [vmem:[#allocation4 + $0xf8] sm:$0xff] %vm901, %v4184
      %4245 = vst.msk [vmem:[#allocation4] sm:$0xff] %vm1084, 0.0
      %4246 = vst.msk [vmem:[#allocation4 + $0x8] sm:$0x7f] %vm1086, 0.0
      %v4247 = vld [vmem:[#allocation3] sm:$0xff]
      %v4248 = vld [vmem:[#allocation3 + $0x8] sm:$0xff]
      %v4249 = vld [vmem:[#allocation3 + $0x10] sm:$0xff]
      %v4250 = vld [vmem:[#allocation3 + $0x18] sm:$0xff]
      %v4251 = vld [vmem:[#allocation3 + $0x20] sm:$0xff]
      %v4252 = vld [vmem:[#allocation3 + $0x28] sm:$0xff]
      %v4253 = vld [vmem:[#allocation3 + $0x30] sm:$0xff]
      %v4254 = vld [vmem:[#allocation3 + $0x38] sm:$0xff]
      %v4255 = vld [vmem:[#allocation3 + $0x40] sm:$0xff]
      %v4256 = vld [vmem:[#allocation3 + $0x48] sm:$0xff]
      %v4257 = vld [vmem:[#allocation3 + $0x50] sm:$0xff]
      %v4258 = vld [vmem:[#allocation3 + $0x58] sm:$0xff]
      %v4259 = vld [vmem:[#allocation3 + $0x60] sm:$0xff]
      %v4260 = vld [vmem:[#allocation3 + $0x68] sm:$0xff]
      %v4261 = vld [vmem:[#allocation3 + $0x70] sm:$0xff]
      %v4262 = vld [vmem:[#allocation3 + $0x78] sm:$0xff]
      %v4263 = vld [vmem:[#allocation3 + $0x80] sm:$0xff]
      %v4264 = vld [vmem:[#allocation3 + $0x88] sm:$0xff]
      %v4265 = vld [vmem:[#allocation3 + $0x90] sm:$0xff]
      %v4266 = vld [vmem:[#allocation3 + $0x98] sm:$0xff]
      %v4267 = vld [vmem:[#allocation3 + $0xa0] sm:$0xff]
      %v4268 = vld [vmem:[#allocation3 + $0xa8] sm:$0xff]
      %v4269 = vld [vmem:[#allocation3 + $0xb0] sm:$0xff]
      %v4270 = vld [vmem:[#allocation3 + $0xb8] sm:$0xff]
      %v4271 = vld [vmem:[#allocation3 + $0xc0] sm:$0xff]
      %v4272 = vld [vmem:[#allocation3 + $0xc8] sm:$0xff]
      %v4273 = vld [vmem:[#allocation3 + $0xd0] sm:$0xff]
      %v4274 = vld [vmem:[#allocation3 + $0xd8] sm:$0xff]
      %v4275 = vld [vmem:[#allocation3 + $0xe0] sm:$0xff]
      %v4276 = vld [vmem:[#allocation3 + $0xe8] sm:$0xff]
      %v4277 = vld [vmem:[#allocation3 + $0xf0] sm:$0x1]
      %v4278 = vld [vmem:[%s8 + $0xf] sm:$0xff]
      %v4279 = vld [vmem:[%s8 + $0x17] sm:$0xff]
      %v4280 = vld [vmem:[%s8 + $0x1f] sm:$0xff]
      %v4281 = vld [vmem:[%s8 + $0x27] sm:$0xff]
      %v4282 = vld [vmem:[%s8 + $0x2f] sm:$0xff]
      %v4283 = vld [vmem:[%s8 + $0x37] sm:$0xff]
      %v4284 = vld [vmem:[%s8 + $0x3f] sm:$0xff]
      %v4285 = vld [vmem:[%s8 + $0x47] sm:$0xff]
      %v4286 = vld [vmem:[%s8 + $0x4f] sm:$0xff]
      %v4287 = vld [vmem:[%s8 + $0x57] sm:$0xff]
      %v4288 = vld [vmem:[%s8 + $0x5f] sm:$0xff]
      %v4289 = vld [vmem:[%s8 + $0x67] sm:$0xff]
      %v4290 = vld [vmem:[%s8 + $0x6f] sm:$0xff]
      %v4291 = vld [vmem:[%s8 + $0x77] sm:$0xff]
      %v4292 = vld [vmem:[%s8 + $0x7f] sm:$0xff]
      %v4293 = vld [vmem:[%s8 + $0x87] sm:$0xff]
      %v4294 = vld [vmem:[%s8 + $0x8f] sm:$0xff]
      %v4295 = vld [vmem:[%s8 + $0x97] sm:$0xff]
      %v4296 = vld [vmem:[%s8 + $0x9f] sm:$0xff]
      %v4297 = vld [vmem:[%s8 + $0xa7] sm:$0xff]
      %v4298 = vld [vmem:[%s8 + $0xaf] sm:$0xff]
      %v4299 = vld [vmem:[%s8 + $0xb7] sm:$0xff]
      %v4300 = vld [vmem:[%s8 + $0xbf] sm:$0xff]
      %v4301 = vld [vmem:[%s8 + $0xc7] sm:$0xff]
      %v4302 = vld [vmem:[%s8 + $0xcf] sm:$0xff]
      %v4303 = vld [vmem:[%s8 + $0xd7] sm:$0xff]
      %v4304 = vld [vmem:[%s8 + $0xdf] sm:$0xff]
      %v4305 = vld [vmem:[%s8 + $0xe7] sm:$0xff]
      %v4306 = vld [vmem:[%s8 + $0xef] sm:$0xff]
      %v4307 = vld [vmem:[%s8 + $0xf7] sm:$0xff]
      %v4308 = vld [vmem:[%s8 + $0xff] sm:$0x1]
      %4310 = vset.pattern.permute.xlu0 0
      %4311 = vperm.xlu0 %4310, %v4278
      %v4312 = vpop.permute.xlu0 %4311
      %4315 = vset.pattern.permute.xlu0 0
      %4316 = vperm.xlu0 %4315, %v4279
      %v4317 = vpop.permute.xlu0 %4316
      %4320 = vset.pattern.permute.xlu0 0
      %4321 = vperm.xlu0 %4320, %v4280
      %v4322 = vpop.permute.xlu0 %4321
      %4325 = vset.pattern.permute.xlu0 0
      %4326 = vperm.xlu0 %4325, %v4281
      %v4327 = vpop.permute.xlu0 %4326
      %4330 = vset.pattern.permute.xlu0 0
      %4331 = vperm.xlu0 %4330, %v4282
      %v4332 = vpop.permute.xlu0 %4331
      %4335 = vset.pattern.permute.xlu0 0
      %4336 = vperm.xlu0 %4335, %v4283
      %v4337 = vpop.permute.xlu0 %4336
      %4340 = vset.pattern.permute.xlu0 0
      %4341 = vperm.xlu0 %4340, %v4284
      %v4342 = vpop.permute.xlu0 %4341
      %4345 = vset.pattern.permute.xlu0 0
      %4346 = vperm.xlu0 %4345, %v4285
      %v4347 = vpop.permute.xlu0 %4346
      %4350 = vset.pattern.permute.xlu0 0
      %4351 = vperm.xlu0 %4350, %v4286
      %v4352 = vpop.permute.xlu0 %4351
      %4355 = vset.pattern.permute.xlu0 0
      %4356 = vperm.xlu0 %4355, %v4287
      %v4357 = vpop.permute.xlu0 %4356
      %4360 = vset.pattern.permute.xlu0 0
      %4361 = vperm.xlu0 %4360, %v4288
      %v4362 = vpop.permute.xlu0 %4361
      %4365 = vset.pattern.permute.xlu0 0
      %4366 = vperm.xlu0 %4365, %v4289
      %v4367 = vpop.permute.xlu0 %4366
      %4370 = vset.pattern.permute.xlu0 0
      %4371 = vperm.xlu0 %4370, %v4290
      %v4372 = vpop.permute.xlu0 %4371
      %4375 = vset.pattern.permute.xlu0 0
      %4376 = vperm.xlu0 %4375, %v4291
      %v4377 = vpop.permute.xlu0 %4376
      %4380 = vset.pattern.permute.xlu0 0
      %4381 = vperm.xlu0 %4380, %v4292
      %v4382 = vpop.permute.xlu0 %4381
      %4385 = vset.pattern.permute.xlu0 0
      %4386 = vperm.xlu0 %4385, %v4293
      %v4387 = vpop.permute.xlu0 %4386
      %4390 = vset.pattern.permute.xlu0 0
      %4391 = vperm.xlu0 %4390, %v4294
      %v4392 = vpop.permute.xlu0 %4391
      %4395 = vset.pattern.permute.xlu0 0
      %4396 = vperm.xlu0 %4395, %v4295
      %v4397 = vpop.permute.xlu0 %4396
      %4400 = vset.pattern.permute.xlu0 0
      %4401 = vperm.xlu0 %4400, %v4296
      %v4402 = vpop.permute.xlu0 %4401
      %4405 = vset.pattern.permute.xlu0 0
      %4406 = vperm.xlu0 %4405, %v4297
      %v4407 = vpop.permute.xlu0 %4406
      %4410 = vset.pattern.permute.xlu0 0
      %4411 = vperm.xlu0 %4410, %v4298
      %v4412 = vpop.permute.xlu0 %4411
      %4415 = vset.pattern.permute.xlu0 0
      %4416 = vperm.xlu0 %4415, %v4299
      %v4417 = vpop.permute.xlu0 %4416
      %4420 = vset.pattern.permute.xlu0 0
      %4421 = vperm.xlu0 %4420, %v4300
      %v4422 = vpop.permute.xlu0 %4421
      %4425 = vset.pattern.permute.xlu0 0
      %4426 = vperm.xlu0 %4425, %v4301
      %v4427 = vpop.permute.xlu0 %4426
      %4430 = vset.pattern.permute.xlu0 0
      %4431 = vperm.xlu0 %4430, %v4302
      %v4432 = vpop.permute.xlu0 %4431
      %4435 = vset.pattern.permute.xlu0 0
      %4436 = vperm.xlu0 %4435, %v4303
      %v4437 = vpop.permute.xlu0 %4436
      %4440 = vset.pattern.permute.xlu0 0
      %4441 = vperm.xlu0 %4440, %v4304
      %v4442 = vpop.permute.xlu0 %4441
      %4445 = vset.pattern.permute.xlu0 0
      %4446 = vperm.xlu0 %4445, %v4305
      %v4447 = vpop.permute.xlu0 %4446
      %4450 = vset.pattern.permute.xlu0 0
      %4451 = vperm.xlu0 %4450, %v4306
      %v4452 = vpop.permute.xlu0 %4451
      %4455 = vset.pattern.permute.xlu0 0
      %4456 = vperm.xlu0 %4455, %v4307
      %v4457 = vpop.permute.xlu0 %4456
      %4460 = vset.pattern.permute.xlu0 0
      %4461 = vperm.xlu0 %4460, %v4308
      %v4462 = vpop.permute.xlu0 %4461
      %v4464 = vmul.f32 %v4247, %v4312
      %v4465 = vmul.f32 %v4248, %v4317
      %v4466 = vmul.f32 %v4249, %v4322
      %v4467 = vmul.f32 %v4250, %v4327
      %v4468 = vmul.f32 %v4251, %v4332
      %v4469 = vmul.f32 %v4252, %v4337
      %v4470 = vmul.f32 %v4253, %v4342
      %v4471 = vmul.f32 %v4254, %v4347
      %v4472 = vmul.f32 %v4255, %v4352
      %v4473 = vmul.f32 %v4256, %v4357
      %v4474 = vmul.f32 %v4257, %v4362
      %v4475 = vmul.f32 %v4258, %v4367
      %v4476 = vmul.f32 %v4259, %v4372
      %v4477 = vmul.f32 %v4260, %v4377
      %v4478 = vmul.f32 %v4261, %v4382
      %v4479 = vmul.f32 %v4262, %v4387
      %v4480 = vmul.f32 %v4263, %v4392
      %v4481 = vmul.f32 %v4264, %v4397
      %v4482 = vmul.f32 %v4265, %v4402
      %v4483 = vmul.f32 %v4266, %v4407
      %v4484 = vmul.f32 %v4267, %v4412
      %v4485 = vmul.f32 %v4268, %v4417
      %v4486 = vmul.f32 %v4269, %v4422
      %v4487 = vmul.f32 %v4270, %v4427
      %v4488 = vmul.f32 %v4271, %v4432
      %v4489 = vmul.f32 %v4272, %v4437
      %v4490 = vmul.f32 %v4273, %v4442
      %v4491 = vmul.f32 %v4274, %v4447
      %v4492 = vmul.f32 %v4275, %v4452
      %v4493 = vmul.f32 %v4276, %v4457
      %v4494 = vmul.f32 %v4277, %v4462
      %4526 = vrot.lane.b32.xlu0 %v4464, 8
      %v4527 = vpop.permute.xlu0 %4526
      %4528 = vrot.lane.b32.xlu0 %v4465, 8
      %v4529 = vpop.permute.xlu0 %4528
      %4530 = vrot.lane.b32.xlu0 %v4466, 8
      %v4531 = vpop.permute.xlu0 %4530
      %4532 = vrot.lane.b32.xlu0 %v4467, 8
      %v4533 = vpop.permute.xlu0 %4532
      %4534 = vrot.lane.b32.xlu0 %v4468, 8
      %v4535 = vpop.permute.xlu0 %4534
      %4536 = vrot.lane.b32.xlu0 %v4469, 8
      %v4537 = vpop.permute.xlu0 %4536
      %4538 = vrot.lane.b32.xlu0 %v4470, 8
      %v4539 = vpop.permute.xlu0 %4538
      %4540 = vrot.lane.b32.xlu0 %v4471, 8
      %v4541 = vpop.permute.xlu0 %4540
      %4542 = vrot.lane.b32.xlu0 %v4472, 8
      %v4543 = vpop.permute.xlu0 %4542
      %4544 = vrot.lane.b32.xlu0 %v4473, 8
      %v4545 = vpop.permute.xlu0 %4544
      %4546 = vrot.lane.b32.xlu0 %v4474, 8
      %v4547 = vpop.permute.xlu0 %4546
      %4548 = vrot.lane.b32.xlu0 %v4475, 8
      %v4549 = vpop.permute.xlu0 %4548
      %4550 = vrot.lane.b32.xlu0 %v4476, 8
      %v4551 = vpop.permute.xlu0 %4550
      %4552 = vrot.lane.b32.xlu0 %v4477, 8
      %v4553 = vpop.permute.xlu0 %4552
      %4554 = vrot.lane.b32.xlu0 %v4478, 8
      %v4555 = vpop.permute.xlu0 %4554
      %4556 = vrot.lane.b32.xlu0 %v4479, 8
      %v4557 = vpop.permute.xlu0 %4556
      %4558 = vrot.lane.b32.xlu0 %v4480, 8
      %v4559 = vpop.permute.xlu0 %4558
      %4560 = vrot.lane.b32.xlu0 %v4481, 8
      %v4561 = vpop.permute.xlu0 %4560
      %4562 = vrot.lane.b32.xlu0 %v4482, 8
      %v4563 = vpop.permute.xlu0 %4562
      %4564 = vrot.lane.b32.xlu0 %v4483, 8
      %v4565 = vpop.permute.xlu0 %4564
      %4566 = vrot.lane.b32.xlu0 %v4484, 8
      %v4567 = vpop.permute.xlu0 %4566
      %4568 = vrot.lane.b32.xlu0 %v4485, 8
      %v4569 = vpop.permute.xlu0 %4568
      %4570 = vrot.lane.b32.xlu0 %v4486, 8
      %v4571 = vpop.permute.xlu0 %4570
      %4572 = vrot.lane.b32.xlu0 %v4487, 8
      %v4573 = vpop.permute.xlu0 %4572
      %4574 = vrot.lane.b32.xlu0 %v4488, 8
      %v4575 = vpop.permute.xlu0 %4574
      %4576 = vrot.lane.b32.xlu0 %v4489, 8
      %v4577 = vpop.permute.xlu0 %4576
      %4578 = vrot.lane.b32.xlu0 %v4490, 8
      %v4579 = vpop.permute.xlu0 %4578
      %4580 = vrot.lane.b32.xlu0 %v4491, 8
      %v4581 = vpop.permute.xlu0 %4580
      %4582 = vrot.lane.b32.xlu0 %v4492, 8
      %v4583 = vpop.permute.xlu0 %4582
      %4584 = vrot.lane.b32.xlu0 %v4493, 8
      %v4585 = vpop.permute.xlu0 %4584
      %4586 = vrot.lane.b32.xlu0 %v4494, 8
      %v4587 = vpop.permute.xlu0 %4586
      %4619 = vst.msk [vmem:[#allocation4 + $0xf] sm:$0xff] %vm1084, %v4527
      %4620 = vst.msk [vmem:[#allocation4 + $0x17] sm:$0xff] %vm1084, %v4529
      %4621 = vst.msk [vmem:[#allocation4 + $0x1f] sm:$0xff] %vm1084, %v4531
      %4622 = vst.msk [vmem:[#allocation4 + $0x27] sm:$0xff] %vm1084, %v4533
      %4623 = vst.msk [vmem:[#allocation4 + $0x2f] sm:$0xff] %vm1084, %v4535
      %4624 = vst.msk [vmem:[#allocation4 + $0x37] sm:$0xff] %vm1084, %v4537
      %4625 = vst.msk [vmem:[#allocation4 + $0x3f] sm:$0xff] %vm1084, %v4539
      %4626 = vst.msk [vmem:[#allocation4 + $0x47] sm:$0xff] %vm1084, %v4541
      %4627 = vst.msk [vmem:[#allocation4 + $0x4f] sm:$0xff] %vm1084, %v4543
      %4628 = vst.msk [vmem:[#allocation4 + $0x57] sm:$0xff] %vm1084, %v4545
      %4629 = vst.msk [vmem:[#allocation4 + $0x5f] sm:$0xff] %vm1084, %v4547
      %4630 = vst.msk [vmem:[#allocation4 + $0x67] sm:$0xff] %vm1084, %v4549
      %4631 = vst.msk [vmem:[#allocation4 + $0x6f] sm:$0xff] %vm1084, %v4551
      %4632 = vst.msk [vmem:[#allocation4 + $0x77] sm:$0xff] %vm1084, %v4553
      %4633 = vst.msk [vmem:[#allocation4 + $0x7f] sm:$0xff] %vm1084, %v4555
      %4634 = vst.msk [vmem:[#allocation4 + $0x87] sm:$0xff] %vm1084, %v4557
      %4635 = vst.msk [vmem:[#allocation4 + $0x8f] sm:$0xff] %vm1084, %v4559
      %4636 = vst.msk [vmem:[#allocation4 + $0x97] sm:$0xff] %vm1084, %v4561
      %4637 = vst.msk [vmem:[#allocation4 + $0x9f] sm:$0xff] %vm1084, %v4563
      %4638 = vst.msk [vmem:[#allocation4 + $0xa7] sm:$0xff] %vm1084, %v4565
      %4639 = vst.msk [vmem:[#allocation4 + $0xaf] sm:$0xff] %vm1084, %v4567
      %4640 = vst.msk [vmem:[#allocation4 + $0xb7] sm:$0xff] %vm1084, %v4569
      %4641 = vst.msk [vmem:[#allocation4 + $0xbf] sm:$0xff] %vm1084, %v4571
      %4642 = vst.msk [vmem:[#allocation4 + $0xc7] sm:$0xff] %vm1084, %v4573
      %4643 = vst.msk [vmem:[#allocation4 + $0xcf] sm:$0xff] %vm1084, %v4575
      %4644 = vst.msk [vmem:[#allocation4 + $0xd7] sm:$0xff] %vm1084, %v4577
      %4645 = vst.msk [vmem:[#allocation4 + $0xdf] sm:$0xff] %vm1084, %v4579
      %4646 = vst.msk [vmem:[#allocation4 + $0xe7] sm:$0xff] %vm1084, %v4581
      %4647 = vst.msk [vmem:[#allocation4 + $0xef] sm:$0xff] %vm1084, %v4583
      %4648 = vst.msk [vmem:[#allocation4 + $0xf7] sm:$0xff] %vm1084, %v4585
      %4649 = vst.msk [vmem:[#allocation4 + $0xff] sm:$0x1] %vm1490, %v4587
      %4650 = vst.msk [vmem:[#allocation4] sm:$0x1] %vm1492, 0.0
      %v4651 = vld [vmem:[#allocation3] sm:$0xff]
      %v4652 = vld [vmem:[#allocation3 + $0x8] sm:$0xff]
      %v4653 = vld [vmem:[#allocation3 + $0x10] sm:$0xff]
      %v4654 = vld [vmem:[#allocation3 + $0x18] sm:$0xff]
      %v4655 = vld [vmem:[#allocation3 + $0x20] sm:$0xff]
      %v4656 = vld [vmem:[#allocation3 + $0x28] sm:$0xff]
      %v4657 = vld [vmem:[#allocation3 + $0x30] sm:$0xff]
      %v4658 = vld [vmem:[#allocation3 + $0x38] sm:$0xff]
      %v4659 = vld [vmem:[#allocation3 + $0x40] sm:$0xff]
      %v4660 = vld [vmem:[#allocation3 + $0x48] sm:$0xff]
      %v4661 = vld [vmem:[#allocation3 + $0x50] sm:$0xff]
      %v4662 = vld [vmem:[#allocation3 + $0x58] sm:$0xff]
      %v4663 = vld [vmem:[#allocation3 + $0x60] sm:$0xff]
      %v4664 = vld [vmem:[#allocation3 + $0x68] sm:$0xff]
      %v4665 = vld [vmem:[#allocation3 + $0x70] sm:$0xff]
      %v4666 = vld [vmem:[#allocation3 + $0x78] sm:$0xff]
      %v4667 = vld [vmem:[#allocation3 + $0x80] sm:$0xff]
      %v4668 = vld [vmem:[#allocation3 + $0x88] sm:$0xff]
      %v4669 = vld [vmem:[#allocation3 + $0x90] sm:$0xff]
      %v4670 = vld [vmem:[#allocation3 + $0x98] sm:$0xff]
      %v4671 = vld [vmem:[#allocation3 + $0xa0] sm:$0xff]
      %v4672 = vld [vmem:[#allocation3 + $0xa8] sm:$0xff]
      %v4673 = vld [vmem:[#allocation3 + $0xb0] sm:$0xff]
      %v4674 = vld [vmem:[#allocation3 + $0xb8] sm:$0xff]
      %v4675 = vld [vmem:[#allocation3 + $0xc0] sm:$0xff]
      %v4676 = vld [vmem:[#allocation3 + $0xc8] sm:$0xff]
      %v4677 = vld [vmem:[#allocation3 + $0xd0] sm:$0xff]
      %v4678 = vld [vmem:[#allocation3 + $0xd8] sm:$0xff]
      %v4679 = vld [vmem:[#allocation3 + $0xe0] sm:$0xff]
      %v4680 = vld [vmem:[#allocation3 + $0xe8] sm:$0xff]
      %v4681 = vld [vmem:[#allocation3 + $0xf0] sm:$0xff]
      %v4682 = vld [vmem:[#allocation3 + $0xf8] sm:$0x7f]
      %v4683 = vld [vmem:[%s7 + $0x1] sm:$0xff]
      %v4684 = vld [vmem:[%s7 + $0x9] sm:$0xff]
      %v4685 = vld [vmem:[%s7 + $0x11] sm:$0xff]
      %v4686 = vld [vmem:[%s7 + $0x19] sm:$0xff]
      %v4687 = vld [vmem:[%s7 + $0x21] sm:$0xff]
      %v4688 = vld [vmem:[%s7 + $0x29] sm:$0xff]
      %v4689 = vld [vmem:[%s7 + $0x31] sm:$0xff]
      %v4690 = vld [vmem:[%s7 + $0x39] sm:$0xff]
      %v4691 = vld [vmem:[%s7 + $0x41] sm:$0xff]
      %v4692 = vld [vmem:[%s7 + $0x49] sm:$0xff]
      %v4693 = vld [vmem:[%s7 + $0x51] sm:$0xff]
      %v4694 = vld [vmem:[%s7 + $0x59] sm:$0xff]
      %v4695 = vld [vmem:[%s7 + $0x61] sm:$0xff]
      %v4696 = vld [vmem:[%s7 + $0x69] sm:$0xff]
      %v4697 = vld [vmem:[%s7 + $0x71] sm:$0xff]
      %v4698 = vld [vmem:[%s7 + $0x79] sm:$0xff]
      %v4699 = vld [vmem:[%s7 + $0x81] sm:$0xff]
      %v4700 = vld [vmem:[%s7 + $0x89] sm:$0xff]
      %v4701 = vld [vmem:[%s7 + $0x91] sm:$0xff]
      %v4702 = vld [vmem:[%s7 + $0x99] sm:$0xff]
      %v4703 = vld [vmem:[%s7 + $0xa1] sm:$0xff]
      %v4704 = vld [vmem:[%s7 + $0xa9] sm:$0xff]
      %v4705 = vld [vmem:[%s7 + $0xb1] sm:$0xff]
      %v4706 = vld [vmem:[%s7 + $0xb9] sm:$0xff]
      %v4707 = vld [vmem:[%s7 + $0xc1] sm:$0xff]
      %v4708 = vld [vmem:[%s7 + $0xc9] sm:$0xff]
      %v4709 = vld [vmem:[%s7 + $0xd1] sm:$0xff]
      %v4710 = vld [vmem:[%s7 + $0xd9] sm:$0xff]
      %v4711 = vld [vmem:[%s7 + $0xe1] sm:$0xff]
      %v4712 = vld [vmem:[%s7 + $0xe9] sm:$0xff]
      %v4713 = vld [vmem:[%s7 + $0xf1] sm:$0xff]
      %v4714 = vld [vmem:[%s7 + $0xf9] sm:$0x7f]
      %4716 = vset.pattern.permute.xlu0 0
      %4717 = vperm.xlu0 %4716, %v4683
      %v4718 = vpop.permute.xlu0 %4717
      %4721 = vset.pattern.permute.xlu0 0
      %4722 = vperm.xlu0 %4721, %v4684
      %v4723 = vpop.permute.xlu0 %4722
      %4726 = vset.pattern.permute.xlu0 0
      %4727 = vperm.xlu0 %4726, %v4685
      %v4728 = vpop.permute.xlu0 %4727
      %4731 = vset.pattern.permute.xlu0 0
      %4732 = vperm.xlu0 %4731, %v4686
      %v4733 = vpop.permute.xlu0 %4732
      %4736 = vset.pattern.permute.xlu0 0
      %4737 = vperm.xlu0 %4736, %v4687
      %v4738 = vpop.permute.xlu0 %4737
      %4741 = vset.pattern.permute.xlu0 0
      %4742 = vperm.xlu0 %4741, %v4688
      %v4743 = vpop.permute.xlu0 %4742
      %4746 = vset.pattern.permute.xlu0 0
      %4747 = vperm.xlu0 %4746, %v4689
      %v4748 = vpop.permute.xlu0 %4747
      %4751 = vset.pattern.permute.xlu0 0
      %4752 = vperm.xlu0 %4751, %v4690
      %v4753 = vpop.permute.xlu0 %4752
      %4756 = vset.pattern.permute.xlu0 0
      %4757 = vperm.xlu0 %4756, %v4691
      %v4758 = vpop.permute.xlu0 %4757
      %4761 = vset.pattern.permute.xlu0 0
      %4762 = vperm.xlu0 %4761, %v4692
      %v4763 = vpop.permute.xlu0 %4762
      %4766 = vset.pattern.permute.xlu0 0
      %4767 = vperm.xlu0 %4766, %v4693
      %v4768 = vpop.permute.xlu0 %4767
      %4771 = vset.pattern.permute.xlu0 0
      %4772 = vperm.xlu0 %4771, %v4694
      %v4773 = vpop.permute.xlu0 %4772
      %4776 = vset.pattern.permute.xlu0 0
      %4777 = vperm.xlu0 %4776, %v4695
      %v4778 = vpop.permute.xlu0 %4777
      %4781 = vset.pattern.permute.xlu0 0
      %4782 = vperm.xlu0 %4781, %v4696
      %v4783 = vpop.permute.xlu0 %4782
      %4786 = vset.pattern.permute.xlu0 0
      %4787 = vperm.xlu0 %4786, %v4697
      %v4788 = vpop.permute.xlu0 %4787
      %4791 = vset.pattern.permute.xlu0 0
      %4792 = vperm.xlu0 %4791, %v4698
      %v4793 = vpop.permute.xlu0 %4792
      %4796 = vset.pattern.permute.xlu0 0
      %4797 = vperm.xlu0 %4796, %v4699
      %v4798 = vpop.permute.xlu0 %4797
      %4801 = vset.pattern.permute.xlu0 0
      %4802 = vperm.xlu0 %4801, %v4700
      %v4803 = vpop.permute.xlu0 %4802
      %4806 = vset.pattern.permute.xlu0 0
      %4807 = vperm.xlu0 %4806, %v4701
      %v4808 = vpop.permute.xlu0 %4807
      %4811 = vset.pattern.permute.xlu0 0
      %4812 = vperm.xlu0 %4811, %v4702
      %v4813 = vpop.permute.xlu0 %4812
      %4816 = vset.pattern.permute.xlu0 0
      %4817 = vperm.xlu0 %4816, %v4703
      %v4818 = vpop.permute.xlu0 %4817
      %4821 = vset.pattern.permute.xlu0 0
      %4822 = vperm.xlu0 %4821, %v4704
      %v4823 = vpop.permute.xlu0 %4822
      %4826 = vset.pattern.permute.xlu0 0
      %4827 = vperm.xlu0 %4826, %v4705
      %v4828 = vpop.permute.xlu0 %4827
      %4831 = vset.pattern.permute.xlu0 0
      %4832 = vperm.xlu0 %4831, %v4706
      %v4833 = vpop.permute.xlu0 %4832
      %4836 = vset.pattern.permute.xlu0 0
      %4837 = vperm.xlu0 %4836, %v4707
      %v4838 = vpop.permute.xlu0 %4837
      %4841 = vset.pattern.permute.xlu0 0
      %4842 = vperm.xlu0 %4841, %v4708
      %v4843 = vpop.permute.xlu0 %4842
      %4846 = vset.pattern.permute.xlu0 0
      %4847 = vperm.xlu0 %4846, %v4709
      %v4848 = vpop.permute.xlu0 %4847
      %4851 = vset.pattern.permute.xlu0 0
      %4852 = vperm.xlu0 %4851, %v4710
      %v4853 = vpop.permute.xlu0 %4852
      %4856 = vset.pattern.permute.xlu0 0
      %4857 = vperm.xlu0 %4856, %v4711
      %v4858 = vpop.permute.xlu0 %4857
      %4861 = vset.pattern.permute.xlu0 0
      %4862 = vperm.xlu0 %4861, %v4712
      %v4863 = vpop.permute.xlu0 %4862
      %4866 = vset.pattern.permute.xlu0 0
      %4867 = vperm.xlu0 %4866, %v4713
      %v4868 = vpop.permute.xlu0 %4867
      %4871 = vset.pattern.permute.xlu0 0
      %4872 = vperm.xlu0 %4871, %v4714
      %v4873 = vpop.permute.xlu0 %4872
      %v4875 = vmul.f32 %v4651, %v4718
      %v4876 = vmul.f32 %v4652, %v4723
      %v4877 = vmul.f32 %v4653, %v4728
      %v4878 = vmul.f32 %v4654, %v4733
      %v4879 = vmul.f32 %v4655, %v4738
      %v4880 = vmul.f32 %v4656, %v4743
      %v4881 = vmul.f32 %v4657, %v4748
      %v4882 = vmul.f32 %v4658, %v4753
      %v4883 = vmul.f32 %v4659, %v4758
      %v4884 = vmul.f32 %v4660, %v4763
      %v4885 = vmul.f32 %v4661, %v4768
      %v4886 = vmul.f32 %v4662, %v4773
      %v4887 = vmul.f32 %v4663, %v4778
      %v4888 = vmul.f32 %v4664, %v4783
      %v4889 = vmul.f32 %v4665, %v4788
      %v4890 = vmul.f32 %v4666, %v4793
      %v4891 = vmul.f32 %v4667, %v4798
      %v4892 = vmul.f32 %v4668, %v4803
      %v4893 = vmul.f32 %v4669, %v4808
      %v4894 = vmul.f32 %v4670, %v4813
      %v4895 = vmul.f32 %v4671, %v4818
      %v4896 = vmul.f32 %v4672, %v4823
      %v4897 = vmul.f32 %v4673, %v4828
      %v4898 = vmul.f32 %v4674, %v4833
      %v4899 = vmul.f32 %v4675, %v4838
      %v4900 = vmul.f32 %v4676, %v4843
      %v4901 = vmul.f32 %v4677, %v4848
      %v4902 = vmul.f32 %v4678, %v4853
      %v4903 = vmul.f32 %v4679, %v4858
      %v4904 = vmul.f32 %v4680, %v4863
      %v4905 = vmul.f32 %v4681, %v4868
      %v4906 = vmul.f32 %v4682, %v4873
      %4939 = vrot.lane.b32.xlu0 %v4875, 12
      %v4940 = vpop.permute.xlu0 %4939
      %4941 = vrot.lane.b32.xlu0 %v4876, 12
      %v4942 = vpop.permute.xlu0 %4941
      %4943 = vrot.lane.b32.xlu0 %v4877, 12
      %v4944 = vpop.permute.xlu0 %4943
      %4945 = vrot.lane.b32.xlu0 %v4878, 12
      %v4946 = vpop.permute.xlu0 %4945
      %4947 = vrot.lane.b32.xlu0 %v4879, 12
      %v4948 = vpop.permute.xlu0 %4947
      %4949 = vrot.lane.b32.xlu0 %v4880, 12
      %v4950 = vpop.permute.xlu0 %4949
      %4951 = vrot.lane.b32.xlu0 %v4881, 12
      %v4952 = vpop.permute.xlu0 %4951
      %4953 = vrot.lane.b32.xlu0 %v4882, 12
      %v4954 = vpop.permute.xlu0 %4953
      %4955 = vrot.lane.b32.xlu0 %v4883, 12
      %v4956 = vpop.permute.xlu0 %4955
      %4957 = vrot.lane.b32.xlu0 %v4884, 12
      %v4958 = vpop.permute.xlu0 %4957
      %4959 = vrot.lane.b32.xlu0 %v4885, 12
      %v4960 = vpop.permute.xlu0 %4959
      %4961 = vrot.lane.b32.xlu0 %v4886, 12
      %v4962 = vpop.permute.xlu0 %4961
      %4963 = vrot.lane.b32.xlu0 %v4887, 12
      %v4964 = vpop.permute.xlu0 %4963
      %4965 = vrot.lane.b32.xlu0 %v4888, 12
      %v4966 = vpop.permute.xlu0 %4965
      %4967 = vrot.lane.b32.xlu0 %v4889, 12
      %v4968 = vpop.permute.xlu0 %4967
      %4969 = vrot.lane.b32.xlu0 %v4890, 12
      %v4970 = vpop.permute.xlu0 %4969
      %4971 = vrot.lane.b32.xlu0 %v4891, 12
      %v4972 = vpop.permute.xlu0 %4971
      %4973 = vrot.lane.b32.xlu0 %v4892, 12
      %v4974 = vpop.permute.xlu0 %4973
      %4975 = vrot.lane.b32.xlu0 %v4893, 12
      %v4976 = vpop.permute.xlu0 %4975
      %4977 = vrot.lane.b32.xlu0 %v4894, 12
      %v4978 = vpop.permute.xlu0 %4977
      %4979 = vrot.lane.b32.xlu0 %v4895, 12
      %v4980 = vpop.permute.xlu0 %4979
      %4981 = vrot.lane.b32.xlu0 %v4896, 12
      %v4982 = vpop.permute.xlu0 %4981
      %4983 = vrot.lane.b32.xlu0 %v4897, 12
      %v4984 = vpop.permute.xlu0 %4983
      %4985 = vrot.lane.b32.xlu0 %v4898, 12
      %v4986 = vpop.permute.xlu0 %4985
      %4987 = vrot.lane.b32.xlu0 %v4899, 12
      %v4988 = vpop.permute.xlu0 %4987
      %4989 = vrot.lane.b32.xlu0 %v4900, 12
      %v4990 = vpop.permute.xlu0 %4989
      %4991 = vrot.lane.b32.xlu0 %v4901, 12
      %v4992 = vpop.permute.xlu0 %4991
      %4993 = vrot.lane.b32.xlu0 %v4902, 12
      %v4994 = vpop.permute.xlu0 %4993
      %4995 = vrot.lane.b32.xlu0 %v4903, 12
      %v4996 = vpop.permute.xlu0 %4995
      %4997 = vrot.lane.b32.xlu0 %v4904, 12
      %v4998 = vpop.permute.xlu0 %4997
      %4999 = vrot.lane.b32.xlu0 %v4905, 12
      %v5000 = vpop.permute.xlu0 %4999
      %5001 = vrot.lane.b32.xlu0 %v4906, 12
      %v5002 = vpop.permute.xlu0 %5001
      %5035 = vst.msk [vmem:[#allocation4 + $0x1] sm:$0xff] %vm1878, %v4940
      %5036 = vst.msk [vmem:[#allocation4 + $0x9] sm:$0xff] %vm1878, %v4942
      %5037 = vst.msk [vmem:[#allocation4 + $0x11] sm:$0xff] %vm1878, %v4944
      %5038 = vst.msk [vmem:[#allocation4 + $0x19] sm:$0xff] %vm1878, %v4946
      %5039 = vst.msk [vmem:[#allocation4 + $0x21] sm:$0xff] %vm1878, %v4948
      %5040 = vst.msk [vmem:[#allocation4 + $0x29] sm:$0xff] %vm1878, %v4950
      %5041 = vst.msk [vmem:[#allocation4 + $0x31] sm:$0xff] %vm1878, %v4952
      %5042 = vst.msk [vmem:[#allocation4 + $0x39] sm:$0xff] %vm1878, %v4954
      %5043 = vst.msk [vmem:[#allocation4 + $0x41] sm:$0xff] %vm1878, %v4956
      %5044 = vst.msk [vmem:[#allocation4 + $0x49] sm:$0xff] %vm1878, %v4958
      %5045 = vst.msk [vmem:[#allocation4 + $0x51] sm:$0xff] %vm1878, %v4960
      %5046 = vst.msk [vmem:[#allocation4 + $0x59] sm:$0xff] %vm1878, %v4962
      %5047 = vst.msk [vmem:[#allocation4 + $0x61] sm:$0xff] %vm1878, %v4964
      %5048 = vst.msk [vmem:[#allocation4 + $0x69] sm:$0xff] %vm1878, %v4966
      %5049 = vst.msk [vmem:[#allocation4 + $0x71] sm:$0xff] %vm1878, %v4968
      %5050 = vst.msk [vmem:[#allocation4 + $0x79] sm:$0xff] %vm1878, %v4970
      %5051 = vst.msk [vmem:[#allocation4 + $0x81] sm:$0xff] %vm1878, %v4972
      %5052 = vst.msk [vmem:[#allocation4 + $0x89] sm:$0xff] %vm1878, %v4974
      %5053 = vst.msk [vmem:[#allocation4 + $0x91] sm:$0xff] %vm1878, %v4976
      %5054 = vst.msk [vmem:[#allocation4 + $0x99] sm:$0xff] %vm1878, %v4978
      %5055 = vst.msk [vmem:[#allocation4 + $0xa1] sm:$0xff] %vm1878, %v4980
      %5056 = vst.msk [vmem:[#allocation4 + $0xa9] sm:$0xff] %vm1878, %v4982
      %5057 = vst.msk [vmem:[#allocation4 + $0xb1] sm:$0xff] %vm1878, %v4984
      %5058 = vst.msk [vmem:[#allocation4 + $0xb9] sm:$0xff] %vm1878, %v4986
      %5059 = vst.msk [vmem:[#allocation4 + $0xc1] sm:$0xff] %vm1878, %v4988
      %5060 = vst.msk [vmem:[#allocation4 + $0xc9] sm:$0xff] %vm1878, %v4990
      %5061 = vst.msk [vmem:[#allocation4 + $0xd1] sm:$0xff] %vm1878, %v4992
      %5062 = vst.msk [vmem:[#allocation4 + $0xd9] sm:$0xff] %vm1878, %v4994
      %5063 = vst.msk [vmem:[#allocation4 + $0xe1] sm:$0xff] %vm1878, %v4996
      %5064 = vst.msk [vmem:[#allocation4 + $0xe9] sm:$0xff] %vm1878, %v4998
      %5065 = vst.msk [vmem:[#allocation4 + $0xf1] sm:$0xff] %vm1878, %v5000
      %5066 = vst.msk [vmem:[#allocation4 + $0xf9] sm:$0x7f] %vm1910, %v5002
      %v5067 = vld [vmem:[#allocation3] sm:$0xff]
      %v5068 = vld [vmem:[#allocation3 + $0x8] sm:$0xff]
      %v5069 = vld [vmem:[#allocation3 + $0x10] sm:$0xff]
      %v5070 = vld [vmem:[#allocation3 + $0x18] sm:$0xff]
      %v5071 = vld [vmem:[#allocation3 + $0x20] sm:$0xff]
      %v5072 = vld [vmem:[#allocation3 + $0x28] sm:$0xff]
      %v5073 = vld [vmem:[#allocation3 + $0x30] sm:$0xff]
      %v5074 = vld [vmem:[#allocation3 + $0x38] sm:$0xff]
      %v5075 = vld [vmem:[#allocation3 + $0x40] sm:$0xff]
      %v5076 = vld [vmem:[#allocation3 + $0x48] sm:$0xff]
      %v5077 = vld [vmem:[#allocation3 + $0x50] sm:$0xff]
      %v5078 = vld [vmem:[#allocation3 + $0x58] sm:$0xff]
      %v5079 = vld [vmem:[#allocation3 + $0x60] sm:$0xff]
      %v5080 = vld [vmem:[#allocation3 + $0x68] sm:$0xff]
      %v5081 = vld [vmem:[#allocation3 + $0x70] sm:$0xff]
      %v5082 = vld [vmem:[#allocation3 + $0x78] sm:$0xff]
      %v5083 = vld [vmem:[#allocation3 + $0x80] sm:$0xff]
      %v5084 = vld [vmem:[#allocation3 + $0x88] sm:$0xff]
      %v5085 = vld [vmem:[#allocation3 + $0x90] sm:$0xff]
      %v5086 = vld [vmem:[#allocation3 + $0x98] sm:$0xff]
      %v5087 = vld [vmem:[#allocation3 + $0xa0] sm:$0xff]
      %v5088 = vld [vmem:[#allocation3 + $0xa8] sm:$0xff]
      %v5089 = vld [vmem:[#allocation3 + $0xb0] sm:$0xff]
      %v5090 = vld [vmem:[#allocation3 + $0xb8] sm:$0xff]
      %v5091 = vld [vmem:[#allocation3 + $0xc0] sm:$0xff]
      %v5092 = vld [vmem:[#allocation3 + $0xc8] sm:$0xff]
      %v5093 = vld [vmem:[#allocation3 + $0xd0] sm:$0xff]
      %v5094 = vld [vmem:[#allocation3 + $0xd8] sm:$0xff]
      %v5095 = vld [vmem:[#allocation3 + $0xe0] sm:$0xff]
      %v5096 = vld [vmem:[#allocation3 + $0xe8] sm:$0xff]
      %v5097 = vld [vmem:[#allocation3 + $0xf0] sm:$0xff]
      %v5098 = vld [vmem:[#allocation3 + $0xf8] sm:$0xff]
      %5131 = vrot.lane.b32.xlu0 %v5067, 16
      %v5132 = vpop.permute.xlu0 %5131
      %5133 = vrot.lane.b32.xlu0 %v5068, 16
      %v5134 = vpop.permute.xlu0 %5133
      %5135 = vrot.lane.b32.xlu0 %v5069, 16
      %v5136 = vpop.permute.xlu0 %5135
      %5137 = vrot.lane.b32.xlu0 %v5070, 16
      %v5138 = vpop.permute.xlu0 %5137
      %5139 = vrot.lane.b32.xlu0 %v5071, 16
      %v5140 = vpop.permute.xlu0 %5139
      %5141 = vrot.lane.b32.xlu0 %v5072, 16
      %v5142 = vpop.permute.xlu0 %5141
      %5143 = vrot.lane.b32.xlu0 %v5073, 16
      %v5144 = vpop.permute.xlu0 %5143
      %5145 = vrot.lane.b32.xlu0 %v5074, 16
      %v5146 = vpop.permute.xlu0 %5145
      %5147 = vrot.lane.b32.xlu0 %v5075, 16
      %v5148 = vpop.permute.xlu0 %5147
      %5149 = vrot.lane.b32.xlu0 %v5076, 16
      %v5150 = vpop.permute.xlu0 %5149
      %5151 = vrot.lane.b32.xlu0 %v5077, 16
      %v5152 = vpop.permute.xlu0 %5151
      %5153 = vrot.lane.b32.xlu0 %v5078, 16
      %v5154 = vpop.permute.xlu0 %5153
      %5155 = vrot.lane.b32.xlu0 %v5079, 16
      %v5156 = vpop.permute.xlu0 %5155
      %5157 = vrot.lane.b32.xlu0 %v5080, 16
      %v5158 = vpop.permute.xlu0 %5157
      %5159 = vrot.lane.b32.xlu0 %v5081, 16
      %v5160 = vpop.permute.xlu0 %5159
      %5161 = vrot.lane.b32.xlu0 %v5082, 16
      %v5162 = vpop.permute.xlu0 %5161
      %5163 = vrot.lane.b32.xlu0 %v5083, 16
      %v5164 = vpop.permute.xlu0 %5163
      %5165 = vrot.lane.b32.xlu0 %v5084, 16
      %v5166 = vpop.permute.xlu0 %5165
      %5167 = vrot.lane.b32.xlu0 %v5085, 16
      %v5168 = vpop.permute.xlu0 %5167
      %5169 = vrot.lane.b32.xlu0 %v5086, 16
      %v5170 = vpop.permute.xlu0 %5169
      %5171 = vrot.lane.b32.xlu0 %v5087, 16
      %v5172 = vpop.permute.xlu0 %5171
      %5173 = vrot.lane.b32.xlu0 %v5088, 16
      %v5174 = vpop.permute.xlu0 %5173
      %5175 = vrot.lane.b32.xlu0 %v5089, 16
      %v5176 = vpop.permute.xlu0 %5175
      %5177 = vrot.lane.b32.xlu0 %v5090, 16
      %v5178 = vpop.permute.xlu0 %5177
      %5179 = vrot.lane.b32.xlu0 %v5091, 16
      %v5180 = vpop.permute.xlu0 %5179
      %5181 = vrot.lane.b32.xlu0 %v5092, 16
      %v5182 = vpop.permute.xlu0 %5181
      %5183 = vrot.lane.b32.xlu0 %v5093, 16
      %v5184 = vpop.permute.xlu0 %5183
      %5185 = vrot.lane.b32.xlu0 %v5094, 16
      %v5186 = vpop.permute.xlu0 %5185
      %5187 = vrot.lane.b32.xlu0 %v5095, 16
      %v5188 = vpop.permute.xlu0 %5187
      %5189 = vrot.lane.b32.xlu0 %v5096, 16
      %v5190 = vpop.permute.xlu0 %5189
      %5191 = vrot.lane.b32.xlu0 %v5097, 16
      %v5192 = vpop.permute.xlu0 %5191
      %5193 = vrot.lane.b32.xlu0 %v5098, 16
      %v5194 = vpop.permute.xlu0 %5193
      %5227 = vst.msk [vmem:[#allocation4] sm:$0xff] %vm2072, %v5132
      %5228 = vst.msk [vmem:[#allocation4 + $0x8] sm:$0xff] %vm2072, %v5134
      %5229 = vst.msk [vmem:[#allocation4 + $0x10] sm:$0xff] %vm2072, %v5136
      %5230 = vst.msk [vmem:[#allocation4 + $0x18] sm:$0xff] %vm2072, %v5138
      %5231 = vst.msk [vmem:[#allocation4 + $0x20] sm:$0xff] %vm2072, %v5140
      %5232 = vst.msk [vmem:[#allocation4 + $0x28] sm:$0xff] %vm2072, %v5142
      %5233 = vst.msk [vmem:[#allocation4 + $0x30] sm:$0xff] %vm2072, %v5144
      %5234 = vst.msk [vmem:[#allocation4 + $0x38] sm:$0xff] %vm2072, %v5146
      %5235 = vst.msk [vmem:[#allocation4 + $0x40] sm:$0xff] %vm2072, %v5148
      %5236 = vst.msk [vmem:[#allocation4 + $0x48] sm:$0xff] %vm2072, %v5150
      %5237 = vst.msk [vmem:[#allocation4 + $0x50] sm:$0xff] %vm2072, %v5152
      %5238 = vst.msk [vmem:[#allocation4 + $0x58] sm:$0xff] %vm2072, %v5154
      %5239 = vst.msk [vmem:[#allocation4 + $0x60] sm:$0xff] %vm2072, %v5156
      %5240 = vst.msk [vmem:[#allocation4 + $0x68] sm:$0xff] %vm2072, %v5158
      %5241 = vst.msk [vmem:[#allocation4 + $0x70] sm:$0xff] %vm2072, %v5160
      %5242 = vst.msk [vmem:[#allocation4 + $0x78] sm:$0xff] %vm2072, %v5162
      %5243 = vst.msk [vmem:[#allocation4 + $0x80] sm:$0xff] %vm2072, %v5164
      %5244 = vst.msk [vmem:[#allocation4 + $0x88] sm:$0xff] %vm2072, %v5166
      %5245 = vst.msk [vmem:[#allocation4 + $0x90] sm:$0xff] %vm2072, %v5168
      %5246 = vst.msk [vmem:[#allocation4 + $0x98] sm:$0xff] %vm2072, %v5170
      %5247 = vst.msk [vmem:[#allocation4 + $0xa0] sm:$0xff] %vm2072, %v5172
      %5248 = vst.msk [vmem:[#allocation4 + $0xa8] sm:$0xff] %vm2072, %v5174
      %5249 = vst.msk [vmem:[#allocation4 + $0xb0] sm:$0xff] %vm2072, %v5176
      %5250 = vst.msk [vmem:[#allocation4 + $0xb8] sm:$0xff] %vm2072, %v5178
      %5251 = vst.msk [vmem:[#allocation4 + $0xc0] sm:$0xff] %vm2072, %v5180
      %5252 = vst.msk [vmem:[#allocation4 + $0xc8] sm:$0xff] %vm2072, %v5182
      %5253 = vst.msk [vmem:[#allocation4 + $0xd0] sm:$0xff] %vm2072, %v5184
      %5254 = vst.msk [vmem:[#allocation4 + $0xd8] sm:$0xff] %vm2072, %v5186
      %5255 = vst.msk [vmem:[#allocation4 + $0xe0] sm:$0xff] %vm2072, %v5188
      %5256 = vst.msk [vmem:[#allocation4 + $0xe8] sm:$0xff] %vm2072, %v5190
      %5257 = vst.msk [vmem:[#allocation4 + $0xf0] sm:$0xff] %vm2072, %v5192
      %5258 = vst.msk [vmem:[#allocation4 + $0xf8] sm:$0xff] %vm2072, %v5194
      %5259 = vst.msk [vmem:[#allocation4 + $0xff] sm:$0x1] %vm2105, 0.0
      %v5260 = vld [vmem:[#allocation3 + $0x1] sm:$0xff]
      %v5261 = vld [vmem:[#allocation3 + $0x9] sm:$0xff]
      %v5262 = vld [vmem:[#allocation3 + $0x11] sm:$0xff]
      %v5263 = vld [vmem:[#allocation3 + $0x19] sm:$0xff]
      %v5264 = vld [vmem:[#allocation3 + $0x21] sm:$0xff]
      %v5265 = vld [vmem:[#allocation3 + $0x29] sm:$0xff]
      %v5266 = vld [vmem:[#allocation3 + $0x31] sm:$0xff]
      %v5267 = vld [vmem:[#allocation3 + $0x39] sm:$0xff]
      %v5268 = vld [vmem:[#allocation3 + $0x41] sm:$0xff]
      %v5269 = vld [vmem:[#allocation3 + $0x49] sm:$0xff]
      %v5270 = vld [vmem:[#allocation3 + $0x51] sm:$0xff]
      %v5271 = vld [vmem:[#allocation3 + $0x59] sm:$0xff]
      %v5272 = vld [vmem:[#allocation3 + $0x61] sm:$0xff]
      %v5273 = vld [vmem:[#allocation3 + $0x69] sm:$0xff]
      %v5274 = vld [vmem:[#allocation3 + $0x71] sm:$0xff]
      %v5275 = vld [vmem:[#allocation3 + $0x79] sm:$0xff]
      %v5276 = vld [vmem:[#allocation3 + $0x81] sm:$0xff]
      %v5277 = vld [vmem:[#allocation3 + $0x89] sm:$0xff]
      %v5278 = vld [vmem:[#allocation3 + $0x91] sm:$0xff]
      %v5279 = vld [vmem:[#allocation3 + $0x99] sm:$0xff]
      %v5280 = vld [vmem:[#allocation3 + $0xa1] sm:$0xff]
      %v5281 = vld [vmem:[#allocation3 + $0xa9] sm:$0xff]
      %v5282 = vld [vmem:[#allocation3 + $0xb1] sm:$0xff]
      %v5283 = vld [vmem:[#allocation3 + $0xb9] sm:$0xff]
      %v5284 = vld [vmem:[#allocation3 + $0xc1] sm:$0xff]
      %v5285 = vld [vmem:[#allocation3 + $0xc9] sm:$0xff]
      %v5286 = vld [vmem:[#allocation3 + $0xd1] sm:$0xff]
      %v5287 = vld [vmem:[#allocation3 + $0xd9] sm:$0xff]
      %v5288 = vld [vmem:[#allocation3 + $0xe1] sm:$0xff]
      %v5289 = vld [vmem:[#allocation3 + $0xe9] sm:$0xff]
      %v5290 = vld [vmem:[#allocation3 + $0xf1] sm:$0xff]
      %v5291 = vld [vmem:[#allocation3 + $0xf9] sm:$0x7f]
      %v5292 = vld [vmem:[%s8] sm:$0xff]
      %v5293 = vld [vmem:[%s8 + $0x8] sm:$0xff]
      %v5294 = vld [vmem:[%s8 + $0x10] sm:$0xff]
      %v5295 = vld [vmem:[%s8 + $0x18] sm:$0xff]
      %v5296 = vld [vmem:[%s8 + $0x20] sm:$0xff]
      %v5297 = vld [vmem:[%s8 + $0x28] sm:$0xff]
      %v5298 = vld [vmem:[%s8 + $0x30] sm:$0xff]
      %v5299 = vld [vmem:[%s8 + $0x38] sm:$0xff]
      %v5300 = vld [vmem:[%s8 + $0x40] sm:$0xff]
      %v5301 = vld [vmem:[%s8 + $0x48] sm:$0xff]
      %v5302 = vld [vmem:[%s8 + $0x50] sm:$0xff]
      %v5303 = vld [vmem:[%s8 + $0x58] sm:$0xff]
      %v5304 = vld [vmem:[%s8 + $0x60] sm:$0xff]
      %v5305 = vld [vmem:[%s8 + $0x68] sm:$0xff]
      %v5306 = vld [vmem:[%s8 + $0x70] sm:$0xff]
      %v5307 = vld [vmem:[%s8 + $0x78] sm:$0xff]
      %v5308 = vld [vmem:[%s8 + $0x80] sm:$0xff]
      %v5309 = vld [vmem:[%s8 + $0x88] sm:$0xff]
      %v5310 = vld [vmem:[%s8 + $0x90] sm:$0xff]
      %v5311 = vld [vmem:[%s8 + $0x98] sm:$0xff]
      %v5312 = vld [vmem:[%s8 + $0xa0] sm:$0xff]
      %v5313 = vld [vmem:[%s8 + $0xa8] sm:$0xff]
      %v5314 = vld [vmem:[%s8 + $0xb0] sm:$0xff]
      %v5315 = vld [vmem:[%s8 + $0xb8] sm:$0xff]
      %v5316 = vld [vmem:[%s8 + $0xc0] sm:$0xff]
      %v5317 = vld [vmem:[%s8 + $0xc8] sm:$0xff]
      %v5318 = vld [vmem:[%s8 + $0xd0] sm:$0xff]
      %v5319 = vld [vmem:[%s8 + $0xd8] sm:$0xff]
      %v5320 = vld [vmem:[%s8 + $0xe0] sm:$0xff]
      %v5321 = vld [vmem:[%s8 + $0xe8] sm:$0xff]
      %v5322 = vld [vmem:[%s8 + $0xf0] sm:$0xff]
      %v5323 = vld [vmem:[%s8 + $0xf8] sm:$0x7f]
      %5325 = vset.pattern.permute.xlu0 0
      %5326 = vperm.xlu0 %5325, %v5292
      %v5327 = vpop.permute.xlu0 %5326
      %5330 = vset.pattern.permute.xlu0 0
      %5331 = vperm.xlu0 %5330, %v5293
      %v5332 = vpop.permute.xlu0 %5331
      %5335 = vset.pattern.permute.xlu0 0
      %5336 = vperm.xlu0 %5335, %v5294
      %v5337 = vpop.permute.xlu0 %5336
      %5340 = vset.pattern.permute.xlu0 0
      %5341 = vperm.xlu0 %5340, %v5295
      %v5342 = vpop.permute.xlu0 %5341
      %5345 = vset.pattern.permute.xlu0 0
      %5346 = vperm.xlu0 %5345, %v5296
      %v5347 = vpop.permute.xlu0 %5346
      %5350 = vset.pattern.permute.xlu0 0
      %5351 = vperm.xlu0 %5350, %v5297
      %v5352 = vpop.permute.xlu0 %5351
      %5355 = vset.pattern.permute.xlu0 0
      %5356 = vperm.xlu0 %5355, %v5298
      %v5357 = vpop.permute.xlu0 %5356
      %5360 = vset.pattern.permute.xlu0 0
      %5361 = vperm.xlu0 %5360, %v5299
      %v5362 = vpop.permute.xlu0 %5361
      %5365 = vset.pattern.permute.xlu0 0
      %5366 = vperm.xlu0 %5365, %v5300
      %v5367 = vpop.permute.xlu0 %5366
      %5370 = vset.pattern.permute.xlu0 0
      %5371 = vperm.xlu0 %5370, %v5301
      %v5372 = vpop.permute.xlu0 %5371
      %5375 = vset.pattern.permute.xlu0 0
      %5376 = vperm.xlu0 %5375, %v5302
      %v5377 = vpop.permute.xlu0 %5376
      %5380 = vset.pattern.permute.xlu0 0
      %5381 = vperm.xlu0 %5380, %v5303
      %v5382 = vpop.permute.xlu0 %5381
      %5385 = vset.pattern.permute.xlu0 0
      %5386 = vperm.xlu0 %5385, %v5304
      %v5387 = vpop.permute.xlu0 %5386
      %5390 = vset.pattern.permute.xlu0 0
      %5391 = vperm.xlu0 %5390, %v5305
      %v5392 = vpop.permute.xlu0 %5391
      %5395 = vset.pattern.permute.xlu0 0
      %5396 = vperm.xlu0 %5395, %v5306
      %v5397 = vpop.permute.xlu0 %5396
      %5400 = vset.pattern.permute.xlu0 0
      %5401 = vperm.xlu0 %5400, %v5307
      %v5402 = vpop.permute.xlu0 %5401
      %5405 = vset.pattern.permute.xlu0 0
      %5406 = vperm.xlu0 %5405, %v5308
      %v5407 = vpop.permute.xlu0 %5406
      %5410 = vset.pattern.permute.xlu0 0
      %5411 = vperm.xlu0 %5410, %v5309
      %v5412 = vpop.permute.xlu0 %5411
      %5415 = vset.pattern.permute.xlu0 0
      %5416 = vperm.xlu0 %5415, %v5310
      %v5417 = vpop.permute.xlu0 %5416
      %5420 = vset.pattern.permute.xlu0 0
      %5421 = vperm.xlu0 %5420, %v5311
      %v5422 = vpop.permute.xlu0 %5421
      %5425 = vset.pattern.permute.xlu0 0
      %5426 = vperm.xlu0 %5425, %v5312
      %v5427 = vpop.permute.xlu0 %5426
      %5430 = vset.pattern.permute.xlu0 0
      %5431 = vperm.xlu0 %5430, %v5313
      %v5432 = vpop.permute.xlu0 %5431
      %5435 = vset.pattern.permute.xlu0 0
      %5436 = vperm.xlu0 %5435, %v5314
      %v5437 = vpop.permute.xlu0 %5436
      %5440 = vset.pattern.permute.xlu0 0
      %5441 = vperm.xlu0 %5440, %v5315
      %v5442 = vpop.permute.xlu0 %5441
      %5445 = vset.pattern.permute.xlu0 0
      %5446 = vperm.xlu0 %5445, %v5316
      %v5447 = vpop.permute.xlu0 %5446
      %5450 = vset.pattern.permute.xlu0 0
      %5451 = vperm.xlu0 %5450, %v5317
      %v5452 = vpop.permute.xlu0 %5451
      %5455 = vset.pattern.permute.xlu0 0
      %5456 = vperm.xlu0 %5455, %v5318
      %v5457 = vpop.permute.xlu0 %5456
      %5460 = vset.pattern.permute.xlu0 0
      %5461 = vperm.xlu0 %5460, %v5319
      %v5462 = vpop.permute.xlu0 %5461
      %5465 = vset.pattern.permute.xlu0 0
      %5466 = vperm.xlu0 %5465, %v5320
      %v5467 = vpop.permute.xlu0 %5466
      %5470 = vset.pattern.permute.xlu0 0
      %5471 = vperm.xlu0 %5470, %v5321
      %v5472 = vpop.permute.xlu0 %5471
      %5475 = vset.pattern.permute.xlu0 0
      %5476 = vperm.xlu0 %5475, %v5322
      %v5477 = vpop.permute.xlu0 %5476
      %5480 = vset.pattern.permute.xlu0 0
      %5481 = vperm.xlu0 %5480, %v5323
      %v5482 = vpop.permute.xlu0 %5481
      %v5484 = vmul.f32 %v5260, %v5327
      %v5485 = vmul.f32 %v5261, %v5332
      %v5486 = vmul.f32 %v5262, %v5337
      %v5487 = vmul.f32 %v5263, %v5342
      %v5488 = vmul.f32 %v5264, %v5347
      %v5489 = vmul.f32 %v5265, %v5352
      %v5490 = vmul.f32 %v5266, %v5357
      %v5491 = vmul.f32 %v5267, %v5362
      %v5492 = vmul.f32 %v5268, %v5367
      %v5493 = vmul.f32 %v5269, %v5372
      %v5494 = vmul.f32 %v5270, %v5377
      %v5495 = vmul.f32 %v5271, %v5382
      %v5496 = vmul.f32 %v5272, %v5387
      %v5497 = vmul.f32 %v5273, %v5392
      %v5498 = vmul.f32 %v5274, %v5397
      %v5499 = vmul.f32 %v5275, %v5402
      %v5500 = vmul.f32 %v5276, %v5407
      %v5501 = vmul.f32 %v5277, %v5412
      %v5502 = vmul.f32 %v5278, %v5417
      %v5503 = vmul.f32 %v5279, %v5422
      %v5504 = vmul.f32 %v5280, %v5427
      %v5505 = vmul.f32 %v5281, %v5432
      %v5506 = vmul.f32 %v5282, %v5437
      %v5507 = vmul.f32 %v5283, %v5442
      %v5508 = vmul.f32 %v5284, %v5447
      %v5509 = vmul.f32 %v5285, %v5452
      %v5510 = vmul.f32 %v5286, %v5457
      %v5511 = vmul.f32 %v5287, %v5462
      %v5512 = vmul.f32 %v5288, %v5467
      %v5513 = vmul.f32 %v5289, %v5472
      %v5514 = vmul.f32 %v5290, %v5477
      %v5515 = vmul.f32 %v5291, %v5482
      %5548 = vrot.lane.b32.xlu0 %v5484, 20
      %v5549 = vpop.permute.xlu0 %5548
      %5550 = vrot.lane.b32.xlu0 %v5485, 20
      %v5551 = vpop.permute.xlu0 %5550
      %5552 = vrot.lane.b32.xlu0 %v5486, 20
      %v5553 = vpop.permute.xlu0 %5552
      %5554 = vrot.lane.b32.xlu0 %v5487, 20
      %v5555 = vpop.permute.xlu0 %5554
      %5556 = vrot.lane.b32.xlu0 %v5488, 20
      %v5557 = vpop.permute.xlu0 %5556
      %5558 = vrot.lane.b32.xlu0 %v5489, 20
      %v5559 = vpop.permute.xlu0 %5558
      %5560 = vrot.lane.b32.xlu0 %v5490, 20
      %v5561 = vpop.permute.xlu0 %5560
      %5562 = vrot.lane.b32.xlu0 %v5491, 20
      %v5563 = vpop.permute.xlu0 %5562
      %5564 = vrot.lane.b32.xlu0 %v5492, 20
      %v5565 = vpop.permute.xlu0 %5564
      %5566 = vrot.lane.b32.xlu0 %v5493, 20
      %v5567 = vpop.permute.xlu0 %5566
      %5568 = vrot.lane.b32.xlu0 %v5494, 20
      %v5569 = vpop.permute.xlu0 %5568
      %5570 = vrot.lane.b32.xlu0 %v5495, 20
      %v5571 = vpop.permute.xlu0 %5570
      %5572 = vrot.lane.b32.xlu0 %v5496, 20
      %v5573 = vpop.permute.xlu0 %5572
      %5574 = vrot.lane.b32.xlu0 %v5497, 20
      %v5575 = vpop.permute.xlu0 %5574
      %5576 = vrot.lane.b32.xlu0 %v5498, 20
      %v5577 = vpop.permute.xlu0 %5576
      %5578 = vrot.lane.b32.xlu0 %v5499, 20
      %v5579 = vpop.permute.xlu0 %5578
      %5580 = vrot.lane.b32.xlu0 %v5500, 20
      %v5581 = vpop.permute.xlu0 %5580
      %5582 = vrot.lane.b32.xlu0 %v5501, 20
      %v5583 = vpop.permute.xlu0 %5582
      %5584 = vrot.lane.b32.xlu0 %v5502, 20
      %v5585 = vpop.permute.xlu0 %5584
      %5586 = vrot.lane.b32.xlu0 %v5503, 20
      %v5587 = vpop.permute.xlu0 %5586
      %5588 = vrot.lane.b32.xlu0 %v5504, 20
      %v5589 = vpop.permute.xlu0 %5588
      %5590 = vrot.lane.b32.xlu0 %v5505, 20
      %v5591 = vpop.permute.xlu0 %5590
      %5592 = vrot.lane.b32.xlu0 %v5506, 20
      %v5593 = vpop.permute.xlu0 %5592
      %5594 = vrot.lane.b32.xlu0 %v5507, 20
      %v5595 = vpop.permute.xlu0 %5594
      %5596 = vrot.lane.b32.xlu0 %v5508, 20
      %v5597 = vpop.permute.xlu0 %5596
      %5598 = vrot.lane.b32.xlu0 %v5509, 20
      %v5599 = vpop.permute.xlu0 %5598
      %5600 = vrot.lane.b32.xlu0 %v5510, 20
      %v5601 = vpop.permute.xlu0 %5600
      %5602 = vrot.lane.b32.xlu0 %v5511, 20
      %v5603 = vpop.permute.xlu0 %5602
      %5604 = vrot.lane.b32.xlu0 %v5512, 20
      %v5605 = vpop.permute.xlu0 %5604
      %5606 = vrot.lane.b32.xlu0 %v5513, 20
      %v5607 = vpop.permute.xlu0 %5606
      %5608 = vrot.lane.b32.xlu0 %v5514, 20
      %v5609 = vpop.permute.xlu0 %5608
      %5610 = vrot.lane.b32.xlu0 %v5515, 20
      %v5611 = vpop.permute.xlu0 %5610
      %5644 = vst.msk [vmem:[#allocation4] sm:$0xff] %vm2491, %v5549
      %5645 = vst.msk [vmem:[#allocation4 + $0x8] sm:$0xff] %vm2491, %v5551
      %5646 = vst.msk [vmem:[#allocation4 + $0x10] sm:$0xff] %vm2491, %v5553
      %5647 = vst.msk [vmem:[#allocation4 + $0x18] sm:$0xff] %vm2491, %v5555
      %5648 = vst.msk [vmem:[#allocation4 + $0x20] sm:$0xff] %vm2491, %v5557
      %5649 = vst.msk [vmem:[#allocation4 + $0x28] sm:$0xff] %vm2491, %v5559
      %5650 = vst.msk [vmem:[#allocation4 + $0x30] sm:$0xff] %vm2491, %v5561
      %5651 = vst.msk [vmem:[#allocation4 + $0x38] sm:$0xff] %vm2491, %v5563
      %5652 = vst.msk [vmem:[#allocation4 + $0x40] sm:$0xff] %vm2491, %v5565
      %5653 = vst.msk [vmem:[#allocation4 + $0x48] sm:$0xff] %vm2491, %v5567
      %5654 = vst.msk [vmem:[#allocation4 + $0x50] sm:$0xff] %vm2491, %v5569
      %5655 = vst.msk [vmem:[#allocation4 + $0x58] sm:$0xff] %vm2491, %v5571
      %5656 = vst.msk [vmem:[#allocation4 + $0x60] sm:$0xff] %vm2491, %v5573
      %5657 = vst.msk [vmem:[#allocation4 + $0x68] sm:$0xff] %vm2491, %v5575
      %5658 = vst.msk [vmem:[#allocation4 + $0x70] sm:$0xff] %vm2491, %v5577
      %5659 = vst.msk [vmem:[#allocation4 + $0x78] sm:$0xff] %vm2491, %v5579
      %5660 = vst.msk [vmem:[#allocation4 + $0x80] sm:$0xff] %vm2491, %v5581
      %5661 = vst.msk [vmem:[#allocation4 + $0x88] sm:$0xff] %vm2491, %v5583
      %5662 = vst.msk [vmem:[#allocation4 + $0x90] sm:$0xff] %vm2491, %v5585
      %5663 = vst.msk [vmem:[#allocation4 + $0x98] sm:$0xff] %vm2491, %v5587
      %5664 = vst.msk [vmem:[#allocation4 + $0xa0] sm:$0xff] %vm2491, %v5589
      %5665 = vst.msk [vmem:[#allocation4 + $0xa8] sm:$0xff] %vm2491, %v5591
      %5666 = vst.msk [vmem:[#allocation4 + $0xb0] sm:$0xff] %vm2491, %v5593
      %5667 = vst.msk [vmem:[#allocation4 + $0xb8] sm:$0xff] %vm2491, %v5595
      %5668 = vst.msk [vmem:[#allocation4 + $0xc0] sm:$0xff] %vm2491, %v5597
      %5669 = vst.msk [vmem:[#allocation4 + $0xc8] sm:$0xff] %vm2491, %v5599
      %5670 = vst.msk [vmem:[#allocation4 + $0xd0] sm:$0xff] %vm2491, %v5601
      %5671 = vst.msk [vmem:[#allocation4 + $0xd8] sm:$0xff] %vm2491, %v5603
      %5672 = vst.msk [vmem:[#allocation4 + $0xe0] sm:$0xff] %vm2491, %v5605
      %5673 = vst.msk [vmem:[#allocation4 + $0xe8] sm:$0xff] %vm2491, %v5607
      %5674 = vst.msk [vmem:[#allocation4 + $0xf0] sm:$0xff] %vm2491, %v5609
      %5675 = vst.msk [vmem:[#allocation4 + $0xf8] sm:$0x7f] %vm2523, %v5611
      %5676 = vst.msk [vmem:[#allocation4 + $0xf1] sm:$0xff] %vm2525, 0.0
      %5677 = vst.msk [vmem:[#allocation4 + $0xf9] sm:$0x7f] %vm2527, 0.0
      %v5678 = vld [vmem:[#allocation3 + $0xf] sm:$0xff]
      %v5679 = vld [vmem:[#allocation3 + $0x17] sm:$0xff]
      %v5680 = vld [vmem:[#allocation3 + $0x1f] sm:$0xff]
      %v5681 = vld [vmem:[#allocation3 + $0x27] sm:$0xff]
      %v5682 = vld [vmem:[#allocation3 + $0x2f] sm:$0xff]
      %v5683 = vld [vmem:[#allocation3 + $0x37] sm:$0xff]
      %v5684 = vld [vmem:[#allocation3 + $0x3f] sm:$0xff]
      %v5685 = vld [vmem:[#allocation3 + $0x47] sm:$0xff]
      %v5686 = vld [vmem:[#allocation3 + $0x4f] sm:$0xff]
      %v5687 = vld [vmem:[#allocation3 + $0x57] sm:$0xff]
      %v5688 = vld [vmem:[#allocation3 + $0x5f] sm:$0xff]
      %v5689 = vld [vmem:[#allocation3 + $0x67] sm:$0xff]
      %v5690 = vld [vmem:[#allocation3 + $0x6f] sm:$0xff]
      %v5691 = vld [vmem:[#allocation3 + $0x77] sm:$0xff]
      %v5692 = vld [vmem:[#allocation3 + $0x7f] sm:$0xff]
      %v5693 = vld [vmem:[#allocation3 + $0x87] sm:$0xff]
      %v5694 = vld [vmem:[#allocation3 + $0x8f] sm:$0xff]
      %v5695 = vld [vmem:[#allocation3 + $0x97] sm:$0xff]
      %v5696 = vld [vmem:[#allocation3 + $0x9f] sm:$0xff]
      %v5697 = vld [vmem:[#allocation3 + $0xa7] sm:$0xff]
      %v5698 = vld [vmem:[#allocation3 + $0xaf] sm:$0xff]
      %v5699 = vld [vmem:[#allocation3 + $0xb7] sm:$0xff]
      %v5700 = vld [vmem:[#allocation3 + $0xbf] sm:$0xff]
      %v5701 = vld [vmem:[#allocation3 + $0xc7] sm:$0xff]
      %v5702 = vld [vmem:[#allocation3 + $0xcf] sm:$0xff]
      %v5703 = vld [vmem:[#allocation3 + $0xd7] sm:$0xff]
      %v5704 = vld [vmem:[#allocation3 + $0xdf] sm:$0xff]
      %v5705 = vld [vmem:[#allocation3 + $0xe7] sm:$0xff]
      %v5706 = vld [vmem:[#allocation3 + $0xef] sm:$0xff]
      %v5707 = vld [vmem:[#allocation3 + $0xf7] sm:$0xff]
      %v5708 = vld [vmem:[#allocation3 + $0xff] sm:$0x1]
      %v5709 = vld [vmem:[%s7] sm:$0xff]
      %v5710 = vld [vmem:[%s7 + $0x8] sm:$0xff]
      %v5711 = vld [vmem:[%s7 + $0x10] sm:$0xff]
      %v5712 = vld [vmem:[%s7 + $0x18] sm:$0xff]
      %v5713 = vld [vmem:[%s7 + $0x20] sm:$0xff]
      %v5714 = vld [vmem:[%s7 + $0x28] sm:$0xff]
      %v5715 = vld [vmem:[%s7 + $0x30] sm:$0xff]
      %v5716 = vld [vmem:[%s7 + $0x38] sm:$0xff]
      %v5717 = vld [vmem:[%s7 + $0x40] sm:$0xff]
      %v5718 = vld [vmem:[%s7 + $0x48] sm:$0xff]
      %v5719 = vld [vmem:[%s7 + $0x50] sm:$0xff]
      %v5720 = vld [vmem:[%s7 + $0x58] sm:$0xff]
      %v5721 = vld [vmem:[%s7 + $0x60] sm:$0xff]
      %v5722 = vld [vmem:[%s7 + $0x68] sm:$0xff]
      %v5723 = vld [vmem:[%s7 + $0x70] sm:$0xff]
      %v5724 = vld [vmem:[%s7 + $0x78] sm:$0xff]
      %v5725 = vld [vmem:[%s7 + $0x80] sm:$0xff]
      %v5726 = vld [vmem:[%s7 + $0x88] sm:$0xff]
      %v5727 = vld [vmem:[%s7 + $0x90] sm:$0xff]
      %v5728 = vld [vmem:[%s7 + $0x98] sm:$0xff]
      %v5729 = vld [vmem:[%s7 + $0xa0] sm:$0xff]
      %v5730 = vld [vmem:[%s7 + $0xa8] sm:$0xff]
      %v5731 = vld [vmem:[%s7 + $0xb0] sm:$0xff]
      %v5732 = vld [vmem:[%s7 + $0xb8] sm:$0xff]
      %v5733 = vld [vmem:[%s7 + $0xc0] sm:$0xff]
      %v5734 = vld [vmem:[%s7 + $0xc8] sm:$0xff]
      %v5735 = vld [vmem:[%s7 + $0xd0] sm:$0xff]
      %v5736 = vld [vmem:[%s7 + $0xd8] sm:$0xff]
      %v5737 = vld [vmem:[%s7 + $0xe0] sm:$0xff]
      %v5738 = vld [vmem:[%s7 + $0xe8] sm:$0xff]
      %v5739 = vld [vmem:[%s7 + $0xf0] sm:$0x1]
      %5741 = vset.pattern.permute.xlu0 0
      %5742 = vperm.xlu0 %5741, %v5709
      %v5743 = vpop.permute.xlu0 %5742
      %5746 = vset.pattern.permute.xlu0 0
      %5747 = vperm.xlu0 %5746, %v5710
      %v5748 = vpop.permute.xlu0 %5747
      %5751 = vset.pattern.permute.xlu0 0
      %5752 = vperm.xlu0 %5751, %v5711
      %v5753 = vpop.permute.xlu0 %5752
      %5756 = vset.pattern.permute.xlu0 0
      %5757 = vperm.xlu0 %5756, %v5712
      %v5758 = vpop.permute.xlu0 %5757
      %5761 = vset.pattern.permute.xlu0 0
      %5762 = vperm.xlu0 %5761, %v5713
      %v5763 = vpop.permute.xlu0 %5762
      %5766 = vset.pattern.permute.xlu0 0
      %5767 = vperm.xlu0 %5766, %v5714
      %v5768 = vpop.permute.xlu0 %5767
      %5771 = vset.pattern.permute.xlu0 0
      %5772 = vperm.xlu0 %5771, %v5715
      %v5773 = vpop.permute.xlu0 %5772
      %5776 = vset.pattern.permute.xlu0 0
      %5777 = vperm.xlu0 %5776, %v5716
      %v5778 = vpop.permute.xlu0 %5777
      %5781 = vset.pattern.permute.xlu0 0
      %5782 = vperm.xlu0 %5781, %v5717
      %v5783 = vpop.permute.xlu0 %5782
      %5786 = vset.pattern.permute.xlu0 0
      %5787 = vperm.xlu0 %5786, %v5718
      %v5788 = vpop.permute.xlu0 %5787
      %5791 = vset.pattern.permute.xlu0 0
      %5792 = vperm.xlu0 %5791, %v5719
      %v5793 = vpop.permute.xlu0 %5792
      %5796 = vset.pattern.permute.xlu0 0
      %5797 = vperm.xlu0 %5796, %v5720
      %v5798 = vpop.permute.xlu0 %5797
      %5801 = vset.pattern.permute.xlu0 0
      %5802 = vperm.xlu0 %5801, %v5721
      %v5803 = vpop.permute.xlu0 %5802
      %5806 = vset.pattern.permute.xlu0 0
      %5807 = vperm.xlu0 %5806, %v5722
      %v5808 = vpop.permute.xlu0 %5807
      %5811 = vset.pattern.permute.xlu0 0
      %5812 = vperm.xlu0 %5811, %v5723
      %v5813 = vpop.permute.xlu0 %5812
      %5816 = vset.pattern.permute.xlu0 0
      %5817 = vperm.xlu0 %5816, %v5724
      %v5818 = vpop.permute.xlu0 %5817
      %5821 = vset.pattern.permute.xlu0 0
      %5822 = vperm.xlu0 %5821, %v5725
      %v5823 = vpop.permute.xlu0 %5822
      %5826 = vset.pattern.permute.xlu0 0
      %5827 = vperm.xlu0 %5826, %v5726
      %v5828 = vpop.permute.xlu0 %5827
      %5831 = vset.pattern.permute.xlu0 0
      %5832 = vperm.xlu0 %5831, %v5727
      %v5833 = vpop.permute.xlu0 %5832
      %5836 = vset.pattern.permute.xlu0 0
      %5837 = vperm.xlu0 %5836, %v5728
      %v5838 = vpop.permute.xlu0 %5837
      %5841 = vset.pattern.permute.xlu0 0
      %5842 = vperm.xlu0 %5841, %v5729
      %v5843 = vpop.permute.xlu0 %5842
      %5846 = vset.pattern.permute.xlu0 0
      %5847 = vperm.xlu0 %5846, %v5730
      %v5848 = vpop.permute.xlu0 %5847
      %5851 = vset.pattern.permute.xlu0 0
      %5852 = vperm.xlu0 %5851, %v5731
      %v5853 = vpop.permute.xlu0 %5852
      %5856 = vset.pattern.permute.xlu0 0
      %5857 = vperm.xlu0 %5856, %v5732
      %v5858 = vpop.permute.xlu0 %5857
      %5861 = vset.pattern.permute.xlu0 0
      %5862 = vperm.xlu0 %5861, %v5733
      %v5863 = vpop.permute.xlu0 %5862
      %5866 = vset.pattern.permute.xlu0 0
      %5867 = vperm.xlu0 %5866, %v5734
      %v5868 = vpop.permute.xlu0 %5867
      %5871 = vset.pattern.permute.xlu0 0
      %5872 = vperm.xlu0 %5871, %v5735
      %v5873 = vpop.permute.xlu0 %5872
      %5876 = vset.pattern.permute.xlu0 0
      %5877 = vperm.xlu0 %5876, %v5736
      %v5878 = vpop.permute.xlu0 %5877
      %5881 = vset.pattern.permute.xlu0 0
      %5882 = vperm.xlu0 %5881, %v5737
      %v5883 = vpop.permute.xlu0 %5882
      %5886 = vset.pattern.permute.xlu0 0
      %5887 = vperm.xlu0 %5886, %v5738
      %v5888 = vpop.permute.xlu0 %5887
      %5891 = vset.pattern.permute.xlu0 0
      %5892 = vperm.xlu0 %5891, %v5739
      %v5893 = vpop.permute.xlu0 %5892
      %v5895 = vmul.f32 %v5678, %v5743
      %v5896 = vmul.f32 %v5679, %v5748
      %v5897 = vmul.f32 %v5680, %v5753
      %v5898 = vmul.f32 %v5681, %v5758
      %v5899 = vmul.f32 %v5682, %v5763
      %v5900 = vmul.f32 %v5683, %v5768
      %v5901 = vmul.f32 %v5684, %v5773
      %v5902 = vmul.f32 %v5685, %v5778
      %v5903 = vmul.f32 %v5686, %v5783
      %v5904 = vmul.f32 %v5687, %v5788
      %v5905 = vmul.f32 %v5688, %v5793
      %v5906 = vmul.f32 %v5689, %v5798
      %v5907 = vmul.f32 %v5690, %v5803
      %v5908 = vmul.f32 %v5691, %v5808
      %v5909 = vmul.f32 %v5692, %v5813
      %v5910 = vmul.f32 %v5693, %v5818
      %v5911 = vmul.f32 %v5694, %v5823
      %v5912 = vmul.f32 %v5695, %v5828
      %v5913 = vmul.f32 %v5696, %v5833
      %v5914 = vmul.f32 %v5697, %v5838
      %v5915 = vmul.f32 %v5698, %v5843
      %v5916 = vmul.f32 %v5699, %v5848
      %v5917 = vmul.f32 %v5700, %v5853
      %v5918 = vmul.f32 %v5701, %v5858
      %v5919 = vmul.f32 %v5702, %v5863
      %v5920 = vmul.f32 %v5703, %v5868
      %v5921 = vmul.f32 %v5704, %v5873
      %v5922 = vmul.f32 %v5705, %v5878
      %v5923 = vmul.f32 %v5706, %v5883
      %v5924 = vmul.f32 %v5707, %v5888
      %v5925 = vmul.f32 %v5708, %v5893
      %5957 = vrot.lane.b32.xlu0 %v5895, 24
      %v5958 = vpop.permute.xlu0 %5957
      %5959 = vrot.lane.b32.xlu0 %v5896, 24
      %v5960 = vpop.permute.xlu0 %5959
      %5961 = vrot.lane.b32.xlu0 %v5897, 24
      %v5962 = vpop.permute.xlu0 %5961
      %5963 = vrot.lane.b32.xlu0 %v5898, 24
      %v5964 = vpop.permute.xlu0 %5963
      %5965 = vrot.lane.b32.xlu0 %v5899, 24
      %v5966 = vpop.permute.xlu0 %5965
      %5967 = vrot.lane.b32.xlu0 %v5900, 24
      %v5968 = vpop.permute.xlu0 %5967
      %5969 = vrot.lane.b32.xlu0 %v5901, 24
      %v5970 = vpop.permute.xlu0 %5969
      %5971 = vrot.lane.b32.xlu0 %v5902, 24
      %v5972 = vpop.permute.xlu0 %5971
      %5973 = vrot.lane.b32.xlu0 %v5903, 24
      %v5974 = vpop.permute.xlu0 %5973
      %5975 = vrot.lane.b32.xlu0 %v5904, 24
      %v5976 = vpop.permute.xlu0 %5975
      %5977 = vrot.lane.b32.xlu0 %v5905, 24
      %v5978 = vpop.permute.xlu0 %5977
      %5979 = vrot.lane.b32.xlu0 %v5906, 24
      %v5980 = vpop.permute.xlu0 %5979
      %5981 = vrot.lane.b32.xlu0 %v5907, 24
      %v5982 = vpop.permute.xlu0 %5981
      %5983 = vrot.lane.b32.xlu0 %v5908, 24
      %v5984 = vpop.permute.xlu0 %5983
      %5985 = vrot.lane.b32.xlu0 %v5909, 24
      %v5986 = vpop.permute.xlu0 %5985
      %5987 = vrot.lane.b32.xlu0 %v5910, 24
      %v5988 = vpop.permute.xlu0 %5987
      %5989 = vrot.lane.b32.xlu0 %v5911, 24
      %v5990 = vpop.permute.xlu0 %5989
      %5991 = vrot.lane.b32.xlu0 %v5912, 24
      %v5992 = vpop.permute.xlu0 %5991
      %5993 = vrot.lane.b32.xlu0 %v5913, 24
      %v5994 = vpop.permute.xlu0 %5993
      %5995 = vrot.lane.b32.xlu0 %v5914, 24
      %v5996 = vpop.permute.xlu0 %5995
      %5997 = vrot.lane.b32.xlu0 %v5915, 24
      %v5998 = vpop.permute.xlu0 %5997
      %5999 = vrot.lane.b32.xlu0 %v5916, 24
      %v6000 = vpop.permute.xlu0 %5999
      %6001 = vrot.lane.b32.xlu0 %v5917, 24
      %v6002 = vpop.permute.xlu0 %6001
      %6003 = vrot.lane.b32.xlu0 %v5918, 24
      %v6004 = vpop.permute.xlu0 %6003
      %6005 = vrot.lane.b32.xlu0 %v5919, 24
      %v6006 = vpop.permute.xlu0 %6005
      %6007 = vrot.lane.b32.xlu0 %v5920, 24
      %v6008 = vpop.permute.xlu0 %6007
      %6009 = vrot.lane.b32.xlu0 %v5921, 24
      %v6010 = vpop.permute.xlu0 %6009
      %6011 = vrot.lane.b32.xlu0 %v5922, 24
      %v6012 = vpop.permute.xlu0 %6011
      %6013 = vrot.lane.b32.xlu0 %v5923, 24
      %v6014 = vpop.permute.xlu0 %6013
      %6015 = vrot.lane.b32.xlu0 %v5924, 24
      %v6016 = vpop.permute.xlu0 %6015
      %6017 = vrot.lane.b32.xlu0 %v5925, 24
      %v6018 = vpop.permute.xlu0 %6017
      %6050 = vst.msk [vmem:[#allocation4] sm:$0xff] %vm2525, %v5958
      %6051 = vst.msk [vmem:[#allocation4 + $0x8] sm:$0xff] %vm2525, %v5960
      %6052 = vst.msk [vmem:[#allocation4 + $0x10] sm:$0xff] %vm2525, %v5962
      %6053 = vst.msk [vmem:[#allocation4 + $0x18] sm:$0xff] %vm2525, %v5964
      %6054 = vst.msk [vmem:[#allocation4 + $0x20] sm:$0xff] %vm2525, %v5966
      %6055 = vst.msk [vmem:[#allocation4 + $0x28] sm:$0xff] %vm2525, %v5968
      %6056 = vst.msk [vmem:[#allocation4 + $0x30] sm:$0xff] %vm2525, %v5970
      %6057 = vst.msk [vmem:[#allocation4 + $0x38] sm:$0xff] %vm2525, %v5972
      %6058 = vst.msk [vmem:[#allocation4 + $0x40] sm:$0xff] %vm2525, %v5974
      %6059 = vst.msk [vmem:[#allocation4 + $0x48] sm:$0xff] %vm2525, %v5976
      %6060 = vst.msk [vmem:[#allocation4 + $0x50] sm:$0xff] %vm2525, %v5978
      %6061 = vst.msk [vmem:[#allocation4 + $0x58] sm:$0xff] %vm2525, %v5980
      %6062 = vst.msk [vmem:[#allocation4 + $0x60] sm:$0xff] %vm2525, %v5982
      %6063 = vst.msk [vmem:[#allocation4 + $0x68] sm:$0xff] %vm2525, %v5984
      %6064 = vst.msk [vmem:[#allocation4 + $0x70] sm:$0xff] %vm2525, %v5986
      %6065 = vst.msk [vmem:[#allocation4 + $0x78] sm:$0xff] %vm2525, %v5988
      %6066 = vst.msk [vmem:[#allocation4 + $0x80] sm:$0xff] %vm2525, %v5990
      %6067 = vst.msk [vmem:[#allocation4 + $0x88] sm:$0xff] %vm2525, %v5992
      %6068 = vst.msk [vmem:[#allocation4 + $0x90] sm:$0xff] %vm2525, %v5994
      %6069 = vst.msk [vmem:[#allocation4 + $0x98] sm:$0xff] %vm2525, %v5996
      %6070 = vst.msk [vmem:[#allocation4 + $0xa0] sm:$0xff] %vm2525, %v5998
      %6071 = vst.msk [vmem:[#allocation4 + $0xa8] sm:$0xff] %vm2525, %v6000
      %6072 = vst.msk [vmem:[#allocation4 + $0xb0] sm:$0xff] %vm2525, %v6002
      %6073 = vst.msk [vmem:[#allocation4 + $0xb8] sm:$0xff] %vm2525, %v6004
      %6074 = vst.msk [vmem:[#allocation4 + $0xc0] sm:$0xff] %vm2525, %v6006
      %6075 = vst.msk [vmem:[#allocation4 + $0xc8] sm:$0xff] %vm2525, %v6008
      %6076 = vst.msk [vmem:[#allocation4 + $0xd0] sm:$0xff] %vm2525, %v6010
      %6077 = vst.msk [vmem:[#allocation4 + $0xd8] sm:$0xff] %vm2525, %v6012
      %6078 = vst.msk [vmem:[#allocation4 + $0xe0] sm:$0xff] %vm2525, %v6014
      %6079 = vst.msk [vmem:[#allocation4 + $0xe8] sm:$0xff] %vm2525, %v6016
      %6080 = vst.msk [vmem:[#allocation4 + $0xf0] sm:$0x1] %vm2931, %v6018
      %6081 = vst.msk [vmem:[#allocation4 + $0xf0] sm:$0xff] %vm2933, 0.0
      %6082 = vst.msk [vmem:[#allocation4 + $0xf8] sm:$0xff] %vm2933, 0.0
      %v6083 = vld [vmem:[#allocation3 + $0x10] sm:$0xff]
      %v6084 = vld [vmem:[#allocation3 + $0x18] sm:$0xff]
      %v6085 = vld [vmem:[#allocation3 + $0x20] sm:$0xff]
      %v6086 = vld [vmem:[#allocation3 + $0x28] sm:$0xff]
      %v6087 = vld [vmem:[#allocation3 + $0x30] sm:$0xff]
      %v6088 = vld [vmem:[#allocation3 + $0x38] sm:$0xff]
      %v6089 = vld [vmem:[#allocation3 + $0x40] sm:$0xff]
      %v6090 = vld [vmem:[#allocation3 + $0x48] sm:$0xff]
      %v6091 = vld [vmem:[#allocation3 + $0x50] sm:$0xff]
      %v6092 = vld [vmem:[#allocation3 + $0x58] sm:$0xff]
      %v6093 = vld [vmem:[#allocation3 + $0x60] sm:$0xff]
      %v6094 = vld [vmem:[#allocation3 + $0x68] sm:$0xff]
      %v6095 = vld [vmem:[#allocation3 + $0x70] sm:$0xff]
      %v6096 = vld [vmem:[#allocation3 + $0x78] sm:$0xff]
      %v6097 = vld [vmem:[#allocation3 + $0x80] sm:$0xff]
      %v6098 = vld [vmem:[#allocation3 + $0x88] sm:$0xff]
      %v6099 = vld [vmem:[#allocation3 + $0x90] sm:$0xff]
      %v6100 = vld [vmem:[#allocation3 + $0x98] sm:$0xff]
      %v6101 = vld [vmem:[#allocation3 + $0xa0] sm:$0xff]
      %v6102 = vld [vmem:[#allocation3 + $0xa8] sm:$0xff]
      %v6103 = vld [vmem:[#allocation3 + $0xb0] sm:$0xff]
      %v6104 = vld [vmem:[#allocation3 + $0xb8] sm:$0xff]
      %v6105 = vld [vmem:[#allocation3 + $0xc0] sm:$0xff]
      %v6106 = vld [vmem:[#allocation3 + $0xc8] sm:$0xff]
      %v6107 = vld [vmem:[#allocation3 + $0xd0] sm:$0xff]
      %v6108 = vld [vmem:[#allocation3 + $0xd8] sm:$0xff]
      %v6109 = vld [vmem:[#allocation3 + $0xe0] sm:$0xff]
      %v6110 = vld [vmem:[#allocation3 + $0xe8] sm:$0xff]
      %v6111 = vld [vmem:[#allocation3 + $0xf0] sm:$0xff]
      %v6112 = vld [vmem:[#allocation3 + $0xf8] sm:$0xff]
      %6143 = vrot.lane.b32.xlu0 %v6083, 28
      %v6144 = vpop.permute.xlu0 %6143
      %6145 = vrot.lane.b32.xlu0 %v6084, 28
      %v6146 = vpop.permute.xlu0 %6145
      %6147 = vrot.lane.b32.xlu0 %v6085, 28
      %v6148 = vpop.permute.xlu0 %6147
      %6149 = vrot.lane.b32.xlu0 %v6086, 28
      %v6150 = vpop.permute.xlu0 %6149
      %6151 = vrot.lane.b32.xlu0 %v6087, 28
      %v6152 = vpop.permute.xlu0 %6151
      %6153 = vrot.lane.b32.xlu0 %v6088, 28
      %v6154 = vpop.permute.xlu0 %6153
      %6155 = vrot.lane.b32.xlu0 %v6089, 28
      %v6156 = vpop.permute.xlu0 %6155
      %6157 = vrot.lane.b32.xlu0 %v6090, 28
      %v6158 = vpop.permute.xlu0 %6157
      %6159 = vrot.lane.b32.xlu0 %v6091, 28
      %v6160 = vpop.permute.xlu0 %6159
      %6161 = vrot.lane.b32.xlu0 %v6092, 28
      %v6162 = vpop.permute.xlu0 %6161
      %6163 = vrot.lane.b32.xlu0 %v6093, 28
      %v6164 = vpop.permute.xlu0 %6163
      %6165 = vrot.lane.b32.xlu0 %v6094, 28
      %v6166 = vpop.permute.xlu0 %6165
      %6167 = vrot.lane.b32.xlu0 %v6095, 28
      %v6168 = vpop.permute.xlu0 %6167
      %6169 = vrot.lane.b32.xlu0 %v6096, 28
      %v6170 = vpop.permute.xlu0 %6169
      %6171 = vrot.lane.b32.xlu0 %v6097, 28
      %v6172 = vpop.permute.xlu0 %6171
      %6173 = vrot.lane.b32.xlu0 %v6098, 28
      %v6174 = vpop.permute.xlu0 %6173
      %6175 = vrot.lane.b32.xlu0 %v6099, 28
      %v6176 = vpop.permute.xlu0 %6175
      %6177 = vrot.lane.b32.xlu0 %v6100, 28
      %v6178 = vpop.permute.xlu0 %6177
      %6179 = vrot.lane.b32.xlu0 %v6101, 28
      %v6180 = vpop.permute.xlu0 %6179
      %6181 = vrot.lane.b32.xlu0 %v6102, 28
      %v6182 = vpop.permute.xlu0 %6181
      %6183 = vrot.lane.b32.xlu0 %v6103, 28
      %v6184 = vpop.permute.xlu0 %6183
      %6185 = vrot.lane.b32.xlu0 %v6104, 28
      %v6186 = vpop.permute.xlu0 %6185
      %6187 = vrot.lane.b32.xlu0 %v6105, 28
      %v6188 = vpop.permute.xlu0 %6187
      %6189 = vrot.lane.b32.xlu0 %v6106, 28
      %v6190 = vpop.permute.xlu0 %6189
      %6191 = vrot.lane.b32.xlu0 %v6107, 28
      %v6192 = vpop.permute.xlu0 %6191
      %6193 = vrot.lane.b32.xlu0 %v6108, 28
      %v6194 = vpop.permute.xlu0 %6193
      %6195 = vrot.lane.b32.xlu0 %v6109, 28
      %v6196 = vpop.permute.xlu0 %6195
      %6197 = vrot.lane.b32.xlu0 %v6110, 28
      %v6198 = vpop.permute.xlu0 %6197
      %6199 = vrot.lane.b32.xlu0 %v6111, 28
      %v6200 = vpop.permute.xlu0 %6199
      %6201 = vrot.lane.b32.xlu0 %v6112, 28
      %v6202 = vpop.permute.xlu0 %6201
      %6233 = vst.msk [vmem:[#allocation4] sm:$0xff] %vm2933, %v6144
      %6234 = vst.msk [vmem:[#allocation4 + $0x8] sm:$0xff] %vm2933, %v6146
      %6235 = vst.msk [vmem:[#allocation4 + $0x10] sm:$0xff] %vm2933, %v6148
      %6236 = vst.msk [vmem:[#allocation4 + $0x18] sm:$0xff] %vm2933, %v6150
      %6237 = vst.msk [vmem:[#allocation4 + $0x20] sm:$0xff] %vm2933, %v6152
      %6238 = vst.msk [vmem:[#allocation4 + $0x28] sm:$0xff] %vm2933, %v6154
      %6239 = vst.msk [vmem:[#allocation4 + $0x30] sm:$0xff] %vm2933, %v6156
      %6240 = vst.msk [vmem:[#allocation4 + $0x38] sm:$0xff] %vm2933, %v6158
      %6241 = vst.msk [vmem:[#allocation4 + $0x40] sm:$0xff] %vm2933, %v6160
      %6242 = vst.msk [vmem:[#allocation4 + $0x48] sm:$0xff] %vm2933, %v6162
      %6243 = vst.msk [vmem:[#allocation4 + $0x50] sm:$0xff] %vm2933, %v6164
      %6244 = vst.msk [vmem:[#allocation4 + $0x58] sm:$0xff] %vm2933, %v6166
      %6245 = vst.msk [vmem:[#allocation4 + $0x60] sm:$0xff] %vm2933, %v6168
      %6246 = vst.msk [vmem:[#allocation4 + $0x68] sm:$0xff] %vm2933, %v6170
      %6247 = vst.msk [vmem:[#allocation4 + $0x70] sm:$0xff] %vm2933, %v6172
      %6248 = vst.msk [vmem:[#allocation4 + $0x78] sm:$0xff] %vm2933, %v6174
      %6249 = vst.msk [vmem:[#allocation4 + $0x80] sm:$0xff] %vm2933, %v6176
      %6250 = vst.msk [vmem:[#allocation4 + $0x88] sm:$0xff] %vm2933, %v6178
      %6251 = vst.msk [vmem:[#allocation4 + $0x90] sm:$0xff] %vm2933, %v6180
      %6252 = vst.msk [vmem:[#allocation4 + $0x98] sm:$0xff] %vm2933, %v6182
      %6253 = vst.msk [vmem:[#allocation4 + $0xa0] sm:$0xff] %vm2933, %v6184
      %6254 = vst.msk [vmem:[#allocation4 + $0xa8] sm:$0xff] %vm2933, %v6186
      %6255 = vst.msk [vmem:[#allocation4 + $0xb0] sm:$0xff] %vm2933, %v6188
      %6256 = vst.msk [vmem:[#allocation4 + $0xb8] sm:$0xff] %vm2933, %v6190
      %6257 = vst.msk [vmem:[#allocation4 + $0xc0] sm:$0xff] %vm2933, %v6192
      %6258 = vst.msk [vmem:[#allocation4 + $0xc8] sm:$0xff] %vm2933, %v6194
      %6259 = vst.msk [vmem:[#allocation4 + $0xd0] sm:$0xff] %vm2933, %v6196
      %6260 = vst.msk [vmem:[#allocation4 + $0xd8] sm:$0xff] %vm2933, %v6198
      %6261 = vst.msk [vmem:[#allocation4 + $0xe0] sm:$0xff] %vm2933, %v6200
      %6262 = vst.msk [vmem:[#allocation4 + $0xe8] sm:$0xff] %vm2933, %v6202
      %6263 = vst.msk [vmem:[#allocation4 + $0xef] sm:$0xff] %vm3116, 0.0
      %6264 = vst.msk [vmem:[#allocation4 + $0xf7] sm:$0xff] %vm3116, 0.0
      %6265 = vst.msk [vmem:[#allocation4 + $0xff] sm:$0x1] %vm3119, 0.0
      %v6266 = vld [vmem:[#allocation3 + $0x11] sm:$0xff]
      %v6267 = vld [vmem:[#allocation3 + $0x19] sm:$0xff]
      %v6268 = vld [vmem:[#allocation3 + $0x21] sm:$0xff]
      %v6269 = vld [vmem:[#allocation3 + $0x29] sm:$0xff]
      %v6270 = vld [vmem:[#allocation3 + $0x31] sm:$0xff]
      %v6271 = vld [vmem:[#allocation3 + $0x39] sm:$0xff]
      %v6272 = vld [vmem:[#allocation3 + $0x41] sm:$0xff]
      %v6273 = vld [vmem:[#allocation3 + $0x49] sm:$0xff]
      %v6274 = vld [vmem:[#allocation3 + $0x51] sm:$0xff]
      %v6275 = vld [vmem:[#allocation3 + $0x59] sm:$0xff]
      %v6276 = vld [vmem:[#allocation3 + $0x61] sm:$0xff]
      %v6277 = vld [vmem:[#allocation3 + $0x69] sm:$0xff]
      %v6278 = vld [vmem:[#allocation3 + $0x71] sm:$0xff]
      %v6279 = vld [vmem:[#allocation3 + $0x79] sm:$0xff]
      %v6280 = vld [vmem:[#allocation3 + $0x81] sm:$0xff]
      %v6281 = vld [vmem:[#allocation3 + $0x89] sm:$0xff]
      %v6282 = vld [vmem:[#allocation3 + $0x91] sm:$0xff]
      %v6283 = vld [vmem:[#allocation3 + $0x99] sm:$0xff]
      %v6284 = vld [vmem:[#allocation3 + $0xa1] sm:$0xff]
      %v6285 = vld [vmem:[#allocation3 + $0xa9] sm:$0xff]
      %v6286 = vld [vmem:[#allocation3 + $0xb1] sm:$0xff]
      %v6287 = vld [vmem:[#allocation3 + $0xb9] sm:$0xff]
      %v6288 = vld [vmem:[#allocation3 + $0xc1] sm:$0xff]
      %v6289 = vld [vmem:[#allocation3 + $0xc9] sm:$0xff]
      %v6290 = vld [vmem:[#allocation3 + $0xd1] sm:$0xff]
      %v6291 = vld [vmem:[#allocation3 + $0xd9] sm:$0xff]
      %v6292 = vld [vmem:[#allocation3 + $0xe1] sm:$0xff]
      %v6293 = vld [vmem:[#allocation3 + $0xe9] sm:$0xff]
      %v6294 = vld [vmem:[#allocation3 + $0xf1] sm:$0xff]
      %v6295 = vld [vmem:[#allocation3 + $0xf9] sm:$0x7f]
      %v6296 = vld [vmem:[%s8] sm:$0xff]
      %v6297 = vld [vmem:[%s8 + $0x8] sm:$0xff]
      %v6298 = vld [vmem:[%s8 + $0x10] sm:$0xff]
      %v6299 = vld [vmem:[%s8 + $0x18] sm:$0xff]
      %v6300 = vld [vmem:[%s8 + $0x20] sm:$0xff]
      %v6301 = vld [vmem:[%s8 + $0x28] sm:$0xff]
      %v6302 = vld [vmem:[%s8 + $0x30] sm:$0xff]
      %v6303 = vld [vmem:[%s8 + $0x38] sm:$0xff]
      %v6304 = vld [vmem:[%s8 + $0x40] sm:$0xff]
      %v6305 = vld [vmem:[%s8 + $0x48] sm:$0xff]
      %v6306 = vld [vmem:[%s8 + $0x50] sm:$0xff]
      %v6307 = vld [vmem:[%s8 + $0x58] sm:$0xff]
      %v6308 = vld [vmem:[%s8 + $0x60] sm:$0xff]
      %v6309 = vld [vmem:[%s8 + $0x68] sm:$0xff]
      %v6310 = vld [vmem:[%s8 + $0x70] sm:$0xff]
      %v6311 = vld [vmem:[%s8 + $0x78] sm:$0xff]
      %v6312 = vld [vmem:[%s8 + $0x80] sm:$0xff]
      %v6313 = vld [vmem:[%s8 + $0x88] sm:$0xff]
      %v6314 = vld [vmem:[%s8 + $0x90] sm:$0xff]
      %v6315 = vld [vmem:[%s8 + $0x98] sm:$0xff]
      %v6316 = vld [vmem:[%s8 + $0xa0] sm:$0xff]
      %v6317 = vld [vmem:[%s8 + $0xa8] sm:$0xff]
      %v6318 = vld [vmem:[%s8 + $0xb0] sm:$0xff]
      %v6319 = vld [vmem:[%s8 + $0xb8] sm:$0xff]
      %v6320 = vld [vmem:[%s8 + $0xc0] sm:$0xff]
      %v6321 = vld [vmem:[%s8 + $0xc8] sm:$0xff]
      %v6322 = vld [vmem:[%s8 + $0xd0] sm:$0xff]
      %v6323 = vld [vmem:[%s8 + $0xd8] sm:$0xff]
      %v6324 = vld [vmem:[%s8 + $0xe0] sm:$0xff]
      %v6325 = vld [vmem:[%s8 + $0xe8] sm:$0x7f]
      %6327 = vset.pattern.permute.xlu0 0
      %6328 = vperm.xlu0 %6327, %v6296
      %v6329 = vpop.permute.xlu0 %6328
      %6332 = vset.pattern.permute.xlu0 0
      %6333 = vperm.xlu0 %6332, %v6297
      %v6334 = vpop.permute.xlu0 %6333
      %6337 = vset.pattern.permute.xlu0 0
      %6338 = vperm.xlu0 %6337, %v6298
      %v6339 = vpop.permute.xlu0 %6338
      %6342 = vset.pattern.permute.xlu0 0
      %6343 = vperm.xlu0 %6342, %v6299
      %v6344 = vpop.permute.xlu0 %6343
      %6347 = vset.pattern.permute.xlu0 0
      %6348 = vperm.xlu0 %6347, %v6300
      %v6349 = vpop.permute.xlu0 %6348
      %6352 = vset.pattern.permute.xlu0 0
      %6353 = vperm.xlu0 %6352, %v6301
      %v6354 = vpop.permute.xlu0 %6353
      %6357 = vset.pattern.permute.xlu0 0
      %6358 = vperm.xlu0 %6357, %v6302
      %v6359 = vpop.permute.xlu0 %6358
      %6362 = vset.pattern.permute.xlu0 0
      %6363 = vperm.xlu0 %6362, %v6303
      %v6364 = vpop.permute.xlu0 %6363
      %6367 = vset.pattern.permute.xlu0 0
      %6368 = vperm.xlu0 %6367, %v6304
      %v6369 = vpop.permute.xlu0 %6368
      %6372 = vset.pattern.permute.xlu0 0
      %6373 = vperm.xlu0 %6372, %v6305
      %v6374 = vpop.permute.xlu0 %6373
      %6377 = vset.pattern.permute.xlu0 0
      %6378 = vperm.xlu0 %6377, %v6306
      %v6379 = vpop.permute.xlu0 %6378
      %6382 = vset.pattern.permute.xlu0 0
      %6383 = vperm.xlu0 %6382, %v6307
      %v6384 = vpop.permute.xlu0 %6383
      %6387 = vset.pattern.permute.xlu0 0
      %6388 = vperm.xlu0 %6387, %v6308
      %v6389 = vpop.permute.xlu0 %6388
      %6392 = vset.pattern.permute.xlu0 0
      %6393 = vperm.xlu0 %6392, %v6309
      %v6394 = vpop.permute.xlu0 %6393
      %6397 = vset.pattern.permute.xlu0 0
      %6398 = vperm.xlu0 %6397, %v6310
      %v6399 = vpop.permute.xlu0 %6398
      %6402 = vset.pattern.permute.xlu0 0
      %6403 = vperm.xlu0 %6402, %v6311
      %v6404 = vpop.permute.xlu0 %6403
      %6407 = vset.pattern.permute.xlu0 0
      %6408 = vperm.xlu0 %6407, %v6312
      %v6409 = vpop.permute.xlu0 %6408
      %6412 = vset.pattern.permute.xlu0 0
      %6413 = vperm.xlu0 %6412, %v6313
      %v6414 = vpop.permute.xlu0 %6413
      %6417 = vset.pattern.permute.xlu0 0
      %6418 = vperm.xlu0 %6417, %v6314
      %v6419 = vpop.permute.xlu0 %6418
      %6422 = vset.pattern.permute.xlu0 0
      %6423 = vperm.xlu0 %6422, %v6315
      %v6424 = vpop.permute.xlu0 %6423
      %6427 = vset.pattern.permute.xlu0 0
      %6428 = vperm.xlu0 %6427, %v6316
      %v6429 = vpop.permute.xlu0 %6428
      %6432 = vset.pattern.permute.xlu0 0
      %6433 = vperm.xlu0 %6432, %v6317
      %v6434 = vpop.permute.xlu0 %6433
      %6437 = vset.pattern.permute.xlu0 0
      %6438 = vperm.xlu0 %6437, %v6318
      %v6439 = vpop.permute.xlu0 %6438
      %6442 = vset.pattern.permute.xlu0 0
      %6443 = vperm.xlu0 %6442, %v6319
      %v6444 = vpop.permute.xlu0 %6443
      %6447 = vset.pattern.permute.xlu0 0
      %6448 = vperm.xlu0 %6447, %v6320
      %v6449 = vpop.permute.xlu0 %6448
      %6452 = vset.pattern.permute.xlu0 0
      %6453 = vperm.xlu0 %6452, %v6321
      %v6454 = vpop.permute.xlu0 %6453
      %6457 = vset.pattern.permute.xlu0 0
      %6458 = vperm.xlu0 %6457, %v6322
      %v6459 = vpop.permute.xlu0 %6458
      %6462 = vset.pattern.permute.xlu0 0
      %6463 = vperm.xlu0 %6462, %v6323
      %v6464 = vpop.permute.xlu0 %6463
      %6467 = vset.pattern.permute.xlu0 0
      %6468 = vperm.xlu0 %6467, %v6324
      %v6469 = vpop.permute.xlu0 %6468
      %6472 = vset.pattern.permute.xlu0 0
      %6473 = vperm.xlu0 %6472, %v6325
      %v6474 = vpop.permute.xlu0 %6473
      %v6476 = vmul.f32 %v6266, %v6329
      %v6477 = vmul.f32 %v6267, %v6334
      %v6478 = vmul.f32 %v6268, %v6339
      %v6479 = vmul.f32 %v6269, %v6344
      %v6480 = vmul.f32 %v6270, %v6349
      %v6481 = vmul.f32 %v6271, %v6354
      %v6482 = vmul.f32 %v6272, %v6359
      %v6483 = vmul.f32 %v6273, %v6364
      %v6484 = vmul.f32 %v6274, %v6369
      %v6485 = vmul.f32 %v6275, %v6374
      %v6486 = vmul.f32 %v6276, %v6379
      %v6487 = vmul.f32 %v6277, %v6384
      %v6488 = vmul.f32 %v6278, %v6389
      %v6489 = vmul.f32 %v6279, %v6394
      %v6490 = vmul.f32 %v6280, %v6399
      %v6491 = vmul.f32 %v6281, %v6404
      %v6492 = vmul.f32 %v6282, %v6409
      %v6493 = vmul.f32 %v6283, %v6414
      %v6494 = vmul.f32 %v6284, %v6419
      %v6495 = vmul.f32 %v6285, %v6424
      %v6496 = vmul.f32 %v6286, %v6429
      %v6497 = vmul.f32 %v6287, %v6434
      %v6498 = vmul.f32 %v6288, %v6439
      %v6499 = vmul.f32 %v6289, %v6444
      %v6500 = vmul.f32 %v6290, %v6449
      %v6501 = vmul.f32 %v6291, %v6454
      %v6502 = vmul.f32 %v6292, %v6459
      %v6503 = vmul.f32 %v6293, %v6464
      %v6504 = vmul.f32 %v6294, %v6469
      %v6505 = vmul.f32 %v6295, %v6474
      %6536 = vrot.lane.b32.xlu0 %v6476, 32
      %v6537 = vpop.permute.xlu0 %6536
      %6538 = vrot.lane.b32.xlu0 %v6477, 32
      %v6539 = vpop.permute.xlu0 %6538
      %6540 = vrot.lane.b32.xlu0 %v6478, 32
      %v6541 = vpop.permute.xlu0 %6540
      %6542 = vrot.lane.b32.xlu0 %v6479, 32
      %v6543 = vpop.permute.xlu0 %6542
      %6544 = vrot.lane.b32.xlu0 %v6480, 32
      %v6545 = vpop.permute.xlu0 %6544
      %6546 = vrot.lane.b32.xlu0 %v6481, 32
      %v6547 = vpop.permute.xlu0 %6546
      %6548 = vrot.lane.b32.xlu0 %v6482, 32
      %v6549 = vpop.permute.xlu0 %6548
      %6550 = vrot.lane.b32.xlu0 %v6483, 32
      %v6551 = vpop.permute.xlu0 %6550
      %6552 = vrot.lane.b32.xlu0 %v6484, 32
      %v6553 = vpop.permute.xlu0 %6552
      %6554 = vrot.lane.b32.xlu0 %v6485, 32
      %v6555 = vpop.permute.xlu0 %6554
      %6556 = vrot.lane.b32.xlu0 %v6486, 32
      %v6557 = vpop.permute.xlu0 %6556
      %6558 = vrot.lane.b32.xlu0 %v6487, 32
      %v6559 = vpop.permute.xlu0 %6558
      %6560 = vrot.lane.b32.xlu0 %v6488, 32
      %v6561 = vpop.permute.xlu0 %6560
      %6562 = vrot.lane.b32.xlu0 %v6489, 32
      %v6563 = vpop.permute.xlu0 %6562
      %6564 = vrot.lane.b32.xlu0 %v6490, 32
      %v6565 = vpop.permute.xlu0 %6564
      %6566 = vrot.lane.b32.xlu0 %v6491, 32
      %v6567 = vpop.permute.xlu0 %6566
      %6568 = vrot.lane.b32.xlu0 %v6492, 32
      %v6569 = vpop.permute.xlu0 %6568
      %6570 = vrot.lane.b32.xlu0 %v6493, 32
      %v6571 = vpop.permute.xlu0 %6570
      %6572 = vrot.lane.b32.xlu0 %v6494, 32
      %v6573 = vpop.permute.xlu0 %6572
      %6574 = vrot.lane.b32.xlu0 %v6495, 32
      %v6575 = vpop.permute.xlu0 %6574
      %6576 = vrot.lane.b32.xlu0 %v6496, 32
      %v6577 = vpop.permute.xlu0 %6576
      %6578 = vrot.lane.b32.xlu0 %v6497, 32
      %v6579 = vpop.permute.xlu0 %6578
      %6580 = vrot.lane.b32.xlu0 %v6498, 32
      %v6581 = vpop.permute.xlu0 %6580
      %6582 = vrot.lane.b32.xlu0 %v6499, 32
      %v6583 = vpop.permute.xlu0 %6582
      %6584 = vrot.lane.b32.xlu0 %v6500, 32
      %v6585 = vpop.permute.xlu0 %6584
      %6586 = vrot.lane.b32.xlu0 %v6501, 32
      %v6587 = vpop.permute.xlu0 %6586
      %6588 = vrot.lane.b32.xlu0 %v6502, 32
      %v6589 = vpop.permute.xlu0 %6588
      %6590 = vrot.lane.b32.xlu0 %v6503, 32
      %v6591 = vpop.permute.xlu0 %6590
      %6592 = vrot.lane.b32.xlu0 %v6504, 32
      %v6593 = vpop.permute.xlu0 %6592
      %6594 = vrot.lane.b32.xlu0 %v6505, 32
      %v6595 = vpop.permute.xlu0 %6594
      %6626 = vst.msk [vmem:[#allocation4] sm:$0xff] %vm3116, %v6537
      %6627 = vst.msk [vmem:[#allocation4 + $0x8] sm:$0xff] %vm3116, %v6539
      %6628 = vst.msk [vmem:[#allocation4 + $0x10] sm:$0xff] %vm3116, %v6541
      %6629 = vst.msk [vmem:[#allocation4 + $0x18] sm:$0xff] %vm3116, %v6543
      %6630 = vst.msk [vmem:[#allocation4 + $0x20] sm:$0xff] %vm3116, %v6545
      %6631 = vst.msk [vmem:[#allocation4 + $0x28] sm:$0xff] %vm3116, %v6547
      %6632 = vst.msk [vmem:[#allocation4 + $0x30] sm:$0xff] %vm3116, %v6549
      %6633 = vst.msk [vmem:[#allocation4 + $0x38] sm:$0xff] %vm3116, %v6551
      %6634 = vst.msk [vmem:[#allocation4 + $0x40] sm:$0xff] %vm3116, %v6553
      %6635 = vst.msk [vmem:[#allocation4 + $0x48] sm:$0xff] %vm3116, %v6555
      %6636 = vst.msk [vmem:[#allocation4 + $0x50] sm:$0xff] %vm3116, %v6557
      %6637 = vst.msk [vmem:[#allocation4 + $0x58] sm:$0xff] %vm3116, %v6559
      %6638 = vst.msk [vmem:[#allocation4 + $0x60] sm:$0xff] %vm3116, %v6561
      %6639 = vst.msk [vmem:[#allocation4 + $0x68] sm:$0xff] %vm3116, %v6563
      %6640 = vst.msk [vmem:[#allocation4 + $0x70] sm:$0xff] %vm3116, %v6565
      %6641 = vst.msk [vmem:[#allocation4 + $0x78] sm:$0xff] %vm3116, %v6567
      %6642 = vst.msk [vmem:[#allocation4 + $0x80] sm:$0xff] %vm3116, %v6569
      %6643 = vst.msk [vmem:[#allocation4 + $0x88] sm:$0xff] %vm3116, %v6571
      %6644 = vst.msk [vmem:[#allocation4 + $0x90] sm:$0xff] %vm3116, %v6573
      %6645 = vst.msk [vmem:[#allocation4 + $0x98] sm:$0xff] %vm3116, %v6575
      %6646 = vst.msk [vmem:[#allocation4 + $0xa0] sm:$0xff] %vm3116, %v6577
      %6647 = vst.msk [vmem:[#allocation4 + $0xa8] sm:$0xff] %vm3116, %v6579
      %6648 = vst.msk [vmem:[#allocation4 + $0xb0] sm:$0xff] %vm3116, %v6581
      %6649 = vst.msk [vmem:[#allocation4 + $0xb8] sm:$0xff] %vm3116, %v6583
      %6650 = vst.msk [vmem:[#allocation4 + $0xc0] sm:$0xff] %vm3116, %v6585
      %6651 = vst.msk [vmem:[#allocation4 + $0xc8] sm:$0xff] %vm3116, %v6587
      %6652 = vst.msk [vmem:[#allocation4 + $0xd0] sm:$0xff] %vm3116, %v6589
      %6653 = vst.msk [vmem:[#allocation4 + $0xd8] sm:$0xff] %vm3116, %v6591
      %6654 = vst.msk [vmem:[#allocation4 + $0xe0] sm:$0xff] %vm3116, %v6593
      %6655 = vst.msk [vmem:[#allocation4 + $0xe8] sm:$0x7f] %vm3510, %v6595
      %v6656 = vld [vmem:[#allocation4] sm:$0xff]
      %v6657 = vld [vmem:[#allocation4 + $0x8] sm:$0xff]
      %v6658 = vld [vmem:[#allocation4 + $0x10] sm:$0xff]
      %v6659 = vld [vmem:[#allocation4 + $0x18] sm:$0xff]
      %v6660 = vld [vmem:[#allocation4 + $0x20] sm:$0xff]
      %v6661 = vld [vmem:[#allocation4 + $0x28] sm:$0xff]
      %v6662 = vld [vmem:[#allocation4 + $0x30] sm:$0xff]
      %v6663 = vld [vmem:[#allocation4 + $0x38] sm:$0xff]
      %v6664 = vld [vmem:[#allocation4 + $0x40] sm:$0xff]
      %v6665 = vld [vmem:[#allocation4 + $0x48] sm:$0xff]
      %v6666 = vld [vmem:[#allocation4 + $0x50] sm:$0xff]
      %v6667 = vld [vmem:[#allocation4 + $0x58] sm:$0xff]
      %v6668 = vld [vmem:[#allocation4 + $0x60] sm:$0xff]
      %v6669 = vld [vmem:[#allocation4 + $0x68] sm:$0xff]
      %v6670 = vld [vmem:[#allocation4 + $0x70] sm:$0xff]
      %v6671 = vld [vmem:[#allocation4 + $0x78] sm:$0xff]
      %v6672 = vld [vmem:[#allocation4 + $0x80] sm:$0xff]
      %v6673 = vld [vmem:[#allocation4 + $0x88] sm:$0xff]
      %v6674 = vld [vmem:[#allocation4 + $0x90] sm:$0xff]
      %v6675 = vld [vmem:[#allocation4 + $0x98] sm:$0xff]
      %v6676 = vld [vmem:[#allocation4 + $0xa0] sm:$0xff]
      %v6677 = vld [vmem:[#allocation4 + $0xa8] sm:$0xff]
      %v6678 = vld [vmem:[#allocation4 + $0xb0] sm:$0xff]
      %v6679 = vld [vmem:[#allocation4 + $0xb8] sm:$0xff]
      %v6680 = vld [vmem:[#allocation4 + $0xc0] sm:$0xff]
      %v6681 = vld [vmem:[#allocation4 + $0xc8] sm:$0xff]
      %v6682 = vld [vmem:[#allocation4 + $0xd0] sm:$0xff]
      %v6683 = vld [vmem:[#allocation4 + $0xd8] sm:$0xff]
      %v6684 = vld [vmem:[#allocation4 + $0xe0] sm:$0xff]
      %v6685 = vld [vmem:[#allocation4 + $0xe8] sm:$0xff]
      %v6686 = vld [vmem:[#allocation4 + $0xf0] sm:$0xff]
      %v6687 = vld [vmem:[#allocation4 + $0xf8] sm:$0xff]
      %v6688 = vpack.c.bf16 %v6657, %v6656
      %v6689 = vpack.c.bf16 %v6659, %v6658
      %v6690 = vpack.c.bf16 %v6661, %v6660
      %v6691 = vpack.c.bf16 %v6663, %v6662
      %v6692 = vpack.c.bf16 %v6665, %v6664
      %v6693 = vpack.c.bf16 %v6667, %v6666
      %v6694 = vpack.c.bf16 %v6669, %v6668
      %v6695 = vpack.c.bf16 %v6671, %v6670
      %v6696 = vpack.c.bf16 %v6673, %v6672
      %v6697 = vpack.c.bf16 %v6675, %v6674
      %v6698 = vpack.c.bf16 %v6677, %v6676
      %v6699 = vpack.c.bf16 %v6679, %v6678
      %v6700 = vpack.c.bf16 %v6681, %v6680
      %v6701 = vpack.c.bf16 %v6683, %v6682
      %v6702 = vpack.c.bf16 %v6685, %v6684
      %v6703 = vpack.c.bf16 %v6687, %v6686
      %v6704 = vld [vmem:[%s5] sm:$0xf]
      %v6705 = vld [vmem:[%s5 + $0x4] sm:$0xf]
      %v6706 = vld [vmem:[%s5 + $0x8] sm:$0xf]
      %v6707 = vld [vmem:[%s5 + $0xc] sm:$0xf]
      %v6708 = vld [vmem:[%s5 + $0x10] sm:$0x3]
      %v6709 = vld [vmem:[%s6] sm:$0x1]
      %v6711 = vperm.slane %v6709, 0
      %v6718 = vunpack.c.l.b16 %v6704
      %v6719 = vunpack.c.l.b16 %v6705
      %v6720 = vunpack.c.l.b16 %v6706
      %v6721 = vunpack.c.l.b16 %v6707
      %v6722 = vunpack.c.l.b16 %v6708
      %v6723 = vpack.c.b16 %v6719, %v6718
      %v6724 = vpack.c.b16 %v6721, %v6720
      %v6725 = vpack.c.b16 %v6722, %v6722
      %v6729 = vsel %vm3584, %v6688, 0
      %v6732 = vsel %vm3584, %v6689, 0
      %v6735 = vsel %vm3584, %v6690, 0
      %v6738 = vsel %vm3584, %v6691, 0
      %v6741 = vsel %vm3584, %v6692, 0
      %v6744 = vsel %vm3584, %v6693, 0
      %v6747 = vsel %vm3584, %v6694, 0
      %v6750 = vsel %vm3584, %v6695, 0
      %v6753 = vsel %vm3584, %v6696, 0
      %v6756 = vsel %vm3584, %v6697, 0
      %v6759 = vsel %vm3584, %v6698, 0
      %v6762 = vsel %vm3584, %v6699, 0
      %v6765 = vsel %vm3584, %v6700, 0
      %v6768 = vsel %vm3584, %v6701, 0
      %v6771 = vsel %vm3584, %v6702, 0
      %v6774 = vsel %vm3584, %v6703, 0
      %v6777 = vsel %vm3633, %v6725, 0
      %6779 = vmatpush.bf16.msra.mxu0 0
      %6780 = vmatpush.bf16.msra.mxu0 0
      %6781 = vmatpush.bf16.msra.mxu0 0
      %6782 = vmatpush.bf16.msra.mxu0 0
      %6783 = vmatpush.bf16.msra.mxu0 0
      %6784 = vmatpush.bf16.msra.mxu0 %v6777
      %6785 = vmatpush.bf16.msra.mxu0 %v6724
      %6786 = vmatpush.bf16.msra.mxu0 %v6723
      %6787 = vmatmul.bf16.gmra.mxu0 %v6729
      %v6788 = vpop.f32.mrf.mxu0
      %v6789 = vadd.f32 %v6711, %v6788
      %v6790 = vpop.f32.mrf.mxu0
      %v6791 = vadd.f32 %v6711, %v6790
      %6792 = vmatmul.bf16.gmra.mxu0 %v6732
      %v6793 = vpop.f32.mrf.mxu0
      %v6794 = vadd.f32 %v6711, %v6793
      %v6795 = vpop.f32.mrf.mxu0
      %v6796 = vadd.f32 %v6711, %v6795
      %6797 = vmatmul.bf16.gmra.mxu0 %v6735
      %v6798 = vpop.f32.mrf.mxu0
      %v6799 = vadd.f32 %v6711, %v6798
      %v6800 = vpop.f32.mrf.mxu0
      %v6801 = vadd.f32 %v6711, %v6800
      %6802 = vmatmul.bf16.gmra.mxu0 %v6738
      %v6803 = vpop.f32.mrf.mxu0
      %v6804 = vadd.f32 %v6711, %v6803
      %v6805 = vpop.f32.mrf.mxu0
      %v6806 = vadd.f32 %v6711, %v6805
      %6807 = vmatmul.bf16.gmra.mxu0 %v6741
      %v6808 = vpop.f32.mrf.mxu0
      %v6809 = vadd.f32 %v6711, %v6808
      %v6810 = vpop.f32.mrf.mxu0
      %v6811 = vadd.f32 %v6711, %v6810
      %6812 = vmatmul.bf16.gmra.mxu0 %v6744
      %v6813 = vpop.f32.mrf.mxu0
      %v6814 = vadd.f32 %v6711, %v6813
      %v6815 = vpop.f32.mrf.mxu0
      %v6816 = vadd.f32 %v6711, %v6815
      %6817 = vmatmul.bf16.gmra.mxu0 %v6747
      %v6818 = vpop.f32.mrf.mxu0
      %v6819 = vadd.f32 %v6711, %v6818
      %v6820 = vpop.f32.mrf.mxu0
      %v6821 = vadd.f32 %v6711, %v6820
      %6822 = vmatmul.bf16.gmra.mxu0 %v6750
      %v6823 = vpop.f32.mrf.mxu0
      %v6824 = vadd.f32 %v6711, %v6823
      %v6825 = vpop.f32.mrf.mxu0
      %v6826 = vadd.f32 %v6711, %v6825
      %6827 = vmatmul.bf16.gmra.mxu0 %v6753
      %v6828 = vpop.f32.mrf.mxu0
      %v6829 = vadd.f32 %v6711, %v6828
      %v6830 = vpop.f32.mrf.mxu0
      %v6831 = vadd.f32 %v6711, %v6830
      %6832 = vmatmul.bf16.gmra.mxu0 %v6756
      %v6833 = vpop.f32.mrf.mxu0
      %v6834 = vadd.f32 %v6711, %v6833
      %v6835 = vpop.f32.mrf.mxu0
      %v6836 = vadd.f32 %v6711, %v6835
      %6837 = vmatmul.bf16.gmra.mxu0 %v6759
      %v6838 = vpop.f32.mrf.mxu0
      %v6839 = vadd.f32 %v6711, %v6838
      %v6840 = vpop.f32.mrf.mxu0
      %v6841 = vadd.f32 %v6711, %v6840
      %6842 = vmatmul.bf16.gmra.mxu0 %v6762
      %v6843 = vpop.f32.mrf.mxu0
      %v6844 = vadd.f32 %v6711, %v6843
      %v6845 = vpop.f32.mrf.mxu0
      %v6846 = vadd.f32 %v6711, %v6845
      %6847 = vmatmul.bf16.gmra.mxu0 %v6765
      %v6848 = vpop.f32.mrf.mxu0
      %v6849 = vadd.f32 %v6711, %v6848
      %v6850 = vpop.f32.mrf.mxu0
      %v6851 = vadd.f32 %v6711, %v6850
      %6852 = vmatmul.bf16.gmra.mxu0 %v6768
      %v6853 = vpop.f32.mrf.mxu0
      %v6854 = vadd.f32 %v6711, %v6853
      %v6855 = vpop.f32.mrf.mxu0
      %v6856 = vadd.f32 %v6711, %v6855
      %6857 = vmatmul.bf16.gmra.mxu0 %v6771
      %v6858 = vpop.f32.mrf.mxu0
      %v6859 = vadd.f32 %v6711, %v6858
      %v6860 = vpop.f32.mrf.mxu0
      %v6861 = vadd.f32 %v6711, %v6860
      %6862 = vmatmul.bf16.gmra.mxu0 %v6774
      %v6863 = vpop.f32.mrf.mxu0
      %v6864 = vadd.f32 %v6711, %v6863
      %v6865 = vpop.f32.mrf.mxu0
      %v6866 = vadd.f32 %v6711, %v6865
      %6867 = vdwg.mxu0
      %v6868 = vld [vmem:[#allocation2] sm:$0xff]
      %v6869 = vld [vmem:[#allocation2 + $0x8] sm:$0xff]
      %v6870 = vld [vmem:[#allocation2 + $0x10] sm:$0xff]
      %v6871 = vld [vmem:[#allocation2 + $0x18] sm:$0xff]
      %v6872 = vld [vmem:[#allocation2 + $0x20] sm:$0xff]
      %v6873 = vld [vmem:[#allocation2 + $0x28] sm:$0xff]
      %v6874 = vld [vmem:[#allocation2 + $0x30] sm:$0xff]
      %v6875 = vld [vmem:[#allocation2 + $0x38] sm:$0xff]
      %v6876 = vld [vmem:[#allocation2 + $0x40] sm:$0xff]
      %v6877 = vld [vmem:[#allocation2 + $0x48] sm:$0xff]
      %v6878 = vld [vmem:[#allocation2 + $0x50] sm:$0xff]
      %v6879 = vld [vmem:[#allocation2 + $0x58] sm:$0xff]
      %v6880 = vld [vmem:[#allocation2 + $0x60] sm:$0xff]
      %v6881 = vld [vmem:[#allocation2 + $0x68] sm:$0xff]
      %v6882 = vld [vmem:[#allocation2 + $0x70] sm:$0xff]
      %v6883 = vld [vmem:[#allocation2 + $0x78] sm:$0xff]
      %v6884 = vld [vmem:[#allocation2 + $0x80] sm:$0xff]
      %v6885 = vld [vmem:[#allocation2 + $0x88] sm:$0xff]
      %v6886 = vld [vmem:[#allocation2 + $0x90] sm:$0xff]
      %v6887 = vld [vmem:[#allocation2 + $0x98] sm:$0xff]
      %v6888 = vld [vmem:[#allocation2 + $0xa0] sm:$0xff]
      %v6889 = vld [vmem:[#allocation2 + $0xa8] sm:$0xff]
      %v6890 = vld [vmem:[#allocation2 + $0xb0] sm:$0xff]
      %v6891 = vld [vmem:[#allocation2 + $0xb8] sm:$0xff]
      %v6892 = vld [vmem:[#allocation2 + $0xc0] sm:$0xff]
      %v6893 = vld [vmem:[#allocation2 + $0xc8] sm:$0xff]
      %v6894 = vld [vmem:[#allocation2 + $0xd0] sm:$0xff]
      %v6895 = vld [vmem:[#allocation2 + $0xd8] sm:$0xff]
      %v6896 = vld [vmem:[#allocation2 + $0xe0] sm:$0xff]
      %v6897 = vld [vmem:[#allocation2 + $0xe8] sm:$0xff]
      %v6898 = vld [vmem:[#allocation2 + $0xf0] sm:$0xff]
      %v6899 = vld [vmem:[#allocation2 + $0xf8] sm:$0xff]
      %v6900 = vadd.f32 %v6789, %v6868
      %v6901 = vadd.f32 %v6791, %v6869
      %v6902 = vadd.f32 %v6794, %v6870
      %v6903 = vadd.f32 %v6796, %v6871
      %v6904 = vadd.f32 %v6799, %v6872
      %v6905 = vadd.f32 %v6801, %v6873
      %v6906 = vadd.f32 %v6804, %v6874
      %v6907 = vadd.f32 %v6806, %v6875
      %v6908 = vadd.f32 %v6809, %v6876
      %v6909 = vadd.f32 %v6811, %v6877
      %v6910 = vadd.f32 %v6814, %v6878
      %v6911 = vadd.f32 %v6816, %v6879
      %v6912 = vadd.f32 %v6819, %v6880
      %v6913 = vadd.f32 %v6821, %v6881
      %v6914 = vadd.f32 %v6824, %v6882
      %v6915 = vadd.f32 %v6826, %v6883
      %v6916 = vadd.f32 %v6829, %v6884
      %v6917 = vadd.f32 %v6831, %v6885
      %v6918 = vadd.f32 %v6834, %v6886
      %v6919 = vadd.f32 %v6836, %v6887
      %v6920 = vadd.f32 %v6839, %v6888
      %v6921 = vadd.f32 %v6841, %v6889
      %v6922 = vadd.f32 %v6844, %v6890
      %v6923 = vadd.f32 %v6846, %v6891
      %v6924 = vadd.f32 %v6849, %v6892
      %v6925 = vadd.f32 %v6851, %v6893
      %v6926 = vadd.f32 %v6854, %v6894
      %v6927 = vadd.f32 %v6856, %v6895
      %v6928 = vadd.f32 %v6859, %v6896
      %v6929 = vadd.f32 %v6861, %v6897
      %v6930 = vadd.f32 %v6864, %v6898
      %v6931 = vadd.f32 %v6866, %v6899
      %6932 = vst.msk [vmem:[%s332] sm:$0xff] %vm593, %v6900
      %6933 = vst.msk [vmem:[%s332 + $0x8] sm:$0xff] %vm593, %v6901
      %6934 = vst.msk [vmem:[%s332 + $0x10] sm:$0xff] %vm593, %v6902
      %6935 = vst.msk [vmem:[%s332 + $0x18] sm:$0xff] %vm593, %v6903
      %6936 = vst.msk [vmem:[%s332 + $0x20] sm:$0xff] %vm593, %v6904
      %6937 = vst.msk [vmem:[%s332 + $0x28] sm:$0xff] %vm593, %v6905
      %6938 = vst.msk [vmem:[%s332 + $0x30] sm:$0xff] %vm593, %v6906
      %6939 = vst.msk [vmem:[%s332 + $0x38] sm:$0xff] %vm593, %v6907
      %6940 = vst.msk [vmem:[%s332 + $0x40] sm:$0xff] %vm593, %v6908
      %6941 = vst.msk [vmem:[%s332 + $0x48] sm:$0xff] %vm593, %v6909
      %6942 = vst.msk [vmem:[%s332 + $0x50] sm:$0xff] %vm593, %v6910
      %6943 = vst.msk [vmem:[%s332 + $0x58] sm:$0xff] %vm593, %v6911
      %6944 = vst.msk [vmem:[%s332 + $0x60] sm:$0xff] %vm593, %v6912
      %6945 = vst.msk [vmem:[%s332 + $0x68] sm:$0xff] %vm593, %v6913
      %6946 = vst.msk [vmem:[%s332 + $0x70] sm:$0xff] %vm593, %v6914
      %6947 = vst.msk [vmem:[%s332 + $0x78] sm:$0xff] %vm593, %v6915
      %6948 = vst.msk [vmem:[%s332 + $0x80] sm:$0xff] %vm593, %v6916
      %6949 = vst.msk [vmem:[%s332 + $0x88] sm:$0xff] %vm593, %v6917
      %6950 = vst.msk [vmem:[%s332 + $0x90] sm:$0xff] %vm593, %v6918
      %6951 = vst.msk [vmem:[%s332 + $0x98] sm:$0xff] %vm593, %v6919
      %6952 = vst.msk [vmem:[%s332 + $0xa0] sm:$0xff] %vm593, %v6920
      %6953 = vst.msk [vmem:[%s332 + $0xa8] sm:$0xff] %vm593, %v6921
      %6954 = vst.msk [vmem:[%s332 + $0xb0] sm:$0xff] %vm593, %v6922
      %6955 = vst.msk [vmem:[%s332 + $0xb8] sm:$0xff] %vm593, %v6923
      %6956 = vst.msk [vmem:[%s332 + $0xc0] sm:$0xff] %vm593, %v6924
      %6957 = vst.msk [vmem:[%s332 + $0xc8] sm:$0xff] %vm593, %v6925
      %6958 = vst.msk [vmem:[%s332 + $0xd0] sm:$0xff] %vm593, %v6926
      %6959 = vst.msk [vmem:[%s332 + $0xd8] sm:$0xff] %vm593, %v6927
      %6960 = vst.msk [vmem:[%s332 + $0xe0] sm:$0xff] %vm593, %v6928
      %6961 = vst.msk [vmem:[%s332 + $0xe8] sm:$0xff] %vm593, %v6929
      %6962 = vst.msk [vmem:[%s332 + $0xf0] sm:$0xff] %vm593, %v6930
      %6963 = vst.msk [vmem:[%s332 + $0xf8] sm:$0xff] %vm593, %v6931
      %p6964 = scmp.lt.s32.totalorder %s20, 1
      %s6965 = scalar_select %p6964, %s20, 1
      %s6966 = smul.addr %s6965, 32
      %s6967 = smul.addr %s6966, 8
      %s6968 = scalar_lea.vmem %s9, %s6967
      // Predicated region
      $region57: #{resblock2.1} parent=55 // pred_check
        %p6969 = pneg %p232
      $region58: #{resblock2.1} parent=55 // pred_check_branch
        %6971 = sbr.rel (%p6969) target = $region60
      $region59: #{resblock2.1} parent=55 // pred_region
        _
      $region60: #{resblock2.1} parent=55 // pred_fallthru
        _
    $region56: #{resblock2.1} parent=5 // pred_fallthru
      _
    %p6972 = scmp.le.s32.totalorder 2, %s15
    // Predicated region
    $region61: #{resblock2.1} parent=5 // pred_check
      %p6973 = pneg %p6972
    $region62: #{resblock2.1} parent=5 // pred_check_branch
      %6975 = sbr.rel (%p6973) target = $region64
    $region63: #{resblock2.1} parent=5 // pred_region
      %s6976 = ssub.s32 %s15, 2
      // Predicated region
      $region65: #{resblock2.1} parent=63 // pred_check
        %p6977 = pneg %p238
      $region66: #{resblock2.1} parent=63 // pred_check_branch
        %6979 = sbr.rel (%p6977) target = $region68
      $region67: #{resblock2.1} parent=63 // pred_region
        %p6980 = scmp.lt.s32.totalorder %s21, 1
        %s6981 = scalar_select %p6980, %s21, 1
        %s6982 = smul.addr %s6981, 32
        %s6983 = smul.addr %s6982, 8
        %s6984 = scalar_lea.vmem %s9, %s6983
      $region68: #{resblock2.1} parent=63 // pred_fallthru
        _
    $region64: #{resblock2.1} parent=5 // pred_fallthru
      _
  $region6: #{resblock2.1} parent=0 // loop_footer
    %s19 = sadd.s32 1, %s15
  $region7: #{resblock2.1} parent=0 // loop_footer_branch
    %14 = sbr.rel target = $region3
  $region8: #{resblock2.1} parent=0 // loop_exit
    _

</llo_original>
